<compile_context>
chip_gen: v7x
topology: tpu7x:2x2x1
jax: 0.10.0
libtpu: 0.0.40
codegen_flags: <defaults>
</compile_context>

<pallas_src>
import functools

import jax
import jax.numpy as jnp
from jax.experimental import pallas as pl
from jax.experimental.pallas import tpu as pltpu


# ----------------------------------------------------------------------------
# Kernel 1: KPConv — influence products streamed into a bf16 slab scratch,
# neighbor sum + channel mixing folded into one MXU matmul, per-tile BN stats.
# ----------------------------------------------------------------------------
def _kpconv_kernel(kp_ref, c_ref, nf_ref, w_ref, o_ref, stats_ref, prods_ref, *,
                   nn, c_in, num_kpts):
    # kp_ref    : SMEM (K, 4)        columns = (-2*kpx, -2*kpy, -2*kpz, ||kp||^2),
    #                                kernel points already scaled by 1/extent.
    # c_ref     : VMEM (3*NN, TN)    centered neighbor coords / extent (comp-major)
    # nf_ref    : VMEM (C_in*NN, TN) gathered neighbor features (channel-major)
    # w_ref     : VMEM (C_out, K*C_in*NN) bf16 weights, each entry repeated NN times
    # o_ref     : VMEM (C_out, TN)   f32 conv output
    # stats_ref : VMEM (1, C_out, 2) per-tile [sum, sum-of-squares] of the output
    # prods_ref : VMEM (K*C_in*NN, TN) bf16 scratch of influence*feature slabs
    #
    # NOTE: the expansion loses the cross term in f32 for shadow neighbors
    # (offset 1e6 -> ||c||^2 ~ 1e12), which is harmless because the influence
    # clamps to 0 there and the gathered shadow feature is exactly 0.
    cx = c_ref[0 * nn:1 * nn, :]
    cy = c_ref[1 * nn:2 * nn, :]
    cz = c_ref[2 * nn:3 * nn, :]
    c_sq = cx * cx + cy * cy + cz * cz            # only ||c||^2 stays resident
    del cx, cy, cz                                # short vreg live ranges

    for k in range(num_kpts):                     # K = 15: unrolled
        # re-slice coordinates from VMEM each iteration (3 vld slots are plentiful)
        sq = (c_sq
              + kp_ref[k, 0] * c_ref[0 * nn:1 * nn, :]
              + kp_ref[k, 1] * c_ref[1 * nn:2 * nn, :]
              + kp_ref[k, 2] * c_ref[2 * nn:3 * nn, :]
              + kp_ref[k, 3])
        sq = jnp.maximum(sq, 0.0)                 # guard fp cancellation near kp
        infl = jnp.maximum(1.0 - jnp.sqrt(sq), 0.0)        # (NN, TN), pre-scaled
        # TODO(synk): at production C_in, switch this unrolled channel loop to a
        # lax.fori_loop with pl.ds slab indexing to bound code size/compile time.
        for c in range(c_in):
            base = (k * c_in + c) * nn
            prods_ref[base:base + nn, :] = (
                infl * nf_ref[c * nn:(c + 1) * nn, :]).astype(jnp.bfloat16)

    # One MXU matmul folds the neighbor sum AND the KPConv channel mixing:
    # (C_out, K*C_in*NN) @ (K*C_in*NN, TN), bf16 operands, f32 accumulation.
    out = jnp.dot(w_ref[...], prods_ref[...], preferred_element_type=jnp.float32)
    o_ref[...] = out

    # Per-tile BatchNorm statistics.  Padded columns are exactly zero (zero
    # features -> zero products -> zero output), so they do not perturb sums.
    stats_ref[0, :, 0:1] = jnp.sum(out, axis=1, keepdims=True)
    stats_ref[0, :, 1:2] = jnp.sum(out * out, axis=1, keepdims=True)


def kpconv_pallas(xyz, feats, neighbor_idx, kernel_pts, weights, extent, *,
                  tile_n=512, pad_to=None):
    N, c_in = feats.shape
    nn_ = neighbor_idx.shape[1]
    K = kernel_pts.shape[0]
    c_out = weights.shape[-1]
    assert tile_n % 128 == 0
    pad_to = tile_n if pad_to is None else pad_to
    assert pad_to % tile_n == 0
    n_pad = ((N + pad_to - 1) // pad_to) * pad_to
    kcn = K * c_in * nn_                    # folded contraction length (960 here)

    # ---- glue: shadow pad + neighbor gather + lane-dense transpose ----------
    # TODO(synk): at production N, move this gather into the kernel
    # (PrefetchScalarGridSpec with per-tile neighbor_idx in SMEM, xyz/feats in
    # pl.ANY, manual double-buffered DMA gather straight into the
    # (3*NN,TN)/(C_in*NN,TN) layout) — the materialized (N,NN,*) arrays plus
    # transposes dominate HBM traffic at scale.
    inv_extent = 1.0 / extent
    xyz_pad = jnp.concatenate([xyz, jnp.full((1, 3), 1e6, xyz.dtype)], axis=0)
    feats_pad = jnp.concatenate([feats, jnp.zeros((1, c_in), feats.dtype)], axis=0)
    c = (xyz_pad[neighbor_idx] - xyz[:, None, :]) * inv_extent   # (N, NN, 3)
    nf = feats_pad[neighbor_idx]                                 # (N, NN, C_in)
    cT = jnp.transpose(c, (2, 1, 0)).reshape(3 * nn_, N)         # (3*NN, N)
    nfT = jnp.transpose(nf, (2, 1, 0)).reshape(c_in * nn_, N)    # (C_in*NN, N)
    cT = jnp.pad(cT, ((0, 0), (0, n_pad - N)))
    nfT = jnp.pad(nfT, ((0, 0), (0, n_pad - N)))

    # Kernel-point constants for the distance expansion, pre-scaled by 1/extent
    # so the kernel never multiplies by inv_extent.
    kp_s = kernel_pts.astype(jnp.float32) * inv_extent
    kp_tab = jnp.concatenate(
        [-2.0 * kp_s, jnp.sum(kp_s * kp_s, axis=1, keepdims=True)],
        axis=1)                                                  # (K, 4)

    # (K, C_in, C_out) -> (C_out, K*C_in*NN) bf16, each weight repeated NN times
    # so the single matmul also performs the sum over neighbors.
    w2 = weights.reshape(K * c_in, c_out)
    w_exp = jnp.transpose(jnp.repeat(w2, nn_, axis=0)).astype(jnp.bfloat16)

    n_tiles = n_pad // tile_n
    kernel = functools.partial(_kpconv_kernel, nn=nn_, c_in=c_in, num_kpts=K)
    # VMEM/step ~ (48+64+32)*TN*4B double-buffered + kcn*TN*2B scratch + 60 KB
    # weights: ~1.7 MB at TN=512 — far below scoped limits on v5e/v6e/v7x.
    # At production N keep n_tiles even and >= ~8 so both v7x TensorCores get
    # work under dimension_semantics=("parallel",).
    out_t, stats = pl.pallas_call(
        kernel,
        out_shape=(jax.ShapeDtypeStruct((c_out, n_pad), jnp.float32),
                   jax.ShapeDtypeStruct((n_tiles, c_out, 2), jnp.float32)),
        grid=(n_tiles,),
        in_specs=[
            pl.BlockSpec(memory_space=pltpu.MemorySpace.SMEM),      # kp_tab (K,4)
            pl.BlockSpec((3 * nn_, tile_n), lambda i: (0, i)),      # cT
            pl.BlockSpec((c_in * nn_, tile_n), lambda i: (0, i)),   # nfT
            pl.BlockSpec((c_out, kcn), lambda i: (0, 0)),           # w_exp (resident)
        ],
        out_specs=[pl.BlockSpec((c_out, tile_n), lambda i: (0, i)),
                   pl.BlockSpec((1, c_out, 2), lambda i: (i, 0, 0))],
        scratch_shapes=[pltpu.VMEM((kcn, tile_n), jnp.bfloat16)],
        compiler_params=pltpu.CompilerParams(
            dimension_semantics=("parallel",)),
    )(kp_tab, cT, nfT, w_exp)
    return out_t, stats                      # (C_out, n_pad), (n_tiles, C_out, 2)


# ----------------------------------------------------------------------------
# Kernel 2: fused BatchNorm (affine, batch stats from kernel-1 partial sums)
# + LeakyReLU, lane-dense (C_out, TN) tiles.
# ----------------------------------------------------------------------------
def _bn_act_kernel(x_ref, scale_ref, shift_ref, o_ref, *, negative_slope):
    y = x_ref[...] * scale_ref[...] + shift_ref[...]           # lane broadcast
    o_ref[...] = jnp.where(y >= 0.0, y, negative_slope * y)


def bn_leakyrelu_pallas(x_t, stats, n_valid, gamma, beta, *, negative_slope=0.2,
                        eps=1e-5, tile_n=1024):
    c, n_pad = x_t.shape
    assert n_pad % tile_n == 0
    # Training-mode BatchNorm1d batch statistics from the per-tile sums emitted
    # by kernel 1 (no extra XLA pass over the (C_out, N) activations).
    tot = jnp.sum(stats, axis=0)                               # (C_out, 2)
    mean = tot[:, 0] / n_valid
    var = jnp.maximum(tot[:, 1] / n_valid - mean * mean, 0.0)  # biased, matches BN
    inv = gamma * jax.lax.rsqrt(var + eps)
    scale = inv.reshape(c, 1).astype(jnp.float32)
    shift = (beta - mean * inv).reshape(c, 1).astype(jnp.float32)

    kernel = functools.partial(_bn_act_kernel, negative_slope=negative_slope)
    return pl.pallas_call(
        kernel,
        out_shape=jax.ShapeDtypeStruct((c, n_pad), jnp.float32),
        grid=(n_pad // tile_n,),
        in_specs=[
            pl.BlockSpec((c, tile_n), lambda i: (0, i)),
            pl.BlockSpec((c, 1), lambda i: (0, 0)),
            pl.BlockSpec((c, 1), lambda i: (0, 0)),
        ],
        out_specs=pl.BlockSpec((c, tile_n), lambda i: (0, i)),
        compiler_params=pltpu.CompilerParams(
            dimension_semantics=("parallel",)),
    )(x_t, scale, shift)


# ----------------------------------------------------------------------------
# Full block
# ----------------------------------------------------------------------------
def kpconv_simple_block(feats, xyz, neighbor_idx, params, *, extent,
                        negative_slope=0.2, eps=1e-5, tile_conv=512,
                        tile_bn=1024, point_major_output=True):
    N = feats.shape[0]
    pad_to = max(tile_conv, tile_bn)
    assert pad_to % tile_conv == 0 and pad_to % tile_bn == 0
    out_t, stats = kpconv_pallas(
        xyz, feats, neighbor_idx, params["kernel_pts"], params["weights"],
        extent, tile_n=tile_conv, pad_to=pad_to)                 # (C_out, n_pad)
    out_t = bn_leakyrelu_pallas(
        out_t, stats, N, params["gamma"], params["beta"],
        negative_slope=negative_slope, eps=eps, tile_n=tile_bn)  # (C_out, n_pad)
    out_cn = out_t[:, :N]               # drop padded columns (required invariant)
    if point_major_output:
        # Transpose only at the module boundary to match torch's (N, C_out);
        # downstream Pallas consumers should take (C_out, N) directly and skip it.
        return jnp.transpose(out_cn)
    return out_cn


# ----------------------------------------------------------------------------
# Pure-JAX reference (mirrors torch KPConv_ops + BatchNorm1d + LeakyReLU)
# ----------------------------------------------------------------------------
def reference(feats, xyz, neighbor_idx, params, *, extent, negative_slope=0.2,
              eps=1e-5):
    N, c_in = feats.shape
    kp = params["kernel_pts"]
    W = params["weights"]
    xyz_pad = jnp.concatenate([xyz, jnp.full((1, 3), 1e6, xyz.dtype)], axis=0)
    feats_pad = jnp.concatenate([feats, jnp.zeros((1, c_in), feats.dtype)], axis=0)
    neigh = xyz_pad[neighbor_idx] - xyz[:, None, :]               # (N, NN, 3)
    diff = neigh[:, :, None, :] - kp[None, None, :, :]            # (N, NN, K, 3)
    sq = jnp.sum(diff * diff, axis=-1)                            # (N, NN, K)
    aw = jnp.maximum(1.0 - jnp.sqrt(sq) / extent, 0.0)            # linear influence
    aw = jnp.transpose(aw, (0, 2, 1))                             # (N, K, NN)
    nfeat = feats_pad[neighbor_idx]                               # (N, NN, C_in)
    weighted = jnp.matmul(aw, nfeat, precision=jax.lax.Precision.HIGHEST)
    out = jnp.einsum("nkc,kco->no", weighted, W,
                     precision=jax.lax.Precision.HIGHEST)         # (N, C_out)
    mean = jnp.mean(out, axis=0)
    var = jnp.var(out, axis=0)
    y = (out - mean) / jnp.sqrt(var + eps) * params["gamma"] + params["beta"]
    return jnp.where(y >= 0.0, y, negative_slope * y)


if __name__ == "__main__":
    # Small synthetic shapes consistent with KPConvSimpleBlock's forward.
    N, NN = 64, 16            # points, neighbors per point
    C_IN, C_OUT = 4, 32       # in/out channels
    K_PTS = 15                # KPConv kernel points (default)
    PREV_GRID, SIGMA = 1.0, 1.0
    EXTENT = PREV_GRID * SIGMA
    NEG_SLOPE = 0.2

    key = jax.random.PRNGKey(0)
    k_xyz, k_feat, k_idx, k_kp, k_w = jax.random.split(key, 5)

    xyz = jax.random.uniform(k_xyz, (N, 3), jnp.float32)
    feats = jax.random.normal(k_feat, (N, C_IN), jnp.float32)
    # include index N (shadow neighbor) to exercise shadow-point handling
    neighbor_idx = jax.random.randint(k_idx, (N, NN), 0, N + 1).astype(jnp.int32)

    params = {
        "kernel_pts": jax.random.normal(k_kp, (K_PTS, 3), jnp.float32) * 0.4 * EXTENT,
        "weights": jax.random.normal(k_w, (K_PTS, C_IN, C_OUT), jnp.float32)
                   * (2.0 / (K_PTS * C_IN)) ** 0.5,
        "gamma": jnp.ones((C_OUT,), jnp.float32),    # BatchNorm1d default affine init
        "beta": jnp.zeros((C_OUT,), jnp.float32),
    }

    out = kpconv_simple_block(feats, xyz, neighbor_idx, params,
                              extent=EXTENT, negative_slope=NEG_SLOPE)
    out = jax.block_until_ready(out)

    ref = reference(feats, xyz, neighbor_idx, params,
                    extent=EXTENT, negative_slope=NEG_SLOPE)
    assert out.shape == (N, C_OUT)
    assert bool(jnp.all(jnp.isfinite(out)))
    max_err = float(jnp.max(jnp.abs(out - ref)))
    # Per-neighbor products are bf16-rounded before the MXU accumulation
    # (f32 accumulate), so the tolerance is slightly looser than pure-f32.
    assert bool(jnp.allclose(out, ref, atol=3e-2, rtol=3e-2)), \
        f"max abs err {max_err}"

    print("KERNEL_OK")
</pallas_src>

<mosaic_0001>
module attributes {stable_mosaic.version = 11 : i64} {
  func.func @_kpconv_kernel(%arg0: i32, %arg1: memref<15x4xf32, #tpu.memory_space<smem>>, %arg2: memref<48x512xf32, #tpu.memory_space<vmem>>, %arg3: memref<64x512xf32, #tpu.memory_space<vmem>>, %arg4: memref<32x960xbf16, #tpu.memory_space<vmem>>, %arg5: memref<32x512xf32, #tpu.memory_space<vmem>>, %arg6: memref<1x32x2xf32, #tpu.memory_space<vmem>>, %arg7: memref<960x512xbf16, #tpu.memory_space<vmem>>) attributes {dimension_semantics = [#tpu.dimension_semantics<parallel>], iteration_bounds = array<i64: 2>, scalar_prefetch = 0 : i64, scratch_operands = 1 : i64, tpu.core_type = #tpu.core_type<tc>, window_params = [{transform_indices = @transform_0, window_bounds = array<i64: 15, 4>}, {transform_indices = @transform_1, window_bounds = array<i64: 48, 512>}, {transform_indices = @transform_2, window_bounds = array<i64: 64, 512>}, {pipeline_mode = #tpu.pipeline_mode<synchronous>, transform_indices = @transform_3, window_bounds = array<i64: 32, 960>}, {transform_indices = @transform_4, window_bounds = array<i64: 32, 512>}, {transform_indices = @transform_5, window_bounds = array<i64: 1, 32, 2>}]} {
    %c0 = arith.constant 0 : index
    %c0_0 = arith.constant 0 : index
    %0 = vector.load %arg2[%c0, %c0_0] : memref<48x512xf32, #tpu.memory_space<vmem>>, vector<16x512xf32>
    %c16 = arith.constant 16 : index
    %c0_1 = arith.constant 0 : index
    %1 = vector.load %arg2[%c16, %c0_1] : memref<48x512xf32, #tpu.memory_space<vmem>>, vector<16x512xf32>
    %c32 = arith.constant 32 : index
    %c0_2 = arith.constant 0 : index
    %2 = vector.load %arg2[%c32, %c0_2] : memref<48x512xf32, #tpu.memory_space<vmem>>, vector<16x512xf32>
    %3 = arith.mulf %0, %0 : vector<16x512xf32>
    %4 = arith.mulf %1, %1 : vector<16x512xf32>
    %5 = arith.addf %3, %4 : vector<16x512xf32>
    %6 = arith.mulf %2, %2 : vector<16x512xf32>
    %7 = arith.addf %5, %6 : vector<16x512xf32>
    %c0_3 = arith.constant 0 : index
    %c0_4 = arith.constant 0 : index
    %8 = memref.load %arg1[%c0_3, %c0_4] : memref<15x4xf32, #tpu.memory_space<smem>>
    %c0_5 = arith.constant 0 : index
    %c0_6 = arith.constant 0 : index
    %9 = vector.load %arg2[%c0_5, %c0_6] : memref<48x512xf32, #tpu.memory_space<vmem>>, vector<16x512xf32>
    %10 = vector.broadcast %8 : f32 to vector<16x512xf32>
    %11 = arith.mulf %10, %9 : vector<16x512xf32>
    %12 = arith.addf %7, %11 : vector<16x512xf32>
    %c0_7 = arith.constant 0 : index
    %c1 = arith.constant 1 : index
    %13 = memref.load %arg1[%c0_7, %c1] : memref<15x4xf32, #tpu.memory_space<smem>>
    %c16_8 = arith.constant 16 : index
    %c0_9 = arith.constant 0 : index
    %14 = vector.load %arg2[%c16_8, %c0_9] : memref<48x512xf32, #tpu.memory_space<vmem>>, vector<16x512xf32>
    %15 = vector.broadcast %13 : f32 to vector<16x512xf32>
    %16 = arith.mulf %15, %14 : vector<16x512xf32>
    %17 = arith.addf %12, %16 : vector<16x512xf32>
    %c0_10 = arith.constant 0 : index
    %c2 = arith.constant 2 : index
    %18 = memref.load %arg1[%c0_10, %c2] : memref<15x4xf32, #tpu.memory_space<smem>>
    %c32_11 = arith.constant 32 : index
    %c0_12 = arith.constant 0 : index
    %19 = vector.load %arg2[%c32_11, %c0_12] : memref<48x512xf32, #tpu.memory_space<vmem>>, vector<16x512xf32>
    %20 = vector.broadcast %18 : f32 to vector<16x512xf32>
    %21 = arith.mulf %20, %19 : vector<16x512xf32>
    %22 = arith.addf %17, %21 : vector<16x512xf32>
    %c0_13 = arith.constant 0 : index
    %c3 = arith.constant 3 : index
    %23 = memref.load %arg1[%c0_13, %c3] : memref<15x4xf32, #tpu.memory_space<smem>>
    %24 = vector.broadcast %23 : f32 to vector<16x512xf32>
    %25 = arith.addf %22, %24 : vector<16x512xf32>
    %cst = arith.constant 0.000000e+00 : f32
    %26 = vector.broadcast %cst : f32 to vector<16x512xf32>
    %27 = arith.maximumf %25, %26 : vector<16x512xf32>
    %28 = math.sqrt %27 : vector<16x512xf32>
    %cst_14 = arith.constant 1.000000e+00 : f32
    %29 = vector.broadcast %cst_14 : f32 to vector<16x512xf32>
    %30 = arith.subf %29, %28 : vector<16x512xf32>
    %cst_15 = arith.constant 0.000000e+00 : f32
    %31 = vector.broadcast %cst_15 : f32 to vector<16x512xf32>
    %32 = arith.maximumf %30, %31 : vector<16x512xf32>
    %c0_16 = arith.constant 0 : index
    %c0_17 = arith.constant 0 : index
    %33 = vector.load %arg3[%c0_16, %c0_17] : memref<64x512xf32, #tpu.memory_space<vmem>>, vector<16x512xf32>
    %34 = arith.mulf %32, %33 : vector<16x512xf32>
    %35 = arith.truncf %34 : vector<16x512xf32> to vector<16x512xbf16>
    %c0_18 = arith.constant 0 : index
    %c0_19 = arith.constant 0 : index
    %36 = vector.load %arg7[%c0_18, %c0_19] : memref<960x512xbf16, #tpu.memory_space<vmem>>, vector<16x512xbf16>
    tpu.vector_store %arg7[%c0_18, %c0_19], %35 {strides = array<i32>} : memref<960x512xbf16, #tpu.memory_space<vmem>>, vector<16x512xbf16>,
    %c16_20 = arith.constant 16 : index
    %c0_21 = arith.constant 0 : index
    %37 = vector.load %arg3[%c16_20, %c0_21] : memref<64x512xf32, #tpu.memory_space<vmem>>, vector<16x512xf32>
    %38 = arith.mulf %32, %37 : vector<16x512xf32>
    %39 = arith.truncf %38 : vector<16x512xf32> to vector<16x512xbf16>
    %c16_22 = arith.constant 16 : index
    %c0_23 = arith.constant 0 : index
    %40 = vector.load %arg7[%c16_22, %c0_23] : memref<960x512xbf16, #tpu.memory_space<vmem>>, vector<16x512xbf16>
    tpu.vector_store %arg7[%c16_22, %c0_23], %39 {strides = array<i32>} : memref<960x512xbf16, #tpu.memory_space<vmem>>, vector<16x512xbf16>,
    %c32_24 = arith.constant 32 : index
    %c0_25 = arith.constant 0 : index
    %41 = vector.load %arg3[%c32_24, %c0_25] : memref<64x512xf32, #tpu.memory_space<vmem>>, vector<16x512xf32>
    %42 = arith.mulf %32, %41 : vector<16x512xf32>
    %43 = arith.truncf %42 : vector<16x512xf32> to vector<16x512xbf16>
    %c32_26 = arith.constant 32 : index
    %c0_27 = arith.constant 0 : index
    %44 = vector.load %arg7[%c32_26, %c0_27] : memref<960x512xbf16, #tpu.memory_space<vmem>>, vector<16x512xbf16>
    tpu.vector_store %arg7[%c32_26, %c0_27], %43 {strides = array<i32>} : memref<960x512xbf16, #tpu.memory_space<vmem>>, vector<16x512xbf16>,
    %c48 = arith.constant 48 : index
    %c0_28 = arith.constant 0 : index
    %45 = vector.load %arg3[%c48, %c0_28] : memref<64x512xf32, #tpu.memory_space<vmem>>, vector<16x512xf32>
    %46 = arith.mulf %32, %45 : vector<16x512xf32>
    %47 = arith.truncf %46 : vector<16x512xf32> to vector<16x512xbf16>
    %c48_29 = arith.constant 48 : index
    %c0_30 = arith.constant 0 : index
    %48 = vector.load %arg7[%c48_29, %c0_30] : memref<960x512xbf16, #tpu.memory_space<vmem>>, vector<16x512xbf16>
    tpu.vector_store %arg7[%c48_29, %c0_30], %47 {strides = array<i32>} : memref<960x512xbf16, #tpu.memory_space<vmem>>, vector<16x512xbf16>,
    %c1_31 = arith.constant 1 : index
    %c0_32 = arith.constant 0 : index
    %49 = memref.load %arg1[%c1_31, %c0_32] : memref<15x4xf32, #tpu.memory_space<smem>>
    %c0_33 = arith.constant 0 : index
    %c0_34 = arith.constant 0 : index
    %50 = vector.load %arg2[%c0_33, %c0_34] : memref<48x512xf32, #tpu.memory_space<vmem>>, vector<16x512xf32>
    %51 = vector.broadcast %49 : f32 to vector<16x512xf32>
    %52 = arith.mulf %51, %50 : vector<16x512xf32>
    %53 = arith.addf %7, %52 : vector<16x512xf32>
    %c1_35 = arith.constant 1 : index
    %c1_36 = arith.constant 1 : index
    %54 = memref.load %arg1[%c1_35, %c1_36] : memref<15x4xf32, #tpu.memory_space<smem>>
    %c16_37 = arith.constant 16 : index
    %c0_38 = arith.constant 0 : index
    %55 = vector.load %arg2[%c16_37, %c0_38] : memref<48x512xf32, #tpu.memory_space<vmem>>, vector<16x512xf32>
    %56 = vector.broadcast %54 : f32 to vector<16x512xf32>
    %57 = arith.mulf %56, %55 : vector<16x512xf32>
    %58 = arith.addf %53, %57 : vector<16x512xf32>
    %c1_39 = arith.constant 1 : index
    %c2_40 = arith.constant 2 : index
    %59 = memref.load %arg1[%c1_39, %c2_40] : memref<15x4xf32, #tpu.memory_space<smem>>
    %c32_41 = arith.constant 32 : index
    %c0_42 = arith.constant 0 : index
    %60 = vector.load %arg2[%c32_41, %c0_42] : memref<48x512xf32, #tpu.memory_space<vmem>>, vector<16x512xf32>
    %61 = vector.broadcast %59 : f32 to vector<16x512xf32>
    %62 = arith.mulf %61, %60 : vector<16x512xf32>
    %63 = arith.addf %58, %62 : vector<16x512xf32>
    %c1_43 = arith.constant 1 : index
    %c3_44 = arith.constant 3 : index
    %64 = memref.load %arg1[%c1_43, %c3_44] : memref<15x4xf32, #tpu.memory_space<smem>>
    %65 = vector.broadcast %64 : f32 to vector<16x512xf32>
    %66 = arith.addf %63, %65 : vector<16x512xf32>
    %cst_45 = arith.constant 0.000000e+00 : f32
    %67 = vector.broadcast %cst_45 : f32 to vector<16x512xf32>
    %68 = arith.maximumf %66, %67 : vector<16x512xf32>
    %69 = math.sqrt %68 : vector<16x512xf32>
    %cst_46 = arith.constant 1.000000e+00 : f32
    %70 = vector.broadcast %cst_46 : f32 to vector<16x512xf32>
    %71 = arith.subf %70, %69 : vector<16x512xf32>
    %cst_47 = arith.constant 0.000000e+00 : f32
    %72 = vector.broadcast %cst_47 : f32 to vector<16x512xf32>
    %73 = arith.maximumf %71, %72 : vector<16x512xf32>
    %c0_48 = arith.constant 0 : index
    %c0_49 = arith.constant 0 : index
    %74 = vector.load %arg3[%c0_48, %c0_49] : memref<64x512xf32, #tpu.memory_space<vmem>>, vector<16x512xf32>
    %75 = arith.mulf %73, %74 : vector<16x512xf32>
    %76 = arith.truncf %75 : vector<16x512xf32> to vector<16x512xbf16>
    %c64 = arith.constant 64 : index
    %c0_50 = arith.constant 0 : index
    %77 = vector.load %arg7[%c64, %c0_50] : memref<960x512xbf16, #tpu.memory_space<vmem>>, vector<16x512xbf16>
    tpu.vector_store %arg7[%c64, %c0_50], %76 {strides = array<i32>} : memref<960x512xbf16, #tpu.memory_space<vmem>>, vector<16x512xbf16>,
    %c16_51 = arith.constant 16 : index
    %c0_52 = arith.constant 0 : index
    %78 = vector.load %arg3[%c16_51, %c0_52] : memref<64x512xf32, #tpu.memory_space<vmem>>, vector<16x512xf32>
    %79 = arith.mulf %73, %78 : vector<16x512xf32>
    %80 = arith.truncf %79 : vector<16x512xf32> to vector<16x512xbf16>
    %c80 = arith.constant 80 : index
    %c0_53 = arith.constant 0 : index
    %81 = vector.load %arg7[%c80, %c0_53] : memref<960x512xbf16, #tpu.memory_space<vmem>>, vector<16x512xbf16>
    tpu.vector_store %arg7[%c80, %c0_53], %80 {strides = array<i32>} : memref<960x512xbf16, #tpu.memory_space<vmem>>, vector<16x512xbf16>,
    %c32_54 = arith.constant 32 : index
    %c0_55 = arith.constant 0 : index
    %82 = vector.load %arg3[%c32_54, %c0_55] : memref<64x512xf32, #tpu.memory_space<vmem>>, vector<16x512xf32>
    %83 = arith.mulf %73, %82 : vector<16x512xf32>
    %84 = arith.truncf %83 : vector<16x512xf32> to vector<16x512xbf16>
    %c96 = arith.constant 96 : index
    %c0_56 = arith.constant 0 : index
    %85 = vector.load %arg7[%c96, %c0_56] : memref<960x512xbf16, #tpu.memory_space<vmem>>, vector<16x512xbf16>
    tpu.vector_store %arg7[%c96, %c0_56], %84 {strides = array<i32>} : memref<960x512xbf16, #tpu.memory_space<vmem>>, vector<16x512xbf16>,
    %c48_57 = arith.constant 48 : index
    %c0_58 = arith.constant 0 : index
    %86 = vector.load %arg3[%c48_57, %c0_58] : memref<64x512xf32, #tpu.memory_space<vmem>>, vector<16x512xf32>
    %87 = arith.mulf %73, %86 : vector<16x512xf32>
    %88 = arith.truncf %87 : vector<16x512xf32> to vector<16x512xbf16>
    %c112 = arith.constant 112 : index
    %c0_59 = arith.constant 0 : index
    %89 = vector.load %arg7[%c112, %c0_59] : memref<960x512xbf16, #tpu.memory_space<vmem>>, vector<16x512xbf16>
    tpu.vector_store %arg7[%c112, %c0_59], %88 {strides = array<i32>} : memref<960x512xbf16, #tpu.memory_space<vmem>>, vector<16x512xbf16>,
    %c2_60 = arith.constant 2 : index
    %c0_61 = arith.constant 0 : index
    %90 = memref.load %arg1[%c2_60, %c0_61] : memref<15x4xf32, #tpu.memory_space<smem>>
    %c0_62 = arith.constant 0 : index
    %c0_63 = arith.constant 0 : index
    %91 = vector.load %arg2[%c0_62, %c0_63] : memref<48x512xf32, #tpu.memory_space<vmem>>, vector<16x512xf32>
    %92 = vector.broadcast %90 : f32 to vector<16x512xf32>
    %93 = arith.mulf %92, %91 : vector<16x512xf32>
    %94 = arith.addf %7, %93 : vector<16x512xf32>
    %c2_64 = arith.constant 2 : index
    %c1_65 = arith.constant 1 : index
    %95 = memref.load %arg1[%c2_64, %c1_65] : memref<15x4xf32, #tpu.memory_space<smem>>
    %c16_66 = arith.constant 16 : index
    %c0_67 = arith.constant 0 : index
    %96 = vector.load %arg2[%c16_66, %c0_67] : memref<48x512xf32, #tpu.memory_space<vmem>>, vector<16x512xf32>
    %97 = vector.broadcast %95 : f32 to vector<16x512xf32>
    %98 = arith.mulf %97, %96 : vector<16x512xf32>
    %99 = arith.addf %94, %98 : vector<16x512xf32>
    %c2_68 = arith.constant 2 : index
    %c2_69 = arith.constant 2 : index
    %100 = memref.load %arg1[%c2_68, %c2_69] : memref<15x4xf32, #tpu.memory_space<smem>>
    %c32_70 = arith.constant 32 : index
    %c0_71 = arith.constant 0 : index
    %101 = vector.load %arg2[%c32_70, %c0_71] : memref<48x512xf32, #tpu.memory_space<vmem>>, vector<16x512xf32>
    %102 = vector.broadcast %100 : f32 to vector<16x512xf32>
    %103 = arith.mulf %102, %101 : vector<16x512xf32>
    %104 = arith.addf %99, %103 : vector<16x512xf32>
    %c2_72 = arith.constant 2 : index
    %c3_73 = arith.constant 3 : index
    %105 = memref.load %arg1[%c2_72, %c3_73] : memref<15x4xf32, #tpu.memory_space<smem>>
    %106 = vector.broadcast %105 : f32 to vector<16x512xf32>
    %107 = arith.addf %104, %106 : vector<16x512xf32>
    %cst_74 = arith.constant 0.000000e+00 : f32
    %108 = vector.broadcast %cst_74 : f32 to vector<16x512xf32>
    %109 = arith.maximumf %107, %108 : vector<16x512xf32>
    %110 = math.sqrt %109 : vector<16x512xf32>
    %cst_75 = arith.constant 1.000000e+00 : f32
    %111 = vector.broadcast %cst_75 : f32 to vector<16x512xf32>
    %112 = arith.subf %111, %110 : vector<16x512xf32>
    %cst_76 = arith.constant 0.000000e+00 : f32
    %113 = vector.broadcast %cst_76 : f32 to vector<16x512xf32>
    %114 = arith.maximumf %112, %113 : vector<16x512xf32>
    %c0_77 = arith.constant 0 : index
    %c0_78 = arith.constant 0 : index
    %115 = vector.load %arg3[%c0_77, %c0_78] : memref<64x512xf32, #tpu.memory_space<vmem>>, vector<16x512xf32>
    %116 = arith.mulf %114, %115 : vector<16x512xf32>
    %117 = arith.truncf %116 : vector<16x512xf32> to vector<16x512xbf16>
    %c128 = arith.constant 128 : index
    %c0_79 = arith.constant 0 : index
    %118 = vector.load %arg7[%c128, %c0_79] : memref<960x512xbf16, #tpu.memory_space<vmem>>, vector<16x512xbf16>
    tpu.vector_store %arg7[%c128, %c0_79], %117 {strides = array<i32>} : memref<960x512xbf16, #tpu.memory_space<vmem>>, vector<16x512xbf16>,
    %c16_80 = arith.constant 16 : index
    %c0_81 = arith.constant 0 : index
    %119 = vector.load %arg3[%c16_80, %c0_81] : memref<64x512xf32, #tpu.memory_space<vmem>>, vector<16x512xf32>
    %120 = arith.mulf %114, %119 : vector<16x512xf32>
    %121 = arith.truncf %120 : vector<16x512xf32> to vector<16x512xbf16>
    %c144 = arith.constant 144 : index
    %c0_82 = arith.constant 0 : index
    %122 = vector.load %arg7[%c144, %c0_82] : memref<960x512xbf16, #tpu.memory_space<vmem>>, vector<16x512xbf16>
    tpu.vector_store %arg7[%c144, %c0_82], %121 {strides = array<i32>} : memref<960x512xbf16, #tpu.memory_space<vmem>>, vector<16x512xbf16>,
    %c32_83 = arith.constant 32 : index
    %c0_84 = arith.constant 0 : index
    %123 = vector.load %arg3[%c32_83, %c0_84] : memref<64x512xf32, #tpu.memory_space<vmem>>, vector<16x512xf32>
    %124 = arith.mulf %114, %123 : vector<16x512xf32>
    %125 = arith.truncf %124 : vector<16x512xf32> to vector<16x512xbf16>
    %c160 = arith.constant 160 : index
    %c0_85 = arith.constant 0 : index
    %126 = vector.load %arg7[%c160, %c0_85] : memref<960x512xbf16, #tpu.memory_space<vmem>>, vector<16x512xbf16>
    tpu.vector_store %arg7[%c160, %c0_85], %125 {strides = array<i32>} : memref<960x512xbf16, #tpu.memory_space<vmem>>, vector<16x512xbf16>,
    %c48_86 = arith.constant 48 : index
    %c0_87 = arith.constant 0 : index
    %127 = vector.load %arg3[%c48_86, %c0_87] : memref<64x512xf32, #tpu.memory_space<vmem>>, vector<16x512xf32>
    %128 = arith.mulf %114, %127 : vector<16x512xf32>
    %129 = arith.truncf %128 : vector<16x512xf32> to vector<16x512xbf16>
    %c176 = arith.constant 176 : index
    %c0_88 = arith.constant 0 : index
    %130 = vector.load %arg7[%c176, %c0_88] : memref<960x512xbf16, #tpu.memory_space<vmem>>, vector<16x512xbf16>
    tpu.vector_store %arg7[%c176, %c0_88], %129 {strides = array<i32>} : memref<960x512xbf16, #tpu.memory_space<vmem>>, vector<16x512xbf16>,
    %c3_89 = arith.constant 3 : index
    %c0_90 = arith.constant 0 : index
    %131 = memref.load %arg1[%c3_89, %c0_90] : memref<15x4xf32, #tpu.memory_space<smem>>
    %c0_91 = arith.constant 0 : index
    %c0_92 = arith.constant 0 : index
    %132 = vector.load %arg2[%c0_91, %c0_92] : memref<48x512xf32, #tpu.memory_space<vmem>>, vector<16x512xf32>
    %133 = vector.broadcast %131 : f32 to vector<16x512xf32>
    %134 = arith.mulf %133, %132 : vector<16x512xf32>
    %135 = arith.addf %7, %134 : vector<16x512xf32>
    %c3_93 = arith.constant 3 : index
    %c1_94 = arith.constant 1 : index
    %136 = memref.load %arg1[%c3_93, %c1_94] : memref<15x4xf32, #tpu.memory_space<smem>>
    %c16_95 = arith.constant 16 : index
    %c0_96 = arith.constant 0 : index
    %137 = vector.load %arg2[%c16_95, %c0_96] : memref<48x512xf32, #tpu.memory_space<vmem>>, vector<16x512xf32>
    %138 = vector.broadcast %136 : f32 to vector<16x512xf32>
    %139 = arith.mulf %138, %137 : vector<16x512xf32>
    %140 = arith.addf %135, %139 : vector<16x512xf32>
    %c3_97 = arith.constant 3 : index
    %c2_98 = arith.constant 2 : index
    %141 = memref.load %arg1[%c3_97, %c2_98] : memref<15x4xf32, #tpu.memory_space<smem>>
    %c32_99 = arith.constant 32 : index
    %c0_100 = arith.constant 0 : index
    %142 = vector.load %arg2[%c32_99, %c0_100] : memref<48x512xf32, #tpu.memory_space<vmem>>, vector<16x512xf32>
    %143 = vector.broadcast %141 : f32 to vector<16x512xf32>
    %144 = arith.mulf %143, %142 : vector<16x512xf32>
    %145 = arith.addf %140, %144 : vector<16x512xf32>
    %c3_101 = arith.constant 3 : index
    %c3_102 = arith.constant 3 : index
    %146 = memref.load %arg1[%c3_101, %c3_102] : memref<15x4xf32, #tpu.memory_space<smem>>
    %147 = vector.broadcast %146 : f32 to vector<16x512xf32>
    %148 = arith.addf %145, %147 : vector<16x512xf32>
    %cst_103 = arith.constant 0.000000e+00 : f32
    %149 = vector.broadcast %cst_103 : f32 to vector<16x512xf32>
    %150 = arith.maximumf %148, %149 : vector<16x512xf32>
    %151 = math.sqrt %150 : vector<16x512xf32>
    %cst_104 = arith.constant 1.000000e+00 : f32
    %152 = vector.broadcast %cst_104 : f32 to vector<16x512xf32>
    %153 = arith.subf %152, %151 : vector<16x512xf32>
    %cst_105 = arith.constant 0.000000e+00 : f32
    %154 = vector.broadcast %cst_105 : f32 to vector<16x512xf32>
    %155 = arith.maximumf %153, %154 : vector<16x512xf32>
    %c0_106 = arith.constant 0 : index
    %c0_107 = arith.constant 0 : index
    %156 = vector.load %arg3[%c0_106, %c0_107] : memref<64x512xf32, #tpu.memory_space<vmem>>, vector<16x512xf32>
    %157 = arith.mulf %155, %156 : vector<16x512xf32>
    %158 = arith.truncf %157 : vector<16x512xf32> to vector<16x512xbf16>
    %c192 = arith.constant 192 : index
    %c0_108 = arith.constant 0 : index
    %159 = vector.load %arg7[%c192, %c0_108] : memref<960x512xbf16, #tpu.memory_space<vmem>>, vector<16x512xbf16>
    tpu.vector_store %arg7[%c192, %c0_108], %158 {strides = array<i32>} : memref<960x512xbf16, #tpu.memory_space<vmem>>, vector<16x512xbf16>,
    %c16_109 = arith.constant 16 : index
    %c0_110 = arith.constant 0 : index
    %160 = vector.load %arg3[%c16_109, %c0_110] : memref<64x512xf32, #tpu.memory_space<vmem>>, vector<16x512xf32>
    %161 = arith.mulf %155, %160 : vector<16x512xf32>
    %162 = arith.truncf %161 : vector<16x512xf32> to vector<16x512xbf16>
    %c208 = arith.constant 208 : index
    %c0_111 = arith.constant 0 : index
    %163 = vector.load %arg7[%c208, %c0_111] : memref<960x512xbf16, #tpu.memory_space<vmem>>, vector<16x512xbf16>
    tpu.vector_store %arg7[%c208, %c0_111], %162 {strides = array<i32>} : memref<960x512xbf16, #tpu.memory_space<vmem>>, vector<16x512xbf16>,
    %c32_112 = arith.constant 32 : index
    %c0_113 = arith.constant 0 : index
    %164 = vector.load %arg3[%c32_112, %c0_113] : memref<64x512xf32, #tpu.memory_space<vmem>>, vector<16x512xf32>
    %165 = arith.mulf %155, %164 : vector<16x512xf32>
    %166 = arith.truncf %165 : vector<16x512xf32> to vector<16x512xbf16>
    %c224 = arith.constant 224 : index
    %c0_114 = arith.constant 0 : index
    %167 = vector.load %arg7[%c224, %c0_114] : memref<960x512xbf16, #tpu.memory_space<vmem>>, vector<16x512xbf16>
    tpu.vector_store %arg7[%c224, %c0_114], %166 {strides = array<i32>} : memref<960x512xbf16, #tpu.memory_space<vmem>>, vector<16x512xbf16>,
    %c48_115 = arith.constant 48 : index
    %c0_116 = arith.constant 0 : index
    %168 = vector.load %arg3[%c48_115, %c0_116] : memref<64x512xf32, #tpu.memory_space<vmem>>, vector<16x512xf32>
    %169 = arith.mulf %155, %168 : vector<16x512xf32>
    %170 = arith.truncf %169 : vector<16x512xf32> to vector<16x512xbf16>
    %c240 = arith.constant 240 : index
    %c0_117 = arith.constant 0 : index
    %171 = vector.load %arg7[%c240, %c0_117] : memref<960x512xbf16, #tpu.memory_space<vmem>>, vector<16x512xbf16>
    tpu.vector_store %arg7[%c240, %c0_117], %170 {strides = array<i32>} : memref<960x512xbf16, #tpu.memory_space<vmem>>, vector<16x512xbf16>,
    %c4 = arith.constant 4 : index
    %c0_118 = arith.constant 0 : index
    %172 = memref.load %arg1[%c4, %c0_118] : memref<15x4xf32, #tpu.memory_space<smem>>
    %c0_119 = arith.constant 0 : index
    %c0_120 = arith.constant 0 : index
    %173 = vector.load %arg2[%c0_119, %c0_120] : memref<48x512xf32, #tpu.memory_space<vmem>>, vector<16x512xf32>
    %174 = vector.broadcast %172 : f32 to vector<16x512xf32>
    %175 = arith.mulf %174, %173 : vector<16x512xf32>
    %176 = arith.addf %7, %175 : vector<16x512xf32>
    %c4_121 = arith.constant 4 : index
    %c1_122 = arith.constant 1 : index
    %177 = memref.load %arg1[%c4_121, %c1_122] : memref<15x4xf32, #tpu.memory_space<smem>>
    %c16_123 = arith.constant 16 : index
    %c0_124 = arith.constant 0 : index
    %178 = vector.load %arg2[%c16_123, %c0_124] : memref<48x512xf32, #tpu.memory_space<vmem>>, vector<16x512xf32>
    %179 = vector.broadcast %177 : f32 to vector<16x512xf32>
    %180 = arith.mulf %179, %178 : vector<16x512xf32>
    %181 = arith.addf %176, %180 : vector<16x512xf32>
    %c4_125 = arith.constant 4 : index
    %c2_126 = arith.constant 2 : index
    %182 = memref.load %arg1[%c4_125, %c2_126] : memref<15x4xf32, #tpu.memory_space<smem>>
    %c32_127 = arith.constant 32 : index
    %c0_128 = arith.constant 0 : index
    %183 = vector.load %arg2[%c32_127, %c0_128] : memref<48x512xf32, #tpu.memory_space<vmem>>, vector<16x512xf32>
    %184 = vector.broadcast %182 : f32 to vector<16x512xf32>
    %185 = arith.mulf %184, %183 : vector<16x512xf32>
    %186 = arith.addf %181, %185 : vector<16x512xf32>
    %c4_129 = arith.constant 4 : index
    %c3_130 = arith.constant 3 : index
    %187 = memref.load %arg1[%c4_129, %c3_130] : memref<15x4xf32, #tpu.memory_space<smem>>
    %188 = vector.broadcast %187 : f32 to vector<16x512xf32>
    %189 = arith.addf %186, %188 : vector<16x512xf32>
    %cst_131 = arith.constant 0.000000e+00 : f32
    %190 = vector.broadcast %cst_131 : f32 to vector<16x512xf32>
    %191 = arith.maximumf %189, %190 : vector<16x512xf32>
    %192 = math.sqrt %191 : vector<16x512xf32>
    %cst_132 = arith.constant 1.000000e+00 : f32
    %193 = vector.broadcast %cst_132 : f32 to vector<16x512xf32>
    %194 = arith.subf %193, %192 : vector<16x512xf32>
    %cst_133 = arith.constant 0.000000e+00 : f32
    %195 = vector.broadcast %cst_133 : f32 to vector<16x512xf32>
    %196 = arith.maximumf %194, %195 : vector<16x512xf32>
    %c0_134 = arith.constant 0 : index
    %c0_135 = arith.constant 0 : index
    %197 = vector.load %arg3[%c0_134, %c0_135] : memref<64x512xf32, #tpu.memory_space<vmem>>, vector<16x512xf32>
    %198 = arith.mulf %196, %197 : vector<16x512xf32>
    %199 = arith.truncf %198 : vector<16x512xf32> to vector<16x512xbf16>
    %c256 = arith.constant 256 : index
    %c0_136 = arith.constant 0 : index
    %200 = vector.load %arg7[%c256, %c0_136] : memref<960x512xbf16, #tpu.memory_space<vmem>>, vector<16x512xbf16>
    tpu.vector_store %arg7[%c256, %c0_136], %199 {strides = array<i32>} : memref<960x512xbf16, #tpu.memory_space<vmem>>, vector<16x512xbf16>,
    %c16_137 = arith.constant 16 : index
    %c0_138 = arith.constant 0 : index
    %201 = vector.load %arg3[%c16_137, %c0_138] : memref<64x512xf32, #tpu.memory_space<vmem>>, vector<16x512xf32>
    %202 = arith.mulf %196, %201 : vector<16x512xf32>
    %203 = arith.truncf %202 : vector<16x512xf32> to vector<16x512xbf16>
    %c272 = arith.constant 272 : index
    %c0_139 = arith.constant 0 : index
    %204 = vector.load %arg7[%c272, %c0_139] : memref<960x512xbf16, #tpu.memory_space<vmem>>, vector<16x512xbf16>
    tpu.vector_store %arg7[%c272, %c0_139], %203 {strides = array<i32>} : memref<960x512xbf16, #tpu.memory_space<vmem>>, vector<16x512xbf16>,
    %c32_140 = arith.constant 32 : index
    %c0_141 = arith.constant 0 : index
    %205 = vector.load %arg3[%c32_140, %c0_141] : memref<64x512xf32, #tpu.memory_space<vmem>>, vector<16x512xf32>
    %206 = arith.mulf %196, %205 : vector<16x512xf32>
    %207 = arith.truncf %206 : vector<16x512xf32> to vector<16x512xbf16>
    %c288 = arith.constant 288 : index
    %c0_142 = arith.constant 0 : index
    %208 = vector.load %arg7[%c288, %c0_142] : memref<960x512xbf16, #tpu.memory_space<vmem>>, vector<16x512xbf16>
    tpu.vector_store %arg7[%c288, %c0_142], %207 {strides = array<i32>} : memref<960x512xbf16, #tpu.memory_space<vmem>>, vector<16x512xbf16>,
    %c48_143 = arith.constant 48 : index
    %c0_144 = arith.constant 0 : index
    %209 = vector.load %arg3[%c48_143, %c0_144] : memref<64x512xf32, #tpu.memory_space<vmem>>, vector<16x512xf32>
    %210 = arith.mulf %196, %209 : vector<16x512xf32>
    %211 = arith.truncf %210 : vector<16x512xf32> to vector<16x512xbf16>
    %c304 = arith.constant 304 : index
    %c0_145 = arith.constant 0 : index
    %212 = vector.load %arg7[%c304, %c0_145] : memref<960x512xbf16, #tpu.memory_space<vmem>>, vector<16x512xbf16>
    tpu.vector_store %arg7[%c304, %c0_145], %211 {strides = array<i32>} : memref<960x512xbf16, #tpu.memory_space<vmem>>, vector<16x512xbf16>,
    %c5 = arith.constant 5 : index
    %c0_146 = arith.constant 0 : index
    %213 = memref.load %arg1[%c5, %c0_146] : memref<15x4xf32, #tpu.memory_space<smem>>
    %c0_147 = arith.constant 0 : index
    %c0_148 = arith.constant 0 : index
    %214 = vector.load %arg2[%c0_147, %c0_148] : memref<48x512xf32, #tpu.memory_space<vmem>>, vector<16x512xf32>
    %215 = vector.broadcast %213 : f32 to vector<16x512xf32>
    %216 = arith.mulf %215, %214 : vector<16x512xf32>
    %217 = arith.addf %7, %216 : vector<16x512xf32>
    %c5_149 = arith.constant 5 : index
    %c1_150 = arith.constant 1 : index
    %218 = memref.load %arg1[%c5_149, %c1_150] : memref<15x4xf32, #tpu.memory_space<smem>>
    %c16_151 = arith.constant 16 : index
    %c0_152 = arith.constant 0 : index
    %219 = vector.load %arg2[%c16_151, %c0_152] : memref<48x512xf32, #tpu.memory_space<vmem>>, vector<16x512xf32>
    %220 = vector.broadcast %218 : f32 to vector<16x512xf32>
    %221 = arith.mulf %220, %219 : vector<16x512xf32>
    %222 = arith.addf %217, %221 : vector<16x512xf32>
    %c5_153 = arith.constant 5 : index
    %c2_154 = arith.constant 2 : index
    %223 = memref.load %arg1[%c5_153, %c2_154] : memref<15x4xf32, #tpu.memory_space<smem>>
    %c32_155 = arith.constant 32 : index
    %c0_156 = arith.constant 0 : index
    %224 = vector.load %arg2[%c32_155, %c0_156] : memref<48x512xf32, #tpu.memory_space<vmem>>, vector<16x512xf32>
    %225 = vector.broadcast %223 : f32 to vector<16x512xf32>
    %226 = arith.mulf %225, %224 : vector<16x512xf32>
    %227 = arith.addf %222, %226 : vector<16x512xf32>
    %c5_157 = arith.constant 5 : index
    %c3_158 = arith.constant 3 : index
    %228 = memref.load %arg1[%c5_157, %c3_158] : memref<15x4xf32, #tpu.memory_space<smem>>
    %229 = vector.broadcast %228 : f32 to vector<16x512xf32>
    %230 = arith.addf %227, %229 : vector<16x512xf32>
    %cst_159 = arith.constant 0.000000e+00 : f32
    %231 = vector.broadcast %cst_159 : f32 to vector<16x512xf32>
    %232 = arith.maximumf %230, %231 : vector<16x512xf32>
    %233 = math.sqrt %232 : vector<16x512xf32>
    %cst_160 = arith.constant 1.000000e+00 : f32
    %234 = vector.broadcast %cst_160 : f32 to vector<16x512xf32>
    %235 = arith.subf %234, %233 : vector<16x512xf32>
    %cst_161 = arith.constant 0.000000e+00 : f32
    %236 = vector.broadcast %cst_161 : f32 to vector<16x512xf32>
    %237 = arith.maximumf %235, %236 : vector<16x512xf32>
    %c0_162 = arith.constant 0 : index
    %c0_163 = arith.constant 0 : index
    %238 = vector.load %arg3[%c0_162, %c0_163] : memref<64x512xf32, #tpu.memory_space<vmem>>, vector<16x512xf32>
    %239 = arith.mulf %237, %238 : vector<16x512xf32>
    %240 = arith.truncf %239 : vector<16x512xf32> to vector<16x512xbf16>
    %c320 = arith.constant 320 : index
    %c0_164 = arith.constant 0 : index
    %241 = vector.load %arg7[%c320, %c0_164] : memref<960x512xbf16, #tpu.memory_space<vmem>>, vector<16x512xbf16>
    tpu.vector_store %arg7[%c320, %c0_164], %240 {strides = array<i32>} : memref<960x512xbf16, #tpu.memory_space<vmem>>, vector<16x512xbf16>,
    %c16_165 = arith.constant 16 : index
    %c0_166 = arith.constant 0 : index
    %242 = vector.load %arg3[%c16_165, %c0_166] : memref<64x512xf32, #tpu.memory_space<vmem>>, vector<16x512xf32>
    %243 = arith.mulf %237, %242 : vector<16x512xf32>
    %244 = arith.truncf %243 : vector<16x512xf32> to vector<16x512xbf16>
    %c336 = arith.constant 336 : index
    %c0_167 = arith.constant 0 : index
    %245 = vector.load %arg7[%c336, %c0_167] : memref<960x512xbf16, #tpu.memory_space<vmem>>, vector<16x512xbf16>
    tpu.vector_store %arg7[%c336, %c0_167], %244 {strides = array<i32>} : memref<960x512xbf16, #tpu.memory_space<vmem>>, vector<16x512xbf16>,
    %c32_168 = arith.constant 32 : index
    %c0_169 = arith.constant 0 : index
    %246 = vector.load %arg3[%c32_168, %c0_169] : memref<64x512xf32, #tpu.memory_space<vmem>>, vector<16x512xf32>
    %247 = arith.mulf %237, %246 : vector<16x512xf32>
    %248 = arith.truncf %247 : vector<16x512xf32> to vector<16x512xbf16>
    %c352 = arith.constant 352 : index
    %c0_170 = arith.constant 0 : index
    %249 = vector.load %arg7[%c352, %c0_170] : memref<960x512xbf16, #tpu.memory_space<vmem>>, vector<16x512xbf16>
    tpu.vector_store %arg7[%c352, %c0_170], %248 {strides = array<i32>} : memref<960x512xbf16, #tpu.memory_space<vmem>>, vector<16x512xbf16>,
    %c48_171 = arith.constant 48 : index
    %c0_172 = arith.constant 0 : index
    %250 = vector.load %arg3[%c48_171, %c0_172] : memref<64x512xf32, #tpu.memory_space<vmem>>, vector<16x512xf32>
    %251 = arith.mulf %237, %250 : vector<16x512xf32>
    %252 = arith.truncf %251 : vector<16x512xf32> to vector<16x512xbf16>
    %c368 = arith.constant 368 : index
    %c0_173 = arith.constant 0 : index
    %253 = vector.load %arg7[%c368, %c0_173] : memref<960x512xbf16, #tpu.memory_space<vmem>>, vector<16x512xbf16>
    tpu.vector_store %arg7[%c368, %c0_173], %252 {strides = array<i32>} : memref<960x512xbf16, #tpu.memory_space<vmem>>, vector<16x512xbf16>,
    %c6 = arith.constant 6 : index
    %c0_174 = arith.constant 0 : index
    %254 = memref.load %arg1[%c6, %c0_174] : memref<15x4xf32, #tpu.memory_space<smem>>
    %c0_175 = arith.constant 0 : index
    %c0_176 = arith.constant 0 : index
    %255 = vector.load %arg2[%c0_175, %c0_176] : memref<48x512xf32, #tpu.memory_space<vmem>>, vector<16x512xf32>
    %256 = vector.broadcast %254 : f32 to vector<16x512xf32>
    %257 = arith.mulf %256, %255 : vector<16x512xf32>
    %258 = arith.addf %7, %257 : vector<16x512xf32>
    %c6_177 = arith.constant 6 : index
    %c1_178 = arith.constant 1 : index
    %259 = memref.load %arg1[%c6_177, %c1_178] : memref<15x4xf32, #tpu.memory_space<smem>>
    %c16_179 = arith.constant 16 : index
    %c0_180 = arith.constant 0 : index
    %260 = vector.load %arg2[%c16_179, %c0_180] : memref<48x512xf32, #tpu.memory_space<vmem>>, vector<16x512xf32>
    %261 = vector.broadcast %259 : f32 to vector<16x512xf32>
    %262 = arith.mulf %261, %260 : vector<16x512xf32>
    %263 = arith.addf %258, %262 : vector<16x512xf32>
    %c6_181 = arith.constant 6 : index
    %c2_182 = arith.constant 2 : index
    %264 = memref.load %arg1[%c6_181, %c2_182] : memref<15x4xf32, #tpu.memory_space<smem>>
    %c32_183 = arith.constant 32 : index
    %c0_184 = arith.constant 0 : index
    %265 = vector.load %arg2[%c32_183, %c0_184] : memref<48x512xf32, #tpu.memory_space<vmem>>, vector<16x512xf32>
    %266 = vector.broadcast %264 : f32 to vector<16x512xf32>
    %267 = arith.mulf %266, %265 : vector<16x512xf32>
    %268 = arith.addf %263, %267 : vector<16x512xf32>
    %c6_185 = arith.constant 6 : index
    %c3_186 = arith.constant 3 : index
    %269 = memref.load %arg1[%c6_185, %c3_186] : memref<15x4xf32, #tpu.memory_space<smem>>
    %270 = vector.broadcast %269 : f32 to vector<16x512xf32>
    %271 = arith.addf %268, %270 : vector<16x512xf32>
    %cst_187 = arith.constant 0.000000e+00 : f32
    %272 = vector.broadcast %cst_187 : f32 to vector<16x512xf32>
    %273 = arith.maximumf %271, %272 : vector<16x512xf32>
    %274 = math.sqrt %273 : vector<16x512xf32>
    %cst_188 = arith.constant 1.000000e+00 : f32
    %275 = vector.broadcast %cst_188 : f32 to vector<16x512xf32>
    %276 = arith.subf %275, %274 : vector<16x512xf32>
    %cst_189 = arith.constant 0.000000e+00 : f32
    %277 = vector.broadcast %cst_189 : f32 to vector<16x512xf32>
    %278 = arith.maximumf %276, %277 : vector<16x512xf32>
    %c0_190 = arith.constant 0 : index
    %c0_191 = arith.constant 0 : index
    %279 = vector.load %arg3[%c0_190, %c0_191] : memref<64x512xf32, #tpu.memory_space<vmem>>, vector<16x512xf32>
    %280 = arith.mulf %278, %279 : vector<16x512xf32>
    %281 = arith.truncf %280 : vector<16x512xf32> to vector<16x512xbf16>
    %c384 = arith.constant 384 : index
    %c0_192 = arith.constant 0 : index
    %282 = vector.load %arg7[%c384, %c0_192] : memref<960x512xbf16, #tpu.memory_space<vmem>>, vector<16x512xbf16>
    tpu.vector_store %arg7[%c384, %c0_192], %281 {strides = array<i32>} : memref<960x512xbf16, #tpu.memory_space<vmem>>, vector<16x512xbf16>,
    %c16_193 = arith.constant 16 : index
    %c0_194 = arith.constant 0 : index
    %283 = vector.load %arg3[%c16_193, %c0_194] : memref<64x512xf32, #tpu.memory_space<vmem>>, vector<16x512xf32>
    %284 = arith.mulf %278, %283 : vector<16x512xf32>
    %285 = arith.truncf %284 : vector<16x512xf32> to vector<16x512xbf16>
    %c400 = arith.constant 400 : index
    %c0_195 = arith.constant 0 : index
    %286 = vector.load %arg7[%c400, %c0_195] : memref<960x512xbf16, #tpu.memory_space<vmem>>, vector<16x512xbf16>
    tpu.vector_store %arg7[%c400, %c0_195], %285 {strides = array<i32>} : memref<960x512xbf16, #tpu.memory_space<vmem>>, vector<16x512xbf16>,
    %c32_196 = arith.constant 32 : index
    %c0_197 = arith.constant 0 : index
    %287 = vector.load %arg3[%c32_196, %c0_197] : memref<64x512xf32, #tpu.memory_space<vmem>>, vector<16x512xf32>
    %288 = arith.mulf %278, %287 : vector<16x512xf32>
    %289 = arith.truncf %288 : vector<16x512xf32> to vector<16x512xbf16>
    %c416 = arith.constant 416 : index
    %c0_198 = arith.constant 0 : index
    %290 = vector.load %arg7[%c416, %c0_198] : memref<960x512xbf16, #tpu.memory_space<vmem>>, vector<16x512xbf16>
    tpu.vector_store %arg7[%c416, %c0_198], %289 {strides = array<i32>} : memref<960x512xbf16, #tpu.memory_space<vmem>>, vector<16x512xbf16>,
    %c48_199 = arith.constant 48 : index
    %c0_200 = arith.constant 0 : index
    %291 = vector.load %arg3[%c48_199, %c0_200] : memref<64x512xf32, #tpu.memory_space<vmem>>, vector<16x512xf32>
    %292 = arith.mulf %278, %291 : vector<16x512xf32>
    %293 = arith.truncf %292 : vector<16x512xf32> to vector<16x512xbf16>
    %c432 = arith.constant 432 : index
    %c0_201 = arith.constant 0 : index
    %294 = vector.load %arg7[%c432, %c0_201] : memref<960x512xbf16, #tpu.memory_space<vmem>>, vector<16x512xbf16>
    tpu.vector_store %arg7[%c432, %c0_201], %293 {strides = array<i32>} : memref<960x512xbf16, #tpu.memory_space<vmem>>, vector<16x512xbf16>,
    %c7 = arith.constant 7 : index
    %c0_202 = arith.constant 0 : index
    %295 = memref.load %arg1[%c7, %c0_202] : memref<15x4xf32, #tpu.memory_space<smem>>
    %c0_203 = arith.constant 0 : index
    %c0_204 = arith.constant 0 : index
    %296 = vector.load %arg2[%c0_203, %c0_204] : memref<48x512xf32, #tpu.memory_space<vmem>>, vector<16x512xf32>
    %297 = vector.broadcast %295 : f32 to vector<16x512xf32>
    %298 = arith.mulf %297, %296 : vector<16x512xf32>
    %299 = arith.addf %7, %298 : vector<16x512xf32>
    %c7_205 = arith.constant 7 : index
    %c1_206 = arith.constant 1 : index
    %300 = memref.load %arg1[%c7_205, %c1_206] : memref<15x4xf32, #tpu.memory_space<smem>>
    %c16_207 = arith.constant 16 : index
    %c0_208 = arith.constant 0 : index
    %301 = vector.load %arg2[%c16_207, %c0_208] : memref<48x512xf32, #tpu.memory_space<vmem>>, vector<16x512xf32>
    %302 = vector.broadcast %300 : f32 to vector<16x512xf32>
    %303 = arith.mulf %302, %301 : vector<16x512xf32>
    %304 = arith.addf %299, %303 : vector<16x512xf32>
    %c7_209 = arith.constant 7 : index
    %c2_210 = arith.constant 2 : index
    %305 = memref.load %arg1[%c7_209, %c2_210] : memref<15x4xf32, #tpu.memory_space<smem>>
    %c32_211 = arith.constant 32 : index
    %c0_212 = arith.constant 0 : index
    %306 = vector.load %arg2[%c32_211, %c0_212] : memref<48x512xf32, #tpu.memory_space<vmem>>, vector<16x512xf32>
    %307 = vector.broadcast %305 : f32 to vector<16x512xf32>
    %308 = arith.mulf %307, %306 : vector<16x512xf32>
    %309 = arith.addf %304, %308 : vector<16x512xf32>
    %c7_213 = arith.constant 7 : index
    %c3_214 = arith.constant 3 : index
    %310 = memref.load %arg1[%c7_213, %c3_214] : memref<15x4xf32, #tpu.memory_space<smem>>
    %311 = vector.broadcast %310 : f32 to vector<16x512xf32>
    %312 = arith.addf %309, %311 : vector<16x512xf32>
    %cst_215 = arith.constant 0.000000e+00 : f32
    %313 = vector.broadcast %cst_215 : f32 to vector<16x512xf32>
    %314 = arith.maximumf %312, %313 : vector<16x512xf32>
    %315 = math.sqrt %314 : vector<16x512xf32>
    %cst_216 = arith.constant 1.000000e+00 : f32
    %316 = vector.broadcast %cst_216 : f32 to vector<16x512xf32>
    %317 = arith.subf %316, %315 : vector<16x512xf32>
    %cst_217 = arith.constant 0.000000e+00 : f32
    %318 = vector.broadcast %cst_217 : f32 to vector<16x512xf32>
    %319 = arith.maximumf %317, %318 : vector<16x512xf32>
    %c0_218 = arith.constant 0 : index
    %c0_219 = arith.constant 0 : index
    %320 = vector.load %arg3[%c0_218, %c0_219] : memref<64x512xf32, #tpu.memory_space<vmem>>, vector<16x512xf32>
    %321 = arith.mulf %319, %320 : vector<16x512xf32>
    %322 = arith.truncf %321 : vector<16x512xf32> to vector<16x512xbf16>
    %c448 = arith.constant 448 : index
    %c0_220 = arith.constant 0 : index
    %323 = vector.load %arg7[%c448, %c0_220] : memref<960x512xbf16, #tpu.memory_space<vmem>>, vector<16x512xbf16>
    tpu.vector_store %arg7[%c448, %c0_220], %322 {strides = array<i32>} : memref<960x512xbf16, #tpu.memory_space<vmem>>, vector<16x512xbf16>,
    %c16_221 = arith.constant 16 : index
    %c0_222 = arith.constant 0 : index
    %324 = vector.load %arg3[%c16_221, %c0_222] : memref<64x512xf32, #tpu.memory_space<vmem>>, vector<16x512xf32>
    %325 = arith.mulf %319, %324 : vector<16x512xf32>
    %326 = arith.truncf %325 : vector<16x512xf32> to vector<16x512xbf16>
    %c464 = arith.constant 464 : index
    %c0_223 = arith.constant 0 : index
    %327 = vector.load %arg7[%c464, %c0_223] : memref<960x512xbf16, #tpu.memory_space<vmem>>, vector<16x512xbf16>
    tpu.vector_store %arg7[%c464, %c0_223], %326 {strides = array<i32>} : memref<960x512xbf16, #tpu.memory_space<vmem>>, vector<16x512xbf16>,
    %c32_224 = arith.constant 32 : index
    %c0_225 = arith.constant 0 : index
    %328 = vector.load %arg3[%c32_224, %c0_225] : memref<64x512xf32, #tpu.memory_space<vmem>>, vector<16x512xf32>
    %329 = arith.mulf %319, %328 : vector<16x512xf32>
    %330 = arith.truncf %329 : vector<16x512xf32> to vector<16x512xbf16>
    %c480 = arith.constant 480 : index
    %c0_226 = arith.constant 0 : index
    %331 = vector.load %arg7[%c480, %c0_226] : memref<960x512xbf16, #tpu.memory_space<vmem>>, vector<16x512xbf16>
    tpu.vector_store %arg7[%c480, %c0_226], %330 {strides = array<i32>} : memref<960x512xbf16, #tpu.memory_space<vmem>>, vector<16x512xbf16>,
    %c48_227 = arith.constant 48 : index
    %c0_228 = arith.constant 0 : index
    %332 = vector.load %arg3[%c48_227, %c0_228] : memref<64x512xf32, #tpu.memory_space<vmem>>, vector<16x512xf32>
    %333 = arith.mulf %319, %332 : vector<16x512xf32>
    %334 = arith.truncf %333 : vector<16x512xf32> to vector<16x512xbf16>
    %c496 = arith.constant 496 : index
    %c0_229 = arith.constant 0 : index
    %335 = vector.load %arg7[%c496, %c0_229] : memref<960x512xbf16, #tpu.memory_space<vmem>>, vector<16x512xbf16>
    tpu.vector_store %arg7[%c496, %c0_229], %334 {strides = array<i32>} : memref<960x512xbf16, #tpu.memory_space<vmem>>, vector<16x512xbf16>,
    %c8 = arith.constant 8 : index
    %c0_230 = arith.constant 0 : index
    %336 = memref.load %arg1[%c8, %c0_230] : memref<15x4xf32, #tpu.memory_space<smem>>
    %c0_231 = arith.constant 0 : index
    %c0_232 = arith.constant 0 : index
    %337 = vector.load %arg2[%c0_231, %c0_232] : memref<48x512xf32, #tpu.memory_space<vmem>>, vector<16x512xf32>
    %338 = vector.broadcast %336 : f32 to vector<16x512xf32>
    %339 = arith.mulf %338, %337 : vector<16x512xf32>
    %340 = arith.addf %7, %339 : vector<16x512xf32>
    %c8_233 = arith.constant 8 : index
    %c1_234 = arith.constant 1 : index
    %341 = memref.load %arg1[%c8_233, %c1_234] : memref<15x4xf32, #tpu.memory_space<smem>>
    %c16_235 = arith.constant 16 : index
    %c0_236 = arith.constant 0 : index
    %342 = vector.load %arg2[%c16_235, %c0_236] : memref<48x512xf32, #tpu.memory_space<vmem>>, vector<16x512xf32>
    %343 = vector.broadcast %341 : f32 to vector<16x512xf32>
    %344 = arith.mulf %343, %342 : vector<16x512xf32>
    %345 = arith.addf %340, %344 : vector<16x512xf32>
    %c8_237 = arith.constant 8 : index
    %c2_238 = arith.constant 2 : index
    %346 = memref.load %arg1[%c8_237, %c2_238] : memref<15x4xf32, #tpu.memory_space<smem>>
    %c32_239 = arith.constant 32 : index
    %c0_240 = arith.constant 0 : index
    %347 = vector.load %arg2[%c32_239, %c0_240] : memref<48x512xf32, #tpu.memory_space<vmem>>, vector<16x512xf32>
    %348 = vector.broadcast %346 : f32 to vector<16x512xf32>
    %349 = arith.mulf %348, %347 : vector<16x512xf32>
    %350 = arith.addf %345, %349 : vector<16x512xf32>
    %c8_241 = arith.constant 8 : index
    %c3_242 = arith.constant 3 : index
    %351 = memref.load %arg1[%c8_241, %c3_242] : memref<15x4xf32, #tpu.memory_space<smem>>
    %352 = vector.broadcast %351 : f32 to vector<16x512xf32>
    %353 = arith.addf %350, %352 : vector<16x512xf32>
    %cst_243 = arith.constant 0.000000e+00 : f32
    %354 = vector.broadcast %cst_243 : f32 to vector<16x512xf32>
    %355 = arith.maximumf %353, %354 : vector<16x512xf32>
    %356 = math.sqrt %355 : vector<16x512xf32>
    %cst_244 = arith.constant 1.000000e+00 : f32
    %357 = vector.broadcast %cst_244 : f32 to vector<16x512xf32>
    %358 = arith.subf %357, %356 : vector<16x512xf32>
    %cst_245 = arith.constant 0.000000e+00 : f32
    %359 = vector.broadcast %cst_245 : f32 to vector<16x512xf32>
    %360 = arith.maximumf %358, %359 : vector<16x512xf32>
    %c0_246 = arith.constant 0 : index
    %c0_247 = arith.constant 0 : index
    %361 = vector.load %arg3[%c0_246, %c0_247] : memref<64x512xf32, #tpu.memory_space<vmem>>, vector<16x512xf32>
    %362 = arith.mulf %360, %361 : vector<16x512xf32>
    %363 = arith.truncf %362 : vector<16x512xf32> to vector<16x512xbf16>
    %c512 = arith.constant 512 : index
    %c0_248 = arith.constant 0 : index
    %364 = vector.load %arg7[%c512, %c0_248] : memref<960x512xbf16, #tpu.memory_space<vmem>>, vector<16x512xbf16>
    tpu.vector_store %arg7[%c512, %c0_248], %363 {strides = array<i32>} : memref<960x512xbf16, #tpu.memory_space<vmem>>, vector<16x512xbf16>,
    %c16_249 = arith.constant 16 : index
    %c0_250 = arith.constant 0 : index
    %365 = vector.load %arg3[%c16_249, %c0_250] : memref<64x512xf32, #tpu.memory_space<vmem>>, vector<16x512xf32>
    %366 = arith.mulf %360, %365 : vector<16x512xf32>
    %367 = arith.truncf %366 : vector<16x512xf32> to vector<16x512xbf16>
    %c528 = arith.constant 528 : index
    %c0_251 = arith.constant 0 : index
    %368 = vector.load %arg7[%c528, %c0_251] : memref<960x512xbf16, #tpu.memory_space<vmem>>, vector<16x512xbf16>
    tpu.vector_store %arg7[%c528, %c0_251], %367 {strides = array<i32>} : memref<960x512xbf16, #tpu.memory_space<vmem>>, vector<16x512xbf16>,
    %c32_252 = arith.constant 32 : index
    %c0_253 = arith.constant 0 : index
    %369 = vector.load %arg3[%c32_252, %c0_253] : memref<64x512xf32, #tpu.memory_space<vmem>>, vector<16x512xf32>
    %370 = arith.mulf %360, %369 : vector<16x512xf32>
    %371 = arith.truncf %370 : vector<16x512xf32> to vector<16x512xbf16>
    %c544 = arith.constant 544 : index
    %c0_254 = arith.constant 0 : index
    %372 = vector.load %arg7[%c544, %c0_254] : memref<960x512xbf16, #tpu.memory_space<vmem>>, vector<16x512xbf16>
    tpu.vector_store %arg7[%c544, %c0_254], %371 {strides = array<i32>} : memref<960x512xbf16, #tpu.memory_space<vmem>>, vector<16x512xbf16>,
    %c48_255 = arith.constant 48 : index
    %c0_256 = arith.constant 0 : index
    %373 = vector.load %arg3[%c48_255, %c0_256] : memref<64x512xf32, #tpu.memory_space<vmem>>, vector<16x512xf32>
    %374 = arith.mulf %360, %373 : vector<16x512xf32>
    %375 = arith.truncf %374 : vector<16x512xf32> to vector<16x512xbf16>
    %c560 = arith.constant 560 : index
    %c0_257 = arith.constant 0 : index
    %376 = vector.load %arg7[%c560, %c0_257] : memref<960x512xbf16, #tpu.memory_space<vmem>>, vector<16x512xbf16>
    tpu.vector_store %arg7[%c560, %c0_257], %375 {strides = array<i32>} : memref<960x512xbf16, #tpu.memory_space<vmem>>, vector<16x512xbf16>,
    %c9 = arith.constant 9 : index
    %c0_258 = arith.constant 0 : index
    %377 = memref.load %arg1[%c9, %c0_258] : memref<15x4xf32, #tpu.memory_space<smem>>
    %c0_259 = arith.constant 0 : index
    %c0_260 = arith.constant 0 : index
    %378 = vector.load %arg2[%c0_259, %c0_260] : memref<48x512xf32, #tpu.memory_space<vmem>>, vector<16x512xf32>
    %379 = vector.broadcast %377 : f32 to vector<16x512xf32>
    %380 = arith.mulf %379, %378 : vector<16x512xf32>
    %381 = arith.addf %7, %380 : vector<16x512xf32>
    %c9_261 = arith.constant 9 : index
    %c1_262 = arith.constant 1 : index
    %382 = memref.load %arg1[%c9_261, %c1_262] : memref<15x4xf32, #tpu.memory_space<smem>>
    %c16_263 = arith.constant 16 : index
    %c0_264 = arith.constant 0 : index
    %383 = vector.load %arg2[%c16_263, %c0_264] : memref<48x512xf32, #tpu.memory_space<vmem>>, vector<16x512xf32>
    %384 = vector.broadcast %382 : f32 to vector<16x512xf32>
    %385 = arith.mulf %384, %383 : vector<16x512xf32>
    %386 = arith.addf %381, %385 : vector<16x512xf32>
    %c9_265 = arith.constant 9 : index
    %c2_266 = arith.constant 2 : index
    %387 = memref.load %arg1[%c9_265, %c2_266] : memref<15x4xf32, #tpu.memory_space<smem>>
    %c32_267 = arith.constant 32 : index
    %c0_268 = arith.constant 0 : index
    %388 = vector.load %arg2[%c32_267, %c0_268] : memref<48x512xf32, #tpu.memory_space<vmem>>, vector<16x512xf32>
    %389 = vector.broadcast %387 : f32 to vector<16x512xf32>
    %390 = arith.mulf %389, %388 : vector<16x512xf32>
    %391 = arith.addf %386, %390 : vector<16x512xf32>
    %c9_269 = arith.constant 9 : index
    %c3_270 = arith.constant 3 : index
    %392 = memref.load %arg1[%c9_269, %c3_270] : memref<15x4xf32, #tpu.memory_space<smem>>
    %393 = vector.broadcast %392 : f32 to vector<16x512xf32>
    %394 = arith.addf %391, %393 : vector<16x512xf32>
    %cst_271 = arith.constant 0.000000e+00 : f32
    %395 = vector.broadcast %cst_271 : f32 to vector<16x512xf32>
    %396 = arith.maximumf %394, %395 : vector<16x512xf32>
    %397 = math.sqrt %396 : vector<16x512xf32>
    %cst_272 = arith.constant 1.000000e+00 : f32
    %398 = vector.broadcast %cst_272 : f32 to vector<16x512xf32>
    %399 = arith.subf %398, %397 : vector<16x512xf32>
    %cst_273 = arith.constant 0.000000e+00 : f32
    %400 = vector.broadcast %cst_273 : f32 to vector<16x512xf32>
    %401 = arith.maximumf %399, %400 : vector<16x512xf32>
    %c0_274 = arith.constant 0 : index
    %c0_275 = arith.constant 0 : index
    %402 = vector.load %arg3[%c0_274, %c0_275] : memref<64x512xf32, #tpu.memory_space<vmem>>, vector<16x512xf32>
    %403 = arith.mulf %401, %402 : vector<16x512xf32>
    %404 = arith.truncf %403 : vector<16x512xf32> to vector<16x512xbf16>
    %c576 = arith.constant 576 : index
    %c0_276 = arith.constant 0 : index
    %405 = vector.load %arg7[%c576, %c0_276] : memref<960x512xbf16, #tpu.memory_space<vmem>>, vector<16x512xbf16>
    tpu.vector_store %arg7[%c576, %c0_276], %404 {strides = array<i32>} : memref<960x512xbf16, #tpu.memory_space<vmem>>, vector<16x512xbf16>,
    %c16_277 = arith.constant 16 : index
    %c0_278 = arith.constant 0 : index
    %406 = vector.load %arg3[%c16_277, %c0_278] : memref<64x512xf32, #tpu.memory_space<vmem>>, vector<16x512xf32>
    %407 = arith.mulf %401, %406 : vector<16x512xf32>
    %408 = arith.truncf %407 : vector<16x512xf32> to vector<16x512xbf16>
    %c592 = arith.constant 592 : index
    %c0_279 = arith.constant 0 : index
    %409 = vector.load %arg7[%c592, %c0_279] : memref<960x512xbf16, #tpu.memory_space<vmem>>, vector<16x512xbf16>
    tpu.vector_store %arg7[%c592, %c0_279], %408 {strides = array<i32>} : memref<960x512xbf16, #tpu.memory_space<vmem>>, vector<16x512xbf16>,
    %c32_280 = arith.constant 32 : index
    %c0_281 = arith.constant 0 : index
    %410 = vector.load %arg3[%c32_280, %c0_281] : memref<64x512xf32, #tpu.memory_space<vmem>>, vector<16x512xf32>
    %411 = arith.mulf %401, %410 : vector<16x512xf32>
    %412 = arith.truncf %411 : vector<16x512xf32> to vector<16x512xbf16>
    %c608 = arith.constant 608 : index
    %c0_282 = arith.constant 0 : index
    %413 = vector.load %arg7[%c608, %c0_282] : memref<960x512xbf16, #tpu.memory_space<vmem>>, vector<16x512xbf16>
    tpu.vector_store %arg7[%c608, %c0_282], %412 {strides = array<i32>} : memref<960x512xbf16, #tpu.memory_space<vmem>>, vector<16x512xbf16>,
    %c48_283 = arith.constant 48 : index
    %c0_284 = arith.constant 0 : index
    %414 = vector.load %arg3[%c48_283, %c0_284] : memref<64x512xf32, #tpu.memory_space<vmem>>, vector<16x512xf32>
    %415 = arith.mulf %401, %414 : vector<16x512xf32>
    %416 = arith.truncf %415 : vector<16x512xf32> to vector<16x512xbf16>
    %c624 = arith.constant 624 : index
    %c0_285 = arith.constant 0 : index
    %417 = vector.load %arg7[%c624, %c0_285] : memref<960x512xbf16, #tpu.memory_space<vmem>>, vector<16x512xbf16>
    tpu.vector_store %arg7[%c624, %c0_285], %416 {strides = array<i32>} : memref<960x512xbf16, #tpu.memory_space<vmem>>, vector<16x512xbf16>,
    %c10 = arith.constant 10 : index
    %c0_286 = arith.constant 0 : index
    %418 = memref.load %arg1[%c10, %c0_286] : memref<15x4xf32, #tpu.memory_space<smem>>
    %c0_287 = arith.constant 0 : index
    %c0_288 = arith.constant 0 : index
    %419 = vector.load %arg2[%c0_287, %c0_288] : memref<48x512xf32, #tpu.memory_space<vmem>>, vector<16x512xf32>
    %420 = vector.broadcast %418 : f32 to vector<16x512xf32>
    %421 = arith.mulf %420, %419 : vector<16x512xf32>
    %422 = arith.addf %7, %421 : vector<16x512xf32>
    %c10_289 = arith.constant 10 : index
    %c1_290 = arith.constant 1 : index
    %423 = memref.load %arg1[%c10_289, %c1_290] : memref<15x4xf32, #tpu.memory_space<smem>>
    %c16_291 = arith.constant 16 : index
    %c0_292 = arith.constant 0 : index
    %424 = vector.load %arg2[%c16_291, %c0_292] : memref<48x512xf32, #tpu.memory_space<vmem>>, vector<16x512xf32>
    %425 = vector.broadcast %423 : f32 to vector<16x512xf32>
    %426 = arith.mulf %425, %424 : vector<16x512xf32>
    %427 = arith.addf %422, %426 : vector<16x512xf32>
    %c10_293 = arith.constant 10 : index
    %c2_294 = arith.constant 2 : index
    %428 = memref.load %arg1[%c10_293, %c2_294] : memref<15x4xf32, #tpu.memory_space<smem>>
    %c32_295 = arith.constant 32 : index
    %c0_296 = arith.constant 0 : index
    %429 = vector.load %arg2[%c32_295, %c0_296] : memref<48x512xf32, #tpu.memory_space<vmem>>, vector<16x512xf32>
    %430 = vector.broadcast %428 : f32 to vector<16x512xf32>
    %431 = arith.mulf %430, %429 : vector<16x512xf32>
    %432 = arith.addf %427, %431 : vector<16x512xf32>
    %c10_297 = arith.constant 10 : index
    %c3_298 = arith.constant 3 : index
    %433 = memref.load %arg1[%c10_297, %c3_298] : memref<15x4xf32, #tpu.memory_space<smem>>
    %434 = vector.broadcast %433 : f32 to vector<16x512xf32>
    %435 = arith.addf %432, %434 : vector<16x512xf32>
    %cst_299 = arith.constant 0.000000e+00 : f32
    %436 = vector.broadcast %cst_299 : f32 to vector<16x512xf32>
    %437 = arith.maximumf %435, %436 : vector<16x512xf32>
    %438 = math.sqrt %437 : vector<16x512xf32>
    %cst_300 = arith.constant 1.000000e+00 : f32
    %439 = vector.broadcast %cst_300 : f32 to vector<16x512xf32>
    %440 = arith.subf %439, %438 : vector<16x512xf32>
    %cst_301 = arith.constant 0.000000e+00 : f32
    %441 = vector.broadcast %cst_301 : f32 to vector<16x512xf32>
    %442 = arith.maximumf %440, %441 : vector<16x512xf32>
    %c0_302 = arith.constant 0 : index
    %c0_303 = arith.constant 0 : index
    %443 = vector.load %arg3[%c0_302, %c0_303] : memref<64x512xf32, #tpu.memory_space<vmem>>, vector<16x512xf32>
    %444 = arith.mulf %442, %443 : vector<16x512xf32>
    %445 = arith.truncf %444 : vector<16x512xf32> to vector<16x512xbf16>
    %c640 = arith.constant 640 : index
    %c0_304 = arith.constant 0 : index
    %446 = vector.load %arg7[%c640, %c0_304] : memref<960x512xbf16, #tpu.memory_space<vmem>>, vector<16x512xbf16>
    tpu.vector_store %arg7[%c640, %c0_304], %445 {strides = array<i32>} : memref<960x512xbf16, #tpu.memory_space<vmem>>, vector<16x512xbf16>,
    %c16_305 = arith.constant 16 : index
    %c0_306 = arith.constant 0 : index
    %447 = vector.load %arg3[%c16_305, %c0_306] : memref<64x512xf32, #tpu.memory_space<vmem>>, vector<16x512xf32>
    %448 = arith.mulf %442, %447 : vector<16x512xf32>
    %449 = arith.truncf %448 : vector<16x512xf32> to vector<16x512xbf16>
    %c656 = arith.constant 656 : index
    %c0_307 = arith.constant 0 : index
    %450 = vector.load %arg7[%c656, %c0_307] : memref<960x512xbf16, #tpu.memory_space<vmem>>, vector<16x512xbf16>
    tpu.vector_store %arg7[%c656, %c0_307], %449 {strides = array<i32>} : memref<960x512xbf16, #tpu.memory_space<vmem>>, vector<16x512xbf16>,
    %c32_308 = arith.constant 32 : index
    %c0_309 = arith.constant 0 : index
    %451 = vector.load %arg3[%c32_308, %c0_309] : memref<64x512xf32, #tpu.memory_space<vmem>>, vector<16x512xf32>
    %452 = arith.mulf %442, %451 : vector<16x512xf32>
    %453 = arith.truncf %452 : vector<16x512xf32> to vector<16x512xbf16>
    %c672 = arith.constant 672 : index
    %c0_310 = arith.constant 0 : index
    %454 = vector.load %arg7[%c672, %c0_310] : memref<960x512xbf16, #tpu.memory_space<vmem>>, vector<16x512xbf16>
    tpu.vector_store %arg7[%c672, %c0_310], %453 {strides = array<i32>} : memref<960x512xbf16, #tpu.memory_space<vmem>>, vector<16x512xbf16>,
    %c48_311 = arith.constant 48 : index
    %c0_312 = arith.constant 0 : index
    %455 = vector.load %arg3[%c48_311, %c0_312] : memref<64x512xf32, #tpu.memory_space<vmem>>, vector<16x512xf32>
    %456 = arith.mulf %442, %455 : vector<16x512xf32>
    %457 = arith.truncf %456 : vector<16x512xf32> to vector<16x512xbf16>
    %c688 = arith.constant 688 : index
    %c0_313 = arith.constant 0 : index
    %458 = vector.load %arg7[%c688, %c0_313] : memref<960x512xbf16, #tpu.memory_space<vmem>>, vector<16x512xbf16>
    tpu.vector_store %arg7[%c688, %c0_313], %457 {strides = array<i32>} : memref<960x512xbf16, #tpu.memory_space<vmem>>, vector<16x512xbf16>,
    %c11 = arith.constant 11 : index
    %c0_314 = arith.constant 0 : index
    %459 = memref.load %arg1[%c11, %c0_314] : memref<15x4xf32, #tpu.memory_space<smem>>
    %c0_315 = arith.constant 0 : index
    %c0_316 = arith.constant 0 : index
    %460 = vector.load %arg2[%c0_315, %c0_316] : memref<48x512xf32, #tpu.memory_space<vmem>>, vector<16x512xf32>
    %461 = vector.broadcast %459 : f32 to vector<16x512xf32>
    %462 = arith.mulf %461, %460 : vector<16x512xf32>
    %463 = arith.addf %7, %462 : vector<16x512xf32>
    %c11_317 = arith.constant 11 : index
    %c1_318 = arith.constant 1 : index
    %464 = memref.load %arg1[%c11_317, %c1_318] : memref<15x4xf32, #tpu.memory_space<smem>>
    %c16_319 = arith.constant 16 : index
    %c0_320 = arith.constant 0 : index
    %465 = vector.load %arg2[%c16_319, %c0_320] : memref<48x512xf32, #tpu.memory_space<vmem>>, vector<16x512xf32>
    %466 = vector.broadcast %464 : f32 to vector<16x512xf32>
    %467 = arith.mulf %466, %465 : vector<16x512xf32>
    %468 = arith.addf %463, %467 : vector<16x512xf32>
    %c11_321 = arith.constant 11 : index
    %c2_322 = arith.constant 2 : index
    %469 = memref.load %arg1[%c11_321, %c2_322] : memref<15x4xf32, #tpu.memory_space<smem>>
    %c32_323 = arith.constant 32 : index
    %c0_324 = arith.constant 0 : index
    %470 = vector.load %arg2[%c32_323, %c0_324] : memref<48x512xf32, #tpu.memory_space<vmem>>, vector<16x512xf32>
    %471 = vector.broadcast %469 : f32 to vector<16x512xf32>
    %472 = arith.mulf %471, %470 : vector<16x512xf32>
    %473 = arith.addf %468, %472 : vector<16x512xf32>
    %c11_325 = arith.constant 11 : index
    %c3_326 = arith.constant 3 : index
    %474 = memref.load %arg1[%c11_325, %c3_326] : memref<15x4xf32, #tpu.memory_space<smem>>
    %475 = vector.broadcast %474 : f32 to vector<16x512xf32>
    %476 = arith.addf %473, %475 : vector<16x512xf32>
    %cst_327 = arith.constant 0.000000e+00 : f32
    %477 = vector.broadcast %cst_327 : f32 to vector<16x512xf32>
    %478 = arith.maximumf %476, %477 : vector<16x512xf32>
    %479 = math.sqrt %478 : vector<16x512xf32>
    %cst_328 = arith.constant 1.000000e+00 : f32
    %480 = vector.broadcast %cst_328 : f32 to vector<16x512xf32>
    %481 = arith.subf %480, %479 : vector<16x512xf32>
    %cst_329 = arith.constant 0.000000e+00 : f32
    %482 = vector.broadcast %cst_329 : f32 to vector<16x512xf32>
    %483 = arith.maximumf %481, %482 : vector<16x512xf32>
    %c0_330 = arith.constant 0 : index
    %c0_331 = arith.constant 0 : index
    %484 = vector.load %arg3[%c0_330, %c0_331] : memref<64x512xf32, #tpu.memory_space<vmem>>, vector<16x512xf32>
    %485 = arith.mulf %483, %484 : vector<16x512xf32>
    %486 = arith.truncf %485 : vector<16x512xf32> to vector<16x512xbf16>
    %c704 = arith.constant 704 : index
    %c0_332 = arith.constant 0 : index
    %487 = vector.load %arg7[%c704, %c0_332] : memref<960x512xbf16, #tpu.memory_space<vmem>>, vector<16x512xbf16>
    tpu.vector_store %arg7[%c704, %c0_332], %486 {strides = array<i32>} : memref<960x512xbf16, #tpu.memory_space<vmem>>, vector<16x512xbf16>,
    %c16_333 = arith.constant 16 : index
    %c0_334 = arith.constant 0 : index
    %488 = vector.load %arg3[%c16_333, %c0_334] : memref<64x512xf32, #tpu.memory_space<vmem>>, vector<16x512xf32>
    %489 = arith.mulf %483, %488 : vector<16x512xf32>
    %490 = arith.truncf %489 : vector<16x512xf32> to vector<16x512xbf16>
    %c720 = arith.constant 720 : index
    %c0_335 = arith.constant 0 : index
    %491 = vector.load %arg7[%c720, %c0_335] : memref<960x512xbf16, #tpu.memory_space<vmem>>, vector<16x512xbf16>
    tpu.vector_store %arg7[%c720, %c0_335], %490 {strides = array<i32>} : memref<960x512xbf16, #tpu.memory_space<vmem>>, vector<16x512xbf16>,
    %c32_336 = arith.constant 32 : index
    %c0_337 = arith.constant 0 : index
    %492 = vector.load %arg3[%c32_336, %c0_337] : memref<64x512xf32, #tpu.memory_space<vmem>>, vector<16x512xf32>
    %493 = arith.mulf %483, %492 : vector<16x512xf32>
    %494 = arith.truncf %493 : vector<16x512xf32> to vector<16x512xbf16>
    %c736 = arith.constant 736 : index
    %c0_338 = arith.constant 0 : index
    %495 = vector.load %arg7[%c736, %c0_338] : memref<960x512xbf16, #tpu.memory_space<vmem>>, vector<16x512xbf16>
    tpu.vector_store %arg7[%c736, %c0_338], %494 {strides = array<i32>} : memref<960x512xbf16, #tpu.memory_space<vmem>>, vector<16x512xbf16>,
    %c48_339 = arith.constant 48 : index
    %c0_340 = arith.constant 0 : index
    %496 = vector.load %arg3[%c48_339, %c0_340] : memref<64x512xf32, #tpu.memory_space<vmem>>, vector<16x512xf32>
    %497 = arith.mulf %483, %496 : vector<16x512xf32>
    %498 = arith.truncf %497 : vector<16x512xf32> to vector<16x512xbf16>
    %c752 = arith.constant 752 : index
    %c0_341 = arith.constant 0 : index
    %499 = vector.load %arg7[%c752, %c0_341] : memref<960x512xbf16, #tpu.memory_space<vmem>>, vector<16x512xbf16>
    tpu.vector_store %arg7[%c752, %c0_341], %498 {strides = array<i32>} : memref<960x512xbf16, #tpu.memory_space<vmem>>, vector<16x512xbf16>,
    %c12 = arith.constant 12 : index
    %c0_342 = arith.constant 0 : index
    %500 = memref.load %arg1[%c12, %c0_342] : memref<15x4xf32, #tpu.memory_space<smem>>
    %c0_343 = arith.constant 0 : index
    %c0_344 = arith.constant 0 : index
    %501 = vector.load %arg2[%c0_343, %c0_344] : memref<48x512xf32, #tpu.memory_space<vmem>>, vector<16x512xf32>
    %502 = vector.broadcast %500 : f32 to vector<16x512xf32>
    %503 = arith.mulf %502, %501 : vector<16x512xf32>
    %504 = arith.addf %7, %503 : vector<16x512xf32>
    %c12_345 = arith.constant 12 : index
    %c1_346 = arith.constant 1 : index
    %505 = memref.load %arg1[%c12_345, %c1_346] : memref<15x4xf32, #tpu.memory_space<smem>>
    %c16_347 = arith.constant 16 : index
    %c0_348 = arith.constant 0 : index
    %506 = vector.load %arg2[%c16_347, %c0_348] : memref<48x512xf32, #tpu.memory_space<vmem>>, vector<16x512xf32>
    %507 = vector.broadcast %505 : f32 to vector<16x512xf32>
    %508 = arith.mulf %507, %506 : vector<16x512xf32>
    %509 = arith.addf %504, %508 : vector<16x512xf32>
    %c12_349 = arith.constant 12 : index
    %c2_350 = arith.constant 2 : index
    %510 = memref.load %arg1[%c12_349, %c2_350] : memref<15x4xf32, #tpu.memory_space<smem>>
    %c32_351 = arith.constant 32 : index
    %c0_352 = arith.constant 0 : index
    %511 = vector.load %arg2[%c32_351, %c0_352] : memref<48x512xf32, #tpu.memory_space<vmem>>, vector<16x512xf32>
    %512 = vector.broadcast %510 : f32 to vector<16x512xf32>
    %513 = arith.mulf %512, %511 : vector<16x512xf32>
    %514 = arith.addf %509, %513 : vector<16x512xf32>
    %c12_353 = arith.constant 12 : index
    %c3_354 = arith.constant 3 : index
    %515 = memref.load %arg1[%c12_353, %c3_354] : memref<15x4xf32, #tpu.memory_space<smem>>
    %516 = vector.broadcast %515 : f32 to vector<16x512xf32>
    %517 = arith.addf %514, %516 : vector<16x512xf32>
    %cst_355 = arith.constant 0.000000e+00 : f32
    %518 = vector.broadcast %cst_355 : f32 to vector<16x512xf32>
    %519 = arith.maximumf %517, %518 : vector<16x512xf32>
    %520 = math.sqrt %519 : vector<16x512xf32>
    %cst_356 = arith.constant 1.000000e+00 : f32
    %521 = vector.broadcast %cst_356 : f32 to vector<16x512xf32>
    %522 = arith.subf %521, %520 : vector<16x512xf32>
    %cst_357 = arith.constant 0.000000e+00 : f32
    %523 = vector.broadcast %cst_357 : f32 to vector<16x512xf32>
    %524 = arith.maximumf %522, %523 : vector<16x512xf32>
    %c0_358 = arith.constant 0 : index
    %c0_359 = arith.constant 0 : index
    %525 = vector.load %arg3[%c0_358, %c0_359] : memref<64x512xf32, #tpu.memory_space<vmem>>, vector<16x512xf32>
    %526 = arith.mulf %524, %525 : vector<16x512xf32>
    %527 = arith.truncf %526 : vector<16x512xf32> to vector<16x512xbf16>
    %c768 = arith.constant 768 : index
    %c0_360 = arith.constant 0 : index
    %528 = vector.load %arg7[%c768, %c0_360] : memref<960x512xbf16, #tpu.memory_space<vmem>>, vector<16x512xbf16>
    tpu.vector_store %arg7[%c768, %c0_360], %527 {strides = array<i32>} : memref<960x512xbf16, #tpu.memory_space<vmem>>, vector<16x512xbf16>,
    %c16_361 = arith.constant 16 : index
    %c0_362 = arith.constant 0 : index
    %529 = vector.load %arg3[%c16_361, %c0_362] : memref<64x512xf32, #tpu.memory_space<vmem>>, vector<16x512xf32>
    %530 = arith.mulf %524, %529 : vector<16x512xf32>
    %531 = arith.truncf %530 : vector<16x512xf32> to vector<16x512xbf16>
    %c784 = arith.constant 784 : index
    %c0_363 = arith.constant 0 : index
    %532 = vector.load %arg7[%c784, %c0_363] : memref<960x512xbf16, #tpu.memory_space<vmem>>, vector<16x512xbf16>
    tpu.vector_store %arg7[%c784, %c0_363], %531 {strides = array<i32>} : memref<960x512xbf16, #tpu.memory_space<vmem>>, vector<16x512xbf16>,
    %c32_364 = arith.constant 32 : index
    %c0_365 = arith.constant 0 : index
    %533 = vector.load %arg3[%c32_364, %c0_365] : memref<64x512xf32, #tpu.memory_space<vmem>>, vector<16x512xf32>
    %534 = arith.mulf %524, %533 : vector<16x512xf32>
    %535 = arith.truncf %534 : vector<16x512xf32> to vector<16x512xbf16>
    %c800 = arith.constant 800 : index
    %c0_366 = arith.constant 0 : index
    %536 = vector.load %arg7[%c800, %c0_366] : memref<960x512xbf16, #tpu.memory_space<vmem>>, vector<16x512xbf16>
    tpu.vector_store %arg7[%c800, %c0_366], %535 {strides = array<i32>} : memref<960x512xbf16, #tpu.memory_space<vmem>>, vector<16x512xbf16>,
    %c48_367 = arith.constant 48 : index
    %c0_368 = arith.constant 0 : index
    %537 = vector.load %arg3[%c48_367, %c0_368] : memref<64x512xf32, #tpu.memory_space<vmem>>, vector<16x512xf32>
    %538 = arith.mulf %524, %537 : vector<16x512xf32>
    %539 = arith.truncf %538 : vector<16x512xf32> to vector<16x512xbf16>
    %c816 = arith.constant 816 : index
    %c0_369 = arith.constant 0 : index
    %540 = vector.load %arg7[%c816, %c0_369] : memref<960x512xbf16, #tpu.memory_space<vmem>>, vector<16x512xbf16>
    tpu.vector_store %arg7[%c816, %c0_369], %539 {strides = array<i32>} : memref<960x512xbf16, #tpu.memory_space<vmem>>, vector<16x512xbf16>,
    %c13 = arith.constant 13 : index
    %c0_370 = arith.constant 0 : index
    %541 = memref.load %arg1[%c13, %c0_370] : memref<15x4xf32, #tpu.memory_space<smem>>
    %c0_371 = arith.constant 0 : index
    %c0_372 = arith.constant 0 : index
    %542 = vector.load %arg2[%c0_371, %c0_372] : memref<48x512xf32, #tpu.memory_space<vmem>>, vector<16x512xf32>
    %543 = vector.broadcast %541 : f32 to vector<16x512xf32>
    %544 = arith.mulf %543, %542 : vector<16x512xf32>
    %545 = arith.addf %7, %544 : vector<16x512xf32>
    %c13_373 = arith.constant 13 : index
    %c1_374 = arith.constant 1 : index
    %546 = memref.load %arg1[%c13_373, %c1_374] : memref<15x4xf32, #tpu.memory_space<smem>>
    %c16_375 = arith.constant 16 : index
    %c0_376 = arith.constant 0 : index
    %547 = vector.load %arg2[%c16_375, %c0_376] : memref<48x512xf32, #tpu.memory_space<vmem>>, vector<16x512xf32>
    %548 = vector.broadcast %546 : f32 to vector<16x512xf32>
    %549 = arith.mulf %548, %547 : vector<16x512xf32>
    %550 = arith.addf %545, %549 : vector<16x512xf32>
    %c13_377 = arith.constant 13 : index
    %c2_378 = arith.constant 2 : index
    %551 = memref.load %arg1[%c13_377, %c2_378] : memref<15x4xf32, #tpu.memory_space<smem>>
    %c32_379 = arith.constant 32 : index
    %c0_380 = arith.constant 0 : index
    %552 = vector.load %arg2[%c32_379, %c0_380] : memref<48x512xf32, #tpu.memory_space<vmem>>, vector<16x512xf32>
    %553 = vector.broadcast %551 : f32 to vector<16x512xf32>
    %554 = arith.mulf %553, %552 : vector<16x512xf32>
    %555 = arith.addf %550, %554 : vector<16x512xf32>
    %c13_381 = arith.constant 13 : index
    %c3_382 = arith.constant 3 : index
    %556 = memref.load %arg1[%c13_381, %c3_382] : memref<15x4xf32, #tpu.memory_space<smem>>
    %557 = vector.broadcast %556 : f32 to vector<16x512xf32>
    %558 = arith.addf %555, %557 : vector<16x512xf32>
    %cst_383 = arith.constant 0.000000e+00 : f32
    %559 = vector.broadcast %cst_383 : f32 to vector<16x512xf32>
    %560 = arith.maximumf %558, %559 : vector<16x512xf32>
    %561 = math.sqrt %560 : vector<16x512xf32>
    %cst_384 = arith.constant 1.000000e+00 : f32
    %562 = vector.broadcast %cst_384 : f32 to vector<16x512xf32>
    %563 = arith.subf %562, %561 : vector<16x512xf32>
    %cst_385 = arith.constant 0.000000e+00 : f32
    %564 = vector.broadcast %cst_385 : f32 to vector<16x512xf32>
    %565 = arith.maximumf %563, %564 : vector<16x512xf32>
    %c0_386 = arith.constant 0 : index
    %c0_387 = arith.constant 0 : index
    %566 = vector.load %arg3[%c0_386, %c0_387] : memref<64x512xf32, #tpu.memory_space<vmem>>, vector<16x512xf32>
    %567 = arith.mulf %565, %566 : vector<16x512xf32>
    %568 = arith.truncf %567 : vector<16x512xf32> to vector<16x512xbf16>
    %c832 = arith.constant 832 : index
    %c0_388 = arith.constant 0 : index
    %569 = vector.load %arg7[%c832, %c0_388] : memref<960x512xbf16, #tpu.memory_space<vmem>>, vector<16x512xbf16>
    tpu.vector_store %arg7[%c832, %c0_388], %568 {strides = array<i32>} : memref<960x512xbf16, #tpu.memory_space<vmem>>, vector<16x512xbf16>,
    %c16_389 = arith.constant 16 : index
    %c0_390 = arith.constant 0 : index
    %570 = vector.load %arg3[%c16_389, %c0_390] : memref<64x512xf32, #tpu.memory_space<vmem>>, vector<16x512xf32>
    %571 = arith.mulf %565, %570 : vector<16x512xf32>
    %572 = arith.truncf %571 : vector<16x512xf32> to vector<16x512xbf16>
    %c848 = arith.constant 848 : index
    %c0_391 = arith.constant 0 : index
    %573 = vector.load %arg7[%c848, %c0_391] : memref<960x512xbf16, #tpu.memory_space<vmem>>, vector<16x512xbf16>
    tpu.vector_store %arg7[%c848, %c0_391], %572 {strides = array<i32>} : memref<960x512xbf16, #tpu.memory_space<vmem>>, vector<16x512xbf16>,
    %c32_392 = arith.constant 32 : index
    %c0_393 = arith.constant 0 : index
    %574 = vector.load %arg3[%c32_392, %c0_393] : memref<64x512xf32, #tpu.memory_space<vmem>>, vector<16x512xf32>
    %575 = arith.mulf %565, %574 : vector<16x512xf32>
    %576 = arith.truncf %575 : vector<16x512xf32> to vector<16x512xbf16>
    %c864 = arith.constant 864 : index
    %c0_394 = arith.constant 0 : index
    %577 = vector.load %arg7[%c864, %c0_394] : memref<960x512xbf16, #tpu.memory_space<vmem>>, vector<16x512xbf16>
    tpu.vector_store %arg7[%c864, %c0_394], %576 {strides = array<i32>} : memref<960x512xbf16, #tpu.memory_space<vmem>>, vector<16x512xbf16>,
    %c48_395 = arith.constant 48 : index
    %c0_396 = arith.constant 0 : index
    %578 = vector.load %arg3[%c48_395, %c0_396] : memref<64x512xf32, #tpu.memory_space<vmem>>, vector<16x512xf32>
    %579 = arith.mulf %565, %578 : vector<16x512xf32>
    %580 = arith.truncf %579 : vector<16x512xf32> to vector<16x512xbf16>
    %c880 = arith.constant 880 : index
    %c0_397 = arith.constant 0 : index
    %581 = vector.load %arg7[%c880, %c0_397] : memref<960x512xbf16, #tpu.memory_space<vmem>>, vector<16x512xbf16>
    tpu.vector_store %arg7[%c880, %c0_397], %580 {strides = array<i32>} : memref<960x512xbf16, #tpu.memory_space<vmem>>, vector<16x512xbf16>,
    %c14 = arith.constant 14 : index
    %c0_398 = arith.constant 0 : index
    %582 = memref.load %arg1[%c14, %c0_398] : memref<15x4xf32, #tpu.memory_space<smem>>
    %c0_399 = arith.constant 0 : index
    %c0_400 = arith.constant 0 : index
    %583 = vector.load %arg2[%c0_399, %c0_400] : memref<48x512xf32, #tpu.memory_space<vmem>>, vector<16x512xf32>
    %584 = vector.broadcast %582 : f32 to vector<16x512xf32>
    %585 = arith.mulf %584, %583 : vector<16x512xf32>
    %586 = arith.addf %7, %585 : vector<16x512xf32>
    %c14_401 = arith.constant 14 : index
    %c1_402 = arith.constant 1 : index
    %587 = memref.load %arg1[%c14_401, %c1_402] : memref<15x4xf32, #tpu.memory_space<smem>>
    %c16_403 = arith.constant 16 : index
    %c0_404 = arith.constant 0 : index
    %588 = vector.load %arg2[%c16_403, %c0_404] : memref<48x512xf32, #tpu.memory_space<vmem>>, vector<16x512xf32>
    %589 = vector.broadcast %587 : f32 to vector<16x512xf32>
    %590 = arith.mulf %589, %588 : vector<16x512xf32>
    %591 = arith.addf %586, %590 : vector<16x512xf32>
    %c14_405 = arith.constant 14 : index
    %c2_406 = arith.constant 2 : index
    %592 = memref.load %arg1[%c14_405, %c2_406] : memref<15x4xf32, #tpu.memory_space<smem>>
    %c32_407 = arith.constant 32 : index
    %c0_408 = arith.constant 0 : index
    %593 = vector.load %arg2[%c32_407, %c0_408] : memref<48x512xf32, #tpu.memory_space<vmem>>, vector<16x512xf32>
    %594 = vector.broadcast %592 : f32 to vector<16x512xf32>
    %595 = arith.mulf %594, %593 : vector<16x512xf32>
    %596 = arith.addf %591, %595 : vector<16x512xf32>
    %c14_409 = arith.constant 14 : index
    %c3_410 = arith.constant 3 : index
    %597 = memref.load %arg1[%c14_409, %c3_410] : memref<15x4xf32, #tpu.memory_space<smem>>
    %598 = vector.broadcast %597 : f32 to vector<16x512xf32>
    %599 = arith.addf %596, %598 : vector<16x512xf32>
    %cst_411 = arith.constant 0.000000e+00 : f32
    %600 = vector.broadcast %cst_411 : f32 to vector<16x512xf32>
    %601 = arith.maximumf %599, %600 : vector<16x512xf32>
    %602 = math.sqrt %601 : vector<16x512xf32>
    %cst_412 = arith.constant 1.000000e+00 : f32
    %603 = vector.broadcast %cst_412 : f32 to vector<16x512xf32>
    %604 = arith.subf %603, %602 : vector<16x512xf32>
    %cst_413 = arith.constant 0.000000e+00 : f32
    %605 = vector.broadcast %cst_413 : f32 to vector<16x512xf32>
    %606 = arith.maximumf %604, %605 : vector<16x512xf32>
    %c0_414 = arith.constant 0 : index
    %c0_415 = arith.constant 0 : index
    %607 = vector.load %arg3[%c0_414, %c0_415] : memref<64x512xf32, #tpu.memory_space<vmem>>, vector<16x512xf32>
    %608 = arith.mulf %606, %607 : vector<16x512xf32>
    %609 = arith.truncf %608 : vector<16x512xf32> to vector<16x512xbf16>
    %c896 = arith.constant 896 : index
    %c0_416 = arith.constant 0 : index
    %610 = vector.load %arg7[%c896, %c0_416] : memref<960x512xbf16, #tpu.memory_space<vmem>>, vector<16x512xbf16>
    tpu.vector_store %arg7[%c896, %c0_416], %609 {strides = array<i32>} : memref<960x512xbf16, #tpu.memory_space<vmem>>, vector<16x512xbf16>,
    %c16_417 = arith.constant 16 : index
    %c0_418 = arith.constant 0 : index
    %611 = vector.load %arg3[%c16_417, %c0_418] : memref<64x512xf32, #tpu.memory_space<vmem>>, vector<16x512xf32>
    %612 = arith.mulf %606, %611 : vector<16x512xf32>
    %613 = arith.truncf %612 : vector<16x512xf32> to vector<16x512xbf16>
    %c912 = arith.constant 912 : index
    %c0_419 = arith.constant 0 : index
    %614 = vector.load %arg7[%c912, %c0_419] : memref<960x512xbf16, #tpu.memory_space<vmem>>, vector<16x512xbf16>
    tpu.vector_store %arg7[%c912, %c0_419], %613 {strides = array<i32>} : memref<960x512xbf16, #tpu.memory_space<vmem>>, vector<16x512xbf16>,
    %c32_420 = arith.constant 32 : index
    %c0_421 = arith.constant 0 : index
    %615 = vector.load %arg3[%c32_420, %c0_421] : memref<64x512xf32, #tpu.memory_space<vmem>>, vector<16x512xf32>
    %616 = arith.mulf %606, %615 : vector<16x512xf32>
    %617 = arith.truncf %616 : vector<16x512xf32> to vector<16x512xbf16>
    %c928 = arith.constant 928 : index
    %c0_422 = arith.constant 0 : index
    %618 = vector.load %arg7[%c928, %c0_422] : memref<960x512xbf16, #tpu.memory_space<vmem>>, vector<16x512xbf16>
    tpu.vector_store %arg7[%c928, %c0_422], %617 {strides = array<i32>} : memref<960x512xbf16, #tpu.memory_space<vmem>>, vector<16x512xbf16>,
    %c48_423 = arith.constant 48 : index
    %c0_424 = arith.constant 0 : index
    %619 = vector.load %arg3[%c48_423, %c0_424] : memref<64x512xf32, #tpu.memory_space<vmem>>, vector<16x512xf32>
    %620 = arith.mulf %606, %619 : vector<16x512xf32>
    %621 = arith.truncf %620 : vector<16x512xf32> to vector<16x512xbf16>
    %c944 = arith.constant 944 : index
    %c0_425 = arith.constant 0 : index
    %622 = vector.load %arg7[%c944, %c0_425] : memref<960x512xbf16, #tpu.memory_space<vmem>>, vector<16x512xbf16>
    tpu.vector_store %arg7[%c944, %c0_425], %621 {strides = array<i32>} : memref<960x512xbf16, #tpu.memory_space<vmem>>, vector<16x512xbf16>,
    %c0_426 = arith.constant 0 : index
    %c0_427 = arith.constant 0 : index
    %623 = vector.load %arg4[%c0_426, %c0_427] : memref<32x960xbf16, #tpu.memory_space<vmem>>, vector<32x960xbf16>
    %c0_428 = arith.constant 0 : index
    %c0_429 = arith.constant 0 : index
    %624 = vector.load %arg7[%c0_428, %c0_429] : memref<960x512xbf16, #tpu.memory_space<vmem>>, vector<960x512xbf16>
    %cst_430 = arith.constant dense<0.000000e+00> : vector<32x512xf32>
    %625 = tpu.matmul %623, %624, %cst_430 {dimension_numbers = #tpu.dot_dimension_numbers<[1], [0], [0], [1], [0, 0, 1, 1], [], []>} : vector<32x960xbf16>, vector<960x512xbf16>, vector<32x512xf32> -> vector<32x512xf32>
    %c0_431 = arith.constant 0 : index
    %c0_432 = arith.constant 0 : index
    %626 = vector.load %arg5[%c0_431, %c0_432] : memref<32x512xf32, #tpu.memory_space<vmem>>, vector<32x512xf32>
    tpu.vector_store %arg5[%c0_431, %c0_432], %625 {strides = array<i32>} : memref<32x512xf32, #tpu.memory_space<vmem>>, vector<32x512xf32>,
    %cst_433 = arith.constant dense<0.000000e+00> : vector<32xf32>
    %627 = vector.multi_reduction <add>, %625, %cst_433 [1] : vector<32x512xf32> to vector<32xf32>
    %628 = vector.shape_cast %627 : vector<32xf32> to vector<32x1xf32>
    %c0_434 = arith.constant 0 : index
    %c0_435 = arith.constant 0 : index
    %c0_436 = arith.constant 0 : index
    %629 = vector.load %arg6[%c0_434, %c0_435, %c0_436] : memref<1x32x2xf32, #tpu.memory_space<vmem>>, vector<1x32x1xf32>
    %630 = vector.shape_cast %629 : vector<1x32x1xf32> to vector<32x1xf32>
    %631 = vector.shape_cast %628 : vector<32x1xf32> to vector<1x32x1xf32>
    tpu.vector_store %arg6[%c0_434, %c0_435, %c0_436], %631 {strides = array<i32>} : memref<1x32x2xf32, #tpu.memory_space<vmem>>, vector<1x32x1xf32>,
    %632 = arith.mulf %625, %625 : vector<32x512xf32>
    %cst_437 = arith.constant dense<0.000000e+00> : vector<32xf32>
    %633 = vector.multi_reduction <add>, %632, %cst_437 [1] : vector<32x512xf32> to vector<32xf32>
    %634 = vector.shape_cast %633 : vector<32xf32> to vector<32x1xf32>
    %c0_438 = arith.constant 0 : index
    %c0_439 = arith.constant 0 : index
    %c1_440 = arith.constant 1 : index
    %635 = vector.load %arg6[%c0_438, %c0_439, %c1_440] : memref<1x32x2xf32, #tpu.memory_space<vmem>>, vector<1x32x1xf32>
    %636 = vector.shape_cast %635 : vector<1x32x1xf32> to vector<32x1xf32>
    %637 = vector.shape_cast %634 : vector<32x1xf32> to vector<1x32x1xf32>
    tpu.vector_store %arg6[%c0_438, %c0_439, %c1_440], %637 {strides = array<i32>} : memref<1x32x2xf32, #tpu.memory_space<vmem>>, vector<1x32x1xf32>,
    return
  }
  func.func @transform_0(%arg0: i32) -> (i32, i32) {
    %c0_i32 = arith.constant 0 : i32
    %c0_i32_0 = arith.constant 0 : i32
    %c0_i32_1 = arith.constant 0 : i32
    return %c0_i32, %c0_i32_0 : i32, i32
  }
  func.func @transform_1(%arg0: i32) -> (i32, i32) {
    %c0_i32 = arith.constant 0 : i32
    %c0_i32_0 = arith.constant 0 : i32
    return %c0_i32, %arg0 : i32, i32
  }
  func.func @transform_2(%arg0: i32) -> (i32, i32) {
    %c0_i32 = arith.constant 0 : i32
    %c0_i32_0 = arith.constant 0 : i32
    return %c0_i32, %arg0 : i32, i32
  }
  func.func @transform_3(%arg0: i32) -> (i32, i32) {
    %c0_i32 = arith.constant 0 : i32
    %c0_i32_0 = arith.constant 0 : i32
    %c0_i32_1 = arith.constant 0 : i32
    return %c0_i32, %c0_i32_0 : i32, i32
  }
  func.func @transform_4(%arg0: i32) -> (i32, i32) {
    %c0_i32 = arith.constant 0 : i32
    %c0_i32_0 = arith.constant 0 : i32
    return %c0_i32, %arg0 : i32, i32
  }
  func.func @transform_5(%arg0: i32) -> (i32, i32, i32) {
    %c0_i32 = arith.constant 0 : i32
    %c0_i32_0 = arith.constant 0 : i32
    %c0_i32_1 = arith.constant 0 : i32
    return %arg0, %c0_i32, %c0_i32_0 : i32, i32, i32
  }
}

</mosaic_0001>

<llo_original>
// kernel: tpu_custom_call.1
$region0: #{tpu_custom_call.1}
  #allocation0 [shape = 'u32[]', space=smem, size = 0x4, offset = 0x4, fixed_abs, tag = 'smem constant byte address 0x4 - core index']
  #allocation1 [shape = 'u32[144,128]{1,0:T(1,128)}', space=vmem, size = 0x12000, scoped, tag = 'internal scratch']
  #allocation2 [shape = 'bf16[960,512]{1,0:T(16,128)(2,1)}', space=vmem, size = 0xf0000, scoped, tag = 'scratch operand']
  %s0 = inlined_call_operand.vmem [shape: f32[15,4], index: 0, kind: input, shape index: {}]
  %s1 = inlined_call_operand.hbm [shape: f32[48,1024], index: 1, kind: input, shape index: {}]
  %s2 = inlined_call_operand.hbm [shape: f32[64,1024], index: 2, kind: input, shape index: {}]
  %s3 = inlined_call_operand.hbm [shape: bf16[32,960], index: 3, kind: input, shape index: {}]
  %s4 = inlined_call_operand.hbm [shape: f32[32,1024], index: 4, kind: output, shape index: {0}]
  %s5 = inlined_call_operand.vmem [shape: f32[2,32,2], index: 5, kind: output, shape index: {1}]
  %6 = xla_tuple %s4, %s5
  %s7 = sld [smem:[#allocation0]]
  $region73: #{tpu_custom_call.1} parent=0
    _
  %s9 = ssub.s32 1, %s7
  %s10 = scalar_select 0, %s9, %s7
  $region1: #{tpu_custom_call.1} parent=0
    #allocation3 [shape = 'u8[8192]{0}', space=smem, size = 0x2000, scoped, tag = 'input window, operand 0, single buffered']
    #allocation4 [shape = 's32[2]{0}', space=sflag, size = 0x8, scoped, tag = 'scoped memory for tpu_custom_call.1']
    #allocation5 [shape = 's32[2]{0}', space=sflag, size = 0x8, scoped, tag = 'scoped memory for tpu_custom_call.1']
    #allocation6 [shape = 's32[2]{0}', space=sflag, size = 0x8, scoped, tag = 'scoped memory for tpu_custom_call.1']
    #allocation7 [shape = 'u8[196608]{0}', space=vmem, size = 0x30000, scoped, tag = 'input window, operand 1']
    #allocation8 [shape = 'u8[262144]{0}', space=vmem, size = 0x40000, scoped, tag = 'input window, operand 2']
    #allocation9 [shape = 's32[2]{0}', space=sflag, size = 0x8, scoped, tag = 'scoped memory for tpu_custom_call.1']
    #allocation10 [shape = 'u8[65536]{0}', space=vmem, size = 0x10000, scoped, tag = 'input window, operand 3, single buffered']
    #allocation11 [shape = 'u8[131072]{0}', space=vmem, size = 0x20000, scoped, tag = 'output window, operand 0']
    %11 = vsyncpa [#allocation6], 0
    %12 = vsyncpa [#allocation4], 0
    %s13 = scalar_lea.sflag [#allocation4], 1
    %14 = vsyncpa %s13, 0
    %15 = vsyncpa [#allocation9], 0
    %s16 = scalar_lea.sflag [#allocation9], 1
    %17 = vsyncpa %s16, 0
    %18 = vsyncpa [#allocation5], 0
    %s19 = scalar_lea.sflag [#allocation5], 1
    %20 = vsyncpa %s19, 0
    loop: start=0, step=1, limit=4
    $region2: #{tpu_custom_call.1} parent=1 // loop_pre_header
      _
    $region3: #{tpu_custom_call.1} parent=1 // loop_header
      %s22 = sphi 0, %s26
      %p23 = scmp.ge.s32.totalorder %s22, 4
      %s30 = sphi 0, %s30
      %s32 = sphi 0, %s30
      %s33 = sphi 0, %s32
      %s47 = sphi 0, %s33
      %s53 = sphi 0, %s55
      %s56 = sphi 0, %s53
      %s57 = sphi 0, %s56
      %s73 = sphi 0, %s57
      %s79 = sphi 0, %s81
      %s82 = sphi 0, %s79
      %s83 = sphi 0, %s82
      %s99 = sphi 0, %s83
      %s103 = sphi 0, %s103
      %s105 = sphi 0, %s103
      %s106 = sphi 0, %s105
      %s120 = sphi 0, %s106
      %s126 = sphi 0, %s128
      %s129 = sphi 0, %s126
      %s130 = sphi 0, %s129
      %s146 = sphi 0, %s130
      %s152 = sphi 0, %s154
      %s155 = sphi 0, %s152
      %s156 = sphi 0, %s155
      %s172 = sphi 0, %s156
    $region4: #{tpu_custom_call.1} parent=1 // loop_header_branch
      %25 = sbr.rel (%p23) target = $region8
    $region5: #{tpu_custom_call.1} parent=1 // loop_body
      %s27 = ssub.s32 %s22, 1
      %s28 = ssub.s32 %s22, 2
      %s29 = sadd.s32 %s22, 1
      %s31 = sadd.s32 %s30, 1
      %p34 = scmp.eq.s32.totalorder %s22, 1
      %p35 = scmp.ne.s32.totalorder %s30, %s32
      %p36 = scmp.eq.s32.totalorder %s22, 0
      %p37 = por %p35, %p36
      %p38 = scmp.ne.s32.totalorder %s30, %s32
      %p39 = scmp.eq.s32.totalorder %s27, 1
      %p40 = por %p38, %p39
      %p41 = scmp.ne.s32.totalorder %s32, %s33
      %p42 = scmp.eq.s32.totalorder %s27, 0
      %p43 = por %p41, %p42
      %p44 = scmp.ne.s32.totalorder %s32, %s33
      %p45 = scmp.eq.s32.totalorder %s28, 1
      %p46 = por %p44, %p45
      %p48 = scmp.ne.s32.totalorder %s33, %s47
      %p49 = scmp.eq.s32.totalorder %s28, 0
      %p50 = por %p48, %p49
      %s51 = ssub.s32 %s22, %s29
      %p52 = scmp.eq.s32.totalorder %s51, 0
      %s54 = sadd.s32 %s53, 1
      %s55 = scalar_select %p52, %s53, %s54
      %p58 = pneg %p52
      %p59 = scmp.eq.s32.totalorder %s22, 1
      %p60 = por %p58, %p59
      %p61 = scmp.ne.s32.totalorder %s53, %s56
      %p62 = scmp.eq.s32.totalorder %s22, 0
      %p63 = por %p61, %p62
      %p64 = scmp.ne.s32.totalorder %s53, %s56
      %p65 = scmp.eq.s32.totalorder %s27, 1
      %p66 = por %p64, %p65
      %p67 = scmp.ne.s32.totalorder %s56, %s57
      %p68 = scmp.eq.s32.totalorder %s27, 0
      %p69 = por %p67, %p68
      %p70 = scmp.ne.s32.totalorder %s56, %s57
      %p71 = scmp.eq.s32.totalorder %s28, 1
      %p72 = por %p70, %p71
      %p74 = scmp.ne.s32.totalorder %s57, %s73
      %p75 = scmp.eq.s32.totalorder %s28, 0
      %p76 = por %p74, %p75
      %s77 = ssub.s32 %s22, %s29
      %p78 = scmp.eq.s32.totalorder %s77, 0
      %s80 = sadd.s32 %s79, 1
      %s81 = scalar_select %p78, %s79, %s80
      %p84 = pneg %p78
      %p85 = scmp.eq.s32.totalorder %s22, 1
      %p86 = por %p84, %p85
      %p87 = scmp.ne.s32.totalorder %s79, %s82
      %p88 = scmp.eq.s32.totalorder %s22, 0
      %p89 = por %p87, %p88
      %p90 = scmp.ne.s32.totalorder %s79, %s82
      %p91 = scmp.eq.s32.totalorder %s27, 1
      %p92 = por %p90, %p91
      %p93 = scmp.ne.s32.totalorder %s82, %s83
      %p94 = scmp.eq.s32.totalorder %s27, 0
      %p95 = por %p93, %p94
      %p96 = scmp.ne.s32.totalorder %s82, %s83
      %p97 = scmp.eq.s32.totalorder %s28, 1
      %p98 = por %p96, %p97
      %p100 = scmp.ne.s32.totalorder %s83, %s99
      %p101 = scmp.eq.s32.totalorder %s28, 0
      %p102 = por %p100, %p101
      %s104 = sadd.s32 %s103, 1
      %p107 = scmp.eq.s32.totalorder %s22, 1
      %p108 = scmp.ne.s32.totalorder %s103, %s105
      %p109 = scmp.eq.s32.totalorder %s22, 0
      %p110 = por %p108, %p109
      %p111 = scmp.ne.s32.totalorder %s103, %s105
      %p112 = scmp.eq.s32.totalorder %s27, 1
      %p113 = por %p111, %p112
      %p114 = scmp.ne.s32.totalorder %s105, %s106
      %p115 = scmp.eq.s32.totalorder %s27, 0
      %p116 = por %p114, %p115
      %p117 = scmp.ne.s32.totalorder %s105, %s106
      %p118 = scmp.eq.s32.totalorder %s28, 1
      %p119 = por %p117, %p118
      %p121 = scmp.ne.s32.totalorder %s106, %s120
      %p122 = scmp.eq.s32.totalorder %s28, 0
      %p123 = por %p121, %p122
      %s124 = ssub.s32 %s22, %s29
      %p125 = scmp.eq.s32.totalorder %s124, 0
      %s127 = sadd.s32 %s126, 1
      %s128 = scalar_select %p125, %s126, %s127
      %p131 = pneg %p125
      %p132 = scmp.eq.s32.totalorder %s22, 1
      %p133 = por %p131, %p132
      %p134 = scmp.ne.s32.totalorder %s126, %s129
      %p135 = scmp.eq.s32.totalorder %s22, 0
      %p136 = por %p134, %p135
      %p137 = scmp.ne.s32.totalorder %s126, %s129
      %p138 = scmp.eq.s32.totalorder %s27, 1
      %p139 = por %p137, %p138
      %p140 = scmp.ne.s32.totalorder %s129, %s130
      %p141 = scmp.eq.s32.totalorder %s27, 0
      %p142 = por %p140, %p141
      %p143 = scmp.ne.s32.totalorder %s129, %s130
      %p144 = scmp.eq.s32.totalorder %s28, 1
      %p145 = por %p143, %p144
      %p147 = scmp.ne.s32.totalorder %s130, %s146
      %p148 = scmp.eq.s32.totalorder %s28, 0
      %p149 = por %p147, %p148
      %s150 = ssub.s32 %s22, %s29
      %p151 = scmp.eq.s32.totalorder %s150, 0
      %s153 = sadd.s32 %s152, 1
      %s154 = scalar_select %p151, %s152, %s153
      %p157 = pneg %p151
      %p158 = scmp.eq.s32.totalorder %s22, 1
      %p159 = por %p157, %p158
      %p160 = scmp.ne.s32.totalorder %s152, %s155
      %p161 = scmp.eq.s32.totalorder %s22, 0
      %p162 = por %p160, %p161
      %p163 = scmp.ne.s32.totalorder %s152, %s155
      %p164 = scmp.eq.s32.totalorder %s27, 1
      %p165 = por %p163, %p164
      %p166 = scmp.ne.s32.totalorder %s155, %s156
      %p167 = scmp.eq.s32.totalorder %s27, 0
      %p168 = por %p166, %p167
      %p169 = scmp.ne.s32.totalorder %s155, %s156
      %p170 = scmp.eq.s32.totalorder %s28, 1
      %p171 = por %p169, %p170
      %p173 = scmp.ne.s32.totalorder %s156, %s172
      %p174 = scmp.eq.s32.totalorder %s28, 0
      %p175 = por %p173, %p174
      %p176 = scmp.le.s32.totalorder 1, %s22
      %p177 = scmp.lt.s32.totalorder %s22, 3
      %p178 = pnand %p176, %p177
      %p179 = pneg %p178
      // Predicated region
      $region9: #{tpu_custom_call.1} parent=5 // pred_check
        _
      $region10: #{tpu_custom_call.1} parent=5 // pred_check_branch
        %181 = sbr.rel (%p178) target = $region12
      $region11: #{tpu_custom_call.1} parent=5 // pred_region
        %s182 = ssub.s32 %s22, 1
        // Predicated region
        $region13: #{tpu_custom_call.1} parent=11 // pred_check
          %p183 = pneg %p43
        $region14: #{tpu_custom_call.1} parent=11 // pred_check_branch
          %185 = sbr.rel (%p183) target = $region16
        $region15: #{tpu_custom_call.1} parent=11 // pred_region
          %s187 = ssub.s32 256, 256
          %188 = vsyncadd [#allocation6], %s187
          %s189 = sshll.u32 %s0, 4
          %s190 = int_to_ptr.vmem [resolvable:$true] %s189
          %195 = dma.vmem_to_smem %s190, 256, [#allocation3], [#allocation6], 128, 128, 8
        $region16: #{tpu_custom_call.1} parent=11 // pred_fallthru
          _
        // Predicated region
        $region17: #{tpu_custom_call.1} parent=11 // pred_check
          %p196 = pneg %p116
        $region18: #{tpu_custom_call.1} parent=11 // pred_check_branch
          %198 = sbr.rel (%p196) target = $region20
        $region19: #{tpu_custom_call.1} parent=11 // pred_region
          %s200 = ssub.s32 2048, 2048
          %201 = vsyncadd [#allocation9], %s200
          %s202 = sshll.u32 [#allocation10], 4
          %s203 = int_to_ptr.vmem [resolvable:$true] %s202
          %208 = dma.hbm_to_vmem [thread:$0]  %s3, 2048, %s203, [#allocation9], 512, 512, 32
        $region20: #{tpu_custom_call.1} parent=11 // pred_fallthru
          _
      $region12: #{tpu_custom_call.1} parent=5 // pred_fallthru
        _
      %p209 = scmp.lt.s32.totalorder %s22, 2
      // Predicated region
      $region21: #{tpu_custom_call.1} parent=5 // pred_check
        %p210 = pneg %p209
      $region22: #{tpu_custom_call.1} parent=5 // pred_check_branch
        %212 = sbr.rel (%p210) target = $region24
      $region23: #{tpu_custom_call.1} parent=5 // pred_region
        // Predicated region
        $region25: #{tpu_custom_call.1} parent=23 // pred_check
          %p213 = pneg %p63
        $region26: #{tpu_custom_call.1} parent=23 // pred_check_branch
          %215 = sbr.rel (%p213) target = $region28
        $region27: #{tpu_custom_call.1} parent=23 // pred_region
          %s216 = sand.u32 %s53, 1
          %s217 = scalar_lea.sflag [#allocation4], %s216
          %s218 = sand.u32 %s53, 1
          %s219 = smul.addr %s218, 192
          %s220 = scalar_lea.vmem [#allocation7], %s219
          %s221 = smul.u32 4, %s22
          %s223 = ssub.s32 3072, 3072
          %224 = vsyncadd %s217, %s223
          %s225 = smul.addr %s221, 128
          %s226 = scalar_lea.hbm %s1, %s225
          %s227 = sshll.u32 %s220, 4
          %s228 = int_to_ptr.vmem [resolvable:$true] %s227
          %233 = dma.hbm_to_vmem [thread:$0]  %s226, 3072, %s228, %s217, 1024, 512, 32
        $region28: #{tpu_custom_call.1} parent=23 // pred_fallthru
          _
        // Predicated region
        $region29: #{tpu_custom_call.1} parent=23 // pred_check
          %p234 = pneg %p89
        $region30: #{tpu_custom_call.1} parent=23 // pred_check_branch
          %236 = sbr.rel (%p234) target = $region32
        $region31: #{tpu_custom_call.1} parent=23 // pred_region
          %s237 = sand.u32 %s22, 1
          %s238 = scalar_lea.sflag [#allocation9], %s237
          %s239 = sand.u32 %s79, 1
          %s240 = smul.addr %s239, 256
          %s241 = scalar_lea.vmem [#allocation8], %s240
          %s242 = smul.u32 4, %s22
          %s244 = ssub.s32 4096, 4096
          %245 = vsyncadd %s238, %s244
          %s246 = smul.addr %s242, 128
          %s247 = scalar_lea.hbm %s2, %s246
          %s248 = sshll.u32 %s241, 4
          %s249 = int_to_ptr.vmem [resolvable:$true] %s248
          %254 = dma.hbm_to_vmem [thread:$0]  %s247, 4096, %s249, %s238, 1024, 512, 32
        $region32: #{tpu_custom_call.1} parent=23 // pred_fallthru
          _
      $region24: #{tpu_custom_call.1} parent=5 // pred_fallthru
        _
      %p255 = scmp.le.s32.totalorder 1, %s22
      %p256 = scmp.lt.s32.totalorder %s22, 3
      %p257 = pnand %p255, %p256
      %p258 = pneg %p257
      // Predicated region
      $region33: #{tpu_custom_call.1} parent=5 // pred_check
        _
      $region34: #{tpu_custom_call.1} parent=5 // pred_check_branch
        %260 = sbr.rel (%p257) target = $region36
      $region35: #{tpu_custom_call.1} parent=5 // pred_region
        %s261 = ssub.s32 %s22, 1
        // Predicated region
        $region37: #{tpu_custom_call.1} parent=35 // pred_check
          %p262 = pneg %p43
        $region38: #{tpu_custom_call.1} parent=35 // pred_check_branch
          %264 = sbr.rel (%p262) target = $region40
        $region39: #{tpu_custom_call.1} parent=35 // pred_region
          %265 = dma.done [#allocation6], 256
        $region40: #{tpu_custom_call.1} parent=35 // pred_fallthru
          _
        %s266 = sand.u32 %s56, 1
        %s267 = scalar_lea.sflag [#allocation4], %s266
        %s268 = sand.u32 %s56, 1
        %s269 = smul.addr %s268, 192
        %s270 = scalar_lea.vmem [#allocation7], %s269
        // Predicated region
        $region41: #{tpu_custom_call.1} parent=35 // pred_check
          %p271 = pneg %p69
        $region42: #{tpu_custom_call.1} parent=35 // pred_check_branch
          %273 = sbr.rel (%p271) target = $region44
        $region43: #{tpu_custom_call.1} parent=35 // pred_region
          %274 = dma.done %s267, 3072
        $region44: #{tpu_custom_call.1} parent=35 // pred_fallthru
          _
        %s275 = sand.u32 %s27, 1
        %s276 = scalar_lea.sflag [#allocation9], %s275
        %s277 = sand.u32 %s82, 1
        %s278 = smul.addr %s277, 256
        %s279 = scalar_lea.vmem [#allocation8], %s278
        // Predicated region
        $region45: #{tpu_custom_call.1} parent=35 // pred_check
          %p280 = pneg %p95
        $region46: #{tpu_custom_call.1} parent=35 // pred_check_branch
          %282 = sbr.rel (%p280) target = $region48
        $region47: #{tpu_custom_call.1} parent=35 // pred_region
          %283 = dma.done %s276, 4096
        $region48: #{tpu_custom_call.1} parent=35 // pred_fallthru
          _
        // Predicated region
        $region49: #{tpu_custom_call.1} parent=35 // pred_check
          %p284 = pneg %p116
        $region50: #{tpu_custom_call.1} parent=35 // pred_check_branch
          %286 = sbr.rel (%p284) target = $region52
        $region51: #{tpu_custom_call.1} parent=35 // pred_region
          %287 = dma.done [#allocation9], 2048
        $region52: #{tpu_custom_call.1} parent=35 // pred_fallthru
          _
        %288 = sfence
        %p289 = pneg %p43
        %p290 = pneg %p40
        %s291 = sand.u32 %s56, 1
        %s292 = scalar_lea.sflag [#allocation4], %s291
        %s293 = sand.u32 %s56, 1
        %s294 = smul.addr %s293, 192
        %s295 = scalar_lea.vmem [#allocation7], %s294
        %p296 = pneg %p69
        %p297 = pneg %p66
        %s298 = sand.u32 %s27, 1
        %s299 = scalar_lea.sflag [#allocation9], %s298
        %s300 = sand.u32 %s82, 1
        %s301 = smul.addr %s300, 256
        %s302 = scalar_lea.vmem [#allocation8], %s301
        %p303 = pneg %p95
        %p304 = pneg %p92
        %p305 = pneg %p116
        %p306 = pneg %p113
        %p307 = pneg %p142
        %p308 = pneg %p139
        %s309 = sand.u32 %s129, 1
        %s310 = scalar_lea.sflag [#allocation5], %s309
        %s311 = sand.u32 %s129, 1
        %s312 = smul.addr %s311, 128
        %s313 = scalar_lea.vmem [#allocation11], %s312
        %p314 = pneg %p168
        %p315 = pneg %p165
        %p316 = scmp.lt.s32.totalorder %s27, 1
        %s317 = scalar_select %p316, %s27, 1
        %s318 = smul.addr %s317, 4
        %s319 = smul.addr %s318, 8
        %s320 = scalar_lea.vmem %s5, %s319
        %s321 = smul.u32 4, %s27
        %s322 = smul.u32 4, %s27
        %s323 = smul.u32 4, %s27
        %p324 = scmp.lt.s32.totalorder %s27, 1
        %s325 = scalar_select %p324, %s27, 1
        %s326 = smul.addr %s325, 4
        %s327 = smul.addr %s326, 8
        %s328 = scalar_lea.vmem %s5, %s327
        %v330 = vld [vmem:[%s270] sm:$0xff]
        %v331 = vld [vmem:[%s270 + $0x8] sm:$0xff]
        %v332 = vld [vmem:[%s270 + $0x10] sm:$0xff]
        %v333 = vld [vmem:[%s270 + $0x18] sm:$0xff]
        %v334 = vld [vmem:[%s270 + $0x20] sm:$0xff]
        %v335 = vld [vmem:[%s270 + $0x28] sm:$0xff]
        %v336 = vld [vmem:[%s270 + $0x30] sm:$0xff]
        %v337 = vld [vmem:[%s270 + $0x38] sm:$0xff]
        %v338 = vld [vmem:[%s270 + $0x40] sm:$0xff]
        %v339 = vld [vmem:[%s270 + $0x48] sm:$0xff]
        %v340 = vld [vmem:[%s270 + $0x50] sm:$0xff]
        %v341 = vld [vmem:[%s270 + $0x58] sm:$0xff]
        %v342 = vld [vmem:[%s270 + $0x60] sm:$0xff]
        %v343 = vld [vmem:[%s270 + $0x68] sm:$0xff]
        %v344 = vld [vmem:[%s270 + $0x70] sm:$0xff]
        %v345 = vld [vmem:[%s270 + $0x78] sm:$0xff]
        %v346 = vld [vmem:[%s270 + $0x80] sm:$0xff]
        %v347 = vld [vmem:[%s270 + $0x88] sm:$0xff]
        %v348 = vld [vmem:[%s270 + $0x90] sm:$0xff]
        %v349 = vld [vmem:[%s270 + $0x98] sm:$0xff]
        %v350 = vld [vmem:[%s270 + $0xa0] sm:$0xff]
        %v351 = vld [vmem:[%s270 + $0xa8] sm:$0xff]
        %v352 = vld [vmem:[%s270 + $0xb0] sm:$0xff]
        %v353 = vld [vmem:[%s270 + $0xb8] sm:$0xff]
        %v354 = vmul.f32 %v330, %v330
        %v355 = vmul.f32 %v331, %v331
        %v356 = vmul.f32 %v332, %v332
        %v357 = vmul.f32 %v333, %v333
        %v358 = vmul.f32 %v334, %v334
        %v359 = vmul.f32 %v335, %v335
        %v360 = vmul.f32 %v336, %v336
        %v361 = vmul.f32 %v337, %v337
        %v362 = vmul.f32 %v338, %v338
        %v363 = vmul.f32 %v339, %v339
        %v364 = vmul.f32 %v340, %v340
        %v365 = vmul.f32 %v341, %v341
        %v366 = vmul.f32 %v342, %v342
        %v367 = vmul.f32 %v343, %v343
        %v368 = vmul.f32 %v344, %v344
        %v369 = vmul.f32 %v345, %v345
        %v370 = vadd.f32 %v354, %v362
        %v371 = vadd.f32 %v355, %v363
        %v372 = vadd.f32 %v356, %v364
        %v373 = vadd.f32 %v357, %v365
        %v374 = vadd.f32 %v358, %v366
        %v375 = vadd.f32 %v359, %v367
        %v376 = vadd.f32 %v360, %v368
        %v377 = vadd.f32 %v361, %v369
        %v378 = vmul.f32 %v346, %v346
        %v379 = vmul.f32 %v347, %v347
        %v380 = vmul.f32 %v348, %v348
        %v381 = vmul.f32 %v349, %v349
        %v382 = vmul.f32 %v350, %v350
        %v383 = vmul.f32 %v351, %v351
        %v384 = vmul.f32 %v352, %v352
        %v385 = vmul.f32 %v353, %v353
        %v386 = vadd.f32 %v370, %v378
        %v387 = vadd.f32 %v371, %v379
        %v388 = vadd.f32 %v372, %v380
        %v389 = vadd.f32 %v373, %v381
        %v390 = vadd.f32 %v374, %v382
        %v391 = vadd.f32 %v375, %v383
        %v392 = vadd.f32 %v376, %v384
        %v393 = vadd.f32 %v377, %v385
        %s394 = sld [smem:[#allocation3]]
        %v395 = vstv %s394
        %v396 = vmul.f32 %v395, %v330
        %v397 = vmul.f32 %v395, %v331
        %v398 = vmul.f32 %v395, %v332
        %v399 = vmul.f32 %v395, %v333
        %v400 = vmul.f32 %v395, %v334
        %v401 = vmul.f32 %v395, %v335
        %v402 = vmul.f32 %v395, %v336
        %v403 = vmul.f32 %v395, %v337
        %v404 = vadd.f32 %v386, %v396
        %v405 = vadd.f32 %v387, %v397
        %v406 = vadd.f32 %v388, %v398
        %v407 = vadd.f32 %v389, %v399
        %v408 = vadd.f32 %v390, %v400
        %v409 = vadd.f32 %v391, %v401
        %v410 = vadd.f32 %v392, %v402
        %v411 = vadd.f32 %v393, %v403
        %s412 = sld [smem:[#allocation3 + $0x1]]
        %v413 = vstv %s412
        %v414 = vmul.f32 %v413, %v338
        %v415 = vmul.f32 %v413, %v339
        %v416 = vmul.f32 %v413, %v340
        %v417 = vmul.f32 %v413, %v341
        %v418 = vmul.f32 %v413, %v342
        %v419 = vmul.f32 %v413, %v343
        %v420 = vmul.f32 %v413, %v344
        %v421 = vmul.f32 %v413, %v345
        %v422 = vadd.f32 %v404, %v414
        %v423 = vadd.f32 %v405, %v415
        %v424 = vadd.f32 %v406, %v416
        %v425 = vadd.f32 %v407, %v417
        %v426 = vadd.f32 %v408, %v418
        %v427 = vadd.f32 %v409, %v419
        %v428 = vadd.f32 %v410, %v420
        %v429 = vadd.f32 %v411, %v421
        %s430 = sld [smem:[#allocation3 + $0x2]]
        %v431 = vstv %s430
        %v432 = vmul.f32 %v431, %v346
        %v433 = vmul.f32 %v431, %v347
        %v434 = vmul.f32 %v431, %v348
        %v435 = vmul.f32 %v431, %v349
        %v436 = vmul.f32 %v431, %v350
        %v437 = vmul.f32 %v431, %v351
        %v438 = vmul.f32 %v431, %v352
        %v439 = vmul.f32 %v431, %v353
        %v440 = vadd.f32 %v422, %v432
        %v441 = vadd.f32 %v423, %v433
        %v442 = vadd.f32 %v424, %v434
        %v443 = vadd.f32 %v425, %v435
        %v444 = vadd.f32 %v426, %v436
        %v445 = vadd.f32 %v427, %v437
        %v446 = vadd.f32 %v428, %v438
        %v447 = vadd.f32 %v429, %v439
        %s448 = sld [smem:[#allocation3 + $0x3]]
        %v449 = vstv %s448
        %v450 = vadd.f32 %v440, %v449
        %v451 = vadd.f32 %v441, %v449
        %v452 = vadd.f32 %v442, %v449
        %v453 = vadd.f32 %v443, %v449
        %v454 = vadd.f32 %v444, %v449
        %v455 = vadd.f32 %v445, %v449
        %v456 = vadd.f32 %v446, %v449
        %v457 = vadd.f32 %v447, %v449
        %v458 = vmax.f32 %v450, 0.0
        %v459 = vmax.f32 %v451, 0.0
        %v460 = vmax.f32 %v452, 0.0
        %v461 = vmax.f32 %v453, 0.0
        %v462 = vmax.f32 %v454, 0.0
        %v463 = vmax.f32 %v455, 0.0
        %v464 = vmax.f32 %v456, 0.0
        %v465 = vmax.f32 %v457, 0.0
        %v466 = vrsqrt.pop %v458
        %v467 = vmul.f32 %v458, %v466
        %vm468 = vcmp.eq.f32.partialorder %v458, inf
        %v469 = vsel %vm468, %v458, %v467
        %vm470 = vcmp.eq.f32.partialorder %v458, 0.0
        %v471 = vand.u32 %v458, 2147483648
        %v472 = vsel %vm470, %v471, %v469
        %v473 = vrsqrt.pop %v459
        %v474 = vmul.f32 %v459, %v473
        %vm475 = vcmp.eq.f32.partialorder %v459, inf
        %v476 = vsel %vm475, %v459, %v474
        %vm477 = vcmp.eq.f32.partialorder %v459, 0.0
        %v478 = vand.u32 %v459, 2147483648
        %v479 = vsel %vm477, %v478, %v476
        %v480 = vrsqrt.pop %v460
        %v481 = vmul.f32 %v460, %v480
        %vm482 = vcmp.eq.f32.partialorder %v460, inf
        %v483 = vsel %vm482, %v460, %v481
        %vm484 = vcmp.eq.f32.partialorder %v460, 0.0
        %v485 = vand.u32 %v460, 2147483648
        %v486 = vsel %vm484, %v485, %v483
        %v487 = vrsqrt.pop %v461
        %v488 = vmul.f32 %v461, %v487
        %vm489 = vcmp.eq.f32.partialorder %v461, inf
        %v490 = vsel %vm489, %v461, %v488
        %vm491 = vcmp.eq.f32.partialorder %v461, 0.0
        %v492 = vand.u32 %v461, 2147483648
        %v493 = vsel %vm491, %v492, %v490
        %v494 = vrsqrt.pop %v462
        %v495 = vmul.f32 %v462, %v494
        %vm496 = vcmp.eq.f32.partialorder %v462, inf
        %v497 = vsel %vm496, %v462, %v495
        %vm498 = vcmp.eq.f32.partialorder %v462, 0.0
        %v499 = vand.u32 %v462, 2147483648
        %v500 = vsel %vm498, %v499, %v497
        %v501 = vrsqrt.pop %v463
        %v502 = vmul.f32 %v463, %v501
        %vm503 = vcmp.eq.f32.partialorder %v463, inf
        %v504 = vsel %vm503, %v463, %v502
        %vm505 = vcmp.eq.f32.partialorder %v463, 0.0
        %v506 = vand.u32 %v463, 2147483648
        %v507 = vsel %vm505, %v506, %v504
        %v508 = vrsqrt.pop %v464
        %v509 = vmul.f32 %v464, %v508
        %vm510 = vcmp.eq.f32.partialorder %v464, inf
        %v511 = vsel %vm510, %v464, %v509
        %vm512 = vcmp.eq.f32.partialorder %v464, 0.0
        %v513 = vand.u32 %v464, 2147483648
        %v514 = vsel %vm512, %v513, %v511
        %v515 = vrsqrt.pop %v465
        %v516 = vmul.f32 %v465, %v515
        %vm517 = vcmp.eq.f32.partialorder %v465, inf
        %v518 = vsel %vm517, %v465, %v516
        %vm519 = vcmp.eq.f32.partialorder %v465, 0.0
        %v520 = vand.u32 %v465, 2147483648
        %v521 = vsel %vm519, %v520, %v518
        %v522 = vsub.f32 1.0, %v472
        %v523 = vsub.f32 1.0, %v479
        %v524 = vsub.f32 1.0, %v486
        %v525 = vsub.f32 1.0, %v493
        %v526 = vsub.f32 1.0, %v500
        %v527 = vsub.f32 1.0, %v507
        %v528 = vsub.f32 1.0, %v514
        %v529 = vsub.f32 1.0, %v521
        %v530 = vmax.f32 %v522, 0.0
        %v531 = vmax.f32 %v523, 0.0
        %v532 = vmax.f32 %v524, 0.0
        %v533 = vmax.f32 %v525, 0.0
        %v534 = vmax.f32 %v526, 0.0
        %v535 = vmax.f32 %v527, 0.0
        %v536 = vmax.f32 %v528, 0.0
        %v537 = vmax.f32 %v529, 0.0
        %v538 = vld [vmem:[%s279] sm:$0xff]
        %v539 = vld [vmem:[%s279 + $0x8] sm:$0xff]
        %v540 = vld [vmem:[%s279 + $0x10] sm:$0xff]
        %v541 = vld [vmem:[%s279 + $0x18] sm:$0xff]
        %v542 = vld [vmem:[%s279 + $0x20] sm:$0xff]
        %v543 = vld [vmem:[%s279 + $0x28] sm:$0xff]
        %v544 = vld [vmem:[%s279 + $0x30] sm:$0xff]
        %v545 = vld [vmem:[%s279 + $0x38] sm:$0xff]
        %v546 = vmul.f32 %v530, %v538
        %v547 = vmul.f32 %v531, %v539
        %v548 = vmul.f32 %v532, %v540
        %v549 = vmul.f32 %v533, %v541
        %v550 = vmul.f32 %v534, %v542
        %v551 = vmul.f32 %v535, %v543
        %v552 = vmul.f32 %v536, %v544
        %v553 = vmul.f32 %v537, %v545
        %v554 = vpack.c.bf16 %v550, %v546
        %v555 = vpack.c.bf16 %v551, %v547
        %v556 = vpack.c.bf16 %v552, %v548
        %v557 = vpack.c.bf16 %v553, %v549
        %558 = vst [vmem:[#allocation2] sm:$0xff] %v554
        %559 = vst [vmem:[#allocation2 + $0x8] sm:$0xff] %v555
        %560 = vst [vmem:[#allocation2 + $0x10] sm:$0xff] %v556
        %561 = vst [vmem:[#allocation2 + $0x18] sm:$0xff] %v557
        %v562 = vld [vmem:[%s279 + $0x40] sm:$0xff]
        %v563 = vld [vmem:[%s279 + $0x48] sm:$0xff]
        %v564 = vld [vmem:[%s279 + $0x50] sm:$0xff]
        %v565 = vld [vmem:[%s279 + $0x58] sm:$0xff]
        %v566 = vld [vmem:[%s279 + $0x60] sm:$0xff]
        %v567 = vld [vmem:[%s279 + $0x68] sm:$0xff]
        %v568 = vld [vmem:[%s279 + $0x70] sm:$0xff]
        %v569 = vld [vmem:[%s279 + $0x78] sm:$0xff]
        %v570 = vmul.f32 %v530, %v562
        %v571 = vmul.f32 %v531, %v563
        %v572 = vmul.f32 %v532, %v564
        %v573 = vmul.f32 %v533, %v565
        %v574 = vmul.f32 %v534, %v566
        %v575 = vmul.f32 %v535, %v567
        %v576 = vmul.f32 %v536, %v568
        %v577 = vmul.f32 %v537, %v569
        %v578 = vpack.c.bf16 %v574, %v570
        %v579 = vpack.c.bf16 %v575, %v571
        %v580 = vpack.c.bf16 %v576, %v572
        %v581 = vpack.c.bf16 %v577, %v573
        %582 = vst [vmem:[#allocation2 + $0x20] sm:$0xff] %v578
        %583 = vst [vmem:[#allocation2 + $0x28] sm:$0xff] %v579
        %584 = vst [vmem:[#allocation2 + $0x30] sm:$0xff] %v580
        %585 = vst [vmem:[#allocation2 + $0x38] sm:$0xff] %v581
        %v586 = vld [vmem:[%s279 + $0x80] sm:$0xff]
        %v587 = vld [vmem:[%s279 + $0x88] sm:$0xff]
        %v588 = vld [vmem:[%s279 + $0x90] sm:$0xff]
        %v589 = vld [vmem:[%s279 + $0x98] sm:$0xff]
        %v590 = vld [vmem:[%s279 + $0xa0] sm:$0xff]
        %v591 = vld [vmem:[%s279 + $0xa8] sm:$0xff]
        %v592 = vld [vmem:[%s279 + $0xb0] sm:$0xff]
        %v593 = vld [vmem:[%s279 + $0xb8] sm:$0xff]
        %v594 = vmul.f32 %v530, %v586
        %v595 = vmul.f32 %v531, %v587
        %v596 = vmul.f32 %v532, %v588
        %v597 = vmul.f32 %v533, %v589
        %v598 = vmul.f32 %v534, %v590
        %v599 = vmul.f32 %v535, %v591
        %v600 = vmul.f32 %v536, %v592
        %v601 = vmul.f32 %v537, %v593
        %v602 = vpack.c.bf16 %v598, %v594
        %v603 = vpack.c.bf16 %v599, %v595
        %v604 = vpack.c.bf16 %v600, %v596
        %v605 = vpack.c.bf16 %v601, %v597
        %606 = vst [vmem:[#allocation2 + $0x40] sm:$0xff] %v602
        %607 = vst [vmem:[#allocation2 + $0x48] sm:$0xff] %v603
        %608 = vst [vmem:[#allocation2 + $0x50] sm:$0xff] %v604
        %609 = vst [vmem:[#allocation2 + $0x58] sm:$0xff] %v605
        %v610 = vld [vmem:[%s279 + $0xc0] sm:$0xff]
        %v611 = vld [vmem:[%s279 + $0xc8] sm:$0xff]
        %v612 = vld [vmem:[%s279 + $0xd0] sm:$0xff]
        %v613 = vld [vmem:[%s279 + $0xd8] sm:$0xff]
        %v614 = vld [vmem:[%s279 + $0xe0] sm:$0xff]
        %v615 = vld [vmem:[%s279 + $0xe8] sm:$0xff]
        %v616 = vld [vmem:[%s279 + $0xf0] sm:$0xff]
        %v617 = vld [vmem:[%s279 + $0xf8] sm:$0xff]
        %v618 = vmul.f32 %v530, %v610
        %v619 = vmul.f32 %v531, %v611
        %v620 = vmul.f32 %v532, %v612
        %v621 = vmul.f32 %v533, %v613
        %v622 = vmul.f32 %v534, %v614
        %v623 = vmul.f32 %v535, %v615
        %v624 = vmul.f32 %v536, %v616
        %v625 = vmul.f32 %v537, %v617
        %v626 = vpack.c.bf16 %v622, %v618
        %v627 = vpack.c.bf16 %v623, %v619
        %v628 = vpack.c.bf16 %v624, %v620
        %v629 = vpack.c.bf16 %v625, %v621
        %630 = vst [vmem:[#allocation2 + $0x60] sm:$0xff] %v626
        %631 = vst [vmem:[#allocation2 + $0x68] sm:$0xff] %v627
        %632 = vst [vmem:[#allocation2 + $0x70] sm:$0xff] %v628
        %633 = vst [vmem:[#allocation2 + $0x78] sm:$0xff] %v629
        %s634 = sld [smem:[#allocation3 + $0x80]]
        %v635 = vld [vmem:[%s270] sm:$0xff]
        %v636 = vld [vmem:[%s270 + $0x8] sm:$0xff]
        %v637 = vld [vmem:[%s270 + $0x10] sm:$0xff]
        %v638 = vld [vmem:[%s270 + $0x18] sm:$0xff]
        %v639 = vld [vmem:[%s270 + $0x20] sm:$0xff]
        %v640 = vld [vmem:[%s270 + $0x28] sm:$0xff]
        %v641 = vld [vmem:[%s270 + $0x30] sm:$0xff]
        %v642 = vld [vmem:[%s270 + $0x38] sm:$0xff]
        %v643 = vstv %s634
        %v644 = vmul.f32 %v643, %v635
        %v645 = vmul.f32 %v643, %v636
        %v646 = vmul.f32 %v643, %v637
        %v647 = vmul.f32 %v643, %v638
        %v648 = vmul.f32 %v643, %v639
        %v649 = vmul.f32 %v643, %v640
        %v650 = vmul.f32 %v643, %v641
        %v651 = vmul.f32 %v643, %v642
        %v652 = vadd.f32 %v386, %v644
        %v653 = vadd.f32 %v387, %v645
        %v654 = vadd.f32 %v388, %v646
        %v655 = vadd.f32 %v389, %v647
        %v656 = vadd.f32 %v390, %v648
        %v657 = vadd.f32 %v391, %v649
        %v658 = vadd.f32 %v392, %v650
        %v659 = vadd.f32 %v393, %v651
        %s660 = sld [smem:[#allocation3 + $0x81]]
        %v661 = vld [vmem:[%s270 + $0x40] sm:$0xff]
        %v662 = vld [vmem:[%s270 + $0x48] sm:$0xff]
        %v663 = vld [vmem:[%s270 + $0x50] sm:$0xff]
        %v664 = vld [vmem:[%s270 + $0x58] sm:$0xff]
        %v665 = vld [vmem:[%s270 + $0x60] sm:$0xff]
        %v666 = vld [vmem:[%s270 + $0x68] sm:$0xff]
        %v667 = vld [vmem:[%s270 + $0x70] sm:$0xff]
        %v668 = vld [vmem:[%s270 + $0x78] sm:$0xff]
        %v669 = vstv %s660
        %v670 = vmul.f32 %v669, %v661
        %v671 = vmul.f32 %v669, %v662
        %v672 = vmul.f32 %v669, %v663
        %v673 = vmul.f32 %v669, %v664
        %v674 = vmul.f32 %v669, %v665
        %v675 = vmul.f32 %v669, %v666
        %v676 = vmul.f32 %v669, %v667
        %v677 = vmul.f32 %v669, %v668
        %v678 = vadd.f32 %v652, %v670
        %v679 = vadd.f32 %v653, %v671
        %v680 = vadd.f32 %v654, %v672
        %v681 = vadd.f32 %v655, %v673
        %v682 = vadd.f32 %v656, %v674
        %v683 = vadd.f32 %v657, %v675
        %v684 = vadd.f32 %v658, %v676
        %v685 = vadd.f32 %v659, %v677
        %s686 = sld [smem:[#allocation3 + $0x82]]
        %v687 = vld [vmem:[%s270 + $0x80] sm:$0xff]
        %v688 = vld [vmem:[%s270 + $0x88] sm:$0xff]
        %v689 = vld [vmem:[%s270 + $0x90] sm:$0xff]
        %v690 = vld [vmem:[%s270 + $0x98] sm:$0xff]
        %v691 = vld [vmem:[%s270 + $0xa0] sm:$0xff]
        %v692 = vld [vmem:[%s270 + $0xa8] sm:$0xff]
        %v693 = vld [vmem:[%s270 + $0xb0] sm:$0xff]
        %v694 = vld [vmem:[%s270 + $0xb8] sm:$0xff]
        %v695 = vstv %s686
        %v696 = vmul.f32 %v695, %v687
        %v697 = vmul.f32 %v695, %v688
        %v698 = vmul.f32 %v695, %v689
        %v699 = vmul.f32 %v695, %v690
        %v700 = vmul.f32 %v695, %v691
        %v701 = vmul.f32 %v695, %v692
        %v702 = vmul.f32 %v695, %v693
        %v703 = vmul.f32 %v695, %v694
        %v704 = vadd.f32 %v678, %v696
        %v705 = vadd.f32 %v679, %v697
        %v706 = vadd.f32 %v680, %v698
        %v707 = vadd.f32 %v681, %v699
        %v708 = vadd.f32 %v682, %v700
        %v709 = vadd.f32 %v683, %v701
        %v710 = vadd.f32 %v684, %v702
        %v711 = vadd.f32 %v685, %v703
        %s712 = sld [smem:[#allocation3 + $0x83]]
        %v713 = vstv %s712
        %v714 = vadd.f32 %v704, %v713
        %v715 = vadd.f32 %v705, %v713
        %v716 = vadd.f32 %v706, %v713
        %v717 = vadd.f32 %v707, %v713
        %v718 = vadd.f32 %v708, %v713
        %v719 = vadd.f32 %v709, %v713
        %v720 = vadd.f32 %v710, %v713
        %v721 = vadd.f32 %v711, %v713
        %v722 = vmax.f32 %v714, 0.0
        %v723 = vmax.f32 %v715, 0.0
        %v724 = vmax.f32 %v716, 0.0
        %v725 = vmax.f32 %v717, 0.0
        %v726 = vmax.f32 %v718, 0.0
        %v727 = vmax.f32 %v719, 0.0
        %v728 = vmax.f32 %v720, 0.0
        %v729 = vmax.f32 %v721, 0.0
        %v730 = vrsqrt.pop %v722
        %v731 = vmul.f32 %v722, %v730
        %vm732 = vcmp.eq.f32.partialorder %v722, inf
        %v733 = vsel %vm732, %v722, %v731
        %vm734 = vcmp.eq.f32.partialorder %v722, 0.0
        %v735 = vand.u32 %v722, 2147483648
        %v736 = vsel %vm734, %v735, %v733
        %v737 = vrsqrt.pop %v723
        %v738 = vmul.f32 %v723, %v737
        %vm739 = vcmp.eq.f32.partialorder %v723, inf
        %v740 = vsel %vm739, %v723, %v738
        %vm741 = vcmp.eq.f32.partialorder %v723, 0.0
        %v742 = vand.u32 %v723, 2147483648
        %v743 = vsel %vm741, %v742, %v740
        %v744 = vrsqrt.pop %v724
        %v745 = vmul.f32 %v724, %v744
        %vm746 = vcmp.eq.f32.partialorder %v724, inf
        %v747 = vsel %vm746, %v724, %v745
        %vm748 = vcmp.eq.f32.partialorder %v724, 0.0
        %v749 = vand.u32 %v724, 2147483648
        %v750 = vsel %vm748, %v749, %v747
        %v751 = vrsqrt.pop %v725
        %v752 = vmul.f32 %v725, %v751
        %vm753 = vcmp.eq.f32.partialorder %v725, inf
        %v754 = vsel %vm753, %v725, %v752
        %vm755 = vcmp.eq.f32.partialorder %v725, 0.0
        %v756 = vand.u32 %v725, 2147483648
        %v757 = vsel %vm755, %v756, %v754
        %v758 = vrsqrt.pop %v726
        %v759 = vmul.f32 %v726, %v758
        %vm760 = vcmp.eq.f32.partialorder %v726, inf
        %v761 = vsel %vm760, %v726, %v759
        %vm762 = vcmp.eq.f32.partialorder %v726, 0.0
        %v763 = vand.u32 %v726, 2147483648
        %v764 = vsel %vm762, %v763, %v761
        %v765 = vrsqrt.pop %v727
        %v766 = vmul.f32 %v727, %v765
        %vm767 = vcmp.eq.f32.partialorder %v727, inf
        %v768 = vsel %vm767, %v727, %v766
        %vm769 = vcmp.eq.f32.partialorder %v727, 0.0
        %v770 = vand.u32 %v727, 2147483648
        %v771 = vsel %vm769, %v770, %v768
        %v772 = vrsqrt.pop %v728
        %v773 = vmul.f32 %v728, %v772
        %vm774 = vcmp.eq.f32.partialorder %v728, inf
        %v775 = vsel %vm774, %v728, %v773
        %vm776 = vcmp.eq.f32.partialorder %v728, 0.0
        %v777 = vand.u32 %v728, 2147483648
        %v778 = vsel %vm776, %v777, %v775
        %v779 = vrsqrt.pop %v729
        %v780 = vmul.f32 %v729, %v779
        %vm781 = vcmp.eq.f32.partialorder %v729, inf
        %v782 = vsel %vm781, %v729, %v780
        %vm783 = vcmp.eq.f32.partialorder %v729, 0.0
        %v784 = vand.u32 %v729, 2147483648
        %v785 = vsel %vm783, %v784, %v782
        %v786 = vsub.f32 1.0, %v736
        %v787 = vsub.f32 1.0, %v743
        %v788 = vsub.f32 1.0, %v750
        %v789 = vsub.f32 1.0, %v757
        %v790 = vsub.f32 1.0, %v764
        %v791 = vsub.f32 1.0, %v771
        %v792 = vsub.f32 1.0, %v778
        %v793 = vsub.f32 1.0, %v785
        %v794 = vmax.f32 %v786, 0.0
        %v795 = vmax.f32 %v787, 0.0
        %v796 = vmax.f32 %v788, 0.0
        %v797 = vmax.f32 %v789, 0.0
        %v798 = vmax.f32 %v790, 0.0
        %v799 = vmax.f32 %v791, 0.0
        %v800 = vmax.f32 %v792, 0.0
        %v801 = vmax.f32 %v793, 0.0
        %v802 = vld [vmem:[%s279] sm:$0xff]
        %v803 = vld [vmem:[%s279 + $0x8] sm:$0xff]
        %v804 = vld [vmem:[%s279 + $0x10] sm:$0xff]
        %v805 = vld [vmem:[%s279 + $0x18] sm:$0xff]
        %v806 = vld [vmem:[%s279 + $0x20] sm:$0xff]
        %v807 = vld [vmem:[%s279 + $0x28] sm:$0xff]
        %v808 = vld [vmem:[%s279 + $0x30] sm:$0xff]
        %v809 = vld [vmem:[%s279 + $0x38] sm:$0xff]
        %v810 = vmul.f32 %v794, %v802
        %v811 = vmul.f32 %v795, %v803
        %v812 = vmul.f32 %v796, %v804
        %v813 = vmul.f32 %v797, %v805
        %v814 = vmul.f32 %v798, %v806
        %v815 = vmul.f32 %v799, %v807
        %v816 = vmul.f32 %v800, %v808
        %v817 = vmul.f32 %v801, %v809
        %v818 = vpack.c.bf16 %v814, %v810
        %v819 = vpack.c.bf16 %v815, %v811
        %v820 = vpack.c.bf16 %v816, %v812
        %v821 = vpack.c.bf16 %v817, %v813
        %822 = vst [vmem:[#allocation2 + $0x80] sm:$0xff] %v818
        %823 = vst [vmem:[#allocation2 + $0x88] sm:$0xff] %v819
        %824 = vst [vmem:[#allocation2 + $0x90] sm:$0xff] %v820
        %825 = vst [vmem:[#allocation2 + $0x98] sm:$0xff] %v821
        %v826 = vld [vmem:[%s279 + $0x40] sm:$0xff]
        %v827 = vld [vmem:[%s279 + $0x48] sm:$0xff]
        %v828 = vld [vmem:[%s279 + $0x50] sm:$0xff]
        %v829 = vld [vmem:[%s279 + $0x58] sm:$0xff]
        %v830 = vld [vmem:[%s279 + $0x60] sm:$0xff]
        %v831 = vld [vmem:[%s279 + $0x68] sm:$0xff]
        %v832 = vld [vmem:[%s279 + $0x70] sm:$0xff]
        %v833 = vld [vmem:[%s279 + $0x78] sm:$0xff]
        %v834 = vmul.f32 %v794, %v826
        %v835 = vmul.f32 %v795, %v827
        %v836 = vmul.f32 %v796, %v828
        %v837 = vmul.f32 %v797, %v829
        %v838 = vmul.f32 %v798, %v830
        %v839 = vmul.f32 %v799, %v831
        %v840 = vmul.f32 %v800, %v832
        %v841 = vmul.f32 %v801, %v833
        %v842 = vpack.c.bf16 %v838, %v834
        %v843 = vpack.c.bf16 %v839, %v835
        %v844 = vpack.c.bf16 %v840, %v836
        %v845 = vpack.c.bf16 %v841, %v837
        %846 = vst [vmem:[#allocation2 + $0xa0] sm:$0xff] %v842
        %847 = vst [vmem:[#allocation2 + $0xa8] sm:$0xff] %v843
        %848 = vst [vmem:[#allocation2 + $0xb0] sm:$0xff] %v844
        %849 = vst [vmem:[#allocation2 + $0xb8] sm:$0xff] %v845
        %v850 = vld [vmem:[%s279 + $0x80] sm:$0xff]
        %v851 = vld [vmem:[%s279 + $0x88] sm:$0xff]
        %v852 = vld [vmem:[%s279 + $0x90] sm:$0xff]
        %v853 = vld [vmem:[%s279 + $0x98] sm:$0xff]
        %v854 = vld [vmem:[%s279 + $0xa0] sm:$0xff]
        %v855 = vld [vmem:[%s279 + $0xa8] sm:$0xff]
        %v856 = vld [vmem:[%s279 + $0xb0] sm:$0xff]
        %v857 = vld [vmem:[%s279 + $0xb8] sm:$0xff]
        %v858 = vmul.f32 %v794, %v850
        %v859 = vmul.f32 %v795, %v851
        %v860 = vmul.f32 %v796, %v852
        %v861 = vmul.f32 %v797, %v853
        %v862 = vmul.f32 %v798, %v854
        %v863 = vmul.f32 %v799, %v855
        %v864 = vmul.f32 %v800, %v856
        %v865 = vmul.f32 %v801, %v857
        %v866 = vpack.c.bf16 %v862, %v858
        %v867 = vpack.c.bf16 %v863, %v859
        %v868 = vpack.c.bf16 %v864, %v860
        %v869 = vpack.c.bf16 %v865, %v861
        %870 = vst [vmem:[#allocation2 + $0xc0] sm:$0xff] %v866
        %871 = vst [vmem:[#allocation2 + $0xc8] sm:$0xff] %v867
        %872 = vst [vmem:[#allocation2 + $0xd0] sm:$0xff] %v868
        %873 = vst [vmem:[#allocation2 + $0xd8] sm:$0xff] %v869
        %v874 = vld [vmem:[%s279 + $0xc0] sm:$0xff]
        %v875 = vld [vmem:[%s279 + $0xc8] sm:$0xff]
        %v876 = vld [vmem:[%s279 + $0xd0] sm:$0xff]
        %v877 = vld [vmem:[%s279 + $0xd8] sm:$0xff]
        %v878 = vld [vmem:[%s279 + $0xe0] sm:$0xff]
        %v879 = vld [vmem:[%s279 + $0xe8] sm:$0xff]
        %v880 = vld [vmem:[%s279 + $0xf0] sm:$0xff]
        %v881 = vld [vmem:[%s279 + $0xf8] sm:$0xff]
        %v882 = vmul.f32 %v794, %v874
        %v883 = vmul.f32 %v795, %v875
        %v884 = vmul.f32 %v796, %v876
        %v885 = vmul.f32 %v797, %v877
        %v886 = vmul.f32 %v798, %v878
        %v887 = vmul.f32 %v799, %v879
        %v888 = vmul.f32 %v800, %v880
        %v889 = vmul.f32 %v801, %v881
        %v890 = vpack.c.bf16 %v886, %v882
        %v891 = vpack.c.bf16 %v887, %v883
        %v892 = vpack.c.bf16 %v888, %v884
        %v893 = vpack.c.bf16 %v889, %v885
        %894 = vst [vmem:[#allocation2 + $0xe0] sm:$0xff] %v890
        %895 = vst [vmem:[#allocation2 + $0xe8] sm:$0xff] %v891
        %896 = vst [vmem:[#allocation2 + $0xf0] sm:$0xff] %v892
        %897 = vst [vmem:[#allocation2 + $0xf8] sm:$0xff] %v893
        %s898 = sld [smem:[#allocation3 + $0x100]]
        %v899 = vld [vmem:[%s270] sm:$0xff]
        %v900 = vld [vmem:[%s270 + $0x8] sm:$0xff]
        %v901 = vld [vmem:[%s270 + $0x10] sm:$0xff]
        %v902 = vld [vmem:[%s270 + $0x18] sm:$0xff]
        %v903 = vld [vmem:[%s270 + $0x20] sm:$0xff]
        %v904 = vld [vmem:[%s270 + $0x28] sm:$0xff]
        %v905 = vld [vmem:[%s270 + $0x30] sm:$0xff]
        %v906 = vld [vmem:[%s270 + $0x38] sm:$0xff]
        %v907 = vstv %s898
        %v908 = vmul.f32 %v907, %v899
        %v909 = vmul.f32 %v907, %v900
        %v910 = vmul.f32 %v907, %v901
        %v911 = vmul.f32 %v907, %v902
        %v912 = vmul.f32 %v907, %v903
        %v913 = vmul.f32 %v907, %v904
        %v914 = vmul.f32 %v907, %v905
        %v915 = vmul.f32 %v907, %v906
        %v916 = vadd.f32 %v386, %v908
        %v917 = vadd.f32 %v387, %v909
        %v918 = vadd.f32 %v388, %v910
        %v919 = vadd.f32 %v389, %v911
        %v920 = vadd.f32 %v390, %v912
        %v921 = vadd.f32 %v391, %v913
        %v922 = vadd.f32 %v392, %v914
        %v923 = vadd.f32 %v393, %v915
        %s924 = sld [smem:[#allocation3 + $0x101]]
        %v925 = vld [vmem:[%s270 + $0x40] sm:$0xff]
        %v926 = vld [vmem:[%s270 + $0x48] sm:$0xff]
        %v927 = vld [vmem:[%s270 + $0x50] sm:$0xff]
        %v928 = vld [vmem:[%s270 + $0x58] sm:$0xff]
        %v929 = vld [vmem:[%s270 + $0x60] sm:$0xff]
        %v930 = vld [vmem:[%s270 + $0x68] sm:$0xff]
        %v931 = vld [vmem:[%s270 + $0x70] sm:$0xff]
        %v932 = vld [vmem:[%s270 + $0x78] sm:$0xff]
        %v933 = vstv %s924
        %v934 = vmul.f32 %v933, %v925
        %v935 = vmul.f32 %v933, %v926
        %v936 = vmul.f32 %v933, %v927
        %v937 = vmul.f32 %v933, %v928
        %v938 = vmul.f32 %v933, %v929
        %v939 = vmul.f32 %v933, %v930
        %v940 = vmul.f32 %v933, %v931
        %v941 = vmul.f32 %v933, %v932
        %v942 = vadd.f32 %v916, %v934
        %v943 = vadd.f32 %v917, %v935
        %v944 = vadd.f32 %v918, %v936
        %v945 = vadd.f32 %v919, %v937
        %v946 = vadd.f32 %v920, %v938
        %v947 = vadd.f32 %v921, %v939
        %v948 = vadd.f32 %v922, %v940
        %v949 = vadd.f32 %v923, %v941
        %s950 = sld [smem:[#allocation3 + $0x102]]
        %v951 = vld [vmem:[%s270 + $0x80] sm:$0xff]
        %v952 = vld [vmem:[%s270 + $0x88] sm:$0xff]
        %v953 = vld [vmem:[%s270 + $0x90] sm:$0xff]
        %v954 = vld [vmem:[%s270 + $0x98] sm:$0xff]
        %v955 = vld [vmem:[%s270 + $0xa0] sm:$0xff]
        %v956 = vld [vmem:[%s270 + $0xa8] sm:$0xff]
        %v957 = vld [vmem:[%s270 + $0xb0] sm:$0xff]
        %v958 = vld [vmem:[%s270 + $0xb8] sm:$0xff]
        %v959 = vstv %s950
        %v960 = vmul.f32 %v959, %v951
        %v961 = vmul.f32 %v959, %v952
        %v962 = vmul.f32 %v959, %v953
        %v963 = vmul.f32 %v959, %v954
        %v964 = vmul.f32 %v959, %v955
        %v965 = vmul.f32 %v959, %v956
        %v966 = vmul.f32 %v959, %v957
        %v967 = vmul.f32 %v959, %v958
        %v968 = vadd.f32 %v942, %v960
        %v969 = vadd.f32 %v943, %v961
        %v970 = vadd.f32 %v944, %v962
        %v971 = vadd.f32 %v945, %v963
        %v972 = vadd.f32 %v946, %v964
        %v973 = vadd.f32 %v947, %v965
        %v974 = vadd.f32 %v948, %v966
        %v975 = vadd.f32 %v949, %v967
        %s976 = sld [smem:[#allocation3 + $0x103]]
        %v977 = vstv %s976
        %v978 = vadd.f32 %v968, %v977
        %v979 = vadd.f32 %v969, %v977
        %v980 = vadd.f32 %v970, %v977
        %v981 = vadd.f32 %v971, %v977
        %v982 = vadd.f32 %v972, %v977
        %v983 = vadd.f32 %v973, %v977
        %v984 = vadd.f32 %v974, %v977
        %v985 = vadd.f32 %v975, %v977
        %v986 = vmax.f32 %v978, 0.0
        %v987 = vmax.f32 %v979, 0.0
        %v988 = vmax.f32 %v980, 0.0
        %v989 = vmax.f32 %v981, 0.0
        %v990 = vmax.f32 %v982, 0.0
        %v991 = vmax.f32 %v983, 0.0
        %v992 = vmax.f32 %v984, 0.0
        %v993 = vmax.f32 %v985, 0.0
        %v994 = vrsqrt.pop %v986
        %v995 = vmul.f32 %v986, %v994
        %vm996 = vcmp.eq.f32.partialorder %v986, inf
        %v997 = vsel %vm996, %v986, %v995
        %vm998 = vcmp.eq.f32.partialorder %v986, 0.0
        %v999 = vand.u32 %v986, 2147483648
        %v1000 = vsel %vm998, %v999, %v997
        %v1001 = vrsqrt.pop %v987
        %v1002 = vmul.f32 %v987, %v1001
        %vm1003 = vcmp.eq.f32.partialorder %v987, inf
        %v1004 = vsel %vm1003, %v987, %v1002
        %vm1005 = vcmp.eq.f32.partialorder %v987, 0.0
        %v1006 = vand.u32 %v987, 2147483648
        %v1007 = vsel %vm1005, %v1006, %v1004
        %v1008 = vrsqrt.pop %v988
        %v1009 = vmul.f32 %v988, %v1008
        %vm1010 = vcmp.eq.f32.partialorder %v988, inf
        %v1011 = vsel %vm1010, %v988, %v1009
        %vm1012 = vcmp.eq.f32.partialorder %v988, 0.0
        %v1013 = vand.u32 %v988, 2147483648
        %v1014 = vsel %vm1012, %v1013, %v1011
        %v1015 = vrsqrt.pop %v989
        %v1016 = vmul.f32 %v989, %v1015
        %vm1017 = vcmp.eq.f32.partialorder %v989, inf
        %v1018 = vsel %vm1017, %v989, %v1016
        %vm1019 = vcmp.eq.f32.partialorder %v989, 0.0
        %v1020 = vand.u32 %v989, 2147483648
        %v1021 = vsel %vm1019, %v1020, %v1018
        %v1022 = vrsqrt.pop %v990
        %v1023 = vmul.f32 %v990, %v1022
        %vm1024 = vcmp.eq.f32.partialorder %v990, inf
        %v1025 = vsel %vm1024, %v990, %v1023
        %vm1026 = vcmp.eq.f32.partialorder %v990, 0.0
        %v1027 = vand.u32 %v990, 2147483648
        %v1028 = vsel %vm1026, %v1027, %v1025
        %v1029 = vrsqrt.pop %v991
        %v1030 = vmul.f32 %v991, %v1029
        %vm1031 = vcmp.eq.f32.partialorder %v991, inf
        %v1032 = vsel %vm1031, %v991, %v1030
        %vm1033 = vcmp.eq.f32.partialorder %v991, 0.0
        %v1034 = vand.u32 %v991, 2147483648
        %v1035 = vsel %vm1033, %v1034, %v1032
        %v1036 = vrsqrt.pop %v992
        %v1037 = vmul.f32 %v992, %v1036
        %vm1038 = vcmp.eq.f32.partialorder %v992, inf
        %v1039 = vsel %vm1038, %v992, %v1037
        %vm1040 = vcmp.eq.f32.partialorder %v992, 0.0
        %v1041 = vand.u32 %v992, 2147483648
        %v1042 = vsel %vm1040, %v1041, %v1039
        %v1043 = vrsqrt.pop %v993
        %v1044 = vmul.f32 %v993, %v1043
        %vm1045 = vcmp.eq.f32.partialorder %v993, inf
        %v1046 = vsel %vm1045, %v993, %v1044
        %vm1047 = vcmp.eq.f32.partialorder %v993, 0.0
        %v1048 = vand.u32 %v993, 2147483648
        %v1049 = vsel %vm1047, %v1048, %v1046
        %v1050 = vsub.f32 1.0, %v1000
        %v1051 = vsub.f32 1.0, %v1007
        %v1052 = vsub.f32 1.0, %v1014
        %v1053 = vsub.f32 1.0, %v1021
        %v1054 = vsub.f32 1.0, %v1028
        %v1055 = vsub.f32 1.0, %v1035
        %v1056 = vsub.f32 1.0, %v1042
        %v1057 = vsub.f32 1.0, %v1049
        %v1058 = vmax.f32 %v1050, 0.0
        %v1059 = vmax.f32 %v1051, 0.0
        %v1060 = vmax.f32 %v1052, 0.0
        %v1061 = vmax.f32 %v1053, 0.0
        %v1062 = vmax.f32 %v1054, 0.0
        %v1063 = vmax.f32 %v1055, 0.0
        %v1064 = vmax.f32 %v1056, 0.0
        %v1065 = vmax.f32 %v1057, 0.0
        %v1066 = vld [vmem:[%s279] sm:$0xff]
        %v1067 = vld [vmem:[%s279 + $0x8] sm:$0xff]
        %v1068 = vld [vmem:[%s279 + $0x10] sm:$0xff]
        %v1069 = vld [vmem:[%s279 + $0x18] sm:$0xff]
        %v1070 = vld [vmem:[%s279 + $0x20] sm:$0xff]
        %v1071 = vld [vmem:[%s279 + $0x28] sm:$0xff]
        %v1072 = vld [vmem:[%s279 + $0x30] sm:$0xff]
        %v1073 = vld [vmem:[%s279 + $0x38] sm:$0xff]
        %v1074 = vmul.f32 %v1058, %v1066
        %v1075 = vmul.f32 %v1059, %v1067
        %v1076 = vmul.f32 %v1060, %v1068
        %v1077 = vmul.f32 %v1061, %v1069
        %v1078 = vmul.f32 %v1062, %v1070
        %v1079 = vmul.f32 %v1063, %v1071
        %v1080 = vmul.f32 %v1064, %v1072
        %v1081 = vmul.f32 %v1065, %v1073
        %v1082 = vpack.c.bf16 %v1078, %v1074
        %v1083 = vpack.c.bf16 %v1079, %v1075
        %v1084 = vpack.c.bf16 %v1080, %v1076
        %v1085 = vpack.c.bf16 %v1081, %v1077
        %1086 = vst [vmem:[#allocation2 + $0x100] sm:$0xff] %v1082
        %1087 = vst [vmem:[#allocation2 + $0x108] sm:$0xff] %v1083
        %1088 = vst [vmem:[#allocation2 + $0x110] sm:$0xff] %v1084
        %1089 = vst [vmem:[#allocation2 + $0x118] sm:$0xff] %v1085
        %v1090 = vld [vmem:[%s279 + $0x40] sm:$0xff]
        %v1091 = vld [vmem:[%s279 + $0x48] sm:$0xff]
        %v1092 = vld [vmem:[%s279 + $0x50] sm:$0xff]
        %v1093 = vld [vmem:[%s279 + $0x58] sm:$0xff]
        %v1094 = vld [vmem:[%s279 + $0x60] sm:$0xff]
        %v1095 = vld [vmem:[%s279 + $0x68] sm:$0xff]
        %v1096 = vld [vmem:[%s279 + $0x70] sm:$0xff]
        %v1097 = vld [vmem:[%s279 + $0x78] sm:$0xff]
        %v1098 = vmul.f32 %v1058, %v1090
        %v1099 = vmul.f32 %v1059, %v1091
        %v1100 = vmul.f32 %v1060, %v1092
        %v1101 = vmul.f32 %v1061, %v1093
        %v1102 = vmul.f32 %v1062, %v1094
        %v1103 = vmul.f32 %v1063, %v1095
        %v1104 = vmul.f32 %v1064, %v1096
        %v1105 = vmul.f32 %v1065, %v1097
        %v1106 = vpack.c.bf16 %v1102, %v1098
        %v1107 = vpack.c.bf16 %v1103, %v1099
        %v1108 = vpack.c.bf16 %v1104, %v1100
        %v1109 = vpack.c.bf16 %v1105, %v1101
        %1110 = vst [vmem:[#allocation2 + $0x120] sm:$0xff] %v1106
        %1111 = vst [vmem:[#allocation2 + $0x128] sm:$0xff] %v1107
        %1112 = vst [vmem:[#allocation2 + $0x130] sm:$0xff] %v1108
        %1113 = vst [vmem:[#allocation2 + $0x138] sm:$0xff] %v1109
        %v1114 = vld [vmem:[%s279 + $0x80] sm:$0xff]
        %v1115 = vld [vmem:[%s279 + $0x88] sm:$0xff]
        %v1116 = vld [vmem:[%s279 + $0x90] sm:$0xff]
        %v1117 = vld [vmem:[%s279 + $0x98] sm:$0xff]
        %v1118 = vld [vmem:[%s279 + $0xa0] sm:$0xff]
        %v1119 = vld [vmem:[%s279 + $0xa8] sm:$0xff]
        %v1120 = vld [vmem:[%s279 + $0xb0] sm:$0xff]
        %v1121 = vld [vmem:[%s279 + $0xb8] sm:$0xff]
        %v1122 = vmul.f32 %v1058, %v1114
        %v1123 = vmul.f32 %v1059, %v1115
        %v1124 = vmul.f32 %v1060, %v1116
        %v1125 = vmul.f32 %v1061, %v1117
        %v1126 = vmul.f32 %v1062, %v1118
        %v1127 = vmul.f32 %v1063, %v1119
        %v1128 = vmul.f32 %v1064, %v1120
        %v1129 = vmul.f32 %v1065, %v1121
        %v1130 = vpack.c.bf16 %v1126, %v1122
        %v1131 = vpack.c.bf16 %v1127, %v1123
        %v1132 = vpack.c.bf16 %v1128, %v1124
        %v1133 = vpack.c.bf16 %v1129, %v1125
        %1134 = vst [vmem:[#allocation2 + $0x140] sm:$0xff] %v1130
        %1135 = vst [vmem:[#allocation2 + $0x148] sm:$0xff] %v1131
        %1136 = vst [vmem:[#allocation2 + $0x150] sm:$0xff] %v1132
        %1137 = vst [vmem:[#allocation2 + $0x158] sm:$0xff] %v1133
        %v1138 = vld [vmem:[%s279 + $0xc0] sm:$0xff]
        %v1139 = vld [vmem:[%s279 + $0xc8] sm:$0xff]
        %v1140 = vld [vmem:[%s279 + $0xd0] sm:$0xff]
        %v1141 = vld [vmem:[%s279 + $0xd8] sm:$0xff]
        %v1142 = vld [vmem:[%s279 + $0xe0] sm:$0xff]
        %v1143 = vld [vmem:[%s279 + $0xe8] sm:$0xff]
        %v1144 = vld [vmem:[%s279 + $0xf0] sm:$0xff]
        %v1145 = vld [vmem:[%s279 + $0xf8] sm:$0xff]
        %v1146 = vmul.f32 %v1058, %v1138
        %v1147 = vmul.f32 %v1059, %v1139
        %v1148 = vmul.f32 %v1060, %v1140
        %v1149 = vmul.f32 %v1061, %v1141
        %v1150 = vmul.f32 %v1062, %v1142
        %v1151 = vmul.f32 %v1063, %v1143
        %v1152 = vmul.f32 %v1064, %v1144
        %v1153 = vmul.f32 %v1065, %v1145
        %v1154 = vpack.c.bf16 %v1150, %v1146
        %v1155 = vpack.c.bf16 %v1151, %v1147
        %v1156 = vpack.c.bf16 %v1152, %v1148
        %v1157 = vpack.c.bf16 %v1153, %v1149
        %1158 = vst [vmem:[#allocation2 + $0x160] sm:$0xff] %v1154
        %1159 = vst [vmem:[#allocation2 + $0x168] sm:$0xff] %v1155
        %1160 = vst [vmem:[#allocation2 + $0x170] sm:$0xff] %v1156
        %1161 = vst [vmem:[#allocation2 + $0x178] sm:$0xff] %v1157
        %s1162 = sld [smem:[#allocation3 + $0x180]]
        %v1163 = vld [vmem:[%s270] sm:$0xff]
        %v1164 = vld [vmem:[%s270 + $0x8] sm:$0xff]
        %v1165 = vld [vmem:[%s270 + $0x10] sm:$0xff]
        %v1166 = vld [vmem:[%s270 + $0x18] sm:$0xff]
        %v1167 = vld [vmem:[%s270 + $0x20] sm:$0xff]
        %v1168 = vld [vmem:[%s270 + $0x28] sm:$0xff]
        %v1169 = vld [vmem:[%s270 + $0x30] sm:$0xff]
        %v1170 = vld [vmem:[%s270 + $0x38] sm:$0xff]
        %v1171 = vstv %s1162
        %v1172 = vmul.f32 %v1171, %v1163
        %v1173 = vmul.f32 %v1171, %v1164
        %v1174 = vmul.f32 %v1171, %v1165
        %v1175 = vmul.f32 %v1171, %v1166
        %v1176 = vmul.f32 %v1171, %v1167
        %v1177 = vmul.f32 %v1171, %v1168
        %v1178 = vmul.f32 %v1171, %v1169
        %v1179 = vmul.f32 %v1171, %v1170
        %v1180 = vadd.f32 %v386, %v1172
        %v1181 = vadd.f32 %v387, %v1173
        %v1182 = vadd.f32 %v388, %v1174
        %v1183 = vadd.f32 %v389, %v1175
        %v1184 = vadd.f32 %v390, %v1176
        %v1185 = vadd.f32 %v391, %v1177
        %v1186 = vadd.f32 %v392, %v1178
        %v1187 = vadd.f32 %v393, %v1179
        %s1188 = sld [smem:[#allocation3 + $0x181]]
        %v1189 = vld [vmem:[%s270 + $0x40] sm:$0xff]
        %v1190 = vld [vmem:[%s270 + $0x48] sm:$0xff]
        %v1191 = vld [vmem:[%s270 + $0x50] sm:$0xff]
        %v1192 = vld [vmem:[%s270 + $0x58] sm:$0xff]
        %v1193 = vld [vmem:[%s270 + $0x60] sm:$0xff]
        %v1194 = vld [vmem:[%s270 + $0x68] sm:$0xff]
        %v1195 = vld [vmem:[%s270 + $0x70] sm:$0xff]
        %v1196 = vld [vmem:[%s270 + $0x78] sm:$0xff]
        %v1197 = vstv %s1188
        %v1198 = vmul.f32 %v1197, %v1189
        %v1199 = vmul.f32 %v1197, %v1190
        %v1200 = vmul.f32 %v1197, %v1191
        %v1201 = vmul.f32 %v1197, %v1192
        %v1202 = vmul.f32 %v1197, %v1193
        %v1203 = vmul.f32 %v1197, %v1194
        %v1204 = vmul.f32 %v1197, %v1195
        %v1205 = vmul.f32 %v1197, %v1196
        %v1206 = vadd.f32 %v1180, %v1198
        %v1207 = vadd.f32 %v1181, %v1199
        %v1208 = vadd.f32 %v1182, %v1200
        %v1209 = vadd.f32 %v1183, %v1201
        %v1210 = vadd.f32 %v1184, %v1202
        %v1211 = vadd.f32 %v1185, %v1203
        %v1212 = vadd.f32 %v1186, %v1204
        %v1213 = vadd.f32 %v1187, %v1205
        %s1214 = sld [smem:[#allocation3 + $0x182]]
        %v1215 = vld [vmem:[%s270 + $0x80] sm:$0xff]
        %v1216 = vld [vmem:[%s270 + $0x88] sm:$0xff]
        %v1217 = vld [vmem:[%s270 + $0x90] sm:$0xff]
        %v1218 = vld [vmem:[%s270 + $0x98] sm:$0xff]
        %v1219 = vld [vmem:[%s270 + $0xa0] sm:$0xff]
        %v1220 = vld [vmem:[%s270 + $0xa8] sm:$0xff]
        %v1221 = vld [vmem:[%s270 + $0xb0] sm:$0xff]
        %v1222 = vld [vmem:[%s270 + $0xb8] sm:$0xff]
        %v1223 = vstv %s1214
        %v1224 = vmul.f32 %v1223, %v1215
        %v1225 = vmul.f32 %v1223, %v1216
        %v1226 = vmul.f32 %v1223, %v1217
        %v1227 = vmul.f32 %v1223, %v1218
        %v1228 = vmul.f32 %v1223, %v1219
        %v1229 = vmul.f32 %v1223, %v1220
        %v1230 = vmul.f32 %v1223, %v1221
        %v1231 = vmul.f32 %v1223, %v1222
        %v1232 = vadd.f32 %v1206, %v1224
        %v1233 = vadd.f32 %v1207, %v1225
        %v1234 = vadd.f32 %v1208, %v1226
        %v1235 = vadd.f32 %v1209, %v1227
        %v1236 = vadd.f32 %v1210, %v1228
        %v1237 = vadd.f32 %v1211, %v1229
        %v1238 = vadd.f32 %v1212, %v1230
        %v1239 = vadd.f32 %v1213, %v1231
        %s1240 = sld [smem:[#allocation3 + $0x183]]
        %v1241 = vstv %s1240
        %v1242 = vadd.f32 %v1232, %v1241
        %v1243 = vadd.f32 %v1233, %v1241
        %v1244 = vadd.f32 %v1234, %v1241
        %v1245 = vadd.f32 %v1235, %v1241
        %v1246 = vadd.f32 %v1236, %v1241
        %v1247 = vadd.f32 %v1237, %v1241
        %v1248 = vadd.f32 %v1238, %v1241
        %v1249 = vadd.f32 %v1239, %v1241
        %v1250 = vmax.f32 %v1242, 0.0
        %v1251 = vmax.f32 %v1243, 0.0
        %v1252 = vmax.f32 %v1244, 0.0
        %v1253 = vmax.f32 %v1245, 0.0
        %v1254 = vmax.f32 %v1246, 0.0
        %v1255 = vmax.f32 %v1247, 0.0
        %v1256 = vmax.f32 %v1248, 0.0
        %v1257 = vmax.f32 %v1249, 0.0
        %v1258 = vrsqrt.pop %v1250
        %v1259 = vmul.f32 %v1250, %v1258
        %vm1260 = vcmp.eq.f32.partialorder %v1250, inf
        %v1261 = vsel %vm1260, %v1250, %v1259
        %vm1262 = vcmp.eq.f32.partialorder %v1250, 0.0
        %v1263 = vand.u32 %v1250, 2147483648
        %v1264 = vsel %vm1262, %v1263, %v1261
        %v1265 = vrsqrt.pop %v1251
        %v1266 = vmul.f32 %v1251, %v1265
        %vm1267 = vcmp.eq.f32.partialorder %v1251, inf
        %v1268 = vsel %vm1267, %v1251, %v1266
        %vm1269 = vcmp.eq.f32.partialorder %v1251, 0.0
        %v1270 = vand.u32 %v1251, 2147483648
        %v1271 = vsel %vm1269, %v1270, %v1268
        %v1272 = vrsqrt.pop %v1252
        %v1273 = vmul.f32 %v1252, %v1272
        %vm1274 = vcmp.eq.f32.partialorder %v1252, inf
        %v1275 = vsel %vm1274, %v1252, %v1273
        %vm1276 = vcmp.eq.f32.partialorder %v1252, 0.0
        %v1277 = vand.u32 %v1252, 2147483648
        %v1278 = vsel %vm1276, %v1277, %v1275
        %v1279 = vrsqrt.pop %v1253
        %v1280 = vmul.f32 %v1253, %v1279
        %vm1281 = vcmp.eq.f32.partialorder %v1253, inf
        %v1282 = vsel %vm1281, %v1253, %v1280
        %vm1283 = vcmp.eq.f32.partialorder %v1253, 0.0
        %v1284 = vand.u32 %v1253, 2147483648
        %v1285 = vsel %vm1283, %v1284, %v1282
        %v1286 = vrsqrt.pop %v1254
        %v1287 = vmul.f32 %v1254, %v1286
        %vm1288 = vcmp.eq.f32.partialorder %v1254, inf
        %v1289 = vsel %vm1288, %v1254, %v1287
        %vm1290 = vcmp.eq.f32.partialorder %v1254, 0.0
        %v1291 = vand.u32 %v1254, 2147483648
        %v1292 = vsel %vm1290, %v1291, %v1289
        %v1293 = vrsqrt.pop %v1255
        %v1294 = vmul.f32 %v1255, %v1293
        %vm1295 = vcmp.eq.f32.partialorder %v1255, inf
        %v1296 = vsel %vm1295, %v1255, %v1294
        %vm1297 = vcmp.eq.f32.partialorder %v1255, 0.0
        %v1298 = vand.u32 %v1255, 2147483648
        %v1299 = vsel %vm1297, %v1298, %v1296
        %v1300 = vrsqrt.pop %v1256
        %v1301 = vmul.f32 %v1256, %v1300
        %vm1302 = vcmp.eq.f32.partialorder %v1256, inf
        %v1303 = vsel %vm1302, %v1256, %v1301
        %vm1304 = vcmp.eq.f32.partialorder %v1256, 0.0
        %v1305 = vand.u32 %v1256, 2147483648
        %v1306 = vsel %vm1304, %v1305, %v1303
        %v1307 = vrsqrt.pop %v1257
        %v1308 = vmul.f32 %v1257, %v1307
        %vm1309 = vcmp.eq.f32.partialorder %v1257, inf
        %v1310 = vsel %vm1309, %v1257, %v1308
        %vm1311 = vcmp.eq.f32.partialorder %v1257, 0.0
        %v1312 = vand.u32 %v1257, 2147483648
        %v1313 = vsel %vm1311, %v1312, %v1310
        %v1314 = vsub.f32 1.0, %v1264
        %v1315 = vsub.f32 1.0, %v1271
        %v1316 = vsub.f32 1.0, %v1278
        %v1317 = vsub.f32 1.0, %v1285
        %v1318 = vsub.f32 1.0, %v1292
        %v1319 = vsub.f32 1.0, %v1299
        %v1320 = vsub.f32 1.0, %v1306
        %v1321 = vsub.f32 1.0, %v1313
        %v1322 = vmax.f32 %v1314, 0.0
        %v1323 = vmax.f32 %v1315, 0.0
        %v1324 = vmax.f32 %v1316, 0.0
        %v1325 = vmax.f32 %v1317, 0.0
        %v1326 = vmax.f32 %v1318, 0.0
        %v1327 = vmax.f32 %v1319, 0.0
        %v1328 = vmax.f32 %v1320, 0.0
        %v1329 = vmax.f32 %v1321, 0.0
        %v1330 = vld [vmem:[%s279] sm:$0xff]
        %v1331 = vld [vmem:[%s279 + $0x8] sm:$0xff]
        %v1332 = vld [vmem:[%s279 + $0x10] sm:$0xff]
        %v1333 = vld [vmem:[%s279 + $0x18] sm:$0xff]
        %v1334 = vld [vmem:[%s279 + $0x20] sm:$0xff]
        %v1335 = vld [vmem:[%s279 + $0x28] sm:$0xff]
        %v1336 = vld [vmem:[%s279 + $0x30] sm:$0xff]
        %v1337 = vld [vmem:[%s279 + $0x38] sm:$0xff]
        %v1338 = vmul.f32 %v1322, %v1330
        %v1339 = vmul.f32 %v1323, %v1331
        %v1340 = vmul.f32 %v1324, %v1332
        %v1341 = vmul.f32 %v1325, %v1333
        %v1342 = vmul.f32 %v1326, %v1334
        %v1343 = vmul.f32 %v1327, %v1335
        %v1344 = vmul.f32 %v1328, %v1336
        %v1345 = vmul.f32 %v1329, %v1337
        %v1346 = vpack.c.bf16 %v1342, %v1338
        %v1347 = vpack.c.bf16 %v1343, %v1339
        %v1348 = vpack.c.bf16 %v1344, %v1340
        %v1349 = vpack.c.bf16 %v1345, %v1341
        %1350 = vst [vmem:[#allocation2 + $0x180] sm:$0xff] %v1346
        %1351 = vst [vmem:[#allocation2 + $0x188] sm:$0xff] %v1347
        %1352 = vst [vmem:[#allocation2 + $0x190] sm:$0xff] %v1348
        %1353 = vst [vmem:[#allocation2 + $0x198] sm:$0xff] %v1349
        %v1354 = vld [vmem:[%s279 + $0x40] sm:$0xff]
        %v1355 = vld [vmem:[%s279 + $0x48] sm:$0xff]
        %v1356 = vld [vmem:[%s279 + $0x50] sm:$0xff]
        %v1357 = vld [vmem:[%s279 + $0x58] sm:$0xff]
        %v1358 = vld [vmem:[%s279 + $0x60] sm:$0xff]
        %v1359 = vld [vmem:[%s279 + $0x68] sm:$0xff]
        %v1360 = vld [vmem:[%s279 + $0x70] sm:$0xff]
        %v1361 = vld [vmem:[%s279 + $0x78] sm:$0xff]
        %v1362 = vmul.f32 %v1322, %v1354
        %v1363 = vmul.f32 %v1323, %v1355
        %v1364 = vmul.f32 %v1324, %v1356
        %v1365 = vmul.f32 %v1325, %v1357
        %v1366 = vmul.f32 %v1326, %v1358
        %v1367 = vmul.f32 %v1327, %v1359
        %v1368 = vmul.f32 %v1328, %v1360
        %v1369 = vmul.f32 %v1329, %v1361
        %v1370 = vpack.c.bf16 %v1366, %v1362
        %v1371 = vpack.c.bf16 %v1367, %v1363
        %v1372 = vpack.c.bf16 %v1368, %v1364
        %v1373 = vpack.c.bf16 %v1369, %v1365
        %1374 = vst [vmem:[#allocation2 + $0x1a0] sm:$0xff] %v1370
        %1375 = vst [vmem:[#allocation2 + $0x1a8] sm:$0xff] %v1371
        %1376 = vst [vmem:[#allocation2 + $0x1b0] sm:$0xff] %v1372
        %1377 = vst [vmem:[#allocation2 + $0x1b8] sm:$0xff] %v1373
        %v1378 = vld [vmem:[%s279 + $0x80] sm:$0xff]
        %v1379 = vld [vmem:[%s279 + $0x88] sm:$0xff]
        %v1380 = vld [vmem:[%s279 + $0x90] sm:$0xff]
        %v1381 = vld [vmem:[%s279 + $0x98] sm:$0xff]
        %v1382 = vld [vmem:[%s279 + $0xa0] sm:$0xff]
        %v1383 = vld [vmem:[%s279 + $0xa8] sm:$0xff]
        %v1384 = vld [vmem:[%s279 + $0xb0] sm:$0xff]
        %v1385 = vld [vmem:[%s279 + $0xb8] sm:$0xff]
        %v1386 = vmul.f32 %v1322, %v1378
        %v1387 = vmul.f32 %v1323, %v1379
        %v1388 = vmul.f32 %v1324, %v1380
        %v1389 = vmul.f32 %v1325, %v1381
        %v1390 = vmul.f32 %v1326, %v1382
        %v1391 = vmul.f32 %v1327, %v1383
        %v1392 = vmul.f32 %v1328, %v1384
        %v1393 = vmul.f32 %v1329, %v1385
        %v1394 = vpack.c.bf16 %v1390, %v1386
        %v1395 = vpack.c.bf16 %v1391, %v1387
        %v1396 = vpack.c.bf16 %v1392, %v1388
        %v1397 = vpack.c.bf16 %v1393, %v1389
        %1398 = vst [vmem:[#allocation2 + $0x1c0] sm:$0xff] %v1394
        %1399 = vst [vmem:[#allocation2 + $0x1c8] sm:$0xff] %v1395
        %1400 = vst [vmem:[#allocation2 + $0x1d0] sm:$0xff] %v1396
        %1401 = vst [vmem:[#allocation2 + $0x1d8] sm:$0xff] %v1397
        %v1402 = vld [vmem:[%s279 + $0xc0] sm:$0xff]
        %v1403 = vld [vmem:[%s279 + $0xc8] sm:$0xff]
        %v1404 = vld [vmem:[%s279 + $0xd0] sm:$0xff]
        %v1405 = vld [vmem:[%s279 + $0xd8] sm:$0xff]
        %v1406 = vld [vmem:[%s279 + $0xe0] sm:$0xff]
        %v1407 = vld [vmem:[%s279 + $0xe8] sm:$0xff]
        %v1408 = vld [vmem:[%s279 + $0xf0] sm:$0xff]
        %v1409 = vld [vmem:[%s279 + $0xf8] sm:$0xff]
        %v1410 = vmul.f32 %v1322, %v1402
        %v1411 = vmul.f32 %v1323, %v1403
        %v1412 = vmul.f32 %v1324, %v1404
        %v1413 = vmul.f32 %v1325, %v1405
        %v1414 = vmul.f32 %v1326, %v1406
        %v1415 = vmul.f32 %v1327, %v1407
        %v1416 = vmul.f32 %v1328, %v1408
        %v1417 = vmul.f32 %v1329, %v1409
        %v1418 = vpack.c.bf16 %v1414, %v1410
        %v1419 = vpack.c.bf16 %v1415, %v1411
        %v1420 = vpack.c.bf16 %v1416, %v1412
        %v1421 = vpack.c.bf16 %v1417, %v1413
        %1422 = vst [vmem:[#allocation2 + $0x1e0] sm:$0xff] %v1418
        %1423 = vst [vmem:[#allocation2 + $0x1e8] sm:$0xff] %v1419
        %1424 = vst [vmem:[#allocation2 + $0x1f0] sm:$0xff] %v1420
        %1425 = vst [vmem:[#allocation2 + $0x1f8] sm:$0xff] %v1421
        %s1426 = sld [smem:[#allocation3 + $0x200]]
        %v1427 = vld [vmem:[%s270] sm:$0xff]
        %v1428 = vld [vmem:[%s270 + $0x8] sm:$0xff]
        %v1429 = vld [vmem:[%s270 + $0x10] sm:$0xff]
        %v1430 = vld [vmem:[%s270 + $0x18] sm:$0xff]
        %v1431 = vld [vmem:[%s270 + $0x20] sm:$0xff]
        %v1432 = vld [vmem:[%s270 + $0x28] sm:$0xff]
        %v1433 = vld [vmem:[%s270 + $0x30] sm:$0xff]
        %v1434 = vld [vmem:[%s270 + $0x38] sm:$0xff]
        %v1435 = vstv %s1426
        %v1436 = vmul.f32 %v1435, %v1427
        %v1437 = vmul.f32 %v1435, %v1428
        %v1438 = vmul.f32 %v1435, %v1429
        %v1439 = vmul.f32 %v1435, %v1430
        %v1440 = vmul.f32 %v1435, %v1431
        %v1441 = vmul.f32 %v1435, %v1432
        %v1442 = vmul.f32 %v1435, %v1433
        %v1443 = vmul.f32 %v1435, %v1434
        %v1444 = vadd.f32 %v386, %v1436
        %v1445 = vadd.f32 %v387, %v1437
        %v1446 = vadd.f32 %v388, %v1438
        %v1447 = vadd.f32 %v389, %v1439
        %v1448 = vadd.f32 %v390, %v1440
        %v1449 = vadd.f32 %v391, %v1441
        %v1450 = vadd.f32 %v392, %v1442
        %v1451 = vadd.f32 %v393, %v1443
        %s1452 = sld [smem:[#allocation3 + $0x201]]
        %v1453 = vld [vmem:[%s270 + $0x40] sm:$0xff]
        %v1454 = vld [vmem:[%s270 + $0x48] sm:$0xff]
        %v1455 = vld [vmem:[%s270 + $0x50] sm:$0xff]
        %v1456 = vld [vmem:[%s270 + $0x58] sm:$0xff]
        %v1457 = vld [vmem:[%s270 + $0x60] sm:$0xff]
        %v1458 = vld [vmem:[%s270 + $0x68] sm:$0xff]
        %v1459 = vld [vmem:[%s270 + $0x70] sm:$0xff]
        %v1460 = vld [vmem:[%s270 + $0x78] sm:$0xff]
        %v1461 = vstv %s1452
        %v1462 = vmul.f32 %v1461, %v1453
        %v1463 = vmul.f32 %v1461, %v1454
        %v1464 = vmul.f32 %v1461, %v1455
        %v1465 = vmul.f32 %v1461, %v1456
        %v1466 = vmul.f32 %v1461, %v1457
        %v1467 = vmul.f32 %v1461, %v1458
        %v1468 = vmul.f32 %v1461, %v1459
        %v1469 = vmul.f32 %v1461, %v1460
        %v1470 = vadd.f32 %v1444, %v1462
        %v1471 = vadd.f32 %v1445, %v1463
        %v1472 = vadd.f32 %v1446, %v1464
        %v1473 = vadd.f32 %v1447, %v1465
        %v1474 = vadd.f32 %v1448, %v1466
        %v1475 = vadd.f32 %v1449, %v1467
        %v1476 = vadd.f32 %v1450, %v1468
        %v1477 = vadd.f32 %v1451, %v1469
        %s1478 = sld [smem:[#allocation3 + $0x202]]
        %v1479 = vld [vmem:[%s270 + $0x80] sm:$0xff]
        %v1480 = vld [vmem:[%s270 + $0x88] sm:$0xff]
        %v1481 = vld [vmem:[%s270 + $0x90] sm:$0xff]
        %v1482 = vld [vmem:[%s270 + $0x98] sm:$0xff]
        %v1483 = vld [vmem:[%s270 + $0xa0] sm:$0xff]
        %v1484 = vld [vmem:[%s270 + $0xa8] sm:$0xff]
        %v1485 = vld [vmem:[%s270 + $0xb0] sm:$0xff]
        %v1486 = vld [vmem:[%s270 + $0xb8] sm:$0xff]
        %v1487 = vstv %s1478
        %v1488 = vmul.f32 %v1487, %v1479
        %v1489 = vmul.f32 %v1487, %v1480
        %v1490 = vmul.f32 %v1487, %v1481
        %v1491 = vmul.f32 %v1487, %v1482
        %v1492 = vmul.f32 %v1487, %v1483
        %v1493 = vmul.f32 %v1487, %v1484
        %v1494 = vmul.f32 %v1487, %v1485
        %v1495 = vmul.f32 %v1487, %v1486
        %v1496 = vadd.f32 %v1470, %v1488
        %v1497 = vadd.f32 %v1471, %v1489
        %v1498 = vadd.f32 %v1472, %v1490
        %v1499 = vadd.f32 %v1473, %v1491
        %v1500 = vadd.f32 %v1474, %v1492
        %v1501 = vadd.f32 %v1475, %v1493
        %v1502 = vadd.f32 %v1476, %v1494
        %v1503 = vadd.f32 %v1477, %v1495
        %s1504 = sld [smem:[#allocation3 + $0x203]]
        %v1505 = vstv %s1504
        %v1506 = vadd.f32 %v1496, %v1505
        %v1507 = vadd.f32 %v1497, %v1505
        %v1508 = vadd.f32 %v1498, %v1505
        %v1509 = vadd.f32 %v1499, %v1505
        %v1510 = vadd.f32 %v1500, %v1505
        %v1511 = vadd.f32 %v1501, %v1505
        %v1512 = vadd.f32 %v1502, %v1505
        %v1513 = vadd.f32 %v1503, %v1505
        %v1514 = vmax.f32 %v1506, 0.0
        %v1515 = vmax.f32 %v1507, 0.0
        %v1516 = vmax.f32 %v1508, 0.0
        %v1517 = vmax.f32 %v1509, 0.0
        %v1518 = vmax.f32 %v1510, 0.0
        %v1519 = vmax.f32 %v1511, 0.0
        %v1520 = vmax.f32 %v1512, 0.0
        %v1521 = vmax.f32 %v1513, 0.0
        %v1522 = vrsqrt.pop %v1514
        %v1523 = vmul.f32 %v1514, %v1522
        %vm1524 = vcmp.eq.f32.partialorder %v1514, inf
        %v1525 = vsel %vm1524, %v1514, %v1523
        %vm1526 = vcmp.eq.f32.partialorder %v1514, 0.0
        %v1527 = vand.u32 %v1514, 2147483648
        %v1528 = vsel %vm1526, %v1527, %v1525
        %v1529 = vrsqrt.pop %v1515
        %v1530 = vmul.f32 %v1515, %v1529
        %vm1531 = vcmp.eq.f32.partialorder %v1515, inf
        %v1532 = vsel %vm1531, %v1515, %v1530
        %vm1533 = vcmp.eq.f32.partialorder %v1515, 0.0
        %v1534 = vand.u32 %v1515, 2147483648
        %v1535 = vsel %vm1533, %v1534, %v1532
        %v1536 = vrsqrt.pop %v1516
        %v1537 = vmul.f32 %v1516, %v1536
        %vm1538 = vcmp.eq.f32.partialorder %v1516, inf
        %v1539 = vsel %vm1538, %v1516, %v1537
        %vm1540 = vcmp.eq.f32.partialorder %v1516, 0.0
        %v1541 = vand.u32 %v1516, 2147483648
        %v1542 = vsel %vm1540, %v1541, %v1539
        %v1543 = vrsqrt.pop %v1517
        %v1544 = vmul.f32 %v1517, %v1543
        %vm1545 = vcmp.eq.f32.partialorder %v1517, inf
        %v1546 = vsel %vm1545, %v1517, %v1544
        %vm1547 = vcmp.eq.f32.partialorder %v1517, 0.0
        %v1548 = vand.u32 %v1517, 2147483648
        %v1549 = vsel %vm1547, %v1548, %v1546
        %v1550 = vrsqrt.pop %v1518
        %v1551 = vmul.f32 %v1518, %v1550
        %vm1552 = vcmp.eq.f32.partialorder %v1518, inf
        %v1553 = vsel %vm1552, %v1518, %v1551
        %vm1554 = vcmp.eq.f32.partialorder %v1518, 0.0
        %v1555 = vand.u32 %v1518, 2147483648
        %v1556 = vsel %vm1554, %v1555, %v1553
        %v1557 = vrsqrt.pop %v1519
        %v1558 = vmul.f32 %v1519, %v1557
        %vm1559 = vcmp.eq.f32.partialorder %v1519, inf
        %v1560 = vsel %vm1559, %v1519, %v1558
        %vm1561 = vcmp.eq.f32.partialorder %v1519, 0.0
        %v1562 = vand.u32 %v1519, 2147483648
        %v1563 = vsel %vm1561, %v1562, %v1560
        %v1564 = vrsqrt.pop %v1520
        %v1565 = vmul.f32 %v1520, %v1564
        %vm1566 = vcmp.eq.f32.partialorder %v1520, inf
        %v1567 = vsel %vm1566, %v1520, %v1565
        %vm1568 = vcmp.eq.f32.partialorder %v1520, 0.0
        %v1569 = vand.u32 %v1520, 2147483648
        %v1570 = vsel %vm1568, %v1569, %v1567
        %v1571 = vrsqrt.pop %v1521
        %v1572 = vmul.f32 %v1521, %v1571
        %vm1573 = vcmp.eq.f32.partialorder %v1521, inf
        %v1574 = vsel %vm1573, %v1521, %v1572
        %vm1575 = vcmp.eq.f32.partialorder %v1521, 0.0
        %v1576 = vand.u32 %v1521, 2147483648
        %v1577 = vsel %vm1575, %v1576, %v1574
        %v1578 = vsub.f32 1.0, %v1528
        %v1579 = vsub.f32 1.0, %v1535
        %v1580 = vsub.f32 1.0, %v1542
        %v1581 = vsub.f32 1.0, %v1549
        %v1582 = vsub.f32 1.0, %v1556
        %v1583 = vsub.f32 1.0, %v1563
        %v1584 = vsub.f32 1.0, %v1570
        %v1585 = vsub.f32 1.0, %v1577
        %v1586 = vmax.f32 %v1578, 0.0
        %v1587 = vmax.f32 %v1579, 0.0
        %v1588 = vmax.f32 %v1580, 0.0
        %v1589 = vmax.f32 %v1581, 0.0
        %v1590 = vmax.f32 %v1582, 0.0
        %v1591 = vmax.f32 %v1583, 0.0
        %v1592 = vmax.f32 %v1584, 0.0
        %v1593 = vmax.f32 %v1585, 0.0
        %v1594 = vld [vmem:[%s279] sm:$0xff]
        %v1595 = vld [vmem:[%s279 + $0x8] sm:$0xff]
        %v1596 = vld [vmem:[%s279 + $0x10] sm:$0xff]
        %v1597 = vld [vmem:[%s279 + $0x18] sm:$0xff]
        %v1598 = vld [vmem:[%s279 + $0x20] sm:$0xff]
        %v1599 = vld [vmem:[%s279 + $0x28] sm:$0xff]
        %v1600 = vld [vmem:[%s279 + $0x30] sm:$0xff]
        %v1601 = vld [vmem:[%s279 + $0x38] sm:$0xff]
        %v1602 = vmul.f32 %v1586, %v1594
        %v1603 = vmul.f32 %v1587, %v1595
        %v1604 = vmul.f32 %v1588, %v1596
        %v1605 = vmul.f32 %v1589, %v1597
        %v1606 = vmul.f32 %v1590, %v1598
        %v1607 = vmul.f32 %v1591, %v1599
        %v1608 = vmul.f32 %v1592, %v1600
        %v1609 = vmul.f32 %v1593, %v1601
        %v1610 = vpack.c.bf16 %v1606, %v1602
        %v1611 = vpack.c.bf16 %v1607, %v1603
        %v1612 = vpack.c.bf16 %v1608, %v1604
        %v1613 = vpack.c.bf16 %v1609, %v1605
        %1614 = vst [vmem:[#allocation2 + $0x200] sm:$0xff] %v1610
        %1615 = vst [vmem:[#allocation2 + $0x208] sm:$0xff] %v1611
        %1616 = vst [vmem:[#allocation2 + $0x210] sm:$0xff] %v1612
        %1617 = vst [vmem:[#allocation2 + $0x218] sm:$0xff] %v1613
        %v1618 = vld [vmem:[%s279 + $0x40] sm:$0xff]
        %v1619 = vld [vmem:[%s279 + $0x48] sm:$0xff]
        %v1620 = vld [vmem:[%s279 + $0x50] sm:$0xff]
        %v1621 = vld [vmem:[%s279 + $0x58] sm:$0xff]
        %v1622 = vld [vmem:[%s279 + $0x60] sm:$0xff]
        %v1623 = vld [vmem:[%s279 + $0x68] sm:$0xff]
        %v1624 = vld [vmem:[%s279 + $0x70] sm:$0xff]
        %v1625 = vld [vmem:[%s279 + $0x78] sm:$0xff]
        %v1626 = vmul.f32 %v1586, %v1618
        %v1627 = vmul.f32 %v1587, %v1619
        %v1628 = vmul.f32 %v1588, %v1620
        %v1629 = vmul.f32 %v1589, %v1621
        %v1630 = vmul.f32 %v1590, %v1622
        %v1631 = vmul.f32 %v1591, %v1623
        %v1632 = vmul.f32 %v1592, %v1624
        %v1633 = vmul.f32 %v1593, %v1625
        %v1634 = vpack.c.bf16 %v1630, %v1626
        %v1635 = vpack.c.bf16 %v1631, %v1627
        %v1636 = vpack.c.bf16 %v1632, %v1628
        %v1637 = vpack.c.bf16 %v1633, %v1629
        %1638 = vst [vmem:[#allocation2 + $0x220] sm:$0xff] %v1634
        %1639 = vst [vmem:[#allocation2 + $0x228] sm:$0xff] %v1635
        %1640 = vst [vmem:[#allocation2 + $0x230] sm:$0xff] %v1636
        %1641 = vst [vmem:[#allocation2 + $0x238] sm:$0xff] %v1637
        %v1642 = vld [vmem:[%s279 + $0x80] sm:$0xff]
        %v1643 = vld [vmem:[%s279 + $0x88] sm:$0xff]
        %v1644 = vld [vmem:[%s279 + $0x90] sm:$0xff]
        %v1645 = vld [vmem:[%s279 + $0x98] sm:$0xff]
        %v1646 = vld [vmem:[%s279 + $0xa0] sm:$0xff]
        %v1647 = vld [vmem:[%s279 + $0xa8] sm:$0xff]
        %v1648 = vld [vmem:[%s279 + $0xb0] sm:$0xff]
        %v1649 = vld [vmem:[%s279 + $0xb8] sm:$0xff]
        %v1650 = vmul.f32 %v1586, %v1642
        %v1651 = vmul.f32 %v1587, %v1643
        %v1652 = vmul.f32 %v1588, %v1644
        %v1653 = vmul.f32 %v1589, %v1645
        %v1654 = vmul.f32 %v1590, %v1646
        %v1655 = vmul.f32 %v1591, %v1647
        %v1656 = vmul.f32 %v1592, %v1648
        %v1657 = vmul.f32 %v1593, %v1649
        %v1658 = vpack.c.bf16 %v1654, %v1650
        %v1659 = vpack.c.bf16 %v1655, %v1651
        %v1660 = vpack.c.bf16 %v1656, %v1652
        %v1661 = vpack.c.bf16 %v1657, %v1653
        %1662 = vst [vmem:[#allocation2 + $0x240] sm:$0xff] %v1658
        %1663 = vst [vmem:[#allocation2 + $0x248] sm:$0xff] %v1659
        %1664 = vst [vmem:[#allocation2 + $0x250] sm:$0xff] %v1660
        %1665 = vst [vmem:[#allocation2 + $0x258] sm:$0xff] %v1661
        %v1666 = vld [vmem:[%s279 + $0xc0] sm:$0xff]
        %v1667 = vld [vmem:[%s279 + $0xc8] sm:$0xff]
        %v1668 = vld [vmem:[%s279 + $0xd0] sm:$0xff]
        %v1669 = vld [vmem:[%s279 + $0xd8] sm:$0xff]
        %v1670 = vld [vmem:[%s279 + $0xe0] sm:$0xff]
        %v1671 = vld [vmem:[%s279 + $0xe8] sm:$0xff]
        %v1672 = vld [vmem:[%s279 + $0xf0] sm:$0xff]
        %v1673 = vld [vmem:[%s279 + $0xf8] sm:$0xff]
        %v1674 = vmul.f32 %v1586, %v1666
        %v1675 = vmul.f32 %v1587, %v1667
        %v1676 = vmul.f32 %v1588, %v1668
        %v1677 = vmul.f32 %v1589, %v1669
        %v1678 = vmul.f32 %v1590, %v1670
        %v1679 = vmul.f32 %v1591, %v1671
        %v1680 = vmul.f32 %v1592, %v1672
        %v1681 = vmul.f32 %v1593, %v1673
        %v1682 = vpack.c.bf16 %v1678, %v1674
        %v1683 = vpack.c.bf16 %v1679, %v1675
        %v1684 = vpack.c.bf16 %v1680, %v1676
        %v1685 = vpack.c.bf16 %v1681, %v1677
        %1686 = vst [vmem:[#allocation2 + $0x260] sm:$0xff] %v1682
        %1687 = vst [vmem:[#allocation2 + $0x268] sm:$0xff] %v1683
        %1688 = vst [vmem:[#allocation2 + $0x270] sm:$0xff] %v1684
        %1689 = vst [vmem:[#allocation2 + $0x278] sm:$0xff] %v1685
        %s1690 = sld [smem:[#allocation3 + $0x280]]
        %v1691 = vld [vmem:[%s270] sm:$0xff]
        %v1692 = vld [vmem:[%s270 + $0x8] sm:$0xff]
        %v1693 = vld [vmem:[%s270 + $0x10] sm:$0xff]
        %v1694 = vld [vmem:[%s270 + $0x18] sm:$0xff]
        %v1695 = vld [vmem:[%s270 + $0x20] sm:$0xff]
        %v1696 = vld [vmem:[%s270 + $0x28] sm:$0xff]
        %v1697 = vld [vmem:[%s270 + $0x30] sm:$0xff]
        %v1698 = vld [vmem:[%s270 + $0x38] sm:$0xff]
        %v1699 = vstv %s1690
        %v1700 = vmul.f32 %v1699, %v1691
        %v1701 = vmul.f32 %v1699, %v1692
        %v1702 = vmul.f32 %v1699, %v1693
        %v1703 = vmul.f32 %v1699, %v1694
        %v1704 = vmul.f32 %v1699, %v1695
        %v1705 = vmul.f32 %v1699, %v1696
        %v1706 = vmul.f32 %v1699, %v1697
        %v1707 = vmul.f32 %v1699, %v1698
        %v1708 = vadd.f32 %v386, %v1700
        %v1709 = vadd.f32 %v387, %v1701
        %v1710 = vadd.f32 %v388, %v1702
        %v1711 = vadd.f32 %v389, %v1703
        %v1712 = vadd.f32 %v390, %v1704
        %v1713 = vadd.f32 %v391, %v1705
        %v1714 = vadd.f32 %v392, %v1706
        %v1715 = vadd.f32 %v393, %v1707
        %s1716 = sld [smem:[#allocation3 + $0x281]]
        %v1717 = vld [vmem:[%s270 + $0x40] sm:$0xff]
        %v1718 = vld [vmem:[%s270 + $0x48] sm:$0xff]
        %v1719 = vld [vmem:[%s270 + $0x50] sm:$0xff]
        %v1720 = vld [vmem:[%s270 + $0x58] sm:$0xff]
        %v1721 = vld [vmem:[%s270 + $0x60] sm:$0xff]
        %v1722 = vld [vmem:[%s270 + $0x68] sm:$0xff]
        %v1723 = vld [vmem:[%s270 + $0x70] sm:$0xff]
        %v1724 = vld [vmem:[%s270 + $0x78] sm:$0xff]
        %v1725 = vstv %s1716
        %v1726 = vmul.f32 %v1725, %v1717
        %v1727 = vmul.f32 %v1725, %v1718
        %v1728 = vmul.f32 %v1725, %v1719
        %v1729 = vmul.f32 %v1725, %v1720
        %v1730 = vmul.f32 %v1725, %v1721
        %v1731 = vmul.f32 %v1725, %v1722
        %v1732 = vmul.f32 %v1725, %v1723
        %v1733 = vmul.f32 %v1725, %v1724
        %v1734 = vadd.f32 %v1708, %v1726
        %v1735 = vadd.f32 %v1709, %v1727
        %v1736 = vadd.f32 %v1710, %v1728
        %v1737 = vadd.f32 %v1711, %v1729
        %v1738 = vadd.f32 %v1712, %v1730
        %v1739 = vadd.f32 %v1713, %v1731
        %v1740 = vadd.f32 %v1714, %v1732
        %v1741 = vadd.f32 %v1715, %v1733
        %s1742 = sld [smem:[#allocation3 + $0x282]]
        %v1743 = vld [vmem:[%s270 + $0x80] sm:$0xff]
        %v1744 = vld [vmem:[%s270 + $0x88] sm:$0xff]
        %v1745 = vld [vmem:[%s270 + $0x90] sm:$0xff]
        %v1746 = vld [vmem:[%s270 + $0x98] sm:$0xff]
        %v1747 = vld [vmem:[%s270 + $0xa0] sm:$0xff]
        %v1748 = vld [vmem:[%s270 + $0xa8] sm:$0xff]
        %v1749 = vld [vmem:[%s270 + $0xb0] sm:$0xff]
        %v1750 = vld [vmem:[%s270 + $0xb8] sm:$0xff]
        %v1751 = vstv %s1742
        %v1752 = vmul.f32 %v1751, %v1743
        %v1753 = vmul.f32 %v1751, %v1744
        %v1754 = vmul.f32 %v1751, %v1745
        %v1755 = vmul.f32 %v1751, %v1746
        %v1756 = vmul.f32 %v1751, %v1747
        %v1757 = vmul.f32 %v1751, %v1748
        %v1758 = vmul.f32 %v1751, %v1749
        %v1759 = vmul.f32 %v1751, %v1750
        %v1760 = vadd.f32 %v1734, %v1752
        %v1761 = vadd.f32 %v1735, %v1753
        %v1762 = vadd.f32 %v1736, %v1754
        %v1763 = vadd.f32 %v1737, %v1755
        %v1764 = vadd.f32 %v1738, %v1756
        %v1765 = vadd.f32 %v1739, %v1757
        %v1766 = vadd.f32 %v1740, %v1758
        %v1767 = vadd.f32 %v1741, %v1759
        %s1768 = sld [smem:[#allocation3 + $0x283]]
        %v1769 = vstv %s1768
        %v1770 = vadd.f32 %v1760, %v1769
        %v1771 = vadd.f32 %v1761, %v1769
        %v1772 = vadd.f32 %v1762, %v1769
        %v1773 = vadd.f32 %v1763, %v1769
        %v1774 = vadd.f32 %v1764, %v1769
        %v1775 = vadd.f32 %v1765, %v1769
        %v1776 = vadd.f32 %v1766, %v1769
        %v1777 = vadd.f32 %v1767, %v1769
        %v1778 = vmax.f32 %v1770, 0.0
        %v1779 = vmax.f32 %v1771, 0.0
        %v1780 = vmax.f32 %v1772, 0.0
        %v1781 = vmax.f32 %v1773, 0.0
        %v1782 = vmax.f32 %v1774, 0.0
        %v1783 = vmax.f32 %v1775, 0.0
        %v1784 = vmax.f32 %v1776, 0.0
        %v1785 = vmax.f32 %v1777, 0.0
        %v1786 = vrsqrt.pop %v1778
        %v1787 = vmul.f32 %v1778, %v1786
        %vm1788 = vcmp.eq.f32.partialorder %v1778, inf
        %v1789 = vsel %vm1788, %v1778, %v1787
        %vm1790 = vcmp.eq.f32.partialorder %v1778, 0.0
        %v1791 = vand.u32 %v1778, 2147483648
        %v1792 = vsel %vm1790, %v1791, %v1789
        %v1793 = vrsqrt.pop %v1779
        %v1794 = vmul.f32 %v1779, %v1793
        %vm1795 = vcmp.eq.f32.partialorder %v1779, inf
        %v1796 = vsel %vm1795, %v1779, %v1794
        %vm1797 = vcmp.eq.f32.partialorder %v1779, 0.0
        %v1798 = vand.u32 %v1779, 2147483648
        %v1799 = vsel %vm1797, %v1798, %v1796
        %v1800 = vrsqrt.pop %v1780
        %v1801 = vmul.f32 %v1780, %v1800
        %vm1802 = vcmp.eq.f32.partialorder %v1780, inf
        %v1803 = vsel %vm1802, %v1780, %v1801
        %vm1804 = vcmp.eq.f32.partialorder %v1780, 0.0
        %v1805 = vand.u32 %v1780, 2147483648
        %v1806 = vsel %vm1804, %v1805, %v1803
        %v1807 = vrsqrt.pop %v1781
        %v1808 = vmul.f32 %v1781, %v1807
        %vm1809 = vcmp.eq.f32.partialorder %v1781, inf
        %v1810 = vsel %vm1809, %v1781, %v1808
        %vm1811 = vcmp.eq.f32.partialorder %v1781, 0.0
        %v1812 = vand.u32 %v1781, 2147483648
        %v1813 = vsel %vm1811, %v1812, %v1810
        %v1814 = vrsqrt.pop %v1782
        %v1815 = vmul.f32 %v1782, %v1814
        %vm1816 = vcmp.eq.f32.partialorder %v1782, inf
        %v1817 = vsel %vm1816, %v1782, %v1815
        %vm1818 = vcmp.eq.f32.partialorder %v1782, 0.0
        %v1819 = vand.u32 %v1782, 2147483648
        %v1820 = vsel %vm1818, %v1819, %v1817
        %v1821 = vrsqrt.pop %v1783
        %v1822 = vmul.f32 %v1783, %v1821
        %vm1823 = vcmp.eq.f32.partialorder %v1783, inf
        %v1824 = vsel %vm1823, %v1783, %v1822
        %vm1825 = vcmp.eq.f32.partialorder %v1783, 0.0
        %v1826 = vand.u32 %v1783, 2147483648
        %v1827 = vsel %vm1825, %v1826, %v1824
        %v1828 = vrsqrt.pop %v1784
        %v1829 = vmul.f32 %v1784, %v1828
        %vm1830 = vcmp.eq.f32.partialorder %v1784, inf
        %v1831 = vsel %vm1830, %v1784, %v1829
        %vm1832 = vcmp.eq.f32.partialorder %v1784, 0.0
        %v1833 = vand.u32 %v1784, 2147483648
        %v1834 = vsel %vm1832, %v1833, %v1831
        %v1835 = vrsqrt.pop %v1785
        %v1836 = vmul.f32 %v1785, %v1835
        %vm1837 = vcmp.eq.f32.partialorder %v1785, inf
        %v1838 = vsel %vm1837, %v1785, %v1836
        %vm1839 = vcmp.eq.f32.partialorder %v1785, 0.0
        %v1840 = vand.u32 %v1785, 2147483648
        %v1841 = vsel %vm1839, %v1840, %v1838
        %v1842 = vsub.f32 1.0, %v1792
        %v1843 = vsub.f32 1.0, %v1799
        %v1844 = vsub.f32 1.0, %v1806
        %v1845 = vsub.f32 1.0, %v1813
        %v1846 = vsub.f32 1.0, %v1820
        %v1847 = vsub.f32 1.0, %v1827
        %v1848 = vsub.f32 1.0, %v1834
        %v1849 = vsub.f32 1.0, %v1841
        %v1850 = vmax.f32 %v1842, 0.0
        %v1851 = vmax.f32 %v1843, 0.0
        %v1852 = vmax.f32 %v1844, 0.0
        %v1853 = vmax.f32 %v1845, 0.0
        %v1854 = vmax.f32 %v1846, 0.0
        %v1855 = vmax.f32 %v1847, 0.0
        %v1856 = vmax.f32 %v1848, 0.0
        %v1857 = vmax.f32 %v1849, 0.0
        %v1858 = vld [vmem:[%s279] sm:$0xff]
        %v1859 = vld [vmem:[%s279 + $0x8] sm:$0xff]
        %v1860 = vld [vmem:[%s279 + $0x10] sm:$0xff]
        %v1861 = vld [vmem:[%s279 + $0x18] sm:$0xff]
        %v1862 = vld [vmem:[%s279 + $0x20] sm:$0xff]
        %v1863 = vld [vmem:[%s279 + $0x28] sm:$0xff]
        %v1864 = vld [vmem:[%s279 + $0x30] sm:$0xff]
        %v1865 = vld [vmem:[%s279 + $0x38] sm:$0xff]
        %v1866 = vmul.f32 %v1850, %v1858
        %v1867 = vmul.f32 %v1851, %v1859
        %v1868 = vmul.f32 %v1852, %v1860
        %v1869 = vmul.f32 %v1853, %v1861
        %v1870 = vmul.f32 %v1854, %v1862
        %v1871 = vmul.f32 %v1855, %v1863
        %v1872 = vmul.f32 %v1856, %v1864
        %v1873 = vmul.f32 %v1857, %v1865
        %v1874 = vpack.c.bf16 %v1870, %v1866
        %v1875 = vpack.c.bf16 %v1871, %v1867
        %v1876 = vpack.c.bf16 %v1872, %v1868
        %v1877 = vpack.c.bf16 %v1873, %v1869
        %1878 = vst [vmem:[#allocation2 + $0x280] sm:$0xff] %v1874
        %1879 = vst [vmem:[#allocation2 + $0x288] sm:$0xff] %v1875
        %1880 = vst [vmem:[#allocation2 + $0x290] sm:$0xff] %v1876
        %1881 = vst [vmem:[#allocation2 + $0x298] sm:$0xff] %v1877
        %v1882 = vld [vmem:[%s279 + $0x40] sm:$0xff]
        %v1883 = vld [vmem:[%s279 + $0x48] sm:$0xff]
        %v1884 = vld [vmem:[%s279 + $0x50] sm:$0xff]
        %v1885 = vld [vmem:[%s279 + $0x58] sm:$0xff]
        %v1886 = vld [vmem:[%s279 + $0x60] sm:$0xff]
        %v1887 = vld [vmem:[%s279 + $0x68] sm:$0xff]
        %v1888 = vld [vmem:[%s279 + $0x70] sm:$0xff]
        %v1889 = vld [vmem:[%s279 + $0x78] sm:$0xff]
        %v1890 = vmul.f32 %v1850, %v1882
        %v1891 = vmul.f32 %v1851, %v1883
        %v1892 = vmul.f32 %v1852, %v1884
        %v1893 = vmul.f32 %v1853, %v1885
        %v1894 = vmul.f32 %v1854, %v1886
        %v1895 = vmul.f32 %v1855, %v1887
        %v1896 = vmul.f32 %v1856, %v1888
        %v1897 = vmul.f32 %v1857, %v1889
        %v1898 = vpack.c.bf16 %v1894, %v1890
        %v1899 = vpack.c.bf16 %v1895, %v1891
        %v1900 = vpack.c.bf16 %v1896, %v1892
        %v1901 = vpack.c.bf16 %v1897, %v1893
        %1902 = vst [vmem:[#allocation2 + $0x2a0] sm:$0xff] %v1898
        %1903 = vst [vmem:[#allocation2 + $0x2a8] sm:$0xff] %v1899
        %1904 = vst [vmem:[#allocation2 + $0x2b0] sm:$0xff] %v1900
        %1905 = vst [vmem:[#allocation2 + $0x2b8] sm:$0xff] %v1901
        %v1906 = vld [vmem:[%s279 + $0x80] sm:$0xff]
        %v1907 = vld [vmem:[%s279 + $0x88] sm:$0xff]
        %v1908 = vld [vmem:[%s279 + $0x90] sm:$0xff]
        %v1909 = vld [vmem:[%s279 + $0x98] sm:$0xff]
        %v1910 = vld [vmem:[%s279 + $0xa0] sm:$0xff]
        %v1911 = vld [vmem:[%s279 + $0xa8] sm:$0xff]
        %v1912 = vld [vmem:[%s279 + $0xb0] sm:$0xff]
        %v1913 = vld [vmem:[%s279 + $0xb8] sm:$0xff]
        %v1914 = vmul.f32 %v1850, %v1906
        %v1915 = vmul.f32 %v1851, %v1907
        %v1916 = vmul.f32 %v1852, %v1908
        %v1917 = vmul.f32 %v1853, %v1909
        %v1918 = vmul.f32 %v1854, %v1910
        %v1919 = vmul.f32 %v1855, %v1911
        %v1920 = vmul.f32 %v1856, %v1912
        %v1921 = vmul.f32 %v1857, %v1913
        %v1922 = vpack.c.bf16 %v1918, %v1914
        %v1923 = vpack.c.bf16 %v1919, %v1915
        %v1924 = vpack.c.bf16 %v1920, %v1916
        %v1925 = vpack.c.bf16 %v1921, %v1917
        %1926 = vst [vmem:[#allocation2 + $0x2c0] sm:$0xff] %v1922
        %1927 = vst [vmem:[#allocation2 + $0x2c8] sm:$0xff] %v1923
        %1928 = vst [vmem:[#allocation2 + $0x2d0] sm:$0xff] %v1924
        %1929 = vst [vmem:[#allocation2 + $0x2d8] sm:$0xff] %v1925
        %v1930 = vld [vmem:[%s279 + $0xc0] sm:$0xff]
        %v1931 = vld [vmem:[%s279 + $0xc8] sm:$0xff]
        %v1932 = vld [vmem:[%s279 + $0xd0] sm:$0xff]
        %v1933 = vld [vmem:[%s279 + $0xd8] sm:$0xff]
        %v1934 = vld [vmem:[%s279 + $0xe0] sm:$0xff]
        %v1935 = vld [vmem:[%s279 + $0xe8] sm:$0xff]
        %v1936 = vld [vmem:[%s279 + $0xf0] sm:$0xff]
        %v1937 = vld [vmem:[%s279 + $0xf8] sm:$0xff]
        %v1938 = vmul.f32 %v1850, %v1930
        %v1939 = vmul.f32 %v1851, %v1931
        %v1940 = vmul.f32 %v1852, %v1932
        %v1941 = vmul.f32 %v1853, %v1933
        %v1942 = vmul.f32 %v1854, %v1934
        %v1943 = vmul.f32 %v1855, %v1935
        %v1944 = vmul.f32 %v1856, %v1936
        %v1945 = vmul.f32 %v1857, %v1937
        %v1946 = vpack.c.bf16 %v1942, %v1938
        %v1947 = vpack.c.bf16 %v1943, %v1939
        %v1948 = vpack.c.bf16 %v1944, %v1940
        %v1949 = vpack.c.bf16 %v1945, %v1941
        %1950 = vst [vmem:[#allocation2 + $0x2e0] sm:$0xff] %v1946
        %1951 = vst [vmem:[#allocation2 + $0x2e8] sm:$0xff] %v1947
        %1952 = vst [vmem:[#allocation2 + $0x2f0] sm:$0xff] %v1948
        %1953 = vst [vmem:[#allocation2 + $0x2f8] sm:$0xff] %v1949
        %s1954 = sld [smem:[#allocation3 + $0x300]]
        %v1955 = vld [vmem:[%s270] sm:$0xff]
        %v1956 = vld [vmem:[%s270 + $0x8] sm:$0xff]
        %v1957 = vld [vmem:[%s270 + $0x10] sm:$0xff]
        %v1958 = vld [vmem:[%s270 + $0x18] sm:$0xff]
        %v1959 = vld [vmem:[%s270 + $0x20] sm:$0xff]
        %v1960 = vld [vmem:[%s270 + $0x28] sm:$0xff]
        %v1961 = vld [vmem:[%s270 + $0x30] sm:$0xff]
        %v1962 = vld [vmem:[%s270 + $0x38] sm:$0xff]
        %v1963 = vstv %s1954
        %v1964 = vmul.f32 %v1963, %v1955
        %v1965 = vmul.f32 %v1963, %v1956
        %v1966 = vmul.f32 %v1963, %v1957
        %v1967 = vmul.f32 %v1963, %v1958
        %v1968 = vmul.f32 %v1963, %v1959
        %v1969 = vmul.f32 %v1963, %v1960
        %v1970 = vmul.f32 %v1963, %v1961
        %v1971 = vmul.f32 %v1963, %v1962
        %v1972 = vadd.f32 %v386, %v1964
        %v1973 = vadd.f32 %v387, %v1965
        %v1974 = vadd.f32 %v388, %v1966
        %v1975 = vadd.f32 %v389, %v1967
        %v1976 = vadd.f32 %v390, %v1968
        %v1977 = vadd.f32 %v391, %v1969
        %v1978 = vadd.f32 %v392, %v1970
        %v1979 = vadd.f32 %v393, %v1971
        %s1980 = sld [smem:[#allocation3 + $0x301]]
        %v1981 = vld [vmem:[%s270 + $0x40] sm:$0xff]
        %v1982 = vld [vmem:[%s270 + $0x48] sm:$0xff]
        %v1983 = vld [vmem:[%s270 + $0x50] sm:$0xff]
        %v1984 = vld [vmem:[%s270 + $0x58] sm:$0xff]
        %v1985 = vld [vmem:[%s270 + $0x60] sm:$0xff]
        %v1986 = vld [vmem:[%s270 + $0x68] sm:$0xff]
        %v1987 = vld [vmem:[%s270 + $0x70] sm:$0xff]
        %v1988 = vld [vmem:[%s270 + $0x78] sm:$0xff]
        %v1989 = vstv %s1980
        %v1990 = vmul.f32 %v1989, %v1981
        %v1991 = vmul.f32 %v1989, %v1982
        %v1992 = vmul.f32 %v1989, %v1983
        %v1993 = vmul.f32 %v1989, %v1984
        %v1994 = vmul.f32 %v1989, %v1985
        %v1995 = vmul.f32 %v1989, %v1986
        %v1996 = vmul.f32 %v1989, %v1987
        %v1997 = vmul.f32 %v1989, %v1988
        %v1998 = vadd.f32 %v1972, %v1990
        %v1999 = vadd.f32 %v1973, %v1991
        %v2000 = vadd.f32 %v1974, %v1992
        %v2001 = vadd.f32 %v1975, %v1993
        %v2002 = vadd.f32 %v1976, %v1994
        %v2003 = vadd.f32 %v1977, %v1995
        %v2004 = vadd.f32 %v1978, %v1996
        %v2005 = vadd.f32 %v1979, %v1997
        %s2006 = sld [smem:[#allocation3 + $0x302]]
        %v2007 = vld [vmem:[%s270 + $0x80] sm:$0xff]
        %v2008 = vld [vmem:[%s270 + $0x88] sm:$0xff]
        %v2009 = vld [vmem:[%s270 + $0x90] sm:$0xff]
        %v2010 = vld [vmem:[%s270 + $0x98] sm:$0xff]
        %v2011 = vld [vmem:[%s270 + $0xa0] sm:$0xff]
        %v2012 = vld [vmem:[%s270 + $0xa8] sm:$0xff]
        %v2013 = vld [vmem:[%s270 + $0xb0] sm:$0xff]
        %v2014 = vld [vmem:[%s270 + $0xb8] sm:$0xff]
        %v2015 = vstv %s2006
        %v2016 = vmul.f32 %v2015, %v2007
        %v2017 = vmul.f32 %v2015, %v2008
        %v2018 = vmul.f32 %v2015, %v2009
        %v2019 = vmul.f32 %v2015, %v2010
        %v2020 = vmul.f32 %v2015, %v2011
        %v2021 = vmul.f32 %v2015, %v2012
        %v2022 = vmul.f32 %v2015, %v2013
        %v2023 = vmul.f32 %v2015, %v2014
        %v2024 = vadd.f32 %v1998, %v2016
        %v2025 = vadd.f32 %v1999, %v2017
        %v2026 = vadd.f32 %v2000, %v2018
        %v2027 = vadd.f32 %v2001, %v2019
        %v2028 = vadd.f32 %v2002, %v2020
        %v2029 = vadd.f32 %v2003, %v2021
        %v2030 = vadd.f32 %v2004, %v2022
        %v2031 = vadd.f32 %v2005, %v2023
        %s2032 = sld [smem:[#allocation3 + $0x303]]
        %v2033 = vstv %s2032
        %v2034 = vadd.f32 %v2024, %v2033
        %v2035 = vadd.f32 %v2025, %v2033
        %v2036 = vadd.f32 %v2026, %v2033
        %v2037 = vadd.f32 %v2027, %v2033
        %v2038 = vadd.f32 %v2028, %v2033
        %v2039 = vadd.f32 %v2029, %v2033
        %v2040 = vadd.f32 %v2030, %v2033
        %v2041 = vadd.f32 %v2031, %v2033
        %v2042 = vmax.f32 %v2034, 0.0
        %v2043 = vmax.f32 %v2035, 0.0
        %v2044 = vmax.f32 %v2036, 0.0
        %v2045 = vmax.f32 %v2037, 0.0
        %v2046 = vmax.f32 %v2038, 0.0
        %v2047 = vmax.f32 %v2039, 0.0
        %v2048 = vmax.f32 %v2040, 0.0
        %v2049 = vmax.f32 %v2041, 0.0
        %v2050 = vrsqrt.pop %v2042
        %v2051 = vmul.f32 %v2042, %v2050
        %vm2052 = vcmp.eq.f32.partialorder %v2042, inf
        %v2053 = vsel %vm2052, %v2042, %v2051
        %vm2054 = vcmp.eq.f32.partialorder %v2042, 0.0
        %v2055 = vand.u32 %v2042, 2147483648
        %v2056 = vsel %vm2054, %v2055, %v2053
        %v2057 = vrsqrt.pop %v2043
        %v2058 = vmul.f32 %v2043, %v2057
        %vm2059 = vcmp.eq.f32.partialorder %v2043, inf
        %v2060 = vsel %vm2059, %v2043, %v2058
        %vm2061 = vcmp.eq.f32.partialorder %v2043, 0.0
        %v2062 = vand.u32 %v2043, 2147483648
        %v2063 = vsel %vm2061, %v2062, %v2060
        %v2064 = vrsqrt.pop %v2044
        %v2065 = vmul.f32 %v2044, %v2064
        %vm2066 = vcmp.eq.f32.partialorder %v2044, inf
        %v2067 = vsel %vm2066, %v2044, %v2065
        %vm2068 = vcmp.eq.f32.partialorder %v2044, 0.0
        %v2069 = vand.u32 %v2044, 2147483648
        %v2070 = vsel %vm2068, %v2069, %v2067
        %v2071 = vrsqrt.pop %v2045
        %v2072 = vmul.f32 %v2045, %v2071
        %vm2073 = vcmp.eq.f32.partialorder %v2045, inf
        %v2074 = vsel %vm2073, %v2045, %v2072
        %vm2075 = vcmp.eq.f32.partialorder %v2045, 0.0
        %v2076 = vand.u32 %v2045, 2147483648
        %v2077 = vsel %vm2075, %v2076, %v2074
        %v2078 = vrsqrt.pop %v2046
        %v2079 = vmul.f32 %v2046, %v2078
        %vm2080 = vcmp.eq.f32.partialorder %v2046, inf
        %v2081 = vsel %vm2080, %v2046, %v2079
        %vm2082 = vcmp.eq.f32.partialorder %v2046, 0.0
        %v2083 = vand.u32 %v2046, 2147483648
        %v2084 = vsel %vm2082, %v2083, %v2081
        %v2085 = vrsqrt.pop %v2047
        %v2086 = vmul.f32 %v2047, %v2085
        %vm2087 = vcmp.eq.f32.partialorder %v2047, inf
        %v2088 = vsel %vm2087, %v2047, %v2086
        %vm2089 = vcmp.eq.f32.partialorder %v2047, 0.0
        %v2090 = vand.u32 %v2047, 2147483648
        %v2091 = vsel %vm2089, %v2090, %v2088
        %v2092 = vrsqrt.pop %v2048
        %v2093 = vmul.f32 %v2048, %v2092
        %vm2094 = vcmp.eq.f32.partialorder %v2048, inf
        %v2095 = vsel %vm2094, %v2048, %v2093
        %vm2096 = vcmp.eq.f32.partialorder %v2048, 0.0
        %v2097 = vand.u32 %v2048, 2147483648
        %v2098 = vsel %vm2096, %v2097, %v2095
        %v2099 = vrsqrt.pop %v2049
        %v2100 = vmul.f32 %v2049, %v2099
        %vm2101 = vcmp.eq.f32.partialorder %v2049, inf
        %v2102 = vsel %vm2101, %v2049, %v2100
        %vm2103 = vcmp.eq.f32.partialorder %v2049, 0.0
        %v2104 = vand.u32 %v2049, 2147483648
        %v2105 = vsel %vm2103, %v2104, %v2102
        %v2106 = vsub.f32 1.0, %v2056
        %v2107 = vsub.f32 1.0, %v2063
        %v2108 = vsub.f32 1.0, %v2070
        %v2109 = vsub.f32 1.0, %v2077
        %v2110 = vsub.f32 1.0, %v2084
        %v2111 = vsub.f32 1.0, %v2091
        %v2112 = vsub.f32 1.0, %v2098
        %v2113 = vsub.f32 1.0, %v2105
        %v2114 = vmax.f32 %v2106, 0.0
        %v2115 = vmax.f32 %v2107, 0.0
        %v2116 = vmax.f32 %v2108, 0.0
        %v2117 = vmax.f32 %v2109, 0.0
        %v2118 = vmax.f32 %v2110, 0.0
        %v2119 = vmax.f32 %v2111, 0.0
        %v2120 = vmax.f32 %v2112, 0.0
        %v2121 = vmax.f32 %v2113, 0.0
        %v2122 = vld [vmem:[%s279] sm:$0xff]
        %v2123 = vld [vmem:[%s279 + $0x8] sm:$0xff]
        %v2124 = vld [vmem:[%s279 + $0x10] sm:$0xff]
        %v2125 = vld [vmem:[%s279 + $0x18] sm:$0xff]
        %v2126 = vld [vmem:[%s279 + $0x20] sm:$0xff]
        %v2127 = vld [vmem:[%s279 + $0x28] sm:$0xff]
        %v2128 = vld [vmem:[%s279 + $0x30] sm:$0xff]
        %v2129 = vld [vmem:[%s279 + $0x38] sm:$0xff]
        %v2130 = vmul.f32 %v2114, %v2122
        %v2131 = vmul.f32 %v2115, %v2123
        %v2132 = vmul.f32 %v2116, %v2124
        %v2133 = vmul.f32 %v2117, %v2125
        %v2134 = vmul.f32 %v2118, %v2126
        %v2135 = vmul.f32 %v2119, %v2127
        %v2136 = vmul.f32 %v2120, %v2128
        %v2137 = vmul.f32 %v2121, %v2129
        %v2138 = vpack.c.bf16 %v2134, %v2130
        %v2139 = vpack.c.bf16 %v2135, %v2131
        %v2140 = vpack.c.bf16 %v2136, %v2132
        %v2141 = vpack.c.bf16 %v2137, %v2133
        %2142 = vst [vmem:[#allocation2 + $0x300] sm:$0xff] %v2138
        %2143 = vst [vmem:[#allocation2 + $0x308] sm:$0xff] %v2139
        %2144 = vst [vmem:[#allocation2 + $0x310] sm:$0xff] %v2140
        %2145 = vst [vmem:[#allocation2 + $0x318] sm:$0xff] %v2141
        %v2146 = vld [vmem:[%s279 + $0x40] sm:$0xff]
        %v2147 = vld [vmem:[%s279 + $0x48] sm:$0xff]
        %v2148 = vld [vmem:[%s279 + $0x50] sm:$0xff]
        %v2149 = vld [vmem:[%s279 + $0x58] sm:$0xff]
        %v2150 = vld [vmem:[%s279 + $0x60] sm:$0xff]
        %v2151 = vld [vmem:[%s279 + $0x68] sm:$0xff]
        %v2152 = vld [vmem:[%s279 + $0x70] sm:$0xff]
        %v2153 = vld [vmem:[%s279 + $0x78] sm:$0xff]
        %v2154 = vmul.f32 %v2114, %v2146
        %v2155 = vmul.f32 %v2115, %v2147
        %v2156 = vmul.f32 %v2116, %v2148
        %v2157 = vmul.f32 %v2117, %v2149
        %v2158 = vmul.f32 %v2118, %v2150
        %v2159 = vmul.f32 %v2119, %v2151
        %v2160 = vmul.f32 %v2120, %v2152
        %v2161 = vmul.f32 %v2121, %v2153
        %v2162 = vpack.c.bf16 %v2158, %v2154
        %v2163 = vpack.c.bf16 %v2159, %v2155
        %v2164 = vpack.c.bf16 %v2160, %v2156
        %v2165 = vpack.c.bf16 %v2161, %v2157
        %2166 = vst [vmem:[#allocation2 + $0x320] sm:$0xff] %v2162
        %2167 = vst [vmem:[#allocation2 + $0x328] sm:$0xff] %v2163
        %2168 = vst [vmem:[#allocation2 + $0x330] sm:$0xff] %v2164
        %2169 = vst [vmem:[#allocation2 + $0x338] sm:$0xff] %v2165
        %v2170 = vld [vmem:[%s279 + $0x80] sm:$0xff]
        %v2171 = vld [vmem:[%s279 + $0x88] sm:$0xff]
        %v2172 = vld [vmem:[%s279 + $0x90] sm:$0xff]
        %v2173 = vld [vmem:[%s279 + $0x98] sm:$0xff]
        %v2174 = vld [vmem:[%s279 + $0xa0] sm:$0xff]
        %v2175 = vld [vmem:[%s279 + $0xa8] sm:$0xff]
        %v2176 = vld [vmem:[%s279 + $0xb0] sm:$0xff]
        %v2177 = vld [vmem:[%s279 + $0xb8] sm:$0xff]
        %v2178 = vmul.f32 %v2114, %v2170
        %v2179 = vmul.f32 %v2115, %v2171
        %v2180 = vmul.f32 %v2116, %v2172
        %v2181 = vmul.f32 %v2117, %v2173
        %v2182 = vmul.f32 %v2118, %v2174
        %v2183 = vmul.f32 %v2119, %v2175
        %v2184 = vmul.f32 %v2120, %v2176
        %v2185 = vmul.f32 %v2121, %v2177
        %v2186 = vpack.c.bf16 %v2182, %v2178
        %v2187 = vpack.c.bf16 %v2183, %v2179
        %v2188 = vpack.c.bf16 %v2184, %v2180
        %v2189 = vpack.c.bf16 %v2185, %v2181
        %2190 = vst [vmem:[#allocation2 + $0x340] sm:$0xff] %v2186
        %2191 = vst [vmem:[#allocation2 + $0x348] sm:$0xff] %v2187
        %2192 = vst [vmem:[#allocation2 + $0x350] sm:$0xff] %v2188
        %2193 = vst [vmem:[#allocation2 + $0x358] sm:$0xff] %v2189
        %v2194 = vld [vmem:[%s279 + $0xc0] sm:$0xff]
        %v2195 = vld [vmem:[%s279 + $0xc8] sm:$0xff]
        %v2196 = vld [vmem:[%s279 + $0xd0] sm:$0xff]
        %v2197 = vld [vmem:[%s279 + $0xd8] sm:$0xff]
        %v2198 = vld [vmem:[%s279 + $0xe0] sm:$0xff]
        %v2199 = vld [vmem:[%s279 + $0xe8] sm:$0xff]
        %v2200 = vld [vmem:[%s279 + $0xf0] sm:$0xff]
        %v2201 = vld [vmem:[%s279 + $0xf8] sm:$0xff]
        %v2202 = vmul.f32 %v2114, %v2194
        %v2203 = vmul.f32 %v2115, %v2195
        %v2204 = vmul.f32 %v2116, %v2196
        %v2205 = vmul.f32 %v2117, %v2197
        %v2206 = vmul.f32 %v2118, %v2198
        %v2207 = vmul.f32 %v2119, %v2199
        %v2208 = vmul.f32 %v2120, %v2200
        %v2209 = vmul.f32 %v2121, %v2201
        %v2210 = vpack.c.bf16 %v2206, %v2202
        %v2211 = vpack.c.bf16 %v2207, %v2203
        %v2212 = vpack.c.bf16 %v2208, %v2204
        %v2213 = vpack.c.bf16 %v2209, %v2205
        %2214 = vst [vmem:[#allocation2 + $0x360] sm:$0xff] %v2210
        %2215 = vst [vmem:[#allocation2 + $0x368] sm:$0xff] %v2211
        %2216 = vst [vmem:[#allocation2 + $0x370] sm:$0xff] %v2212
        %2217 = vst [vmem:[#allocation2 + $0x378] sm:$0xff] %v2213
        %s2218 = sld [smem:[#allocation3 + $0x380]]
        %v2219 = vld [vmem:[%s270] sm:$0xff]
        %v2220 = vld [vmem:[%s270 + $0x8] sm:$0xff]
        %v2221 = vld [vmem:[%s270 + $0x10] sm:$0xff]
        %v2222 = vld [vmem:[%s270 + $0x18] sm:$0xff]
        %v2223 = vld [vmem:[%s270 + $0x20] sm:$0xff]
        %v2224 = vld [vmem:[%s270 + $0x28] sm:$0xff]
        %v2225 = vld [vmem:[%s270 + $0x30] sm:$0xff]
        %v2226 = vld [vmem:[%s270 + $0x38] sm:$0xff]
        %v2227 = vstv %s2218
        %v2228 = vmul.f32 %v2227, %v2219
        %v2229 = vmul.f32 %v2227, %v2220
        %v2230 = vmul.f32 %v2227, %v2221
        %v2231 = vmul.f32 %v2227, %v2222
        %v2232 = vmul.f32 %v2227, %v2223
        %v2233 = vmul.f32 %v2227, %v2224
        %v2234 = vmul.f32 %v2227, %v2225
        %v2235 = vmul.f32 %v2227, %v2226
        %v2236 = vadd.f32 %v386, %v2228
        %v2237 = vadd.f32 %v387, %v2229
        %v2238 = vadd.f32 %v388, %v2230
        %v2239 = vadd.f32 %v389, %v2231
        %v2240 = vadd.f32 %v390, %v2232
        %v2241 = vadd.f32 %v391, %v2233
        %v2242 = vadd.f32 %v392, %v2234
        %v2243 = vadd.f32 %v393, %v2235
        %s2244 = sld [smem:[#allocation3 + $0x381]]
        %v2245 = vld [vmem:[%s270 + $0x40] sm:$0xff]
        %v2246 = vld [vmem:[%s270 + $0x48] sm:$0xff]
        %v2247 = vld [vmem:[%s270 + $0x50] sm:$0xff]
        %v2248 = vld [vmem:[%s270 + $0x58] sm:$0xff]
        %v2249 = vld [vmem:[%s270 + $0x60] sm:$0xff]
        %v2250 = vld [vmem:[%s270 + $0x68] sm:$0xff]
        %v2251 = vld [vmem:[%s270 + $0x70] sm:$0xff]
        %v2252 = vld [vmem:[%s270 + $0x78] sm:$0xff]
        %v2253 = vstv %s2244
        %v2254 = vmul.f32 %v2253, %v2245
        %v2255 = vmul.f32 %v2253, %v2246
        %v2256 = vmul.f32 %v2253, %v2247
        %v2257 = vmul.f32 %v2253, %v2248
        %v2258 = vmul.f32 %v2253, %v2249
        %v2259 = vmul.f32 %v2253, %v2250
        %v2260 = vmul.f32 %v2253, %v2251
        %v2261 = vmul.f32 %v2253, %v2252
        %v2262 = vadd.f32 %v2236, %v2254
        %v2263 = vadd.f32 %v2237, %v2255
        %v2264 = vadd.f32 %v2238, %v2256
        %v2265 = vadd.f32 %v2239, %v2257
        %v2266 = vadd.f32 %v2240, %v2258
        %v2267 = vadd.f32 %v2241, %v2259
        %v2268 = vadd.f32 %v2242, %v2260
        %v2269 = vadd.f32 %v2243, %v2261
        %s2270 = sld [smem:[#allocation3 + $0x382]]
        %v2271 = vld [vmem:[%s270 + $0x80] sm:$0xff]
        %v2272 = vld [vmem:[%s270 + $0x88] sm:$0xff]
        %v2273 = vld [vmem:[%s270 + $0x90] sm:$0xff]
        %v2274 = vld [vmem:[%s270 + $0x98] sm:$0xff]
        %v2275 = vld [vmem:[%s270 + $0xa0] sm:$0xff]
        %v2276 = vld [vmem:[%s270 + $0xa8] sm:$0xff]
        %v2277 = vld [vmem:[%s270 + $0xb0] sm:$0xff]
        %v2278 = vld [vmem:[%s270 + $0xb8] sm:$0xff]
        %v2279 = vstv %s2270
        %v2280 = vmul.f32 %v2279, %v2271
        %v2281 = vmul.f32 %v2279, %v2272
        %v2282 = vmul.f32 %v2279, %v2273
        %v2283 = vmul.f32 %v2279, %v2274
        %v2284 = vmul.f32 %v2279, %v2275
        %v2285 = vmul.f32 %v2279, %v2276
        %v2286 = vmul.f32 %v2279, %v2277
        %v2287 = vmul.f32 %v2279, %v2278
        %v2288 = vadd.f32 %v2262, %v2280
        %v2289 = vadd.f32 %v2263, %v2281
        %v2290 = vadd.f32 %v2264, %v2282
        %v2291 = vadd.f32 %v2265, %v2283
        %v2292 = vadd.f32 %v2266, %v2284
        %v2293 = vadd.f32 %v2267, %v2285
        %v2294 = vadd.f32 %v2268, %v2286
        %v2295 = vadd.f32 %v2269, %v2287
        %s2296 = sld [smem:[#allocation3 + $0x383]]
        %v2297 = vstv %s2296
        %v2298 = vadd.f32 %v2288, %v2297
        %v2299 = vadd.f32 %v2289, %v2297
        %v2300 = vadd.f32 %v2290, %v2297
        %v2301 = vadd.f32 %v2291, %v2297
        %v2302 = vadd.f32 %v2292, %v2297
        %v2303 = vadd.f32 %v2293, %v2297
        %v2304 = vadd.f32 %v2294, %v2297
        %v2305 = vadd.f32 %v2295, %v2297
        %v2306 = vmax.f32 %v2298, 0.0
        %v2307 = vmax.f32 %v2299, 0.0
        %v2308 = vmax.f32 %v2300, 0.0
        %v2309 = vmax.f32 %v2301, 0.0
        %v2310 = vmax.f32 %v2302, 0.0
        %v2311 = vmax.f32 %v2303, 0.0
        %v2312 = vmax.f32 %v2304, 0.0
        %v2313 = vmax.f32 %v2305, 0.0
        %v2314 = vrsqrt.pop %v2306
        %v2315 = vmul.f32 %v2306, %v2314
        %vm2316 = vcmp.eq.f32.partialorder %v2306, inf
        %v2317 = vsel %vm2316, %v2306, %v2315
        %vm2318 = vcmp.eq.f32.partialorder %v2306, 0.0
        %v2319 = vand.u32 %v2306, 2147483648
        %v2320 = vsel %vm2318, %v2319, %v2317
        %v2321 = vrsqrt.pop %v2307
        %v2322 = vmul.f32 %v2307, %v2321
        %vm2323 = vcmp.eq.f32.partialorder %v2307, inf
        %v2324 = vsel %vm2323, %v2307, %v2322
        %vm2325 = vcmp.eq.f32.partialorder %v2307, 0.0
        %v2326 = vand.u32 %v2307, 2147483648
        %v2327 = vsel %vm2325, %v2326, %v2324
        %v2328 = vrsqrt.pop %v2308
        %v2329 = vmul.f32 %v2308, %v2328
        %vm2330 = vcmp.eq.f32.partialorder %v2308, inf
        %v2331 = vsel %vm2330, %v2308, %v2329
        %vm2332 = vcmp.eq.f32.partialorder %v2308, 0.0
        %v2333 = vand.u32 %v2308, 2147483648
        %v2334 = vsel %vm2332, %v2333, %v2331
        %v2335 = vrsqrt.pop %v2309
        %v2336 = vmul.f32 %v2309, %v2335
        %vm2337 = vcmp.eq.f32.partialorder %v2309, inf
        %v2338 = vsel %vm2337, %v2309, %v2336
        %vm2339 = vcmp.eq.f32.partialorder %v2309, 0.0
        %v2340 = vand.u32 %v2309, 2147483648
        %v2341 = vsel %vm2339, %v2340, %v2338
        %v2342 = vrsqrt.pop %v2310
        %v2343 = vmul.f32 %v2310, %v2342
        %vm2344 = vcmp.eq.f32.partialorder %v2310, inf
        %v2345 = vsel %vm2344, %v2310, %v2343
        %vm2346 = vcmp.eq.f32.partialorder %v2310, 0.0
        %v2347 = vand.u32 %v2310, 2147483648
        %v2348 = vsel %vm2346, %v2347, %v2345
        %v2349 = vrsqrt.pop %v2311
        %v2350 = vmul.f32 %v2311, %v2349
        %vm2351 = vcmp.eq.f32.partialorder %v2311, inf
        %v2352 = vsel %vm2351, %v2311, %v2350
        %vm2353 = vcmp.eq.f32.partialorder %v2311, 0.0
        %v2354 = vand.u32 %v2311, 2147483648
        %v2355 = vsel %vm2353, %v2354, %v2352
        %v2356 = vrsqrt.pop %v2312
        %v2357 = vmul.f32 %v2312, %v2356
        %vm2358 = vcmp.eq.f32.partialorder %v2312, inf
        %v2359 = vsel %vm2358, %v2312, %v2357
        %vm2360 = vcmp.eq.f32.partialorder %v2312, 0.0
        %v2361 = vand.u32 %v2312, 2147483648
        %v2362 = vsel %vm2360, %v2361, %v2359
        %v2363 = vrsqrt.pop %v2313
        %v2364 = vmul.f32 %v2313, %v2363
        %vm2365 = vcmp.eq.f32.partialorder %v2313, inf
        %v2366 = vsel %vm2365, %v2313, %v2364
        %vm2367 = vcmp.eq.f32.partialorder %v2313, 0.0
        %v2368 = vand.u32 %v2313, 2147483648
        %v2369 = vsel %vm2367, %v2368, %v2366
        %v2370 = vsub.f32 1.0, %v2320
        %v2371 = vsub.f32 1.0, %v2327
        %v2372 = vsub.f32 1.0, %v2334
        %v2373 = vsub.f32 1.0, %v2341
        %v2374 = vsub.f32 1.0, %v2348
        %v2375 = vsub.f32 1.0, %v2355
        %v2376 = vsub.f32 1.0, %v2362
        %v2377 = vsub.f32 1.0, %v2369
        %v2378 = vmax.f32 %v2370, 0.0
        %v2379 = vmax.f32 %v2371, 0.0
        %v2380 = vmax.f32 %v2372, 0.0
        %v2381 = vmax.f32 %v2373, 0.0
        %v2382 = vmax.f32 %v2374, 0.0
        %v2383 = vmax.f32 %v2375, 0.0
        %v2384 = vmax.f32 %v2376, 0.0
        %v2385 = vmax.f32 %v2377, 0.0
        %v2386 = vld [vmem:[%s279] sm:$0xff]
        %v2387 = vld [vmem:[%s279 + $0x8] sm:$0xff]
        %v2388 = vld [vmem:[%s279 + $0x10] sm:$0xff]
        %v2389 = vld [vmem:[%s279 + $0x18] sm:$0xff]
        %v2390 = vld [vmem:[%s279 + $0x20] sm:$0xff]
        %v2391 = vld [vmem:[%s279 + $0x28] sm:$0xff]
        %v2392 = vld [vmem:[%s279 + $0x30] sm:$0xff]
        %v2393 = vld [vmem:[%s279 + $0x38] sm:$0xff]
        %v2394 = vmul.f32 %v2378, %v2386
        %v2395 = vmul.f32 %v2379, %v2387
        %v2396 = vmul.f32 %v2380, %v2388
        %v2397 = vmul.f32 %v2381, %v2389
        %v2398 = vmul.f32 %v2382, %v2390
        %v2399 = vmul.f32 %v2383, %v2391
        %v2400 = vmul.f32 %v2384, %v2392
        %v2401 = vmul.f32 %v2385, %v2393
        %v2402 = vpack.c.bf16 %v2398, %v2394
        %v2403 = vpack.c.bf16 %v2399, %v2395
        %v2404 = vpack.c.bf16 %v2400, %v2396
        %v2405 = vpack.c.bf16 %v2401, %v2397
        %2406 = vst [vmem:[#allocation2 + $0x380] sm:$0xff] %v2402
        %2407 = vst [vmem:[#allocation2 + $0x388] sm:$0xff] %v2403
        %2408 = vst [vmem:[#allocation2 + $0x390] sm:$0xff] %v2404
        %2409 = vst [vmem:[#allocation2 + $0x398] sm:$0xff] %v2405
        %v2410 = vld [vmem:[%s279 + $0x40] sm:$0xff]
        %v2411 = vld [vmem:[%s279 + $0x48] sm:$0xff]
        %v2412 = vld [vmem:[%s279 + $0x50] sm:$0xff]
        %v2413 = vld [vmem:[%s279 + $0x58] sm:$0xff]
        %v2414 = vld [vmem:[%s279 + $0x60] sm:$0xff]
        %v2415 = vld [vmem:[%s279 + $0x68] sm:$0xff]
        %v2416 = vld [vmem:[%s279 + $0x70] sm:$0xff]
        %v2417 = vld [vmem:[%s279 + $0x78] sm:$0xff]
        %v2418 = vmul.f32 %v2378, %v2410
        %v2419 = vmul.f32 %v2379, %v2411
        %v2420 = vmul.f32 %v2380, %v2412
        %v2421 = vmul.f32 %v2381, %v2413
        %v2422 = vmul.f32 %v2382, %v2414
        %v2423 = vmul.f32 %v2383, %v2415
        %v2424 = vmul.f32 %v2384, %v2416
        %v2425 = vmul.f32 %v2385, %v2417
        %v2426 = vpack.c.bf16 %v2422, %v2418
        %v2427 = vpack.c.bf16 %v2423, %v2419
        %v2428 = vpack.c.bf16 %v2424, %v2420
        %v2429 = vpack.c.bf16 %v2425, %v2421
        %2430 = vst [vmem:[#allocation2 + $0x3a0] sm:$0xff] %v2426
        %2431 = vst [vmem:[#allocation2 + $0x3a8] sm:$0xff] %v2427
        %2432 = vst [vmem:[#allocation2 + $0x3b0] sm:$0xff] %v2428
        %2433 = vst [vmem:[#allocation2 + $0x3b8] sm:$0xff] %v2429
        %v2434 = vld [vmem:[%s279 + $0x80] sm:$0xff]
        %v2435 = vld [vmem:[%s279 + $0x88] sm:$0xff]
        %v2436 = vld [vmem:[%s279 + $0x90] sm:$0xff]
        %v2437 = vld [vmem:[%s279 + $0x98] sm:$0xff]
        %v2438 = vld [vmem:[%s279 + $0xa0] sm:$0xff]
        %v2439 = vld [vmem:[%s279 + $0xa8] sm:$0xff]
        %v2440 = vld [vmem:[%s279 + $0xb0] sm:$0xff]
        %v2441 = vld [vmem:[%s279 + $0xb8] sm:$0xff]
        %v2442 = vmul.f32 %v2378, %v2434
        %v2443 = vmul.f32 %v2379, %v2435
        %v2444 = vmul.f32 %v2380, %v2436
        %v2445 = vmul.f32 %v2381, %v2437
        %v2446 = vmul.f32 %v2382, %v2438
        %v2447 = vmul.f32 %v2383, %v2439
        %v2448 = vmul.f32 %v2384, %v2440
        %v2449 = vmul.f32 %v2385, %v2441
        %v2450 = vpack.c.bf16 %v2446, %v2442
        %v2451 = vpack.c.bf16 %v2447, %v2443
        %v2452 = vpack.c.bf16 %v2448, %v2444
        %v2453 = vpack.c.bf16 %v2449, %v2445
        %2454 = vst [vmem:[#allocation2 + $0x3c0] sm:$0xff] %v2450
        %2455 = vst [vmem:[#allocation2 + $0x3c8] sm:$0xff] %v2451
        %2456 = vst [vmem:[#allocation2 + $0x3d0] sm:$0xff] %v2452
        %2457 = vst [vmem:[#allocation2 + $0x3d8] sm:$0xff] %v2453
        %v2458 = vld [vmem:[%s279 + $0xc0] sm:$0xff]
        %v2459 = vld [vmem:[%s279 + $0xc8] sm:$0xff]
        %v2460 = vld [vmem:[%s279 + $0xd0] sm:$0xff]
        %v2461 = vld [vmem:[%s279 + $0xd8] sm:$0xff]
        %v2462 = vld [vmem:[%s279 + $0xe0] sm:$0xff]
        %v2463 = vld [vmem:[%s279 + $0xe8] sm:$0xff]
        %v2464 = vld [vmem:[%s279 + $0xf0] sm:$0xff]
        %v2465 = vld [vmem:[%s279 + $0xf8] sm:$0xff]
        %v2466 = vmul.f32 %v2378, %v2458
        %v2467 = vmul.f32 %v2379, %v2459
        %v2468 = vmul.f32 %v2380, %v2460
        %v2469 = vmul.f32 %v2381, %v2461
        %v2470 = vmul.f32 %v2382, %v2462
        %v2471 = vmul.f32 %v2383, %v2463
        %v2472 = vmul.f32 %v2384, %v2464
        %v2473 = vmul.f32 %v2385, %v2465
        %v2474 = vpack.c.bf16 %v2470, %v2466
        %v2475 = vpack.c.bf16 %v2471, %v2467
        %v2476 = vpack.c.bf16 %v2472, %v2468
        %v2477 = vpack.c.bf16 %v2473, %v2469
        %2478 = vst [vmem:[#allocation2 + $0x3e0] sm:$0xff] %v2474
        %2479 = vst [vmem:[#allocation2 + $0x3e8] sm:$0xff] %v2475
        %2480 = vst [vmem:[#allocation2 + $0x3f0] sm:$0xff] %v2476
        %2481 = vst [vmem:[#allocation2 + $0x3f8] sm:$0xff] %v2477
        %s2482 = sld [smem:[#allocation3 + $0x400]]
        %v2483 = vld [vmem:[%s270] sm:$0xff]
        %v2484 = vld [vmem:[%s270 + $0x8] sm:$0xff]
        %v2485 = vld [vmem:[%s270 + $0x10] sm:$0xff]
        %v2486 = vld [vmem:[%s270 + $0x18] sm:$0xff]
        %v2487 = vld [vmem:[%s270 + $0x20] sm:$0xff]
        %v2488 = vld [vmem:[%s270 + $0x28] sm:$0xff]
        %v2489 = vld [vmem:[%s270 + $0x30] sm:$0xff]
        %v2490 = vld [vmem:[%s270 + $0x38] sm:$0xff]
        %v2491 = vstv %s2482
        %v2492 = vmul.f32 %v2491, %v2483
        %v2493 = vmul.f32 %v2491, %v2484
        %v2494 = vmul.f32 %v2491, %v2485
        %v2495 = vmul.f32 %v2491, %v2486
        %v2496 = vmul.f32 %v2491, %v2487
        %v2497 = vmul.f32 %v2491, %v2488
        %v2498 = vmul.f32 %v2491, %v2489
        %v2499 = vmul.f32 %v2491, %v2490
        %v2500 = vadd.f32 %v386, %v2492
        %v2501 = vadd.f32 %v387, %v2493
        %v2502 = vadd.f32 %v388, %v2494
        %v2503 = vadd.f32 %v389, %v2495
        %v2504 = vadd.f32 %v390, %v2496
        %v2505 = vadd.f32 %v391, %v2497
        %v2506 = vadd.f32 %v392, %v2498
        %v2507 = vadd.f32 %v393, %v2499
        %s2508 = sld [smem:[#allocation3 + $0x401]]
        %v2509 = vld [vmem:[%s270 + $0x40] sm:$0xff]
        %v2510 = vld [vmem:[%s270 + $0x48] sm:$0xff]
        %v2511 = vld [vmem:[%s270 + $0x50] sm:$0xff]
        %v2512 = vld [vmem:[%s270 + $0x58] sm:$0xff]
        %v2513 = vld [vmem:[%s270 + $0x60] sm:$0xff]
        %v2514 = vld [vmem:[%s270 + $0x68] sm:$0xff]
        %v2515 = vld [vmem:[%s270 + $0x70] sm:$0xff]
        %v2516 = vld [vmem:[%s270 + $0x78] sm:$0xff]
        %v2517 = vstv %s2508
        %v2518 = vmul.f32 %v2517, %v2509
        %v2519 = vmul.f32 %v2517, %v2510
        %v2520 = vmul.f32 %v2517, %v2511
        %v2521 = vmul.f32 %v2517, %v2512
        %v2522 = vmul.f32 %v2517, %v2513
        %v2523 = vmul.f32 %v2517, %v2514
        %v2524 = vmul.f32 %v2517, %v2515
        %v2525 = vmul.f32 %v2517, %v2516
        %v2526 = vadd.f32 %v2500, %v2518
        %v2527 = vadd.f32 %v2501, %v2519
        %v2528 = vadd.f32 %v2502, %v2520
        %v2529 = vadd.f32 %v2503, %v2521
        %v2530 = vadd.f32 %v2504, %v2522
        %v2531 = vadd.f32 %v2505, %v2523
        %v2532 = vadd.f32 %v2506, %v2524
        %v2533 = vadd.f32 %v2507, %v2525
        %s2534 = sld [smem:[#allocation3 + $0x402]]
        %v2535 = vld [vmem:[%s270 + $0x80] sm:$0xff]
        %v2536 = vld [vmem:[%s270 + $0x88] sm:$0xff]
        %v2537 = vld [vmem:[%s270 + $0x90] sm:$0xff]
        %v2538 = vld [vmem:[%s270 + $0x98] sm:$0xff]
        %v2539 = vld [vmem:[%s270 + $0xa0] sm:$0xff]
        %v2540 = vld [vmem:[%s270 + $0xa8] sm:$0xff]
        %v2541 = vld [vmem:[%s270 + $0xb0] sm:$0xff]
        %v2542 = vld [vmem:[%s270 + $0xb8] sm:$0xff]
        %v2543 = vstv %s2534
        %v2544 = vmul.f32 %v2543, %v2535
        %v2545 = vmul.f32 %v2543, %v2536
        %v2546 = vmul.f32 %v2543, %v2537
        %v2547 = vmul.f32 %v2543, %v2538
        %v2548 = vmul.f32 %v2543, %v2539
        %v2549 = vmul.f32 %v2543, %v2540
        %v2550 = vmul.f32 %v2543, %v2541
        %v2551 = vmul.f32 %v2543, %v2542
        %v2552 = vadd.f32 %v2526, %v2544
        %v2553 = vadd.f32 %v2527, %v2545
        %v2554 = vadd.f32 %v2528, %v2546
        %v2555 = vadd.f32 %v2529, %v2547
        %v2556 = vadd.f32 %v2530, %v2548
        %v2557 = vadd.f32 %v2531, %v2549
        %v2558 = vadd.f32 %v2532, %v2550
        %v2559 = vadd.f32 %v2533, %v2551
        %s2560 = sld [smem:[#allocation3 + $0x403]]
        %v2561 = vstv %s2560
        %v2562 = vadd.f32 %v2552, %v2561
        %v2563 = vadd.f32 %v2553, %v2561
        %v2564 = vadd.f32 %v2554, %v2561
        %v2565 = vadd.f32 %v2555, %v2561
        %v2566 = vadd.f32 %v2556, %v2561
        %v2567 = vadd.f32 %v2557, %v2561
        %v2568 = vadd.f32 %v2558, %v2561
        %v2569 = vadd.f32 %v2559, %v2561
        %v2570 = vmax.f32 %v2562, 0.0
        %v2571 = vmax.f32 %v2563, 0.0
        %v2572 = vmax.f32 %v2564, 0.0
        %v2573 = vmax.f32 %v2565, 0.0
        %v2574 = vmax.f32 %v2566, 0.0
        %v2575 = vmax.f32 %v2567, 0.0
        %v2576 = vmax.f32 %v2568, 0.0
        %v2577 = vmax.f32 %v2569, 0.0
        %v2578 = vrsqrt.pop %v2570
        %v2579 = vmul.f32 %v2570, %v2578
        %vm2580 = vcmp.eq.f32.partialorder %v2570, inf
        %v2581 = vsel %vm2580, %v2570, %v2579
        %vm2582 = vcmp.eq.f32.partialorder %v2570, 0.0
        %v2583 = vand.u32 %v2570, 2147483648
        %v2584 = vsel %vm2582, %v2583, %v2581
        %v2585 = vrsqrt.pop %v2571
        %v2586 = vmul.f32 %v2571, %v2585
        %vm2587 = vcmp.eq.f32.partialorder %v2571, inf
        %v2588 = vsel %vm2587, %v2571, %v2586
        %vm2589 = vcmp.eq.f32.partialorder %v2571, 0.0
        %v2590 = vand.u32 %v2571, 2147483648
        %v2591 = vsel %vm2589, %v2590, %v2588
        %v2592 = vrsqrt.pop %v2572
        %v2593 = vmul.f32 %v2572, %v2592
        %vm2594 = vcmp.eq.f32.partialorder %v2572, inf
        %v2595 = vsel %vm2594, %v2572, %v2593
        %vm2596 = vcmp.eq.f32.partialorder %v2572, 0.0
        %v2597 = vand.u32 %v2572, 2147483648
        %v2598 = vsel %vm2596, %v2597, %v2595
        %v2599 = vrsqrt.pop %v2573
        %v2600 = vmul.f32 %v2573, %v2599
        %vm2601 = vcmp.eq.f32.partialorder %v2573, inf
        %v2602 = vsel %vm2601, %v2573, %v2600
        %vm2603 = vcmp.eq.f32.partialorder %v2573, 0.0
        %v2604 = vand.u32 %v2573, 2147483648
        %v2605 = vsel %vm2603, %v2604, %v2602
        %v2606 = vrsqrt.pop %v2574
        %v2607 = vmul.f32 %v2574, %v2606
        %vm2608 = vcmp.eq.f32.partialorder %v2574, inf
        %v2609 = vsel %vm2608, %v2574, %v2607
        %vm2610 = vcmp.eq.f32.partialorder %v2574, 0.0
        %v2611 = vand.u32 %v2574, 2147483648
        %v2612 = vsel %vm2610, %v2611, %v2609
        %v2613 = vrsqrt.pop %v2575
        %v2614 = vmul.f32 %v2575, %v2613
        %vm2615 = vcmp.eq.f32.partialorder %v2575, inf
        %v2616 = vsel %vm2615, %v2575, %v2614
        %vm2617 = vcmp.eq.f32.partialorder %v2575, 0.0
        %v2618 = vand.u32 %v2575, 2147483648
        %v2619 = vsel %vm2617, %v2618, %v2616
        %v2620 = vrsqrt.pop %v2576
        %v2621 = vmul.f32 %v2576, %v2620
        %vm2622 = vcmp.eq.f32.partialorder %v2576, inf
        %v2623 = vsel %vm2622, %v2576, %v2621
        %vm2624 = vcmp.eq.f32.partialorder %v2576, 0.0
        %v2625 = vand.u32 %v2576, 2147483648
        %v2626 = vsel %vm2624, %v2625, %v2623
        %v2627 = vrsqrt.pop %v2577
        %v2628 = vmul.f32 %v2577, %v2627
        %vm2629 = vcmp.eq.f32.partialorder %v2577, inf
        %v2630 = vsel %vm2629, %v2577, %v2628
        %vm2631 = vcmp.eq.f32.partialorder %v2577, 0.0
        %v2632 = vand.u32 %v2577, 2147483648
        %v2633 = vsel %vm2631, %v2632, %v2630
        %v2634 = vsub.f32 1.0, %v2584
        %v2635 = vsub.f32 1.0, %v2591
        %v2636 = vsub.f32 1.0, %v2598
        %v2637 = vsub.f32 1.0, %v2605
        %v2638 = vsub.f32 1.0, %v2612
        %v2639 = vsub.f32 1.0, %v2619
        %v2640 = vsub.f32 1.0, %v2626
        %v2641 = vsub.f32 1.0, %v2633
        %v2642 = vmax.f32 %v2634, 0.0
        %v2643 = vmax.f32 %v2635, 0.0
        %v2644 = vmax.f32 %v2636, 0.0
        %v2645 = vmax.f32 %v2637, 0.0
        %v2646 = vmax.f32 %v2638, 0.0
        %v2647 = vmax.f32 %v2639, 0.0
        %v2648 = vmax.f32 %v2640, 0.0
        %v2649 = vmax.f32 %v2641, 0.0
        %v2650 = vld [vmem:[%s279] sm:$0xff]
        %v2651 = vld [vmem:[%s279 + $0x8] sm:$0xff]
        %v2652 = vld [vmem:[%s279 + $0x10] sm:$0xff]
        %v2653 = vld [vmem:[%s279 + $0x18] sm:$0xff]
        %v2654 = vld [vmem:[%s279 + $0x20] sm:$0xff]
        %v2655 = vld [vmem:[%s279 + $0x28] sm:$0xff]
        %v2656 = vld [vmem:[%s279 + $0x30] sm:$0xff]
        %v2657 = vld [vmem:[%s279 + $0x38] sm:$0xff]
        %v2658 = vmul.f32 %v2642, %v2650
        %v2659 = vmul.f32 %v2643, %v2651
        %v2660 = vmul.f32 %v2644, %v2652
        %v2661 = vmul.f32 %v2645, %v2653
        %v2662 = vmul.f32 %v2646, %v2654
        %v2663 = vmul.f32 %v2647, %v2655
        %v2664 = vmul.f32 %v2648, %v2656
        %v2665 = vmul.f32 %v2649, %v2657
        %v2666 = vpack.c.bf16 %v2662, %v2658
        %v2667 = vpack.c.bf16 %v2663, %v2659
        %v2668 = vpack.c.bf16 %v2664, %v2660
        %v2669 = vpack.c.bf16 %v2665, %v2661
        %2670 = vst [vmem:[#allocation2 + $0x400] sm:$0xff] %v2666
        %2671 = vst [vmem:[#allocation2 + $0x408] sm:$0xff] %v2667
        %2672 = vst [vmem:[#allocation2 + $0x410] sm:$0xff] %v2668
        %2673 = vst [vmem:[#allocation2 + $0x418] sm:$0xff] %v2669
        %v2674 = vld [vmem:[%s279 + $0x40] sm:$0xff]
        %v2675 = vld [vmem:[%s279 + $0x48] sm:$0xff]
        %v2676 = vld [vmem:[%s279 + $0x50] sm:$0xff]
        %v2677 = vld [vmem:[%s279 + $0x58] sm:$0xff]
        %v2678 = vld [vmem:[%s279 + $0x60] sm:$0xff]
        %v2679 = vld [vmem:[%s279 + $0x68] sm:$0xff]
        %v2680 = vld [vmem:[%s279 + $0x70] sm:$0xff]
        %v2681 = vld [vmem:[%s279 + $0x78] sm:$0xff]
        %v2682 = vmul.f32 %v2642, %v2674
        %v2683 = vmul.f32 %v2643, %v2675
        %v2684 = vmul.f32 %v2644, %v2676
        %v2685 = vmul.f32 %v2645, %v2677
        %v2686 = vmul.f32 %v2646, %v2678
        %v2687 = vmul.f32 %v2647, %v2679
        %v2688 = vmul.f32 %v2648, %v2680
        %v2689 = vmul.f32 %v2649, %v2681
        %v2690 = vpack.c.bf16 %v2686, %v2682
        %v2691 = vpack.c.bf16 %v2687, %v2683
        %v2692 = vpack.c.bf16 %v2688, %v2684
        %v2693 = vpack.c.bf16 %v2689, %v2685
        %2694 = vst [vmem:[#allocation2 + $0x420] sm:$0xff] %v2690
        %2695 = vst [vmem:[#allocation2 + $0x428] sm:$0xff] %v2691
        %2696 = vst [vmem:[#allocation2 + $0x430] sm:$0xff] %v2692
        %2697 = vst [vmem:[#allocation2 + $0x438] sm:$0xff] %v2693
        %v2698 = vld [vmem:[%s279 + $0x80] sm:$0xff]
        %v2699 = vld [vmem:[%s279 + $0x88] sm:$0xff]
        %v2700 = vld [vmem:[%s279 + $0x90] sm:$0xff]
        %v2701 = vld [vmem:[%s279 + $0x98] sm:$0xff]
        %v2702 = vld [vmem:[%s279 + $0xa0] sm:$0xff]
        %v2703 = vld [vmem:[%s279 + $0xa8] sm:$0xff]
        %v2704 = vld [vmem:[%s279 + $0xb0] sm:$0xff]
        %v2705 = vld [vmem:[%s279 + $0xb8] sm:$0xff]
        %v2706 = vmul.f32 %v2642, %v2698
        %v2707 = vmul.f32 %v2643, %v2699
        %v2708 = vmul.f32 %v2644, %v2700
        %v2709 = vmul.f32 %v2645, %v2701
        %v2710 = vmul.f32 %v2646, %v2702
        %v2711 = vmul.f32 %v2647, %v2703
        %v2712 = vmul.f32 %v2648, %v2704
        %v2713 = vmul.f32 %v2649, %v2705
        %v2714 = vpack.c.bf16 %v2710, %v2706
        %v2715 = vpack.c.bf16 %v2711, %v2707
        %v2716 = vpack.c.bf16 %v2712, %v2708
        %v2717 = vpack.c.bf16 %v2713, %v2709
        %2718 = vst [vmem:[#allocation2 + $0x440] sm:$0xff] %v2714
        %2719 = vst [vmem:[#allocation2 + $0x448] sm:$0xff] %v2715
        %2720 = vst [vmem:[#allocation2 + $0x450] sm:$0xff] %v2716
        %2721 = vst [vmem:[#allocation2 + $0x458] sm:$0xff] %v2717
        %v2722 = vld [vmem:[%s279 + $0xc0] sm:$0xff]
        %v2723 = vld [vmem:[%s279 + $0xc8] sm:$0xff]
        %v2724 = vld [vmem:[%s279 + $0xd0] sm:$0xff]
        %v2725 = vld [vmem:[%s279 + $0xd8] sm:$0xff]
        %v2726 = vld [vmem:[%s279 + $0xe0] sm:$0xff]
        %v2727 = vld [vmem:[%s279 + $0xe8] sm:$0xff]
        %v2728 = vld [vmem:[%s279 + $0xf0] sm:$0xff]
        %v2729 = vld [vmem:[%s279 + $0xf8] sm:$0xff]
        %v2730 = vmul.f32 %v2642, %v2722
        %v2731 = vmul.f32 %v2643, %v2723
        %v2732 = vmul.f32 %v2644, %v2724
        %v2733 = vmul.f32 %v2645, %v2725
        %v2734 = vmul.f32 %v2646, %v2726
        %v2735 = vmul.f32 %v2647, %v2727
        %v2736 = vmul.f32 %v2648, %v2728
        %v2737 = vmul.f32 %v2649, %v2729
        %v2738 = vpack.c.bf16 %v2734, %v2730
        %v2739 = vpack.c.bf16 %v2735, %v2731
        %v2740 = vpack.c.bf16 %v2736, %v2732
        %v2741 = vpack.c.bf16 %v2737, %v2733
        %2742 = vst [vmem:[#allocation2 + $0x460] sm:$0xff] %v2738
        %2743 = vst [vmem:[#allocation2 + $0x468] sm:$0xff] %v2739
        %2744 = vst [vmem:[#allocation2 + $0x470] sm:$0xff] %v2740
        %2745 = vst [vmem:[#allocation2 + $0x478] sm:$0xff] %v2741
        %s2746 = sld [smem:[#allocation3 + $0x480]]
        %v2747 = vld [vmem:[%s270] sm:$0xff]
        %v2748 = vld [vmem:[%s270 + $0x8] sm:$0xff]
        %v2749 = vld [vmem:[%s270 + $0x10] sm:$0xff]
        %v2750 = vld [vmem:[%s270 + $0x18] sm:$0xff]
        %v2751 = vld [vmem:[%s270 + $0x20] sm:$0xff]
        %v2752 = vld [vmem:[%s270 + $0x28] sm:$0xff]
        %v2753 = vld [vmem:[%s270 + $0x30] sm:$0xff]
        %v2754 = vld [vmem:[%s270 + $0x38] sm:$0xff]
        %v2755 = vstv %s2746
        %v2756 = vmul.f32 %v2755, %v2747
        %v2757 = vmul.f32 %v2755, %v2748
        %v2758 = vmul.f32 %v2755, %v2749
        %v2759 = vmul.f32 %v2755, %v2750
        %v2760 = vmul.f32 %v2755, %v2751
        %v2761 = vmul.f32 %v2755, %v2752
        %v2762 = vmul.f32 %v2755, %v2753
        %v2763 = vmul.f32 %v2755, %v2754
        %v2764 = vadd.f32 %v386, %v2756
        %v2765 = vadd.f32 %v387, %v2757
        %v2766 = vadd.f32 %v388, %v2758
        %v2767 = vadd.f32 %v389, %v2759
        %v2768 = vadd.f32 %v390, %v2760
        %v2769 = vadd.f32 %v391, %v2761
        %v2770 = vadd.f32 %v392, %v2762
        %v2771 = vadd.f32 %v393, %v2763
        %s2772 = sld [smem:[#allocation3 + $0x481]]
        %v2773 = vld [vmem:[%s270 + $0x40] sm:$0xff]
        %v2774 = vld [vmem:[%s270 + $0x48] sm:$0xff]
        %v2775 = vld [vmem:[%s270 + $0x50] sm:$0xff]
        %v2776 = vld [vmem:[%s270 + $0x58] sm:$0xff]
        %v2777 = vld [vmem:[%s270 + $0x60] sm:$0xff]
        %v2778 = vld [vmem:[%s270 + $0x68] sm:$0xff]
        %v2779 = vld [vmem:[%s270 + $0x70] sm:$0xff]
        %v2780 = vld [vmem:[%s270 + $0x78] sm:$0xff]
        %v2781 = vstv %s2772
        %v2782 = vmul.f32 %v2781, %v2773
        %v2783 = vmul.f32 %v2781, %v2774
        %v2784 = vmul.f32 %v2781, %v2775
        %v2785 = vmul.f32 %v2781, %v2776
        %v2786 = vmul.f32 %v2781, %v2777
        %v2787 = vmul.f32 %v2781, %v2778
        %v2788 = vmul.f32 %v2781, %v2779
        %v2789 = vmul.f32 %v2781, %v2780
        %v2790 = vadd.f32 %v2764, %v2782
        %v2791 = vadd.f32 %v2765, %v2783
        %v2792 = vadd.f32 %v2766, %v2784
        %v2793 = vadd.f32 %v2767, %v2785
        %v2794 = vadd.f32 %v2768, %v2786
        %v2795 = vadd.f32 %v2769, %v2787
        %v2796 = vadd.f32 %v2770, %v2788
        %v2797 = vadd.f32 %v2771, %v2789
        %s2798 = sld [smem:[#allocation3 + $0x482]]
        %v2799 = vld [vmem:[%s270 + $0x80] sm:$0xff]
        %v2800 = vld [vmem:[%s270 + $0x88] sm:$0xff]
        %v2801 = vld [vmem:[%s270 + $0x90] sm:$0xff]
        %v2802 = vld [vmem:[%s270 + $0x98] sm:$0xff]
        %v2803 = vld [vmem:[%s270 + $0xa0] sm:$0xff]
        %v2804 = vld [vmem:[%s270 + $0xa8] sm:$0xff]
        %v2805 = vld [vmem:[%s270 + $0xb0] sm:$0xff]
        %v2806 = vld [vmem:[%s270 + $0xb8] sm:$0xff]
        %v2807 = vstv %s2798
        %v2808 = vmul.f32 %v2807, %v2799
        %v2809 = vmul.f32 %v2807, %v2800
        %v2810 = vmul.f32 %v2807, %v2801
        %v2811 = vmul.f32 %v2807, %v2802
        %v2812 = vmul.f32 %v2807, %v2803
        %v2813 = vmul.f32 %v2807, %v2804
        %v2814 = vmul.f32 %v2807, %v2805
        %v2815 = vmul.f32 %v2807, %v2806
        %v2816 = vadd.f32 %v2790, %v2808
        %v2817 = vadd.f32 %v2791, %v2809
        %v2818 = vadd.f32 %v2792, %v2810
        %v2819 = vadd.f32 %v2793, %v2811
        %v2820 = vadd.f32 %v2794, %v2812
        %v2821 = vadd.f32 %v2795, %v2813
        %v2822 = vadd.f32 %v2796, %v2814
        %v2823 = vadd.f32 %v2797, %v2815
        %s2824 = sld [smem:[#allocation3 + $0x483]]
        %v2825 = vstv %s2824
        %v2826 = vadd.f32 %v2816, %v2825
        %v2827 = vadd.f32 %v2817, %v2825
        %v2828 = vadd.f32 %v2818, %v2825
        %v2829 = vadd.f32 %v2819, %v2825
        %v2830 = vadd.f32 %v2820, %v2825
        %v2831 = vadd.f32 %v2821, %v2825
        %v2832 = vadd.f32 %v2822, %v2825
        %v2833 = vadd.f32 %v2823, %v2825
        %v2834 = vmax.f32 %v2826, 0.0
        %v2835 = vmax.f32 %v2827, 0.0
        %v2836 = vmax.f32 %v2828, 0.0
        %v2837 = vmax.f32 %v2829, 0.0
        %v2838 = vmax.f32 %v2830, 0.0
        %v2839 = vmax.f32 %v2831, 0.0
        %v2840 = vmax.f32 %v2832, 0.0
        %v2841 = vmax.f32 %v2833, 0.0
        %v2842 = vrsqrt.pop %v2834
        %v2843 = vmul.f32 %v2834, %v2842
        %vm2844 = vcmp.eq.f32.partialorder %v2834, inf
        %v2845 = vsel %vm2844, %v2834, %v2843
        %vm2846 = vcmp.eq.f32.partialorder %v2834, 0.0
        %v2847 = vand.u32 %v2834, 2147483648
        %v2848 = vsel %vm2846, %v2847, %v2845
        %v2849 = vrsqrt.pop %v2835
        %v2850 = vmul.f32 %v2835, %v2849
        %vm2851 = vcmp.eq.f32.partialorder %v2835, inf
        %v2852 = vsel %vm2851, %v2835, %v2850
        %vm2853 = vcmp.eq.f32.partialorder %v2835, 0.0
        %v2854 = vand.u32 %v2835, 2147483648
        %v2855 = vsel %vm2853, %v2854, %v2852
        %v2856 = vrsqrt.pop %v2836
        %v2857 = vmul.f32 %v2836, %v2856
        %vm2858 = vcmp.eq.f32.partialorder %v2836, inf
        %v2859 = vsel %vm2858, %v2836, %v2857
        %vm2860 = vcmp.eq.f32.partialorder %v2836, 0.0
        %v2861 = vand.u32 %v2836, 2147483648
        %v2862 = vsel %vm2860, %v2861, %v2859
        %v2863 = vrsqrt.pop %v2837
        %v2864 = vmul.f32 %v2837, %v2863
        %vm2865 = vcmp.eq.f32.partialorder %v2837, inf
        %v2866 = vsel %vm2865, %v2837, %v2864
        %vm2867 = vcmp.eq.f32.partialorder %v2837, 0.0
        %v2868 = vand.u32 %v2837, 2147483648
        %v2869 = vsel %vm2867, %v2868, %v2866
        %v2870 = vrsqrt.pop %v2838
        %v2871 = vmul.f32 %v2838, %v2870
        %vm2872 = vcmp.eq.f32.partialorder %v2838, inf
        %v2873 = vsel %vm2872, %v2838, %v2871
        %vm2874 = vcmp.eq.f32.partialorder %v2838, 0.0
        %v2875 = vand.u32 %v2838, 2147483648
        %v2876 = vsel %vm2874, %v2875, %v2873
        %v2877 = vrsqrt.pop %v2839
        %v2878 = vmul.f32 %v2839, %v2877
        %vm2879 = vcmp.eq.f32.partialorder %v2839, inf
        %v2880 = vsel %vm2879, %v2839, %v2878
        %vm2881 = vcmp.eq.f32.partialorder %v2839, 0.0
        %v2882 = vand.u32 %v2839, 2147483648
        %v2883 = vsel %vm2881, %v2882, %v2880
        %v2884 = vrsqrt.pop %v2840
        %v2885 = vmul.f32 %v2840, %v2884
        %vm2886 = vcmp.eq.f32.partialorder %v2840, inf
        %v2887 = vsel %vm2886, %v2840, %v2885
        %vm2888 = vcmp.eq.f32.partialorder %v2840, 0.0
        %v2889 = vand.u32 %v2840, 2147483648
        %v2890 = vsel %vm2888, %v2889, %v2887
        %v2891 = vrsqrt.pop %v2841
        %v2892 = vmul.f32 %v2841, %v2891
        %vm2893 = vcmp.eq.f32.partialorder %v2841, inf
        %v2894 = vsel %vm2893, %v2841, %v2892
        %vm2895 = vcmp.eq.f32.partialorder %v2841, 0.0
        %v2896 = vand.u32 %v2841, 2147483648
        %v2897 = vsel %vm2895, %v2896, %v2894
        %v2898 = vsub.f32 1.0, %v2848
        %v2899 = vsub.f32 1.0, %v2855
        %v2900 = vsub.f32 1.0, %v2862
        %v2901 = vsub.f32 1.0, %v2869
        %v2902 = vsub.f32 1.0, %v2876
        %v2903 = vsub.f32 1.0, %v2883
        %v2904 = vsub.f32 1.0, %v2890
        %v2905 = vsub.f32 1.0, %v2897
        %v2906 = vmax.f32 %v2898, 0.0
        %v2907 = vmax.f32 %v2899, 0.0
        %v2908 = vmax.f32 %v2900, 0.0
        %v2909 = vmax.f32 %v2901, 0.0
        %v2910 = vmax.f32 %v2902, 0.0
        %v2911 = vmax.f32 %v2903, 0.0
        %v2912 = vmax.f32 %v2904, 0.0
        %v2913 = vmax.f32 %v2905, 0.0
        %v2914 = vld [vmem:[%s279] sm:$0xff]
        %v2915 = vld [vmem:[%s279 + $0x8] sm:$0xff]
        %v2916 = vld [vmem:[%s279 + $0x10] sm:$0xff]
        %v2917 = vld [vmem:[%s279 + $0x18] sm:$0xff]
        %v2918 = vld [vmem:[%s279 + $0x20] sm:$0xff]
        %v2919 = vld [vmem:[%s279 + $0x28] sm:$0xff]
        %v2920 = vld [vmem:[%s279 + $0x30] sm:$0xff]
        %v2921 = vld [vmem:[%s279 + $0x38] sm:$0xff]
        %v2922 = vmul.f32 %v2906, %v2914
        %v2923 = vmul.f32 %v2907, %v2915
        %v2924 = vmul.f32 %v2908, %v2916
        %v2925 = vmul.f32 %v2909, %v2917
        %v2926 = vmul.f32 %v2910, %v2918
        %v2927 = vmul.f32 %v2911, %v2919
        %v2928 = vmul.f32 %v2912, %v2920
        %v2929 = vmul.f32 %v2913, %v2921
        %v2930 = vpack.c.bf16 %v2926, %v2922
        %v2931 = vpack.c.bf16 %v2927, %v2923
        %v2932 = vpack.c.bf16 %v2928, %v2924
        %v2933 = vpack.c.bf16 %v2929, %v2925
        %2934 = vst [vmem:[#allocation2 + $0x480] sm:$0xff] %v2930
        %2935 = vst [vmem:[#allocation2 + $0x488] sm:$0xff] %v2931
        %2936 = vst [vmem:[#allocation2 + $0x490] sm:$0xff] %v2932
        %2937 = vst [vmem:[#allocation2 + $0x498] sm:$0xff] %v2933
        %v2938 = vld [vmem:[%s279 + $0x40] sm:$0xff]
        %v2939 = vld [vmem:[%s279 + $0x48] sm:$0xff]
        %v2940 = vld [vmem:[%s279 + $0x50] sm:$0xff]
        %v2941 = vld [vmem:[%s279 + $0x58] sm:$0xff]
        %v2942 = vld [vmem:[%s279 + $0x60] sm:$0xff]
        %v2943 = vld [vmem:[%s279 + $0x68] sm:$0xff]
        %v2944 = vld [vmem:[%s279 + $0x70] sm:$0xff]
        %v2945 = vld [vmem:[%s279 + $0x78] sm:$0xff]
        %v2946 = vmul.f32 %v2906, %v2938
        %v2947 = vmul.f32 %v2907, %v2939
        %v2948 = vmul.f32 %v2908, %v2940
        %v2949 = vmul.f32 %v2909, %v2941
        %v2950 = vmul.f32 %v2910, %v2942
        %v2951 = vmul.f32 %v2911, %v2943
        %v2952 = vmul.f32 %v2912, %v2944
        %v2953 = vmul.f32 %v2913, %v2945
        %v2954 = vpack.c.bf16 %v2950, %v2946
        %v2955 = vpack.c.bf16 %v2951, %v2947
        %v2956 = vpack.c.bf16 %v2952, %v2948
        %v2957 = vpack.c.bf16 %v2953, %v2949
        %2958 = vst [vmem:[#allocation2 + $0x4a0] sm:$0xff] %v2954
        %2959 = vst [vmem:[#allocation2 + $0x4a8] sm:$0xff] %v2955
        %2960 = vst [vmem:[#allocation2 + $0x4b0] sm:$0xff] %v2956
        %2961 = vst [vmem:[#allocation2 + $0x4b8] sm:$0xff] %v2957
        %v2962 = vld [vmem:[%s279 + $0x80] sm:$0xff]
        %v2963 = vld [vmem:[%s279 + $0x88] sm:$0xff]
        %v2964 = vld [vmem:[%s279 + $0x90] sm:$0xff]
        %v2965 = vld [vmem:[%s279 + $0x98] sm:$0xff]
        %v2966 = vld [vmem:[%s279 + $0xa0] sm:$0xff]
        %v2967 = vld [vmem:[%s279 + $0xa8] sm:$0xff]
        %v2968 = vld [vmem:[%s279 + $0xb0] sm:$0xff]
        %v2969 = vld [vmem:[%s279 + $0xb8] sm:$0xff]
        %v2970 = vmul.f32 %v2906, %v2962
        %v2971 = vmul.f32 %v2907, %v2963
        %v2972 = vmul.f32 %v2908, %v2964
        %v2973 = vmul.f32 %v2909, %v2965
        %v2974 = vmul.f32 %v2910, %v2966
        %v2975 = vmul.f32 %v2911, %v2967
        %v2976 = vmul.f32 %v2912, %v2968
        %v2977 = vmul.f32 %v2913, %v2969
        %v2978 = vpack.c.bf16 %v2974, %v2970
        %v2979 = vpack.c.bf16 %v2975, %v2971
        %v2980 = vpack.c.bf16 %v2976, %v2972
        %v2981 = vpack.c.bf16 %v2977, %v2973
        %2982 = vst [vmem:[#allocation2 + $0x4c0] sm:$0xff] %v2978
        %2983 = vst [vmem:[#allocation2 + $0x4c8] sm:$0xff] %v2979
        %2984 = vst [vmem:[#allocation2 + $0x4d0] sm:$0xff] %v2980
        %2985 = vst [vmem:[#allocation2 + $0x4d8] sm:$0xff] %v2981
        %v2986 = vld [vmem:[%s279 + $0xc0] sm:$0xff]
        %v2987 = vld [vmem:[%s279 + $0xc8] sm:$0xff]
        %v2988 = vld [vmem:[%s279 + $0xd0] sm:$0xff]
        %v2989 = vld [vmem:[%s279 + $0xd8] sm:$0xff]
        %v2990 = vld [vmem:[%s279 + $0xe0] sm:$0xff]
        %v2991 = vld [vmem:[%s279 + $0xe8] sm:$0xff]
        %v2992 = vld [vmem:[%s279 + $0xf0] sm:$0xff]
        %v2993 = vld [vmem:[%s279 + $0xf8] sm:$0xff]
        %v2994 = vmul.f32 %v2906, %v2986
        %v2995 = vmul.f32 %v2907, %v2987
        %v2996 = vmul.f32 %v2908, %v2988
        %v2997 = vmul.f32 %v2909, %v2989
        %v2998 = vmul.f32 %v2910, %v2990
        %v2999 = vmul.f32 %v2911, %v2991
        %v3000 = vmul.f32 %v2912, %v2992
        %v3001 = vmul.f32 %v2913, %v2993
        %v3002 = vpack.c.bf16 %v2998, %v2994
        %v3003 = vpack.c.bf16 %v2999, %v2995
        %v3004 = vpack.c.bf16 %v3000, %v2996
        %v3005 = vpack.c.bf16 %v3001, %v2997
        %3006 = vst [vmem:[#allocation2 + $0x4e0] sm:$0xff] %v3002
        %3007 = vst [vmem:[#allocation2 + $0x4e8] sm:$0xff] %v3003
        %3008 = vst [vmem:[#allocation2 + $0x4f0] sm:$0xff] %v3004
        %3009 = vst [vmem:[#allocation2 + $0x4f8] sm:$0xff] %v3005
        %s3010 = sld [smem:[#allocation3 + $0x500]]
        %v3011 = vld [vmem:[%s270] sm:$0xff]
        %v3012 = vld [vmem:[%s270 + $0x8] sm:$0xff]
        %v3013 = vld [vmem:[%s270 + $0x10] sm:$0xff]
        %v3014 = vld [vmem:[%s270 + $0x18] sm:$0xff]
        %v3015 = vld [vmem:[%s270 + $0x20] sm:$0xff]
        %v3016 = vld [vmem:[%s270 + $0x28] sm:$0xff]
        %v3017 = vld [vmem:[%s270 + $0x30] sm:$0xff]
        %v3018 = vld [vmem:[%s270 + $0x38] sm:$0xff]
        %v3019 = vstv %s3010
        %v3020 = vmul.f32 %v3019, %v3011
        %v3021 = vmul.f32 %v3019, %v3012
        %v3022 = vmul.f32 %v3019, %v3013
        %v3023 = vmul.f32 %v3019, %v3014
        %v3024 = vmul.f32 %v3019, %v3015
        %v3025 = vmul.f32 %v3019, %v3016
        %v3026 = vmul.f32 %v3019, %v3017
        %v3027 = vmul.f32 %v3019, %v3018
        %v3028 = vadd.f32 %v386, %v3020
        %v3029 = vadd.f32 %v387, %v3021
        %v3030 = vadd.f32 %v388, %v3022
        %v3031 = vadd.f32 %v389, %v3023
        %v3032 = vadd.f32 %v390, %v3024
        %v3033 = vadd.f32 %v391, %v3025
        %v3034 = vadd.f32 %v392, %v3026
        %v3035 = vadd.f32 %v393, %v3027
        %s3036 = sld [smem:[#allocation3 + $0x501]]
        %v3037 = vld [vmem:[%s270 + $0x40] sm:$0xff]
        %v3038 = vld [vmem:[%s270 + $0x48] sm:$0xff]
        %v3039 = vld [vmem:[%s270 + $0x50] sm:$0xff]
        %v3040 = vld [vmem:[%s270 + $0x58] sm:$0xff]
        %v3041 = vld [vmem:[%s270 + $0x60] sm:$0xff]
        %v3042 = vld [vmem:[%s270 + $0x68] sm:$0xff]
        %v3043 = vld [vmem:[%s270 + $0x70] sm:$0xff]
        %v3044 = vld [vmem:[%s270 + $0x78] sm:$0xff]
        %v3045 = vstv %s3036
        %v3046 = vmul.f32 %v3045, %v3037
        %v3047 = vmul.f32 %v3045, %v3038
        %v3048 = vmul.f32 %v3045, %v3039
        %v3049 = vmul.f32 %v3045, %v3040
        %v3050 = vmul.f32 %v3045, %v3041
        %v3051 = vmul.f32 %v3045, %v3042
        %v3052 = vmul.f32 %v3045, %v3043
        %v3053 = vmul.f32 %v3045, %v3044
        %v3054 = vadd.f32 %v3028, %v3046
        %v3055 = vadd.f32 %v3029, %v3047
        %v3056 = vadd.f32 %v3030, %v3048
        %v3057 = vadd.f32 %v3031, %v3049
        %v3058 = vadd.f32 %v3032, %v3050
        %v3059 = vadd.f32 %v3033, %v3051
        %v3060 = vadd.f32 %v3034, %v3052
        %v3061 = vadd.f32 %v3035, %v3053
        %s3062 = sld [smem:[#allocation3 + $0x502]]
        %v3063 = vld [vmem:[%s270 + $0x80] sm:$0xff]
        %v3064 = vld [vmem:[%s270 + $0x88] sm:$0xff]
        %v3065 = vld [vmem:[%s270 + $0x90] sm:$0xff]
        %v3066 = vld [vmem:[%s270 + $0x98] sm:$0xff]
        %v3067 = vld [vmem:[%s270 + $0xa0] sm:$0xff]
        %v3068 = vld [vmem:[%s270 + $0xa8] sm:$0xff]
        %v3069 = vld [vmem:[%s270 + $0xb0] sm:$0xff]
        %v3070 = vld [vmem:[%s270 + $0xb8] sm:$0xff]
        %v3071 = vstv %s3062
        %v3072 = vmul.f32 %v3071, %v3063
        %v3073 = vmul.f32 %v3071, %v3064
        %v3074 = vmul.f32 %v3071, %v3065
        %v3075 = vmul.f32 %v3071, %v3066
        %v3076 = vmul.f32 %v3071, %v3067
        %v3077 = vmul.f32 %v3071, %v3068
        %v3078 = vmul.f32 %v3071, %v3069
        %v3079 = vmul.f32 %v3071, %v3070
        %v3080 = vadd.f32 %v3054, %v3072
        %v3081 = vadd.f32 %v3055, %v3073
        %v3082 = vadd.f32 %v3056, %v3074
        %v3083 = vadd.f32 %v3057, %v3075
        %v3084 = vadd.f32 %v3058, %v3076
        %v3085 = vadd.f32 %v3059, %v3077
        %v3086 = vadd.f32 %v3060, %v3078
        %v3087 = vadd.f32 %v3061, %v3079
        %s3088 = sld [smem:[#allocation3 + $0x503]]
        %v3089 = vstv %s3088
        %v3090 = vadd.f32 %v3080, %v3089
        %v3091 = vadd.f32 %v3081, %v3089
        %v3092 = vadd.f32 %v3082, %v3089
        %v3093 = vadd.f32 %v3083, %v3089
        %v3094 = vadd.f32 %v3084, %v3089
        %v3095 = vadd.f32 %v3085, %v3089
        %v3096 = vadd.f32 %v3086, %v3089
        %v3097 = vadd.f32 %v3087, %v3089
        %v3098 = vmax.f32 %v3090, 0.0
        %v3099 = vmax.f32 %v3091, 0.0
        %v3100 = vmax.f32 %v3092, 0.0
        %v3101 = vmax.f32 %v3093, 0.0
        %v3102 = vmax.f32 %v3094, 0.0
        %v3103 = vmax.f32 %v3095, 0.0
        %v3104 = vmax.f32 %v3096, 0.0
        %v3105 = vmax.f32 %v3097, 0.0
        %v3106 = vrsqrt.pop %v3098
        %v3107 = vmul.f32 %v3098, %v3106
        %vm3108 = vcmp.eq.f32.partialorder %v3098, inf
        %v3109 = vsel %vm3108, %v3098, %v3107
        %vm3110 = vcmp.eq.f32.partialorder %v3098, 0.0
        %v3111 = vand.u32 %v3098, 2147483648
        %v3112 = vsel %vm3110, %v3111, %v3109
        %v3113 = vrsqrt.pop %v3099
        %v3114 = vmul.f32 %v3099, %v3113
        %vm3115 = vcmp.eq.f32.partialorder %v3099, inf
        %v3116 = vsel %vm3115, %v3099, %v3114
        %vm3117 = vcmp.eq.f32.partialorder %v3099, 0.0
        %v3118 = vand.u32 %v3099, 2147483648
        %v3119 = vsel %vm3117, %v3118, %v3116
        %v3120 = vrsqrt.pop %v3100
        %v3121 = vmul.f32 %v3100, %v3120
        %vm3122 = vcmp.eq.f32.partialorder %v3100, inf
        %v3123 = vsel %vm3122, %v3100, %v3121
        %vm3124 = vcmp.eq.f32.partialorder %v3100, 0.0
        %v3125 = vand.u32 %v3100, 2147483648
        %v3126 = vsel %vm3124, %v3125, %v3123
        %v3127 = vrsqrt.pop %v3101
        %v3128 = vmul.f32 %v3101, %v3127
        %vm3129 = vcmp.eq.f32.partialorder %v3101, inf
        %v3130 = vsel %vm3129, %v3101, %v3128
        %vm3131 = vcmp.eq.f32.partialorder %v3101, 0.0
        %v3132 = vand.u32 %v3101, 2147483648
        %v3133 = vsel %vm3131, %v3132, %v3130
        %v3134 = vrsqrt.pop %v3102
        %v3135 = vmul.f32 %v3102, %v3134
        %vm3136 = vcmp.eq.f32.partialorder %v3102, inf
        %v3137 = vsel %vm3136, %v3102, %v3135
        %vm3138 = vcmp.eq.f32.partialorder %v3102, 0.0
        %v3139 = vand.u32 %v3102, 2147483648
        %v3140 = vsel %vm3138, %v3139, %v3137
        %v3141 = vrsqrt.pop %v3103
        %v3142 = vmul.f32 %v3103, %v3141
        %vm3143 = vcmp.eq.f32.partialorder %v3103, inf
        %v3144 = vsel %vm3143, %v3103, %v3142
        %vm3145 = vcmp.eq.f32.partialorder %v3103, 0.0
        %v3146 = vand.u32 %v3103, 2147483648
        %v3147 = vsel %vm3145, %v3146, %v3144
        %v3148 = vrsqrt.pop %v3104
        %v3149 = vmul.f32 %v3104, %v3148
        %vm3150 = vcmp.eq.f32.partialorder %v3104, inf
        %v3151 = vsel %vm3150, %v3104, %v3149
        %vm3152 = vcmp.eq.f32.partialorder %v3104, 0.0
        %v3153 = vand.u32 %v3104, 2147483648
        %v3154 = vsel %vm3152, %v3153, %v3151
        %v3155 = vrsqrt.pop %v3105
        %v3156 = vmul.f32 %v3105, %v3155
        %vm3157 = vcmp.eq.f32.partialorder %v3105, inf
        %v3158 = vsel %vm3157, %v3105, %v3156
        %vm3159 = vcmp.eq.f32.partialorder %v3105, 0.0
        %v3160 = vand.u32 %v3105, 2147483648
        %v3161 = vsel %vm3159, %v3160, %v3158
        %v3162 = vsub.f32 1.0, %v3112
        %v3163 = vsub.f32 1.0, %v3119
        %v3164 = vsub.f32 1.0, %v3126
        %v3165 = vsub.f32 1.0, %v3133
        %v3166 = vsub.f32 1.0, %v3140
        %v3167 = vsub.f32 1.0, %v3147
        %v3168 = vsub.f32 1.0, %v3154
        %v3169 = vsub.f32 1.0, %v3161
        %v3170 = vmax.f32 %v3162, 0.0
        %v3171 = vmax.f32 %v3163, 0.0
        %v3172 = vmax.f32 %v3164, 0.0
        %v3173 = vmax.f32 %v3165, 0.0
        %v3174 = vmax.f32 %v3166, 0.0
        %v3175 = vmax.f32 %v3167, 0.0
        %v3176 = vmax.f32 %v3168, 0.0
        %v3177 = vmax.f32 %v3169, 0.0
        %v3178 = vld [vmem:[%s279] sm:$0xff]
        %v3179 = vld [vmem:[%s279 + $0x8] sm:$0xff]
        %v3180 = vld [vmem:[%s279 + $0x10] sm:$0xff]
        %v3181 = vld [vmem:[%s279 + $0x18] sm:$0xff]
        %v3182 = vld [vmem:[%s279 + $0x20] sm:$0xff]
        %v3183 = vld [vmem:[%s279 + $0x28] sm:$0xff]
        %v3184 = vld [vmem:[%s279 + $0x30] sm:$0xff]
        %v3185 = vld [vmem:[%s279 + $0x38] sm:$0xff]
        %v3186 = vmul.f32 %v3170, %v3178
        %v3187 = vmul.f32 %v3171, %v3179
        %v3188 = vmul.f32 %v3172, %v3180
        %v3189 = vmul.f32 %v3173, %v3181
        %v3190 = vmul.f32 %v3174, %v3182
        %v3191 = vmul.f32 %v3175, %v3183
        %v3192 = vmul.f32 %v3176, %v3184
        %v3193 = vmul.f32 %v3177, %v3185
        %v3194 = vpack.c.bf16 %v3190, %v3186
        %v3195 = vpack.c.bf16 %v3191, %v3187
        %v3196 = vpack.c.bf16 %v3192, %v3188
        %v3197 = vpack.c.bf16 %v3193, %v3189
        %3198 = vst [vmem:[#allocation2 + $0x500] sm:$0xff] %v3194
        %3199 = vst [vmem:[#allocation2 + $0x508] sm:$0xff] %v3195
        %3200 = vst [vmem:[#allocation2 + $0x510] sm:$0xff] %v3196
        %3201 = vst [vmem:[#allocation2 + $0x518] sm:$0xff] %v3197
        %v3202 = vld [vmem:[%s279 + $0x40] sm:$0xff]
        %v3203 = vld [vmem:[%s279 + $0x48] sm:$0xff]
        %v3204 = vld [vmem:[%s279 + $0x50] sm:$0xff]
        %v3205 = vld [vmem:[%s279 + $0x58] sm:$0xff]
        %v3206 = vld [vmem:[%s279 + $0x60] sm:$0xff]
        %v3207 = vld [vmem:[%s279 + $0x68] sm:$0xff]
        %v3208 = vld [vmem:[%s279 + $0x70] sm:$0xff]
        %v3209 = vld [vmem:[%s279 + $0x78] sm:$0xff]
        %v3210 = vmul.f32 %v3170, %v3202
        %v3211 = vmul.f32 %v3171, %v3203
        %v3212 = vmul.f32 %v3172, %v3204
        %v3213 = vmul.f32 %v3173, %v3205
        %v3214 = vmul.f32 %v3174, %v3206
        %v3215 = vmul.f32 %v3175, %v3207
        %v3216 = vmul.f32 %v3176, %v3208
        %v3217 = vmul.f32 %v3177, %v3209
        %v3218 = vpack.c.bf16 %v3214, %v3210
        %v3219 = vpack.c.bf16 %v3215, %v3211
        %v3220 = vpack.c.bf16 %v3216, %v3212
        %v3221 = vpack.c.bf16 %v3217, %v3213
        %3222 = vst [vmem:[#allocation2 + $0x520] sm:$0xff] %v3218
        %3223 = vst [vmem:[#allocation2 + $0x528] sm:$0xff] %v3219
        %3224 = vst [vmem:[#allocation2 + $0x530] sm:$0xff] %v3220
        %3225 = vst [vmem:[#allocation2 + $0x538] sm:$0xff] %v3221
        %v3226 = vld [vmem:[%s279 + $0x80] sm:$0xff]
        %v3227 = vld [vmem:[%s279 + $0x88] sm:$0xff]
        %v3228 = vld [vmem:[%s279 + $0x90] sm:$0xff]
        %v3229 = vld [vmem:[%s279 + $0x98] sm:$0xff]
        %v3230 = vld [vmem:[%s279 + $0xa0] sm:$0xff]
        %v3231 = vld [vmem:[%s279 + $0xa8] sm:$0xff]
        %v3232 = vld [vmem:[%s279 + $0xb0] sm:$0xff]
        %v3233 = vld [vmem:[%s279 + $0xb8] sm:$0xff]
        %v3234 = vmul.f32 %v3170, %v3226
        %v3235 = vmul.f32 %v3171, %v3227
        %v3236 = vmul.f32 %v3172, %v3228
        %v3237 = vmul.f32 %v3173, %v3229
        %v3238 = vmul.f32 %v3174, %v3230
        %v3239 = vmul.f32 %v3175, %v3231
        %v3240 = vmul.f32 %v3176, %v3232
        %v3241 = vmul.f32 %v3177, %v3233
        %v3242 = vpack.c.bf16 %v3238, %v3234
        %v3243 = vpack.c.bf16 %v3239, %v3235
        %v3244 = vpack.c.bf16 %v3240, %v3236
        %v3245 = vpack.c.bf16 %v3241, %v3237
        %3246 = vst [vmem:[#allocation2 + $0x540] sm:$0xff] %v3242
        %3247 = vst [vmem:[#allocation2 + $0x548] sm:$0xff] %v3243
        %3248 = vst [vmem:[#allocation2 + $0x550] sm:$0xff] %v3244
        %3249 = vst [vmem:[#allocation2 + $0x558] sm:$0xff] %v3245
        %v3250 = vld [vmem:[%s279 + $0xc0] sm:$0xff]
        %v3251 = vld [vmem:[%s279 + $0xc8] sm:$0xff]
        %v3252 = vld [vmem:[%s279 + $0xd0] sm:$0xff]
        %v3253 = vld [vmem:[%s279 + $0xd8] sm:$0xff]
        %v3254 = vld [vmem:[%s279 + $0xe0] sm:$0xff]
        %v3255 = vld [vmem:[%s279 + $0xe8] sm:$0xff]
        %v3256 = vld [vmem:[%s279 + $0xf0] sm:$0xff]
        %v3257 = vld [vmem:[%s279 + $0xf8] sm:$0xff]
        %v3258 = vmul.f32 %v3170, %v3250
        %v3259 = vmul.f32 %v3171, %v3251
        %v3260 = vmul.f32 %v3172, %v3252
        %v3261 = vmul.f32 %v3173, %v3253
        %v3262 = vmul.f32 %v3174, %v3254
        %v3263 = vmul.f32 %v3175, %v3255
        %v3264 = vmul.f32 %v3176, %v3256
        %v3265 = vmul.f32 %v3177, %v3257
        %v3266 = vpack.c.bf16 %v3262, %v3258
        %v3267 = vpack.c.bf16 %v3263, %v3259
        %v3268 = vpack.c.bf16 %v3264, %v3260
        %v3269 = vpack.c.bf16 %v3265, %v3261
        %3270 = vst [vmem:[#allocation2 + $0x560] sm:$0xff] %v3266
        %3271 = vst [vmem:[#allocation2 + $0x568] sm:$0xff] %v3267
        %3272 = vst [vmem:[#allocation2 + $0x570] sm:$0xff] %v3268
        %3273 = vst [vmem:[#allocation2 + $0x578] sm:$0xff] %v3269
        %s3274 = sld [smem:[#allocation3 + $0x580]]
        %v3275 = vld [vmem:[%s270] sm:$0xff]
        %v3276 = vld [vmem:[%s270 + $0x8] sm:$0xff]
        %v3277 = vld [vmem:[%s270 + $0x10] sm:$0xff]
        %v3278 = vld [vmem:[%s270 + $0x18] sm:$0xff]
        %v3279 = vld [vmem:[%s270 + $0x20] sm:$0xff]
        %v3280 = vld [vmem:[%s270 + $0x28] sm:$0xff]
        %v3281 = vld [vmem:[%s270 + $0x30] sm:$0xff]
        %v3282 = vld [vmem:[%s270 + $0x38] sm:$0xff]
        %v3283 = vstv %s3274
        %v3284 = vmul.f32 %v3283, %v3275
        %v3285 = vmul.f32 %v3283, %v3276
        %v3286 = vmul.f32 %v3283, %v3277
        %v3287 = vmul.f32 %v3283, %v3278
        %v3288 = vmul.f32 %v3283, %v3279
        %v3289 = vmul.f32 %v3283, %v3280
        %v3290 = vmul.f32 %v3283, %v3281
        %v3291 = vmul.f32 %v3283, %v3282
        %v3292 = vadd.f32 %v386, %v3284
        %v3293 = vadd.f32 %v387, %v3285
        %v3294 = vadd.f32 %v388, %v3286
        %v3295 = vadd.f32 %v389, %v3287
        %v3296 = vadd.f32 %v390, %v3288
        %v3297 = vadd.f32 %v391, %v3289
        %v3298 = vadd.f32 %v392, %v3290
        %v3299 = vadd.f32 %v393, %v3291
        %s3300 = sld [smem:[#allocation3 + $0x581]]
        %v3301 = vld [vmem:[%s270 + $0x40] sm:$0xff]
        %v3302 = vld [vmem:[%s270 + $0x48] sm:$0xff]
        %v3303 = vld [vmem:[%s270 + $0x50] sm:$0xff]
        %v3304 = vld [vmem:[%s270 + $0x58] sm:$0xff]
        %v3305 = vld [vmem:[%s270 + $0x60] sm:$0xff]
        %v3306 = vld [vmem:[%s270 + $0x68] sm:$0xff]
        %v3307 = vld [vmem:[%s270 + $0x70] sm:$0xff]
        %v3308 = vld [vmem:[%s270 + $0x78] sm:$0xff]
        %v3309 = vstv %s3300
        %v3310 = vmul.f32 %v3309, %v3301
        %v3311 = vmul.f32 %v3309, %v3302
        %v3312 = vmul.f32 %v3309, %v3303
        %v3313 = vmul.f32 %v3309, %v3304
        %v3314 = vmul.f32 %v3309, %v3305
        %v3315 = vmul.f32 %v3309, %v3306
        %v3316 = vmul.f32 %v3309, %v3307
        %v3317 = vmul.f32 %v3309, %v3308
        %v3318 = vadd.f32 %v3292, %v3310
        %v3319 = vadd.f32 %v3293, %v3311
        %v3320 = vadd.f32 %v3294, %v3312
        %v3321 = vadd.f32 %v3295, %v3313
        %v3322 = vadd.f32 %v3296, %v3314
        %v3323 = vadd.f32 %v3297, %v3315
        %v3324 = vadd.f32 %v3298, %v3316
        %v3325 = vadd.f32 %v3299, %v3317
        %s3326 = sld [smem:[#allocation3 + $0x582]]
        %v3327 = vld [vmem:[%s270 + $0x80] sm:$0xff]
        %v3328 = vld [vmem:[%s270 + $0x88] sm:$0xff]
        %v3329 = vld [vmem:[%s270 + $0x90] sm:$0xff]
        %v3330 = vld [vmem:[%s270 + $0x98] sm:$0xff]
        %v3331 = vld [vmem:[%s270 + $0xa0] sm:$0xff]
        %v3332 = vld [vmem:[%s270 + $0xa8] sm:$0xff]
        %v3333 = vld [vmem:[%s270 + $0xb0] sm:$0xff]
        %v3334 = vld [vmem:[%s270 + $0xb8] sm:$0xff]
        %v3335 = vstv %s3326
        %v3336 = vmul.f32 %v3335, %v3327
        %v3337 = vmul.f32 %v3335, %v3328
        %v3338 = vmul.f32 %v3335, %v3329
        %v3339 = vmul.f32 %v3335, %v3330
        %v3340 = vmul.f32 %v3335, %v3331
        %v3341 = vmul.f32 %v3335, %v3332
        %v3342 = vmul.f32 %v3335, %v3333
        %v3343 = vmul.f32 %v3335, %v3334
        %v3344 = vadd.f32 %v3318, %v3336
        %v3345 = vadd.f32 %v3319, %v3337
        %v3346 = vadd.f32 %v3320, %v3338
        %v3347 = vadd.f32 %v3321, %v3339
        %v3348 = vadd.f32 %v3322, %v3340
        %v3349 = vadd.f32 %v3323, %v3341
        %v3350 = vadd.f32 %v3324, %v3342
        %v3351 = vadd.f32 %v3325, %v3343
        %s3352 = sld [smem:[#allocation3 + $0x583]]
        %v3353 = vstv %s3352
        %v3354 = vadd.f32 %v3344, %v3353
        %v3355 = vadd.f32 %v3345, %v3353
        %v3356 = vadd.f32 %v3346, %v3353
        %v3357 = vadd.f32 %v3347, %v3353
        %v3358 = vadd.f32 %v3348, %v3353
        %v3359 = vadd.f32 %v3349, %v3353
        %v3360 = vadd.f32 %v3350, %v3353
        %v3361 = vadd.f32 %v3351, %v3353
        %v3362 = vmax.f32 %v3354, 0.0
        %v3363 = vmax.f32 %v3355, 0.0
        %v3364 = vmax.f32 %v3356, 0.0
        %v3365 = vmax.f32 %v3357, 0.0
        %v3366 = vmax.f32 %v3358, 0.0
        %v3367 = vmax.f32 %v3359, 0.0
        %v3368 = vmax.f32 %v3360, 0.0
        %v3369 = vmax.f32 %v3361, 0.0
        %v3370 = vrsqrt.pop %v3362
        %v3371 = vmul.f32 %v3362, %v3370
        %vm3372 = vcmp.eq.f32.partialorder %v3362, inf
        %v3373 = vsel %vm3372, %v3362, %v3371
        %vm3374 = vcmp.eq.f32.partialorder %v3362, 0.0
        %v3375 = vand.u32 %v3362, 2147483648
        %v3376 = vsel %vm3374, %v3375, %v3373
        %v3377 = vrsqrt.pop %v3363
        %v3378 = vmul.f32 %v3363, %v3377
        %vm3379 = vcmp.eq.f32.partialorder %v3363, inf
        %v3380 = vsel %vm3379, %v3363, %v3378
        %vm3381 = vcmp.eq.f32.partialorder %v3363, 0.0
        %v3382 = vand.u32 %v3363, 2147483648
        %v3383 = vsel %vm3381, %v3382, %v3380
        %v3384 = vrsqrt.pop %v3364
        %v3385 = vmul.f32 %v3364, %v3384
        %vm3386 = vcmp.eq.f32.partialorder %v3364, inf
        %v3387 = vsel %vm3386, %v3364, %v3385
        %vm3388 = vcmp.eq.f32.partialorder %v3364, 0.0
        %v3389 = vand.u32 %v3364, 2147483648
        %v3390 = vsel %vm3388, %v3389, %v3387
        %v3391 = vrsqrt.pop %v3365
        %v3392 = vmul.f32 %v3365, %v3391
        %vm3393 = vcmp.eq.f32.partialorder %v3365, inf
        %v3394 = vsel %vm3393, %v3365, %v3392
        %vm3395 = vcmp.eq.f32.partialorder %v3365, 0.0
        %v3396 = vand.u32 %v3365, 2147483648
        %v3397 = vsel %vm3395, %v3396, %v3394
        %v3398 = vrsqrt.pop %v3366
        %v3399 = vmul.f32 %v3366, %v3398
        %vm3400 = vcmp.eq.f32.partialorder %v3366, inf
        %v3401 = vsel %vm3400, %v3366, %v3399
        %vm3402 = vcmp.eq.f32.partialorder %v3366, 0.0
        %v3403 = vand.u32 %v3366, 2147483648
        %v3404 = vsel %vm3402, %v3403, %v3401
        %v3405 = vrsqrt.pop %v3367
        %v3406 = vmul.f32 %v3367, %v3405
        %vm3407 = vcmp.eq.f32.partialorder %v3367, inf
        %v3408 = vsel %vm3407, %v3367, %v3406
        %vm3409 = vcmp.eq.f32.partialorder %v3367, 0.0
        %v3410 = vand.u32 %v3367, 2147483648
        %v3411 = vsel %vm3409, %v3410, %v3408
        %v3412 = vrsqrt.pop %v3368
        %v3413 = vmul.f32 %v3368, %v3412
        %vm3414 = vcmp.eq.f32.partialorder %v3368, inf
        %v3415 = vsel %vm3414, %v3368, %v3413
        %vm3416 = vcmp.eq.f32.partialorder %v3368, 0.0
        %v3417 = vand.u32 %v3368, 2147483648
        %v3418 = vsel %vm3416, %v3417, %v3415
        %v3419 = vrsqrt.pop %v3369
        %v3420 = vmul.f32 %v3369, %v3419
        %vm3421 = vcmp.eq.f32.partialorder %v3369, inf
        %v3422 = vsel %vm3421, %v3369, %v3420
        %vm3423 = vcmp.eq.f32.partialorder %v3369, 0.0
        %v3424 = vand.u32 %v3369, 2147483648
        %v3425 = vsel %vm3423, %v3424, %v3422
        %v3426 = vsub.f32 1.0, %v3376
        %v3427 = vsub.f32 1.0, %v3383
        %v3428 = vsub.f32 1.0, %v3390
        %v3429 = vsub.f32 1.0, %v3397
        %v3430 = vsub.f32 1.0, %v3404
        %v3431 = vsub.f32 1.0, %v3411
        %v3432 = vsub.f32 1.0, %v3418
        %v3433 = vsub.f32 1.0, %v3425
        %v3434 = vmax.f32 %v3426, 0.0
        %v3435 = vmax.f32 %v3427, 0.0
        %v3436 = vmax.f32 %v3428, 0.0
        %v3437 = vmax.f32 %v3429, 0.0
        %v3438 = vmax.f32 %v3430, 0.0
        %v3439 = vmax.f32 %v3431, 0.0
        %v3440 = vmax.f32 %v3432, 0.0
        %v3441 = vmax.f32 %v3433, 0.0
        %v3442 = vld [vmem:[%s279] sm:$0xff]
        %v3443 = vld [vmem:[%s279 + $0x8] sm:$0xff]
        %v3444 = vld [vmem:[%s279 + $0x10] sm:$0xff]
        %v3445 = vld [vmem:[%s279 + $0x18] sm:$0xff]
        %v3446 = vld [vmem:[%s279 + $0x20] sm:$0xff]
        %v3447 = vld [vmem:[%s279 + $0x28] sm:$0xff]
        %v3448 = vld [vmem:[%s279 + $0x30] sm:$0xff]
        %v3449 = vld [vmem:[%s279 + $0x38] sm:$0xff]
        %v3450 = vmul.f32 %v3434, %v3442
        %v3451 = vmul.f32 %v3435, %v3443
        %v3452 = vmul.f32 %v3436, %v3444
        %v3453 = vmul.f32 %v3437, %v3445
        %v3454 = vmul.f32 %v3438, %v3446
        %v3455 = vmul.f32 %v3439, %v3447
        %v3456 = vmul.f32 %v3440, %v3448
        %v3457 = vmul.f32 %v3441, %v3449
        %v3458 = vpack.c.bf16 %v3454, %v3450
        %v3459 = vpack.c.bf16 %v3455, %v3451
        %v3460 = vpack.c.bf16 %v3456, %v3452
        %v3461 = vpack.c.bf16 %v3457, %v3453
        %3462 = vst [vmem:[#allocation2 + $0x580] sm:$0xff] %v3458
        %3463 = vst [vmem:[#allocation2 + $0x588] sm:$0xff] %v3459
        %3464 = vst [vmem:[#allocation2 + $0x590] sm:$0xff] %v3460
        %3465 = vst [vmem:[#allocation2 + $0x598] sm:$0xff] %v3461
        %v3466 = vld [vmem:[%s279 + $0x40] sm:$0xff]
        %v3467 = vld [vmem:[%s279 + $0x48] sm:$0xff]
        %v3468 = vld [vmem:[%s279 + $0x50] sm:$0xff]
        %v3469 = vld [vmem:[%s279 + $0x58] sm:$0xff]
        %v3470 = vld [vmem:[%s279 + $0x60] sm:$0xff]
        %v3471 = vld [vmem:[%s279 + $0x68] sm:$0xff]
        %v3472 = vld [vmem:[%s279 + $0x70] sm:$0xff]
        %v3473 = vld [vmem:[%s279 + $0x78] sm:$0xff]
        %v3474 = vmul.f32 %v3434, %v3466
        %v3475 = vmul.f32 %v3435, %v3467
        %v3476 = vmul.f32 %v3436, %v3468
        %v3477 = vmul.f32 %v3437, %v3469
        %v3478 = vmul.f32 %v3438, %v3470
        %v3479 = vmul.f32 %v3439, %v3471
        %v3480 = vmul.f32 %v3440, %v3472
        %v3481 = vmul.f32 %v3441, %v3473
        %v3482 = vpack.c.bf16 %v3478, %v3474
        %v3483 = vpack.c.bf16 %v3479, %v3475
        %v3484 = vpack.c.bf16 %v3480, %v3476
        %v3485 = vpack.c.bf16 %v3481, %v3477
        %3486 = vst [vmem:[#allocation2 + $0x5a0] sm:$0xff] %v3482
        %3487 = vst [vmem:[#allocation2 + $0x5a8] sm:$0xff] %v3483
        %3488 = vst [vmem:[#allocation2 + $0x5b0] sm:$0xff] %v3484
        %3489 = vst [vmem:[#allocation2 + $0x5b8] sm:$0xff] %v3485
        %v3490 = vld [vmem:[%s279 + $0x80] sm:$0xff]
        %v3491 = vld [vmem:[%s279 + $0x88] sm:$0xff]
        %v3492 = vld [vmem:[%s279 + $0x90] sm:$0xff]
        %v3493 = vld [vmem:[%s279 + $0x98] sm:$0xff]
        %v3494 = vld [vmem:[%s279 + $0xa0] sm:$0xff]
        %v3495 = vld [vmem:[%s279 + $0xa8] sm:$0xff]
        %v3496 = vld [vmem:[%s279 + $0xb0] sm:$0xff]
        %v3497 = vld [vmem:[%s279 + $0xb8] sm:$0xff]
        %v3498 = vmul.f32 %v3434, %v3490
        %v3499 = vmul.f32 %v3435, %v3491
        %v3500 = vmul.f32 %v3436, %v3492
        %v3501 = vmul.f32 %v3437, %v3493
        %v3502 = vmul.f32 %v3438, %v3494
        %v3503 = vmul.f32 %v3439, %v3495
        %v3504 = vmul.f32 %v3440, %v3496
        %v3505 = vmul.f32 %v3441, %v3497
        %v3506 = vpack.c.bf16 %v3502, %v3498
        %v3507 = vpack.c.bf16 %v3503, %v3499
        %v3508 = vpack.c.bf16 %v3504, %v3500
        %v3509 = vpack.c.bf16 %v3505, %v3501
        %3510 = vst [vmem:[#allocation2 + $0x5c0] sm:$0xff] %v3506
        %3511 = vst [vmem:[#allocation2 + $0x5c8] sm:$0xff] %v3507
        %3512 = vst [vmem:[#allocation2 + $0x5d0] sm:$0xff] %v3508
        %3513 = vst [vmem:[#allocation2 + $0x5d8] sm:$0xff] %v3509
        %v3514 = vld [vmem:[%s279 + $0xc0] sm:$0xff]
        %v3515 = vld [vmem:[%s279 + $0xc8] sm:$0xff]
        %v3516 = vld [vmem:[%s279 + $0xd0] sm:$0xff]
        %v3517 = vld [vmem:[%s279 + $0xd8] sm:$0xff]
        %v3518 = vld [vmem:[%s279 + $0xe0] sm:$0xff]
        %v3519 = vld [vmem:[%s279 + $0xe8] sm:$0xff]
        %v3520 = vld [vmem:[%s279 + $0xf0] sm:$0xff]
        %v3521 = vld [vmem:[%s279 + $0xf8] sm:$0xff]
        %v3522 = vmul.f32 %v3434, %v3514
        %v3523 = vmul.f32 %v3435, %v3515
        %v3524 = vmul.f32 %v3436, %v3516
        %v3525 = vmul.f32 %v3437, %v3517
        %v3526 = vmul.f32 %v3438, %v3518
        %v3527 = vmul.f32 %v3439, %v3519
        %v3528 = vmul.f32 %v3440, %v3520
        %v3529 = vmul.f32 %v3441, %v3521
        %v3530 = vpack.c.bf16 %v3526, %v3522
        %v3531 = vpack.c.bf16 %v3527, %v3523
        %v3532 = vpack.c.bf16 %v3528, %v3524
        %v3533 = vpack.c.bf16 %v3529, %v3525
        %3534 = vst [vmem:[#allocation2 + $0x5e0] sm:$0xff] %v3530
        %3535 = vst [vmem:[#allocation2 + $0x5e8] sm:$0xff] %v3531
        %3536 = vst [vmem:[#allocation2 + $0x5f0] sm:$0xff] %v3532
        %3537 = vst [vmem:[#allocation2 + $0x5f8] sm:$0xff] %v3533
        %s3538 = sld [smem:[#allocation3 + $0x600]]
        %v3539 = vld [vmem:[%s270] sm:$0xff]
        %v3540 = vld [vmem:[%s270 + $0x8] sm:$0xff]
        %v3541 = vld [vmem:[%s270 + $0x10] sm:$0xff]
        %v3542 = vld [vmem:[%s270 + $0x18] sm:$0xff]
        %v3543 = vld [vmem:[%s270 + $0x20] sm:$0xff]
        %v3544 = vld [vmem:[%s270 + $0x28] sm:$0xff]
        %v3545 = vld [vmem:[%s270 + $0x30] sm:$0xff]
        %v3546 = vld [vmem:[%s270 + $0x38] sm:$0xff]
        %v3547 = vstv %s3538
        %v3548 = vmul.f32 %v3547, %v3539
        %v3549 = vmul.f32 %v3547, %v3540
        %v3550 = vmul.f32 %v3547, %v3541
        %v3551 = vmul.f32 %v3547, %v3542
        %v3552 = vmul.f32 %v3547, %v3543
        %v3553 = vmul.f32 %v3547, %v3544
        %v3554 = vmul.f32 %v3547, %v3545
        %v3555 = vmul.f32 %v3547, %v3546
        %v3556 = vadd.f32 %v386, %v3548
        %v3557 = vadd.f32 %v387, %v3549
        %v3558 = vadd.f32 %v388, %v3550
        %v3559 = vadd.f32 %v389, %v3551
        %v3560 = vadd.f32 %v390, %v3552
        %v3561 = vadd.f32 %v391, %v3553
        %v3562 = vadd.f32 %v392, %v3554
        %v3563 = vadd.f32 %v393, %v3555
        %s3564 = sld [smem:[#allocation3 + $0x601]]
        %v3565 = vld [vmem:[%s270 + $0x40] sm:$0xff]
        %v3566 = vld [vmem:[%s270 + $0x48] sm:$0xff]
        %v3567 = vld [vmem:[%s270 + $0x50] sm:$0xff]
        %v3568 = vld [vmem:[%s270 + $0x58] sm:$0xff]
        %v3569 = vld [vmem:[%s270 + $0x60] sm:$0xff]
        %v3570 = vld [vmem:[%s270 + $0x68] sm:$0xff]
        %v3571 = vld [vmem:[%s270 + $0x70] sm:$0xff]
        %v3572 = vld [vmem:[%s270 + $0x78] sm:$0xff]
        %v3573 = vstv %s3564
        %v3574 = vmul.f32 %v3573, %v3565
        %v3575 = vmul.f32 %v3573, %v3566
        %v3576 = vmul.f32 %v3573, %v3567
        %v3577 = vmul.f32 %v3573, %v3568
        %v3578 = vmul.f32 %v3573, %v3569
        %v3579 = vmul.f32 %v3573, %v3570
        %v3580 = vmul.f32 %v3573, %v3571
        %v3581 = vmul.f32 %v3573, %v3572
        %v3582 = vadd.f32 %v3556, %v3574
        %v3583 = vadd.f32 %v3557, %v3575
        %v3584 = vadd.f32 %v3558, %v3576
        %v3585 = vadd.f32 %v3559, %v3577
        %v3586 = vadd.f32 %v3560, %v3578
        %v3587 = vadd.f32 %v3561, %v3579
        %v3588 = vadd.f32 %v3562, %v3580
        %v3589 = vadd.f32 %v3563, %v3581
        %s3590 = sld [smem:[#allocation3 + $0x602]]
        %v3591 = vld [vmem:[%s270 + $0x80] sm:$0xff]
        %v3592 = vld [vmem:[%s270 + $0x88] sm:$0xff]
        %v3593 = vld [vmem:[%s270 + $0x90] sm:$0xff]
        %v3594 = vld [vmem:[%s270 + $0x98] sm:$0xff]
        %v3595 = vld [vmem:[%s270 + $0xa0] sm:$0xff]
        %v3596 = vld [vmem:[%s270 + $0xa8] sm:$0xff]
        %v3597 = vld [vmem:[%s270 + $0xb0] sm:$0xff]
        %v3598 = vld [vmem:[%s270 + $0xb8] sm:$0xff]
        %v3599 = vstv %s3590
        %v3600 = vmul.f32 %v3599, %v3591
        %v3601 = vmul.f32 %v3599, %v3592
        %v3602 = vmul.f32 %v3599, %v3593
        %v3603 = vmul.f32 %v3599, %v3594
        %v3604 = vmul.f32 %v3599, %v3595
        %v3605 = vmul.f32 %v3599, %v3596
        %v3606 = vmul.f32 %v3599, %v3597
        %v3607 = vmul.f32 %v3599, %v3598
        %v3608 = vadd.f32 %v3582, %v3600
        %v3609 = vadd.f32 %v3583, %v3601
        %v3610 = vadd.f32 %v3584, %v3602
        %v3611 = vadd.f32 %v3585, %v3603
        %v3612 = vadd.f32 %v3586, %v3604
        %v3613 = vadd.f32 %v3587, %v3605
        %v3614 = vadd.f32 %v3588, %v3606
        %v3615 = vadd.f32 %v3589, %v3607
        %s3616 = sld [smem:[#allocation3 + $0x603]]
        %v3617 = vstv %s3616
        %v3618 = vadd.f32 %v3608, %v3617
        %v3619 = vadd.f32 %v3609, %v3617
        %v3620 = vadd.f32 %v3610, %v3617
        %v3621 = vadd.f32 %v3611, %v3617
        %v3622 = vadd.f32 %v3612, %v3617
        %v3623 = vadd.f32 %v3613, %v3617
        %v3624 = vadd.f32 %v3614, %v3617
        %v3625 = vadd.f32 %v3615, %v3617
        %v3626 = vmax.f32 %v3618, 0.0
        %v3627 = vmax.f32 %v3619, 0.0
        %v3628 = vmax.f32 %v3620, 0.0
        %v3629 = vmax.f32 %v3621, 0.0
        %v3630 = vmax.f32 %v3622, 0.0
        %v3631 = vmax.f32 %v3623, 0.0
        %v3632 = vmax.f32 %v3624, 0.0
        %v3633 = vmax.f32 %v3625, 0.0
        %v3634 = vrsqrt.pop %v3626
        %v3635 = vmul.f32 %v3626, %v3634
        %vm3636 = vcmp.eq.f32.partialorder %v3626, inf
        %v3637 = vsel %vm3636, %v3626, %v3635
        %vm3638 = vcmp.eq.f32.partialorder %v3626, 0.0
        %v3639 = vand.u32 %v3626, 2147483648
        %v3640 = vsel %vm3638, %v3639, %v3637
        %v3641 = vrsqrt.pop %v3627
        %v3642 = vmul.f32 %v3627, %v3641
        %vm3643 = vcmp.eq.f32.partialorder %v3627, inf
        %v3644 = vsel %vm3643, %v3627, %v3642
        %vm3645 = vcmp.eq.f32.partialorder %v3627, 0.0
        %v3646 = vand.u32 %v3627, 2147483648
        %v3647 = vsel %vm3645, %v3646, %v3644
        %v3648 = vrsqrt.pop %v3628
        %v3649 = vmul.f32 %v3628, %v3648
        %vm3650 = vcmp.eq.f32.partialorder %v3628, inf
        %v3651 = vsel %vm3650, %v3628, %v3649
        %vm3652 = vcmp.eq.f32.partialorder %v3628, 0.0
        %v3653 = vand.u32 %v3628, 2147483648
        %v3654 = vsel %vm3652, %v3653, %v3651
        %v3655 = vrsqrt.pop %v3629
        %v3656 = vmul.f32 %v3629, %v3655
        %vm3657 = vcmp.eq.f32.partialorder %v3629, inf
        %v3658 = vsel %vm3657, %v3629, %v3656
        %vm3659 = vcmp.eq.f32.partialorder %v3629, 0.0
        %v3660 = vand.u32 %v3629, 2147483648
        %v3661 = vsel %vm3659, %v3660, %v3658
        %v3662 = vrsqrt.pop %v3630
        %v3663 = vmul.f32 %v3630, %v3662
        %vm3664 = vcmp.eq.f32.partialorder %v3630, inf
        %v3665 = vsel %vm3664, %v3630, %v3663
        %vm3666 = vcmp.eq.f32.partialorder %v3630, 0.0
        %v3667 = vand.u32 %v3630, 2147483648
        %v3668 = vsel %vm3666, %v3667, %v3665
        %v3669 = vrsqrt.pop %v3631
        %v3670 = vmul.f32 %v3631, %v3669
        %vm3671 = vcmp.eq.f32.partialorder %v3631, inf
        %v3672 = vsel %vm3671, %v3631, %v3670
        %vm3673 = vcmp.eq.f32.partialorder %v3631, 0.0
        %v3674 = vand.u32 %v3631, 2147483648
        %v3675 = vsel %vm3673, %v3674, %v3672
        %v3676 = vrsqrt.pop %v3632
        %v3677 = vmul.f32 %v3632, %v3676
        %vm3678 = vcmp.eq.f32.partialorder %v3632, inf
        %v3679 = vsel %vm3678, %v3632, %v3677
        %vm3680 = vcmp.eq.f32.partialorder %v3632, 0.0
        %v3681 = vand.u32 %v3632, 2147483648
        %v3682 = vsel %vm3680, %v3681, %v3679
        %v3683 = vrsqrt.pop %v3633
        %v3684 = vmul.f32 %v3633, %v3683
        %vm3685 = vcmp.eq.f32.partialorder %v3633, inf
        %v3686 = vsel %vm3685, %v3633, %v3684
        %vm3687 = vcmp.eq.f32.partialorder %v3633, 0.0
        %v3688 = vand.u32 %v3633, 2147483648
        %v3689 = vsel %vm3687, %v3688, %v3686
        %v3690 = vsub.f32 1.0, %v3640
        %v3691 = vsub.f32 1.0, %v3647
        %v3692 = vsub.f32 1.0, %v3654
        %v3693 = vsub.f32 1.0, %v3661
        %v3694 = vsub.f32 1.0, %v3668
        %v3695 = vsub.f32 1.0, %v3675
        %v3696 = vsub.f32 1.0, %v3682
        %v3697 = vsub.f32 1.0, %v3689
        %v3698 = vmax.f32 %v3690, 0.0
        %v3699 = vmax.f32 %v3691, 0.0
        %v3700 = vmax.f32 %v3692, 0.0
        %v3701 = vmax.f32 %v3693, 0.0
        %v3702 = vmax.f32 %v3694, 0.0
        %v3703 = vmax.f32 %v3695, 0.0
        %v3704 = vmax.f32 %v3696, 0.0
        %v3705 = vmax.f32 %v3697, 0.0
        %v3706 = vld [vmem:[%s279] sm:$0xff]
        %v3707 = vld [vmem:[%s279 + $0x8] sm:$0xff]
        %v3708 = vld [vmem:[%s279 + $0x10] sm:$0xff]
        %v3709 = vld [vmem:[%s279 + $0x18] sm:$0xff]
        %v3710 = vld [vmem:[%s279 + $0x20] sm:$0xff]
        %v3711 = vld [vmem:[%s279 + $0x28] sm:$0xff]
        %v3712 = vld [vmem:[%s279 + $0x30] sm:$0xff]
        %v3713 = vld [vmem:[%s279 + $0x38] sm:$0xff]
        %v3714 = vmul.f32 %v3698, %v3706
        %v3715 = vmul.f32 %v3699, %v3707
        %v3716 = vmul.f32 %v3700, %v3708
        %v3717 = vmul.f32 %v3701, %v3709
        %v3718 = vmul.f32 %v3702, %v3710
        %v3719 = vmul.f32 %v3703, %v3711
        %v3720 = vmul.f32 %v3704, %v3712
        %v3721 = vmul.f32 %v3705, %v3713
        %v3722 = vpack.c.bf16 %v3718, %v3714
        %v3723 = vpack.c.bf16 %v3719, %v3715
        %v3724 = vpack.c.bf16 %v3720, %v3716
        %v3725 = vpack.c.bf16 %v3721, %v3717
        %3726 = vst [vmem:[#allocation2 + $0x600] sm:$0xff] %v3722
        %3727 = vst [vmem:[#allocation2 + $0x608] sm:$0xff] %v3723
        %3728 = vst [vmem:[#allocation2 + $0x610] sm:$0xff] %v3724
        %3729 = vst [vmem:[#allocation2 + $0x618] sm:$0xff] %v3725
        %v3730 = vld [vmem:[%s279 + $0x40] sm:$0xff]
        %v3731 = vld [vmem:[%s279 + $0x48] sm:$0xff]
        %v3732 = vld [vmem:[%s279 + $0x50] sm:$0xff]
        %v3733 = vld [vmem:[%s279 + $0x58] sm:$0xff]
        %v3734 = vld [vmem:[%s279 + $0x60] sm:$0xff]
        %v3735 = vld [vmem:[%s279 + $0x68] sm:$0xff]
        %v3736 = vld [vmem:[%s279 + $0x70] sm:$0xff]
        %v3737 = vld [vmem:[%s279 + $0x78] sm:$0xff]
        %v3738 = vmul.f32 %v3698, %v3730
        %v3739 = vmul.f32 %v3699, %v3731
        %v3740 = vmul.f32 %v3700, %v3732
        %v3741 = vmul.f32 %v3701, %v3733
        %v3742 = vmul.f32 %v3702, %v3734
        %v3743 = vmul.f32 %v3703, %v3735
        %v3744 = vmul.f32 %v3704, %v3736
        %v3745 = vmul.f32 %v3705, %v3737
        %v3746 = vpack.c.bf16 %v3742, %v3738
        %v3747 = vpack.c.bf16 %v3743, %v3739
        %v3748 = vpack.c.bf16 %v3744, %v3740
        %v3749 = vpack.c.bf16 %v3745, %v3741
        %3750 = vst [vmem:[#allocation2 + $0x620] sm:$0xff] %v3746
        %3751 = vst [vmem:[#allocation2 + $0x628] sm:$0xff] %v3747
        %3752 = vst [vmem:[#allocation2 + $0x630] sm:$0xff] %v3748
        %3753 = vst [vmem:[#allocation2 + $0x638] sm:$0xff] %v3749
        %v3754 = vld [vmem:[%s279 + $0x80] sm:$0xff]
        %v3755 = vld [vmem:[%s279 + $0x88] sm:$0xff]
        %v3756 = vld [vmem:[%s279 + $0x90] sm:$0xff]
        %v3757 = vld [vmem:[%s279 + $0x98] sm:$0xff]
        %v3758 = vld [vmem:[%s279 + $0xa0] sm:$0xff]
        %v3759 = vld [vmem:[%s279 + $0xa8] sm:$0xff]
        %v3760 = vld [vmem:[%s279 + $0xb0] sm:$0xff]
        %v3761 = vld [vmem:[%s279 + $0xb8] sm:$0xff]
        %v3762 = vmul.f32 %v3698, %v3754
        %v3763 = vmul.f32 %v3699, %v3755
        %v3764 = vmul.f32 %v3700, %v3756
        %v3765 = vmul.f32 %v3701, %v3757
        %v3766 = vmul.f32 %v3702, %v3758
        %v3767 = vmul.f32 %v3703, %v3759
        %v3768 = vmul.f32 %v3704, %v3760
        %v3769 = vmul.f32 %v3705, %v3761
        %v3770 = vpack.c.bf16 %v3766, %v3762
        %v3771 = vpack.c.bf16 %v3767, %v3763
        %v3772 = vpack.c.bf16 %v3768, %v3764
        %v3773 = vpack.c.bf16 %v3769, %v3765
        %3774 = vst [vmem:[#allocation2 + $0x640] sm:$0xff] %v3770
        %3775 = vst [vmem:[#allocation2 + $0x648] sm:$0xff] %v3771
        %3776 = vst [vmem:[#allocation2 + $0x650] sm:$0xff] %v3772
        %3777 = vst [vmem:[#allocation2 + $0x658] sm:$0xff] %v3773
        %v3778 = vld [vmem:[%s279 + $0xc0] sm:$0xff]
        %v3779 = vld [vmem:[%s279 + $0xc8] sm:$0xff]
        %v3780 = vld [vmem:[%s279 + $0xd0] sm:$0xff]
        %v3781 = vld [vmem:[%s279 + $0xd8] sm:$0xff]
        %v3782 = vld [vmem:[%s279 + $0xe0] sm:$0xff]
        %v3783 = vld [vmem:[%s279 + $0xe8] sm:$0xff]
        %v3784 = vld [vmem:[%s279 + $0xf0] sm:$0xff]
        %v3785 = vld [vmem:[%s279 + $0xf8] sm:$0xff]
        %v3786 = vmul.f32 %v3698, %v3778
        %v3787 = vmul.f32 %v3699, %v3779
        %v3788 = vmul.f32 %v3700, %v3780
        %v3789 = vmul.f32 %v3701, %v3781
        %v3790 = vmul.f32 %v3702, %v3782
        %v3791 = vmul.f32 %v3703, %v3783
        %v3792 = vmul.f32 %v3704, %v3784
        %v3793 = vmul.f32 %v3705, %v3785
        %v3794 = vpack.c.bf16 %v3790, %v3786
        %v3795 = vpack.c.bf16 %v3791, %v3787
        %v3796 = vpack.c.bf16 %v3792, %v3788
        %v3797 = vpack.c.bf16 %v3793, %v3789
        %3798 = vst [vmem:[#allocation2 + $0x660] sm:$0xff] %v3794
        %3799 = vst [vmem:[#allocation2 + $0x668] sm:$0xff] %v3795
        %3800 = vst [vmem:[#allocation2 + $0x670] sm:$0xff] %v3796
        %3801 = vst [vmem:[#allocation2 + $0x678] sm:$0xff] %v3797
        %s3802 = sld [smem:[#allocation3 + $0x680]]
        %v3803 = vld [vmem:[%s270] sm:$0xff]
        %v3804 = vld [vmem:[%s270 + $0x8] sm:$0xff]
        %v3805 = vld [vmem:[%s270 + $0x10] sm:$0xff]
        %v3806 = vld [vmem:[%s270 + $0x18] sm:$0xff]
        %v3807 = vld [vmem:[%s270 + $0x20] sm:$0xff]
        %v3808 = vld [vmem:[%s270 + $0x28] sm:$0xff]
        %v3809 = vld [vmem:[%s270 + $0x30] sm:$0xff]
        %v3810 = vld [vmem:[%s270 + $0x38] sm:$0xff]
        %v3811 = vstv %s3802
        %v3812 = vmul.f32 %v3811, %v3803
        %v3813 = vmul.f32 %v3811, %v3804
        %v3814 = vmul.f32 %v3811, %v3805
        %v3815 = vmul.f32 %v3811, %v3806
        %v3816 = vmul.f32 %v3811, %v3807
        %v3817 = vmul.f32 %v3811, %v3808
        %v3818 = vmul.f32 %v3811, %v3809
        %v3819 = vmul.f32 %v3811, %v3810
        %v3820 = vadd.f32 %v386, %v3812
        %v3821 = vadd.f32 %v387, %v3813
        %v3822 = vadd.f32 %v388, %v3814
        %v3823 = vadd.f32 %v389, %v3815
        %v3824 = vadd.f32 %v390, %v3816
        %v3825 = vadd.f32 %v391, %v3817
        %v3826 = vadd.f32 %v392, %v3818
        %v3827 = vadd.f32 %v393, %v3819
        %s3828 = sld [smem:[#allocation3 + $0x681]]
        %v3829 = vld [vmem:[%s270 + $0x40] sm:$0xff]
        %v3830 = vld [vmem:[%s270 + $0x48] sm:$0xff]
        %v3831 = vld [vmem:[%s270 + $0x50] sm:$0xff]
        %v3832 = vld [vmem:[%s270 + $0x58] sm:$0xff]
        %v3833 = vld [vmem:[%s270 + $0x60] sm:$0xff]
        %v3834 = vld [vmem:[%s270 + $0x68] sm:$0xff]
        %v3835 = vld [vmem:[%s270 + $0x70] sm:$0xff]
        %v3836 = vld [vmem:[%s270 + $0x78] sm:$0xff]
        %v3837 = vstv %s3828
        %v3838 = vmul.f32 %v3837, %v3829
        %v3839 = vmul.f32 %v3837, %v3830
        %v3840 = vmul.f32 %v3837, %v3831
        %v3841 = vmul.f32 %v3837, %v3832
        %v3842 = vmul.f32 %v3837, %v3833
        %v3843 = vmul.f32 %v3837, %v3834
        %v3844 = vmul.f32 %v3837, %v3835
        %v3845 = vmul.f32 %v3837, %v3836
        %v3846 = vadd.f32 %v3820, %v3838
        %v3847 = vadd.f32 %v3821, %v3839
        %v3848 = vadd.f32 %v3822, %v3840
        %v3849 = vadd.f32 %v3823, %v3841
        %v3850 = vadd.f32 %v3824, %v3842
        %v3851 = vadd.f32 %v3825, %v3843
        %v3852 = vadd.f32 %v3826, %v3844
        %v3853 = vadd.f32 %v3827, %v3845
        %s3854 = sld [smem:[#allocation3 + $0x682]]
        %v3855 = vld [vmem:[%s270 + $0x80] sm:$0xff]
        %v3856 = vld [vmem:[%s270 + $0x88] sm:$0xff]
        %v3857 = vld [vmem:[%s270 + $0x90] sm:$0xff]
        %v3858 = vld [vmem:[%s270 + $0x98] sm:$0xff]
        %v3859 = vld [vmem:[%s270 + $0xa0] sm:$0xff]
        %v3860 = vld [vmem:[%s270 + $0xa8] sm:$0xff]
        %v3861 = vld [vmem:[%s270 + $0xb0] sm:$0xff]
        %v3862 = vld [vmem:[%s270 + $0xb8] sm:$0xff]
        %v3863 = vstv %s3854
        %v3864 = vmul.f32 %v3863, %v3855
        %v3865 = vmul.f32 %v3863, %v3856
        %v3866 = vmul.f32 %v3863, %v3857
        %v3867 = vmul.f32 %v3863, %v3858
        %v3868 = vmul.f32 %v3863, %v3859
        %v3869 = vmul.f32 %v3863, %v3860
        %v3870 = vmul.f32 %v3863, %v3861
        %v3871 = vmul.f32 %v3863, %v3862
        %v3872 = vadd.f32 %v3846, %v3864
        %v3873 = vadd.f32 %v3847, %v3865
        %v3874 = vadd.f32 %v3848, %v3866
        %v3875 = vadd.f32 %v3849, %v3867
        %v3876 = vadd.f32 %v3850, %v3868
        %v3877 = vadd.f32 %v3851, %v3869
        %v3878 = vadd.f32 %v3852, %v3870
        %v3879 = vadd.f32 %v3853, %v3871
        %s3880 = sld [smem:[#allocation3 + $0x683]]
        %v3881 = vstv %s3880
        %v3882 = vadd.f32 %v3872, %v3881
        %v3883 = vadd.f32 %v3873, %v3881
        %v3884 = vadd.f32 %v3874, %v3881
        %v3885 = vadd.f32 %v3875, %v3881
        %v3886 = vadd.f32 %v3876, %v3881
        %v3887 = vadd.f32 %v3877, %v3881
        %v3888 = vadd.f32 %v3878, %v3881
        %v3889 = vadd.f32 %v3879, %v3881
        %v3890 = vmax.f32 %v3882, 0.0
        %v3891 = vmax.f32 %v3883, 0.0
        %v3892 = vmax.f32 %v3884, 0.0
        %v3893 = vmax.f32 %v3885, 0.0
        %v3894 = vmax.f32 %v3886, 0.0
        %v3895 = vmax.f32 %v3887, 0.0
        %v3896 = vmax.f32 %v3888, 0.0
        %v3897 = vmax.f32 %v3889, 0.0
        %v3898 = vrsqrt.pop %v3890
        %v3899 = vmul.f32 %v3890, %v3898
        %vm3900 = vcmp.eq.f32.partialorder %v3890, inf
        %v3901 = vsel %vm3900, %v3890, %v3899
        %vm3902 = vcmp.eq.f32.partialorder %v3890, 0.0
        %v3903 = vand.u32 %v3890, 2147483648
        %v3904 = vsel %vm3902, %v3903, %v3901
        %v3905 = vrsqrt.pop %v3891
        %v3906 = vmul.f32 %v3891, %v3905
        %vm3907 = vcmp.eq.f32.partialorder %v3891, inf
        %v3908 = vsel %vm3907, %v3891, %v3906
        %vm3909 = vcmp.eq.f32.partialorder %v3891, 0.0
        %v3910 = vand.u32 %v3891, 2147483648
        %v3911 = vsel %vm3909, %v3910, %v3908
        %v3912 = vrsqrt.pop %v3892
        %v3913 = vmul.f32 %v3892, %v3912
        %vm3914 = vcmp.eq.f32.partialorder %v3892, inf
        %v3915 = vsel %vm3914, %v3892, %v3913
        %vm3916 = vcmp.eq.f32.partialorder %v3892, 0.0
        %v3917 = vand.u32 %v3892, 2147483648
        %v3918 = vsel %vm3916, %v3917, %v3915
        %v3919 = vrsqrt.pop %v3893
        %v3920 = vmul.f32 %v3893, %v3919
        %vm3921 = vcmp.eq.f32.partialorder %v3893, inf
        %v3922 = vsel %vm3921, %v3893, %v3920
        %vm3923 = vcmp.eq.f32.partialorder %v3893, 0.0
        %v3924 = vand.u32 %v3893, 2147483648
        %v3925 = vsel %vm3923, %v3924, %v3922
        %v3926 = vrsqrt.pop %v3894
        %v3927 = vmul.f32 %v3894, %v3926
        %vm3928 = vcmp.eq.f32.partialorder %v3894, inf
        %v3929 = vsel %vm3928, %v3894, %v3927
        %vm3930 = vcmp.eq.f32.partialorder %v3894, 0.0
        %v3931 = vand.u32 %v3894, 2147483648
        %v3932 = vsel %vm3930, %v3931, %v3929
        %v3933 = vrsqrt.pop %v3895
        %v3934 = vmul.f32 %v3895, %v3933
        %vm3935 = vcmp.eq.f32.partialorder %v3895, inf
        %v3936 = vsel %vm3935, %v3895, %v3934
        %vm3937 = vcmp.eq.f32.partialorder %v3895, 0.0
        %v3938 = vand.u32 %v3895, 2147483648
        %v3939 = vsel %vm3937, %v3938, %v3936
        %v3940 = vrsqrt.pop %v3896
        %v3941 = vmul.f32 %v3896, %v3940
        %vm3942 = vcmp.eq.f32.partialorder %v3896, inf
        %v3943 = vsel %vm3942, %v3896, %v3941
        %vm3944 = vcmp.eq.f32.partialorder %v3896, 0.0
        %v3945 = vand.u32 %v3896, 2147483648
        %v3946 = vsel %vm3944, %v3945, %v3943
        %v3947 = vrsqrt.pop %v3897
        %v3948 = vmul.f32 %v3897, %v3947
        %vm3949 = vcmp.eq.f32.partialorder %v3897, inf
        %v3950 = vsel %vm3949, %v3897, %v3948
        %vm3951 = vcmp.eq.f32.partialorder %v3897, 0.0
        %v3952 = vand.u32 %v3897, 2147483648
        %v3953 = vsel %vm3951, %v3952, %v3950
        %v3954 = vsub.f32 1.0, %v3904
        %v3955 = vsub.f32 1.0, %v3911
        %v3956 = vsub.f32 1.0, %v3918
        %v3957 = vsub.f32 1.0, %v3925
        %v3958 = vsub.f32 1.0, %v3932
        %v3959 = vsub.f32 1.0, %v3939
        %v3960 = vsub.f32 1.0, %v3946
        %v3961 = vsub.f32 1.0, %v3953
        %v3962 = vmax.f32 %v3954, 0.0
        %v3963 = vmax.f32 %v3955, 0.0
        %v3964 = vmax.f32 %v3956, 0.0
        %v3965 = vmax.f32 %v3957, 0.0
        %v3966 = vmax.f32 %v3958, 0.0
        %v3967 = vmax.f32 %v3959, 0.0
        %v3968 = vmax.f32 %v3960, 0.0
        %v3969 = vmax.f32 %v3961, 0.0
        %v3970 = vld [vmem:[%s279] sm:$0xff]
        %v3971 = vld [vmem:[%s279 + $0x8] sm:$0xff]
        %v3972 = vld [vmem:[%s279 + $0x10] sm:$0xff]
        %v3973 = vld [vmem:[%s279 + $0x18] sm:$0xff]
        %v3974 = vld [vmem:[%s279 + $0x20] sm:$0xff]
        %v3975 = vld [vmem:[%s279 + $0x28] sm:$0xff]
        %v3976 = vld [vmem:[%s279 + $0x30] sm:$0xff]
        %v3977 = vld [vmem:[%s279 + $0x38] sm:$0xff]
        %v3978 = vmul.f32 %v3962, %v3970
        %v3979 = vmul.f32 %v3963, %v3971
        %v3980 = vmul.f32 %v3964, %v3972
        %v3981 = vmul.f32 %v3965, %v3973
        %v3982 = vmul.f32 %v3966, %v3974
        %v3983 = vmul.f32 %v3967, %v3975
        %v3984 = vmul.f32 %v3968, %v3976
        %v3985 = vmul.f32 %v3969, %v3977
        %v3986 = vpack.c.bf16 %v3982, %v3978
        %v3987 = vpack.c.bf16 %v3983, %v3979
        %v3988 = vpack.c.bf16 %v3984, %v3980
        %v3989 = vpack.c.bf16 %v3985, %v3981
        %3990 = vst [vmem:[#allocation2 + $0x680] sm:$0xff] %v3986
        %3991 = vst [vmem:[#allocation2 + $0x688] sm:$0xff] %v3987
        %3992 = vst [vmem:[#allocation2 + $0x690] sm:$0xff] %v3988
        %3993 = vst [vmem:[#allocation2 + $0x698] sm:$0xff] %v3989
        %v3994 = vld [vmem:[%s279 + $0x40] sm:$0xff]
        %v3995 = vld [vmem:[%s279 + $0x48] sm:$0xff]
        %v3996 = vld [vmem:[%s279 + $0x50] sm:$0xff]
        %v3997 = vld [vmem:[%s279 + $0x58] sm:$0xff]
        %v3998 = vld [vmem:[%s279 + $0x60] sm:$0xff]
        %v3999 = vld [vmem:[%s279 + $0x68] sm:$0xff]
        %v4000 = vld [vmem:[%s279 + $0x70] sm:$0xff]
        %v4001 = vld [vmem:[%s279 + $0x78] sm:$0xff]
        %v4002 = vmul.f32 %v3962, %v3994
        %v4003 = vmul.f32 %v3963, %v3995
        %v4004 = vmul.f32 %v3964, %v3996
        %v4005 = vmul.f32 %v3965, %v3997
        %v4006 = vmul.f32 %v3966, %v3998
        %v4007 = vmul.f32 %v3967, %v3999
        %v4008 = vmul.f32 %v3968, %v4000
        %v4009 = vmul.f32 %v3969, %v4001
        %v4010 = vpack.c.bf16 %v4006, %v4002
        %v4011 = vpack.c.bf16 %v4007, %v4003
        %v4012 = vpack.c.bf16 %v4008, %v4004
        %v4013 = vpack.c.bf16 %v4009, %v4005
        %4014 = vst [vmem:[#allocation2 + $0x6a0] sm:$0xff] %v4010
        %4015 = vst [vmem:[#allocation2 + $0x6a8] sm:$0xff] %v4011
        %4016 = vst [vmem:[#allocation2 + $0x6b0] sm:$0xff] %v4012
        %4017 = vst [vmem:[#allocation2 + $0x6b8] sm:$0xff] %v4013
        %v4018 = vld [vmem:[%s279 + $0x80] sm:$0xff]
        %v4019 = vld [vmem:[%s279 + $0x88] sm:$0xff]
        %v4020 = vld [vmem:[%s279 + $0x90] sm:$0xff]
        %v4021 = vld [vmem:[%s279 + $0x98] sm:$0xff]
        %v4022 = vld [vmem:[%s279 + $0xa0] sm:$0xff]
        %v4023 = vld [vmem:[%s279 + $0xa8] sm:$0xff]
        %v4024 = vld [vmem:[%s279 + $0xb0] sm:$0xff]
        %v4025 = vld [vmem:[%s279 + $0xb8] sm:$0xff]
        %v4026 = vmul.f32 %v3962, %v4018
        %v4027 = vmul.f32 %v3963, %v4019
        %v4028 = vmul.f32 %v3964, %v4020
        %v4029 = vmul.f32 %v3965, %v4021
        %v4030 = vmul.f32 %v3966, %v4022
        %v4031 = vmul.f32 %v3967, %v4023
        %v4032 = vmul.f32 %v3968, %v4024
        %v4033 = vmul.f32 %v3969, %v4025
        %v4034 = vpack.c.bf16 %v4030, %v4026
        %v4035 = vpack.c.bf16 %v4031, %v4027
        %v4036 = vpack.c.bf16 %v4032, %v4028
        %v4037 = vpack.c.bf16 %v4033, %v4029
        %4038 = vst [vmem:[#allocation2 + $0x6c0] sm:$0xff] %v4034
        %4039 = vst [vmem:[#allocation2 + $0x6c8] sm:$0xff] %v4035
        %4040 = vst [vmem:[#allocation2 + $0x6d0] sm:$0xff] %v4036
        %4041 = vst [vmem:[#allocation2 + $0x6d8] sm:$0xff] %v4037
        %v4042 = vld [vmem:[%s279 + $0xc0] sm:$0xff]
        %v4043 = vld [vmem:[%s279 + $0xc8] sm:$0xff]
        %v4044 = vld [vmem:[%s279 + $0xd0] sm:$0xff]
        %v4045 = vld [vmem:[%s279 + $0xd8] sm:$0xff]
        %v4046 = vld [vmem:[%s279 + $0xe0] sm:$0xff]
        %v4047 = vld [vmem:[%s279 + $0xe8] sm:$0xff]
        %v4048 = vld [vmem:[%s279 + $0xf0] sm:$0xff]
        %v4049 = vld [vmem:[%s279 + $0xf8] sm:$0xff]
        %v4050 = vmul.f32 %v3962, %v4042
        %v4051 = vmul.f32 %v3963, %v4043
        %v4052 = vmul.f32 %v3964, %v4044
        %v4053 = vmul.f32 %v3965, %v4045
        %v4054 = vmul.f32 %v3966, %v4046
        %v4055 = vmul.f32 %v3967, %v4047
        %v4056 = vmul.f32 %v3968, %v4048
        %v4057 = vmul.f32 %v3969, %v4049
        %v4058 = vpack.c.bf16 %v4054, %v4050
        %v4059 = vpack.c.bf16 %v4055, %v4051
        %v4060 = vpack.c.bf16 %v4056, %v4052
        %v4061 = vpack.c.bf16 %v4057, %v4053
        %4062 = vst [vmem:[#allocation2 + $0x6e0] sm:$0xff] %v4058
        %4063 = vst [vmem:[#allocation2 + $0x6e8] sm:$0xff] %v4059
        %4064 = vst [vmem:[#allocation2 + $0x6f0] sm:$0xff] %v4060
        %4065 = vst [vmem:[#allocation2 + $0x6f8] sm:$0xff] %v4061
        %s4066 = sld [smem:[#allocation3 + $0x700]]
        %v4067 = vld [vmem:[%s270] sm:$0xff]
        %v4068 = vld [vmem:[%s270 + $0x8] sm:$0xff]
        %v4069 = vld [vmem:[%s270 + $0x10] sm:$0xff]
        %v4070 = vld [vmem:[%s270 + $0x18] sm:$0xff]
        %v4071 = vld [vmem:[%s270 + $0x20] sm:$0xff]
        %v4072 = vld [vmem:[%s270 + $0x28] sm:$0xff]
        %v4073 = vld [vmem:[%s270 + $0x30] sm:$0xff]
        %v4074 = vld [vmem:[%s270 + $0x38] sm:$0xff]
        %v4075 = vstv %s4066
        %v4076 = vmul.f32 %v4075, %v4067
        %v4077 = vmul.f32 %v4075, %v4068
        %v4078 = vmul.f32 %v4075, %v4069
        %v4079 = vmul.f32 %v4075, %v4070
        %v4080 = vmul.f32 %v4075, %v4071
        %v4081 = vmul.f32 %v4075, %v4072
        %v4082 = vmul.f32 %v4075, %v4073
        %v4083 = vmul.f32 %v4075, %v4074
        %v4084 = vadd.f32 %v386, %v4076
        %v4085 = vadd.f32 %v387, %v4077
        %v4086 = vadd.f32 %v388, %v4078
        %v4087 = vadd.f32 %v389, %v4079
        %v4088 = vadd.f32 %v390, %v4080
        %v4089 = vadd.f32 %v391, %v4081
        %v4090 = vadd.f32 %v392, %v4082
        %v4091 = vadd.f32 %v393, %v4083
        %s4092 = sld [smem:[#allocation3 + $0x701]]
        %v4093 = vld [vmem:[%s270 + $0x40] sm:$0xff]
        %v4094 = vld [vmem:[%s270 + $0x48] sm:$0xff]
        %v4095 = vld [vmem:[%s270 + $0x50] sm:$0xff]
        %v4096 = vld [vmem:[%s270 + $0x58] sm:$0xff]
        %v4097 = vld [vmem:[%s270 + $0x60] sm:$0xff]
        %v4098 = vld [vmem:[%s270 + $0x68] sm:$0xff]
        %v4099 = vld [vmem:[%s270 + $0x70] sm:$0xff]
        %v4100 = vld [vmem:[%s270 + $0x78] sm:$0xff]
        %v4101 = vstv %s4092
        %v4102 = vmul.f32 %v4101, %v4093
        %v4103 = vmul.f32 %v4101, %v4094
        %v4104 = vmul.f32 %v4101, %v4095
        %v4105 = vmul.f32 %v4101, %v4096
        %v4106 = vmul.f32 %v4101, %v4097
        %v4107 = vmul.f32 %v4101, %v4098
        %v4108 = vmul.f32 %v4101, %v4099
        %v4109 = vmul.f32 %v4101, %v4100
        %v4110 = vadd.f32 %v4084, %v4102
        %v4111 = vadd.f32 %v4085, %v4103
        %v4112 = vadd.f32 %v4086, %v4104
        %v4113 = vadd.f32 %v4087, %v4105
        %v4114 = vadd.f32 %v4088, %v4106
        %v4115 = vadd.f32 %v4089, %v4107
        %v4116 = vadd.f32 %v4090, %v4108
        %v4117 = vadd.f32 %v4091, %v4109
        %s4118 = sld [smem:[#allocation3 + $0x702]]
        %v4119 = vld [vmem:[%s270 + $0x80] sm:$0xff]
        %v4120 = vld [vmem:[%s270 + $0x88] sm:$0xff]
        %v4121 = vld [vmem:[%s270 + $0x90] sm:$0xff]
        %v4122 = vld [vmem:[%s270 + $0x98] sm:$0xff]
        %v4123 = vld [vmem:[%s270 + $0xa0] sm:$0xff]
        %v4124 = vld [vmem:[%s270 + $0xa8] sm:$0xff]
        %v4125 = vld [vmem:[%s270 + $0xb0] sm:$0xff]
        %v4126 = vld [vmem:[%s270 + $0xb8] sm:$0xff]
        %v4127 = vstv %s4118
        %v4128 = vmul.f32 %v4127, %v4119
        %v4129 = vmul.f32 %v4127, %v4120
        %v4130 = vmul.f32 %v4127, %v4121
        %v4131 = vmul.f32 %v4127, %v4122
        %v4132 = vmul.f32 %v4127, %v4123
        %v4133 = vmul.f32 %v4127, %v4124
        %v4134 = vmul.f32 %v4127, %v4125
        %v4135 = vmul.f32 %v4127, %v4126
        %v4136 = vadd.f32 %v4110, %v4128
        %v4137 = vadd.f32 %v4111, %v4129
        %v4138 = vadd.f32 %v4112, %v4130
        %v4139 = vadd.f32 %v4113, %v4131
        %v4140 = vadd.f32 %v4114, %v4132
        %v4141 = vadd.f32 %v4115, %v4133
        %v4142 = vadd.f32 %v4116, %v4134
        %v4143 = vadd.f32 %v4117, %v4135
        %s4144 = sld [smem:[#allocation3 + $0x703]]
        %v4145 = vstv %s4144
        %v4146 = vadd.f32 %v4136, %v4145
        %v4147 = vadd.f32 %v4137, %v4145
        %v4148 = vadd.f32 %v4138, %v4145
        %v4149 = vadd.f32 %v4139, %v4145
        %v4150 = vadd.f32 %v4140, %v4145
        %v4151 = vadd.f32 %v4141, %v4145
        %v4152 = vadd.f32 %v4142, %v4145
        %v4153 = vadd.f32 %v4143, %v4145
        %v4154 = vmax.f32 %v4146, 0.0
        %v4155 = vmax.f32 %v4147, 0.0
        %v4156 = vmax.f32 %v4148, 0.0
        %v4157 = vmax.f32 %v4149, 0.0
        %v4158 = vmax.f32 %v4150, 0.0
        %v4159 = vmax.f32 %v4151, 0.0
        %v4160 = vmax.f32 %v4152, 0.0
        %v4161 = vmax.f32 %v4153, 0.0
        %v4162 = vrsqrt.pop %v4154
        %v4163 = vmul.f32 %v4154, %v4162
        %vm4164 = vcmp.eq.f32.partialorder %v4154, inf
        %v4165 = vsel %vm4164, %v4154, %v4163
        %vm4166 = vcmp.eq.f32.partialorder %v4154, 0.0
        %v4167 = vand.u32 %v4154, 2147483648
        %v4168 = vsel %vm4166, %v4167, %v4165
        %v4169 = vrsqrt.pop %v4155
        %v4170 = vmul.f32 %v4155, %v4169
        %vm4171 = vcmp.eq.f32.partialorder %v4155, inf
        %v4172 = vsel %vm4171, %v4155, %v4170
        %vm4173 = vcmp.eq.f32.partialorder %v4155, 0.0
        %v4174 = vand.u32 %v4155, 2147483648
        %v4175 = vsel %vm4173, %v4174, %v4172
        %v4176 = vrsqrt.pop %v4156
        %v4177 = vmul.f32 %v4156, %v4176
        %vm4178 = vcmp.eq.f32.partialorder %v4156, inf
        %v4179 = vsel %vm4178, %v4156, %v4177
        %vm4180 = vcmp.eq.f32.partialorder %v4156, 0.0
        %v4181 = vand.u32 %v4156, 2147483648
        %v4182 = vsel %vm4180, %v4181, %v4179
        %v4183 = vrsqrt.pop %v4157
        %v4184 = vmul.f32 %v4157, %v4183
        %vm4185 = vcmp.eq.f32.partialorder %v4157, inf
        %v4186 = vsel %vm4185, %v4157, %v4184
        %vm4187 = vcmp.eq.f32.partialorder %v4157, 0.0
        %v4188 = vand.u32 %v4157, 2147483648
        %v4189 = vsel %vm4187, %v4188, %v4186
        %v4190 = vrsqrt.pop %v4158
        %v4191 = vmul.f32 %v4158, %v4190
        %vm4192 = vcmp.eq.f32.partialorder %v4158, inf
        %v4193 = vsel %vm4192, %v4158, %v4191
        %vm4194 = vcmp.eq.f32.partialorder %v4158, 0.0
        %v4195 = vand.u32 %v4158, 2147483648
        %v4196 = vsel %vm4194, %v4195, %v4193
        %v4197 = vrsqrt.pop %v4159
        %v4198 = vmul.f32 %v4159, %v4197
        %vm4199 = vcmp.eq.f32.partialorder %v4159, inf
        %v4200 = vsel %vm4199, %v4159, %v4198
        %vm4201 = vcmp.eq.f32.partialorder %v4159, 0.0
        %v4202 = vand.u32 %v4159, 2147483648
        %v4203 = vsel %vm4201, %v4202, %v4200
        %v4204 = vrsqrt.pop %v4160
        %v4205 = vmul.f32 %v4160, %v4204
        %vm4206 = vcmp.eq.f32.partialorder %v4160, inf
        %v4207 = vsel %vm4206, %v4160, %v4205
        %vm4208 = vcmp.eq.f32.partialorder %v4160, 0.0
        %v4209 = vand.u32 %v4160, 2147483648
        %v4210 = vsel %vm4208, %v4209, %v4207
        %v4211 = vrsqrt.pop %v4161
        %v4212 = vmul.f32 %v4161, %v4211
        %vm4213 = vcmp.eq.f32.partialorder %v4161, inf
        %v4214 = vsel %vm4213, %v4161, %v4212
        %vm4215 = vcmp.eq.f32.partialorder %v4161, 0.0
        %v4216 = vand.u32 %v4161, 2147483648
        %v4217 = vsel %vm4215, %v4216, %v4214
        %v4218 = vsub.f32 1.0, %v4168
        %v4219 = vsub.f32 1.0, %v4175
        %v4220 = vsub.f32 1.0, %v4182
        %v4221 = vsub.f32 1.0, %v4189
        %v4222 = vsub.f32 1.0, %v4196
        %v4223 = vsub.f32 1.0, %v4203
        %v4224 = vsub.f32 1.0, %v4210
        %v4225 = vsub.f32 1.0, %v4217
        %v4226 = vmax.f32 %v4218, 0.0
        %v4227 = vmax.f32 %v4219, 0.0
        %v4228 = vmax.f32 %v4220, 0.0
        %v4229 = vmax.f32 %v4221, 0.0
        %v4230 = vmax.f32 %v4222, 0.0
        %v4231 = vmax.f32 %v4223, 0.0
        %v4232 = vmax.f32 %v4224, 0.0
        %v4233 = vmax.f32 %v4225, 0.0
        %v4234 = vld [vmem:[%s279] sm:$0xff]
        %v4235 = vld [vmem:[%s279 + $0x8] sm:$0xff]
        %v4236 = vld [vmem:[%s279 + $0x10] sm:$0xff]
        %v4237 = vld [vmem:[%s279 + $0x18] sm:$0xff]
        %v4238 = vld [vmem:[%s279 + $0x20] sm:$0xff]
        %v4239 = vld [vmem:[%s279 + $0x28] sm:$0xff]
        %v4240 = vld [vmem:[%s279 + $0x30] sm:$0xff]
        %v4241 = vld [vmem:[%s279 + $0x38] sm:$0xff]
        %v4242 = vmul.f32 %v4226, %v4234
        %v4243 = vmul.f32 %v4227, %v4235
        %v4244 = vmul.f32 %v4228, %v4236
        %v4245 = vmul.f32 %v4229, %v4237
        %v4246 = vmul.f32 %v4230, %v4238
        %v4247 = vmul.f32 %v4231, %v4239
        %v4248 = vmul.f32 %v4232, %v4240
        %v4249 = vmul.f32 %v4233, %v4241
        %v4250 = vpack.c.bf16 %v4246, %v4242
        %v4251 = vpack.c.bf16 %v4247, %v4243
        %v4252 = vpack.c.bf16 %v4248, %v4244
        %v4253 = vpack.c.bf16 %v4249, %v4245
        %4254 = vst [vmem:[#allocation2 + $0x700] sm:$0xff] %v4250
        %4255 = vst [vmem:[#allocation2 + $0x708] sm:$0xff] %v4251
        %4256 = vst [vmem:[#allocation2 + $0x710] sm:$0xff] %v4252
        %4257 = vst [vmem:[#allocation2 + $0x718] sm:$0xff] %v4253
        %v4258 = vld [vmem:[%s279 + $0x40] sm:$0xff]
        %v4259 = vld [vmem:[%s279 + $0x48] sm:$0xff]
        %v4260 = vld [vmem:[%s279 + $0x50] sm:$0xff]
        %v4261 = vld [vmem:[%s279 + $0x58] sm:$0xff]
        %v4262 = vld [vmem:[%s279 + $0x60] sm:$0xff]
        %v4263 = vld [vmem:[%s279 + $0x68] sm:$0xff]
        %v4264 = vld [vmem:[%s279 + $0x70] sm:$0xff]
        %v4265 = vld [vmem:[%s279 + $0x78] sm:$0xff]
        %v4266 = vmul.f32 %v4226, %v4258
        %v4267 = vmul.f32 %v4227, %v4259
        %v4268 = vmul.f32 %v4228, %v4260
        %v4269 = vmul.f32 %v4229, %v4261
        %v4270 = vmul.f32 %v4230, %v4262
        %v4271 = vmul.f32 %v4231, %v4263
        %v4272 = vmul.f32 %v4232, %v4264
        %v4273 = vmul.f32 %v4233, %v4265
        %v4274 = vpack.c.bf16 %v4270, %v4266
        %v4275 = vpack.c.bf16 %v4271, %v4267
        %v4276 = vpack.c.bf16 %v4272, %v4268
        %v4277 = vpack.c.bf16 %v4273, %v4269
        %4278 = vst [vmem:[#allocation2 + $0x720] sm:$0xff] %v4274
        %4279 = vst [vmem:[#allocation2 + $0x728] sm:$0xff] %v4275
        %4280 = vst [vmem:[#allocation2 + $0x730] sm:$0xff] %v4276
        %4281 = vst [vmem:[#allocation2 + $0x738] sm:$0xff] %v4277
        %v4282 = vld [vmem:[%s279 + $0x80] sm:$0xff]
        %v4283 = vld [vmem:[%s279 + $0x88] sm:$0xff]
        %v4284 = vld [vmem:[%s279 + $0x90] sm:$0xff]
        %v4285 = vld [vmem:[%s279 + $0x98] sm:$0xff]
        %v4286 = vld [vmem:[%s279 + $0xa0] sm:$0xff]
        %v4287 = vld [vmem:[%s279 + $0xa8] sm:$0xff]
        %v4288 = vld [vmem:[%s279 + $0xb0] sm:$0xff]
        %v4289 = vld [vmem:[%s279 + $0xb8] sm:$0xff]
        %v4290 = vmul.f32 %v4226, %v4282
        %v4291 = vmul.f32 %v4227, %v4283
        %v4292 = vmul.f32 %v4228, %v4284
        %v4293 = vmul.f32 %v4229, %v4285
        %v4294 = vmul.f32 %v4230, %v4286
        %v4295 = vmul.f32 %v4231, %v4287
        %v4296 = vmul.f32 %v4232, %v4288
        %v4297 = vmul.f32 %v4233, %v4289
        %v4298 = vpack.c.bf16 %v4294, %v4290
        %v4299 = vpack.c.bf16 %v4295, %v4291
        %v4300 = vpack.c.bf16 %v4296, %v4292
        %v4301 = vpack.c.bf16 %v4297, %v4293
        %4302 = vst [vmem:[#allocation2 + $0x740] sm:$0xff] %v4298
        %4303 = vst [vmem:[#allocation2 + $0x748] sm:$0xff] %v4299
        %4304 = vst [vmem:[#allocation2 + $0x750] sm:$0xff] %v4300
        %4305 = vst [vmem:[#allocation2 + $0x758] sm:$0xff] %v4301
        %v4306 = vld [vmem:[%s279 + $0xc0] sm:$0xff]
        %v4307 = vld [vmem:[%s279 + $0xc8] sm:$0xff]
        %v4308 = vld [vmem:[%s279 + $0xd0] sm:$0xff]
        %v4309 = vld [vmem:[%s279 + $0xd8] sm:$0xff]
        %v4310 = vld [vmem:[%s279 + $0xe0] sm:$0xff]
        %v4311 = vld [vmem:[%s279 + $0xe8] sm:$0xff]
        %v4312 = vld [vmem:[%s279 + $0xf0] sm:$0xff]
        %v4313 = vld [vmem:[%s279 + $0xf8] sm:$0xff]
        %v4314 = vmul.f32 %v4226, %v4306
        %v4315 = vmul.f32 %v4227, %v4307
        %v4316 = vmul.f32 %v4228, %v4308
        %v4317 = vmul.f32 %v4229, %v4309
        %v4318 = vmul.f32 %v4230, %v4310
        %v4319 = vmul.f32 %v4231, %v4311
        %v4320 = vmul.f32 %v4232, %v4312
        %v4321 = vmul.f32 %v4233, %v4313
        %v4322 = vpack.c.bf16 %v4318, %v4314
        %v4323 = vpack.c.bf16 %v4319, %v4315
        %v4324 = vpack.c.bf16 %v4320, %v4316
        %v4325 = vpack.c.bf16 %v4321, %v4317
        %4326 = vst [vmem:[#allocation2 + $0x760] sm:$0xff] %v4322
        %4327 = vst [vmem:[#allocation2 + $0x768] sm:$0xff] %v4323
        %4328 = vst [vmem:[#allocation2 + $0x770] sm:$0xff] %v4324
        %4329 = vst [vmem:[#allocation2 + $0x778] sm:$0xff] %v4325
        %v4330 = vld [vmem:[#allocation10] sm:$0xff]
        %v4331 = vld [vmem:[#allocation10 + $0x8] sm:$0xff]
        %v4332 = vld [vmem:[#allocation10 + $0x10] sm:$0xff]
        %v4333 = vld [vmem:[#allocation10 + $0x18] sm:$0xff]
        %v4334 = vld [vmem:[#allocation10 + $0x20] sm:$0xff]
        %v4335 = vld [vmem:[#allocation10 + $0x28] sm:$0xff]
        %v4336 = vld [vmem:[#allocation10 + $0x30] sm:$0xff]
        %v4337 = vld [vmem:[#allocation10 + $0x38] sm:$0xff]
        %v4338 = vld [vmem:[#allocation10 + $0x40] sm:$0xff]
        %v4339 = vld [vmem:[#allocation10 + $0x48] sm:$0xff]
        %v4340 = vld [vmem:[#allocation10 + $0x50] sm:$0xff]
        %v4341 = vld [vmem:[#allocation10 + $0x58] sm:$0xff]
        %v4342 = vld [vmem:[#allocation10 + $0x60] sm:$0xff]
        %v4343 = vld [vmem:[#allocation10 + $0x68] sm:$0xff]
        %v4344 = vld [vmem:[#allocation10 + $0x70] sm:$0xff]
        %v4345 = vld [vmem:[#allocation10 + $0x78] sm:$0xff]
        %v4346 = vld [vmem:[#allocation2] sm:$0xff]
        %v4347 = vld [vmem:[#allocation2 + $0x8] sm:$0xff]
        %v4348 = vld [vmem:[#allocation2 + $0x10] sm:$0xff]
        %v4349 = vld [vmem:[#allocation2 + $0x18] sm:$0xff]
        %v4350 = vld [vmem:[#allocation2 + $0x20] sm:$0xff]
        %v4351 = vld [vmem:[#allocation2 + $0x28] sm:$0xff]
        %v4352 = vld [vmem:[#allocation2 + $0x30] sm:$0xff]
        %v4353 = vld [vmem:[#allocation2 + $0x38] sm:$0xff]
        %v4354 = vld [vmem:[#allocation2 + $0x40] sm:$0xff]
        %v4355 = vld [vmem:[#allocation2 + $0x48] sm:$0xff]
        %v4356 = vld [vmem:[#allocation2 + $0x50] sm:$0xff]
        %v4357 = vld [vmem:[#allocation2 + $0x58] sm:$0xff]
        %v4358 = vld [vmem:[#allocation2 + $0x60] sm:$0xff]
        %v4359 = vld [vmem:[#allocation2 + $0x68] sm:$0xff]
        %v4360 = vld [vmem:[#allocation2 + $0x70] sm:$0xff]
        %v4361 = vld [vmem:[#allocation2 + $0x78] sm:$0xff]
        %v4362 = vld [vmem:[#allocation2 + $0x80] sm:$0xff]
        %v4363 = vld [vmem:[#allocation2 + $0x88] sm:$0xff]
        %v4364 = vld [vmem:[#allocation2 + $0x90] sm:$0xff]
        %v4365 = vld [vmem:[#allocation2 + $0x98] sm:$0xff]
        %v4366 = vld [vmem:[#allocation2 + $0xa0] sm:$0xff]
        %v4367 = vld [vmem:[#allocation2 + $0xa8] sm:$0xff]
        %v4368 = vld [vmem:[#allocation2 + $0xb0] sm:$0xff]
        %v4369 = vld [vmem:[#allocation2 + $0xb8] sm:$0xff]
        %v4370 = vld [vmem:[#allocation2 + $0xc0] sm:$0xff]
        %v4371 = vld [vmem:[#allocation2 + $0xc8] sm:$0xff]
        %v4372 = vld [vmem:[#allocation2 + $0xd0] sm:$0xff]
        %v4373 = vld [vmem:[#allocation2 + $0xd8] sm:$0xff]
        %v4374 = vld [vmem:[#allocation2 + $0xe0] sm:$0xff]
        %v4375 = vld [vmem:[#allocation2 + $0xe8] sm:$0xff]
        %v4376 = vld [vmem:[#allocation2 + $0xf0] sm:$0xff]
        %v4377 = vld [vmem:[#allocation2 + $0xf8] sm:$0xff]
        %v4378 = vld [vmem:[#allocation2 + $0x100] sm:$0xff]
        %v4379 = vld [vmem:[#allocation2 + $0x108] sm:$0xff]
        %v4380 = vld [vmem:[#allocation2 + $0x110] sm:$0xff]
        %v4381 = vld [vmem:[#allocation2 + $0x118] sm:$0xff]
        %v4382 = vld [vmem:[#allocation2 + $0x120] sm:$0xff]
        %v4383 = vld [vmem:[#allocation2 + $0x128] sm:$0xff]
        %v4384 = vld [vmem:[#allocation2 + $0x130] sm:$0xff]
        %v4385 = vld [vmem:[#allocation2 + $0x138] sm:$0xff]
        %v4386 = vld [vmem:[#allocation2 + $0x140] sm:$0xff]
        %v4387 = vld [vmem:[#allocation2 + $0x148] sm:$0xff]
        %v4388 = vld [vmem:[#allocation2 + $0x150] sm:$0xff]
        %v4389 = vld [vmem:[#allocation2 + $0x158] sm:$0xff]
        %v4390 = vld [vmem:[#allocation2 + $0x160] sm:$0xff]
        %v4391 = vld [vmem:[#allocation2 + $0x168] sm:$0xff]
        %v4392 = vld [vmem:[#allocation2 + $0x170] sm:$0xff]
        %v4393 = vld [vmem:[#allocation2 + $0x178] sm:$0xff]
        %v4394 = vld [vmem:[#allocation2 + $0x180] sm:$0xff]
        %v4395 = vld [vmem:[#allocation2 + $0x188] sm:$0xff]
        %v4396 = vld [vmem:[#allocation2 + $0x190] sm:$0xff]
        %v4397 = vld [vmem:[#allocation2 + $0x198] sm:$0xff]
        %v4398 = vld [vmem:[#allocation2 + $0x1a0] sm:$0xff]
        %v4399 = vld [vmem:[#allocation2 + $0x1a8] sm:$0xff]
        %v4400 = vld [vmem:[#allocation2 + $0x1b0] sm:$0xff]
        %v4401 = vld [vmem:[#allocation2 + $0x1b8] sm:$0xff]
        %v4402 = vld [vmem:[#allocation2 + $0x1c0] sm:$0xff]
        %v4403 = vld [vmem:[#allocation2 + $0x1c8] sm:$0xff]
        %v4404 = vld [vmem:[#allocation2 + $0x1d0] sm:$0xff]
        %v4405 = vld [vmem:[#allocation2 + $0x1d8] sm:$0xff]
        %v4406 = vld [vmem:[#allocation2 + $0x1e0] sm:$0xff]
        %v4407 = vld [vmem:[#allocation2 + $0x1e8] sm:$0xff]
        %v4408 = vld [vmem:[#allocation2 + $0x1f0] sm:$0xff]
        %v4409 = vld [vmem:[#allocation2 + $0x1f8] sm:$0xff]
        %v4410 = vld [vmem:[#allocation2 + $0x200] sm:$0xff]
        %v4411 = vld [vmem:[#allocation2 + $0x208] sm:$0xff]
        %v4412 = vld [vmem:[#allocation2 + $0x210] sm:$0xff]
        %v4413 = vld [vmem:[#allocation2 + $0x218] sm:$0xff]
        %v4414 = vld [vmem:[#allocation2 + $0x220] sm:$0xff]
        %v4415 = vld [vmem:[#allocation2 + $0x228] sm:$0xff]
        %v4416 = vld [vmem:[#allocation2 + $0x230] sm:$0xff]
        %v4417 = vld [vmem:[#allocation2 + $0x238] sm:$0xff]
        %v4418 = vld [vmem:[#allocation2 + $0x240] sm:$0xff]
        %v4419 = vld [vmem:[#allocation2 + $0x248] sm:$0xff]
        %v4420 = vld [vmem:[#allocation2 + $0x250] sm:$0xff]
        %v4421 = vld [vmem:[#allocation2 + $0x258] sm:$0xff]
        %v4422 = vld [vmem:[#allocation2 + $0x260] sm:$0xff]
        %v4423 = vld [vmem:[#allocation2 + $0x268] sm:$0xff]
        %v4424 = vld [vmem:[#allocation2 + $0x270] sm:$0xff]
        %v4425 = vld [vmem:[#allocation2 + $0x278] sm:$0xff]
        %v4426 = vld [vmem:[#allocation2 + $0x280] sm:$0xff]
        %v4427 = vld [vmem:[#allocation2 + $0x288] sm:$0xff]
        %v4428 = vld [vmem:[#allocation2 + $0x290] sm:$0xff]
        %v4429 = vld [vmem:[#allocation2 + $0x298] sm:$0xff]
        %v4430 = vld [vmem:[#allocation2 + $0x2a0] sm:$0xff]
        %v4431 = vld [vmem:[#allocation2 + $0x2a8] sm:$0xff]
        %v4432 = vld [vmem:[#allocation2 + $0x2b0] sm:$0xff]
        %v4433 = vld [vmem:[#allocation2 + $0x2b8] sm:$0xff]
        %v4434 = vld [vmem:[#allocation2 + $0x2c0] sm:$0xff]
        %v4435 = vld [vmem:[#allocation2 + $0x2c8] sm:$0xff]
        %v4436 = vld [vmem:[#allocation2 + $0x2d0] sm:$0xff]
        %v4437 = vld [vmem:[#allocation2 + $0x2d8] sm:$0xff]
        %v4438 = vld [vmem:[#allocation2 + $0x2e0] sm:$0xff]
        %v4439 = vld [vmem:[#allocation2 + $0x2e8] sm:$0xff]
        %v4440 = vld [vmem:[#allocation2 + $0x2f0] sm:$0xff]
        %v4441 = vld [vmem:[#allocation2 + $0x2f8] sm:$0xff]
        %v4442 = vld [vmem:[#allocation2 + $0x300] sm:$0xff]
        %v4443 = vld [vmem:[#allocation2 + $0x308] sm:$0xff]
        %v4444 = vld [vmem:[#allocation2 + $0x310] sm:$0xff]
        %v4445 = vld [vmem:[#allocation2 + $0x318] sm:$0xff]
        %v4446 = vld [vmem:[#allocation2 + $0x320] sm:$0xff]
        %v4447 = vld [vmem:[#allocation2 + $0x328] sm:$0xff]
        %v4448 = vld [vmem:[#allocation2 + $0x330] sm:$0xff]
        %v4449 = vld [vmem:[#allocation2 + $0x338] sm:$0xff]
        %v4450 = vld [vmem:[#allocation2 + $0x340] sm:$0xff]
        %v4451 = vld [vmem:[#allocation2 + $0x348] sm:$0xff]
        %v4452 = vld [vmem:[#allocation2 + $0x350] sm:$0xff]
        %v4453 = vld [vmem:[#allocation2 + $0x358] sm:$0xff]
        %v4454 = vld [vmem:[#allocation2 + $0x360] sm:$0xff]
        %v4455 = vld [vmem:[#allocation2 + $0x368] sm:$0xff]
        %v4456 = vld [vmem:[#allocation2 + $0x370] sm:$0xff]
        %v4457 = vld [vmem:[#allocation2 + $0x378] sm:$0xff]
        %v4458 = vld [vmem:[#allocation2 + $0x380] sm:$0xff]
        %v4459 = vld [vmem:[#allocation2 + $0x388] sm:$0xff]
        %v4460 = vld [vmem:[#allocation2 + $0x390] sm:$0xff]
        %v4461 = vld [vmem:[#allocation2 + $0x398] sm:$0xff]
        %v4462 = vld [vmem:[#allocation2 + $0x3a0] sm:$0xff]
        %v4463 = vld [vmem:[#allocation2 + $0x3a8] sm:$0xff]
        %v4464 = vld [vmem:[#allocation2 + $0x3b0] sm:$0xff]
        %v4465 = vld [vmem:[#allocation2 + $0x3b8] sm:$0xff]
        %v4466 = vld [vmem:[#allocation2 + $0x3c0] sm:$0xff]
        %v4467 = vld [vmem:[#allocation2 + $0x3c8] sm:$0xff]
        %v4468 = vld [vmem:[#allocation2 + $0x3d0] sm:$0xff]
        %v4469 = vld [vmem:[#allocation2 + $0x3d8] sm:$0xff]
        %v4470 = vld [vmem:[#allocation2 + $0x3e0] sm:$0xff]
        %v4471 = vld [vmem:[#allocation2 + $0x3e8] sm:$0xff]
        %v4472 = vld [vmem:[#allocation2 + $0x3f0] sm:$0xff]
        %v4473 = vld [vmem:[#allocation2 + $0x3f8] sm:$0xff]
        %v4474 = vld [vmem:[#allocation2 + $0x400] sm:$0xff]
        %v4475 = vld [vmem:[#allocation2 + $0x408] sm:$0xff]
        %v4476 = vld [vmem:[#allocation2 + $0x410] sm:$0xff]
        %v4477 = vld [vmem:[#allocation2 + $0x418] sm:$0xff]
        %v4478 = vld [vmem:[#allocation2 + $0x420] sm:$0xff]
        %v4479 = vld [vmem:[#allocation2 + $0x428] sm:$0xff]
        %v4480 = vld [vmem:[#allocation2 + $0x430] sm:$0xff]
        %v4481 = vld [vmem:[#allocation2 + $0x438] sm:$0xff]
        %v4482 = vld [vmem:[#allocation2 + $0x440] sm:$0xff]
        %v4483 = vld [vmem:[#allocation2 + $0x448] sm:$0xff]
        %v4484 = vld [vmem:[#allocation2 + $0x450] sm:$0xff]
        %v4485 = vld [vmem:[#allocation2 + $0x458] sm:$0xff]
        %v4486 = vld [vmem:[#allocation2 + $0x460] sm:$0xff]
        %v4487 = vld [vmem:[#allocation2 + $0x468] sm:$0xff]
        %v4488 = vld [vmem:[#allocation2 + $0x470] sm:$0xff]
        %v4489 = vld [vmem:[#allocation2 + $0x478] sm:$0xff]
        %v4490 = vld [vmem:[#allocation2 + $0x480] sm:$0xff]
        %v4491 = vld [vmem:[#allocation2 + $0x488] sm:$0xff]
        %v4492 = vld [vmem:[#allocation2 + $0x490] sm:$0xff]
        %v4493 = vld [vmem:[#allocation2 + $0x498] sm:$0xff]
        %v4494 = vld [vmem:[#allocation2 + $0x4a0] sm:$0xff]
        %v4495 = vld [vmem:[#allocation2 + $0x4a8] sm:$0xff]
        %v4496 = vld [vmem:[#allocation2 + $0x4b0] sm:$0xff]
        %v4497 = vld [vmem:[#allocation2 + $0x4b8] sm:$0xff]
        %v4498 = vld [vmem:[#allocation2 + $0x4c0] sm:$0xff]
        %v4499 = vld [vmem:[#allocation2 + $0x4c8] sm:$0xff]
        %v4500 = vld [vmem:[#allocation2 + $0x4d0] sm:$0xff]
        %v4501 = vld [vmem:[#allocation2 + $0x4d8] sm:$0xff]
        %v4502 = vld [vmem:[#allocation2 + $0x4e0] sm:$0xff]
        %v4503 = vld [vmem:[#allocation2 + $0x4e8] sm:$0xff]
        %v4504 = vld [vmem:[#allocation2 + $0x4f0] sm:$0xff]
        %v4505 = vld [vmem:[#allocation2 + $0x4f8] sm:$0xff]
        %v4506 = vld [vmem:[#allocation2 + $0x500] sm:$0xff]
        %v4507 = vld [vmem:[#allocation2 + $0x508] sm:$0xff]
        %v4508 = vld [vmem:[#allocation2 + $0x510] sm:$0xff]
        %v4509 = vld [vmem:[#allocation2 + $0x518] sm:$0xff]
        %v4510 = vld [vmem:[#allocation2 + $0x520] sm:$0xff]
        %v4511 = vld [vmem:[#allocation2 + $0x528] sm:$0xff]
        %v4512 = vld [vmem:[#allocation2 + $0x530] sm:$0xff]
        %v4513 = vld [vmem:[#allocation2 + $0x538] sm:$0xff]
        %v4514 = vld [vmem:[#allocation2 + $0x540] sm:$0xff]
        %v4515 = vld [vmem:[#allocation2 + $0x548] sm:$0xff]
        %v4516 = vld [vmem:[#allocation2 + $0x550] sm:$0xff]
        %v4517 = vld [vmem:[#allocation2 + $0x558] sm:$0xff]
        %v4518 = vld [vmem:[#allocation2 + $0x560] sm:$0xff]
        %v4519 = vld [vmem:[#allocation2 + $0x568] sm:$0xff]
        %v4520 = vld [vmem:[#allocation2 + $0x570] sm:$0xff]
        %v4521 = vld [vmem:[#allocation2 + $0x578] sm:$0xff]
        %v4522 = vld [vmem:[#allocation2 + $0x580] sm:$0xff]
        %v4523 = vld [vmem:[#allocation2 + $0x588] sm:$0xff]
        %v4524 = vld [vmem:[#allocation2 + $0x590] sm:$0xff]
        %v4525 = vld [vmem:[#allocation2 + $0x598] sm:$0xff]
        %v4526 = vld [vmem:[#allocation2 + $0x5a0] sm:$0xff]
        %v4527 = vld [vmem:[#allocation2 + $0x5a8] sm:$0xff]
        %v4528 = vld [vmem:[#allocation2 + $0x5b0] sm:$0xff]
        %v4529 = vld [vmem:[#allocation2 + $0x5b8] sm:$0xff]
        %v4530 = vld [vmem:[#allocation2 + $0x5c0] sm:$0xff]
        %v4531 = vld [vmem:[#allocation2 + $0x5c8] sm:$0xff]
        %v4532 = vld [vmem:[#allocation2 + $0x5d0] sm:$0xff]
        %v4533 = vld [vmem:[#allocation2 + $0x5d8] sm:$0xff]
        %v4534 = vld [vmem:[#allocation2 + $0x5e0] sm:$0xff]
        %v4535 = vld [vmem:[#allocation2 + $0x5e8] sm:$0xff]
        %v4536 = vld [vmem:[#allocation2 + $0x5f0] sm:$0xff]
        %v4537 = vld [vmem:[#allocation2 + $0x5f8] sm:$0xff]
        %v4538 = vld [vmem:[#allocation2 + $0x600] sm:$0xff]
        %v4539 = vld [vmem:[#allocation2 + $0x608] sm:$0xff]
        %v4540 = vld [vmem:[#allocation2 + $0x610] sm:$0xff]
        %v4541 = vld [vmem:[#allocation2 + $0x618] sm:$0xff]
        %v4542 = vld [vmem:[#allocation2 + $0x620] sm:$0xff]
        %v4543 = vld [vmem:[#allocation2 + $0x628] sm:$0xff]
        %v4544 = vld [vmem:[#allocation2 + $0x630] sm:$0xff]
        %v4545 = vld [vmem:[#allocation2 + $0x638] sm:$0xff]
        %v4546 = vld [vmem:[#allocation2 + $0x640] sm:$0xff]
        %v4547 = vld [vmem:[#allocation2 + $0x648] sm:$0xff]
        %v4548 = vld [vmem:[#allocation2 + $0x650] sm:$0xff]
        %v4549 = vld [vmem:[#allocation2 + $0x658] sm:$0xff]
        %v4550 = vld [vmem:[#allocation2 + $0x660] sm:$0xff]
        %v4551 = vld [vmem:[#allocation2 + $0x668] sm:$0xff]
        %v4552 = vld [vmem:[#allocation2 + $0x670] sm:$0xff]
        %v4553 = vld [vmem:[#allocation2 + $0x678] sm:$0xff]
        %v4554 = vld [vmem:[#allocation2 + $0x680] sm:$0xff]
        %v4555 = vld [vmem:[#allocation2 + $0x688] sm:$0xff]
        %v4556 = vld [vmem:[#allocation2 + $0x690] sm:$0xff]
        %v4557 = vld [vmem:[#allocation2 + $0x698] sm:$0xff]
        %v4558 = vld [vmem:[#allocation2 + $0x6a0] sm:$0xff]
        %v4559 = vld [vmem:[#allocation2 + $0x6a8] sm:$0xff]
        %v4560 = vld [vmem:[#allocation2 + $0x6b0] sm:$0xff]
        %v4561 = vld [vmem:[#allocation2 + $0x6b8] sm:$0xff]
        %v4562 = vld [vmem:[#allocation2 + $0x6c0] sm:$0xff]
        %v4563 = vld [vmem:[#allocation2 + $0x6c8] sm:$0xff]
        %v4564 = vld [vmem:[#allocation2 + $0x6d0] sm:$0xff]
        %v4565 = vld [vmem:[#allocation2 + $0x6d8] sm:$0xff]
        %v4566 = vld [vmem:[#allocation2 + $0x6e0] sm:$0xff]
        %v4567 = vld [vmem:[#allocation2 + $0x6e8] sm:$0xff]
        %v4568 = vld [vmem:[#allocation2 + $0x6f0] sm:$0xff]
        %v4569 = vld [vmem:[#allocation2 + $0x6f8] sm:$0xff]
        %v4570 = vld [vmem:[#allocation2 + $0x700] sm:$0xff]
        %v4571 = vld [vmem:[#allocation2 + $0x708] sm:$0xff]
        %v4572 = vld [vmem:[#allocation2 + $0x710] sm:$0xff]
        %v4573 = vld [vmem:[#allocation2 + $0x718] sm:$0xff]
        %v4574 = vld [vmem:[#allocation2 + $0x720] sm:$0xff]
        %v4575 = vld [vmem:[#allocation2 + $0x728] sm:$0xff]
        %v4576 = vld [vmem:[#allocation2 + $0x730] sm:$0xff]
        %v4577 = vld [vmem:[#allocation2 + $0x738] sm:$0xff]
        %v4578 = vld [vmem:[#allocation2 + $0x740] sm:$0xff]
        %v4579 = vld [vmem:[#allocation2 + $0x748] sm:$0xff]
        %v4580 = vld [vmem:[#allocation2 + $0x750] sm:$0xff]
        %v4581 = vld [vmem:[#allocation2 + $0x758] sm:$0xff]
        %v4582 = vld [vmem:[#allocation2 + $0x760] sm:$0xff]
        %v4583 = vld [vmem:[#allocation2 + $0x768] sm:$0xff]
        %v4584 = vld [vmem:[#allocation2 + $0x770] sm:$0xff]
        %v4585 = vld [vmem:[#allocation2 + $0x778] sm:$0xff]
        %v4602 = vunpack.c.l.b16 %v4330
        %v4603 = vunpack.c.h.b16 %v4330
        %v4604 = vunpack.c.l.b16 %v4331
        %v4605 = vunpack.c.h.b16 %v4331
        %v4606 = vunpack.c.l.b16 %v4332
        %v4607 = vunpack.c.h.b16 %v4332
        %v4608 = vunpack.c.l.b16 %v4333
        %v4609 = vunpack.c.h.b16 %v4333
        %v4610 = vunpack.c.l.b16 %v4334
        %v4611 = vunpack.c.h.b16 %v4334
        %v4612 = vunpack.c.l.b16 %v4335
        %v4613 = vunpack.c.h.b16 %v4335
        %v4614 = vunpack.c.l.b16 %v4336
        %v4615 = vunpack.c.h.b16 %v4336
        %v4616 = vunpack.c.l.b16 %v4337
        %v4617 = vunpack.c.h.b16 %v4337
        %v4618 = vunpack.c.l.b16 %v4338
        %v4619 = vunpack.c.h.b16 %v4338
        %v4620 = vunpack.c.l.b16 %v4339
        %v4621 = vunpack.c.h.b16 %v4339
        %v4622 = vunpack.c.l.b16 %v4340
        %v4623 = vunpack.c.h.b16 %v4340
        %v4624 = vunpack.c.l.b16 %v4341
        %v4625 = vunpack.c.h.b16 %v4341
        %v4626 = vunpack.c.l.b16 %v4342
        %v4627 = vunpack.c.h.b16 %v4342
        %v4628 = vunpack.c.l.b16 %v4343
        %v4629 = vunpack.c.h.b16 %v4343
        %v4630 = vunpack.c.l.b16 %v4344
        %v4631 = vunpack.c.h.b16 %v4344
        %v4632 = vunpack.c.l.b16 %v4345
        %v4633 = vunpack.c.h.b16 %v4345
        %v4634 = vpack.c.b16 %v4610, %v4602
        %v4635 = vpack.c.b16 %v4611, %v4603
        %v4636 = vpack.c.b16 %v4612, %v4604
        %v4637 = vpack.c.b16 %v4613, %v4605
        %v4638 = vpack.c.b16 %v4614, %v4606
        %v4639 = vpack.c.b16 %v4615, %v4607
        %v4640 = vpack.c.b16 %v4616, %v4608
        %v4641 = vpack.c.b16 %v4617, %v4609
        %v4642 = vpack.c.b16 %v4626, %v4618
        %v4643 = vpack.c.b16 %v4627, %v4619
        %v4644 = vpack.c.b16 %v4628, %v4620
        %v4645 = vpack.c.b16 %v4629, %v4621
        %v4646 = vpack.c.b16 %v4630, %v4622
        %v4647 = vpack.c.b16 %v4631, %v4623
        %v4648 = vpack.c.b16 %v4632, %v4624
        %v4649 = vpack.c.b16 %v4633, %v4625
        %vm4664 = vcmask 523264
        %v4666 = vsel %vm4664, %v4641, 0
        %v4669 = vsel %vm4664, %v4649, 0
        %4671 = vmatprep.subr.bf16.mxu0 %v4347
        %4672 = vmatpush1.bf16.msra.mxu0 %v4346
        %4673 = vmatprep.subr.bf16.mxu0 %v4351
        %4674 = vmatpush1.bf16.msra.mxu0 %v4350
        %4675 = vmatprep.subr.bf16.mxu0 %v4355
        %4676 = vmatpush1.bf16.msra.mxu0 %v4354
        %4677 = vmatprep.subr.bf16.mxu0 %v4359
        %4678 = vmatpush1.bf16.msra.mxu0 %v4358
        %4679 = vmatprep.subr.bf16.mxu0 %v4363
        %4680 = vmatpush1.bf16.msra.mxu0 %v4362
        %4681 = vmatprep.subr.bf16.mxu0 %v4367
        %4682 = vmatpush1.bf16.msra.mxu0 %v4366
        %4683 = vmatprep.subr.bf16.mxu0 %v4371
        %4684 = vmatpush1.bf16.msra.mxu0 %v4370
        %4685 = vmatprep.subr.bf16.mxu0 %v4375
        %4686 = vmatpush1.bf16.msra.mxu0 %v4374
        %4687 = vmatprep.subr.bf16.mxu0 %v4379
        %4688 = vmatpush1.bf16.msra.mxu0 %v4378
        %4689 = vmatprep.subr.bf16.mxu0 %v4383
        %4690 = vmatpush1.bf16.msra.mxu0 %v4382
        %4691 = vmatprep.subr.bf16.mxu0 %v4387
        %4692 = vmatpush1.bf16.msra.mxu0 %v4386
        %4693 = vmatprep.subr.bf16.mxu0 %v4391
        %4694 = vmatpush1.bf16.msra.mxu0 %v4390
        %4695 = vmatprep.subr.bf16.mxu0 %v4395
        %4696 = vmatpush1.bf16.msra.mxu0 %v4394
        %4697 = vmatprep.subr.bf16.mxu0 %v4399
        %4698 = vmatpush1.bf16.msra.mxu0 %v4398
        %4699 = vmatprep.subr.bf16.mxu0 %v4403
        %4700 = vmatpush1.bf16.msra.mxu0 %v4402
        %4701 = vmatprep.subr.bf16.mxu0 %v4407
        %4702 = vmatpush1.bf16.msra.mxu0 %v4406
        %4703 = vmatprep.mubr.bf16.mxu0 %v4635
        %4704 = vmatmul.mubr.bf16.gmra.mrb[0].mxu0 %v4634
        %v4705 = vpop.f32.mrb[0].mxu0
        %v4706 = vadd.f32 0.0, %v4705
        %v4707 = vpop.f32.mrb[0].mxu0
        %v4708 = vadd.f32 0.0, %v4707
        %v4709 = vpop.f32.mrb[0].mxu0
        %v4710 = vadd.f32 0.0, %v4709
        %v4711 = vpop.f32.mrb[0].mxu0
        %v4712 = vadd.f32 0.0, %v4711
        %4713 = vmatprep.mubr.bf16.mxu0 %v4643
        %4714 = vmatmul.mubr.bf16.gmra.mrb[0].mxu0 %v4642
        %v4715 = vpop.f32.mrb[0].mxu0
        %v4716 = vadd.f32 0.0, %v4715
        %v4717 = vpop.f32.mrb[0].mxu0
        %v4718 = vadd.f32 0.0, %v4717
        %v4719 = vpop.f32.mrb[0].mxu0
        %v4720 = vadd.f32 0.0, %v4719
        %v4721 = vpop.f32.mrb[0].mxu0
        %v4722 = vadd.f32 0.0, %v4721
        %4723 = vdwg.mxu0
        %4724 = vmatprep.subr.bf16.mxu0 %v4411
        %4725 = vmatpush1.bf16.msra.mxu0 %v4410
        %4726 = vmatprep.subr.bf16.mxu0 %v4415
        %4727 = vmatpush1.bf16.msra.mxu0 %v4414
        %4728 = vmatprep.subr.bf16.mxu0 %v4419
        %4729 = vmatpush1.bf16.msra.mxu0 %v4418
        %4730 = vmatprep.subr.bf16.mxu0 %v4423
        %4731 = vmatpush1.bf16.msra.mxu0 %v4422
        %4732 = vmatprep.subr.bf16.mxu0 %v4427
        %4733 = vmatpush1.bf16.msra.mxu0 %v4426
        %4734 = vmatprep.subr.bf16.mxu0 %v4431
        %4735 = vmatpush1.bf16.msra.mxu0 %v4430
        %4736 = vmatprep.subr.bf16.mxu0 %v4435
        %4737 = vmatpush1.bf16.msra.mxu0 %v4434
        %4738 = vmatprep.subr.bf16.mxu0 %v4439
        %4739 = vmatpush1.bf16.msra.mxu0 %v4438
        %4740 = vmatprep.subr.bf16.mxu0 %v4443
        %4741 = vmatpush1.bf16.msra.mxu0 %v4442
        %4742 = vmatprep.subr.bf16.mxu0 %v4447
        %4743 = vmatpush1.bf16.msra.mxu0 %v4446
        %4744 = vmatprep.subr.bf16.mxu0 %v4451
        %4745 = vmatpush1.bf16.msra.mxu0 %v4450
        %4746 = vmatprep.subr.bf16.mxu0 %v4455
        %4747 = vmatpush1.bf16.msra.mxu0 %v4454
        %4748 = vmatprep.subr.bf16.mxu0 %v4459
        %4749 = vmatpush1.bf16.msra.mxu0 %v4458
        %4750 = vmatprep.subr.bf16.mxu0 %v4463
        %4751 = vmatpush1.bf16.msra.mxu0 %v4462
        %4752 = vmatprep.subr.bf16.mxu0 %v4467
        %4753 = vmatpush1.bf16.msra.mxu0 %v4466
        %4754 = vmatprep.subr.bf16.mxu0 %v4471
        %4755 = vmatpush1.bf16.msra.mxu0 %v4470
        %4756 = vmatprep.mubr.bf16.mxu0 %v4637
        %4757 = vmatmul.mubr.bf16.gmra.mrb[0].mxu0 %v4636
        %v4758 = vpop.f32.mrb[0].mxu0
        %v4759 = vadd.f32 %v4706, %v4758
        %v4760 = vpop.f32.mrb[0].mxu0
        %v4761 = vadd.f32 %v4708, %v4760
        %v4762 = vpop.f32.mrb[0].mxu0
        %v4763 = vadd.f32 %v4710, %v4762
        %v4764 = vpop.f32.mrb[0].mxu0
        %v4765 = vadd.f32 %v4712, %v4764
        %4766 = vmatprep.mubr.bf16.mxu0 %v4645
        %4767 = vmatmul.mubr.bf16.gmra.mrb[0].mxu0 %v4644
        %v4768 = vpop.f32.mrb[0].mxu0
        %v4769 = vadd.f32 %v4716, %v4768
        %v4770 = vpop.f32.mrb[0].mxu0
        %v4771 = vadd.f32 %v4718, %v4770
        %v4772 = vpop.f32.mrb[0].mxu0
        %v4773 = vadd.f32 %v4720, %v4772
        %v4774 = vpop.f32.mrb[0].mxu0
        %v4775 = vadd.f32 %v4722, %v4774
        %4776 = vdwg.mxu0
        %4777 = vmatprep.subr.bf16.mxu0 %v4475
        %4778 = vmatpush1.bf16.msra.mxu0 %v4474
        %4779 = vmatprep.subr.bf16.mxu0 %v4479
        %4780 = vmatpush1.bf16.msra.mxu0 %v4478
        %4781 = vmatprep.subr.bf16.mxu0 %v4483
        %4782 = vmatpush1.bf16.msra.mxu0 %v4482
        %4783 = vmatprep.subr.bf16.mxu0 %v4487
        %4784 = vmatpush1.bf16.msra.mxu0 %v4486
        %4785 = vmatprep.subr.bf16.mxu0 %v4491
        %4786 = vmatpush1.bf16.msra.mxu0 %v4490
        %4787 = vmatprep.subr.bf16.mxu0 %v4495
        %4788 = vmatpush1.bf16.msra.mxu0 %v4494
        %4789 = vmatprep.subr.bf16.mxu0 %v4499
        %4790 = vmatpush1.bf16.msra.mxu0 %v4498
        %4791 = vmatprep.subr.bf16.mxu0 %v4503
        %4792 = vmatpush1.bf16.msra.mxu0 %v4502
        %4793 = vmatprep.subr.bf16.mxu0 %v4507
        %4794 = vmatpush1.bf16.msra.mxu0 %v4506
        %4795 = vmatprep.subr.bf16.mxu0 %v4511
        %4796 = vmatpush1.bf16.msra.mxu0 %v4510
        %4797 = vmatprep.subr.bf16.mxu0 %v4515
        %4798 = vmatpush1.bf16.msra.mxu0 %v4514
        %4799 = vmatprep.subr.bf16.mxu0 %v4519
        %4800 = vmatpush1.bf16.msra.mxu0 %v4518
        %4801 = vmatprep.subr.bf16.mxu0 %v4523
        %4802 = vmatpush1.bf16.msra.mxu0 %v4522
        %4803 = vmatprep.subr.bf16.mxu0 %v4527
        %4804 = vmatpush1.bf16.msra.mxu0 %v4526
        %4805 = vmatprep.subr.bf16.mxu0 %v4531
        %4806 = vmatpush1.bf16.msra.mxu0 %v4530
        %4807 = vmatprep.subr.bf16.mxu0 %v4535
        %4808 = vmatpush1.bf16.msra.mxu0 %v4534
        %4809 = vmatprep.mubr.bf16.mxu0 %v4639
        %4810 = vmatmul.mubr.bf16.gmra.mrb[0].mxu0 %v4638
        %v4811 = vpop.f32.mrb[0].mxu0
        %v4812 = vadd.f32 %v4759, %v4811
        %v4813 = vpop.f32.mrb[0].mxu0
        %v4814 = vadd.f32 %v4761, %v4813
        %v4815 = vpop.f32.mrb[0].mxu0
        %v4816 = vadd.f32 %v4763, %v4815
        %v4817 = vpop.f32.mrb[0].mxu0
        %v4818 = vadd.f32 %v4765, %v4817
        %4819 = vmatprep.mubr.bf16.mxu0 %v4647
        %4820 = vmatmul.mubr.bf16.gmra.mrb[0].mxu0 %v4646
        %v4821 = vpop.f32.mrb[0].mxu0
        %v4822 = vadd.f32 %v4769, %v4821
        %v4823 = vpop.f32.mrb[0].mxu0
        %v4824 = vadd.f32 %v4771, %v4823
        %v4825 = vpop.f32.mrb[0].mxu0
        %v4826 = vadd.f32 %v4773, %v4825
        %v4827 = vpop.f32.mrb[0].mxu0
        %v4828 = vadd.f32 %v4775, %v4827
        %4829 = vdwg.mxu0
        %4830 = vmatprep.subr.bf16.mxu0 %v4539
        %4831 = vmatpush1.bf16.msra.mxu0 %v4538
        %4832 = vmatprep.subr.bf16.mxu0 %v4543
        %4833 = vmatpush1.bf16.msra.mxu0 %v4542
        %4834 = vmatprep.subr.bf16.mxu0 %v4547
        %4835 = vmatpush1.bf16.msra.mxu0 %v4546
        %4836 = vmatprep.subr.bf16.mxu0 %v4551
        %4837 = vmatpush1.bf16.msra.mxu0 %v4550
        %4838 = vmatprep.subr.bf16.mxu0 %v4555
        %4839 = vmatpush1.bf16.msra.mxu0 %v4554
        %4840 = vmatprep.subr.bf16.mxu0 %v4559
        %4841 = vmatpush1.bf16.msra.mxu0 %v4558
        %4842 = vmatprep.subr.bf16.mxu0 %v4563
        %4843 = vmatpush1.bf16.msra.mxu0 %v4562
        %4844 = vmatprep.subr.bf16.mxu0 %v4567
        %4845 = vmatpush1.bf16.msra.mxu0 %v4566
        %4846 = vmatprep.subr.bf16.mxu0 %v4571
        %4847 = vmatpush1.bf16.msra.mxu0 %v4570
        %4848 = vmatprep.subr.bf16.mxu0 %v4575
        %4849 = vmatpush1.bf16.msra.mxu0 %v4574
        %4850 = vmatprep.subr.bf16.mxu0 %v4579
        %4851 = vmatpush1.bf16.msra.mxu0 %v4578
        %4852 = vmatprep.subr.bf16.mxu0 %v4583
        %4853 = vmatpush1.bf16.msra.mxu0 %v4582
        %4854 = vmatprep.subr.bf16.mxu0 0
        %4855 = vmatpush1.bf16.msra.mxu0 0
        %4856 = vmatprep.subr.bf16.mxu0 0
        %4857 = vmatpush1.bf16.msra.mxu0 0
        %4858 = vmatprep.subr.bf16.mxu0 0
        %4859 = vmatpush1.bf16.msra.mxu0 0
        %4860 = vmatprep.subr.bf16.mxu0 0
        %4861 = vmatpush1.bf16.msra.mxu0 0
        %4862 = vmatprep.mubr.bf16.mxu0 %v4666
        %4863 = vmatmul.mubr.bf16.gmra.mrb[0].mxu0 %v4640
        %v4864 = vpop.f32.mrb[0].mxu0
        %v4865 = vadd.f32 %v4812, %v4864
        %v4866 = vpop.f32.mrb[0].mxu0
        %v4867 = vadd.f32 %v4814, %v4866
        %v4868 = vpop.f32.mrb[0].mxu0
        %v4869 = vadd.f32 %v4816, %v4868
        %v4870 = vpop.f32.mrb[0].mxu0
        %v4871 = vadd.f32 %v4818, %v4870
        %4872 = vmatprep.mubr.bf16.mxu0 %v4669
        %4873 = vmatmul.mubr.bf16.gmra.mrb[0].mxu0 %v4648
        %v4874 = vpop.f32.mrb[0].mxu0
        %v4875 = vadd.f32 %v4822, %v4874
        %v4876 = vpop.f32.mrb[0].mxu0
        %v4877 = vadd.f32 %v4824, %v4876
        %v4878 = vpop.f32.mrb[0].mxu0
        %v4879 = vadd.f32 %v4826, %v4878
        %v4880 = vpop.f32.mrb[0].mxu0
        %v4881 = vadd.f32 %v4828, %v4880
        %4882 = vdwg.mxu0
        %4883 = vmatprep.subr.bf16.mxu0 %v4349
        %4884 = vmatpush1.bf16.msra.mxu0 %v4348
        %4885 = vmatprep.subr.bf16.mxu0 %v4353
        %4886 = vmatpush1.bf16.msra.mxu0 %v4352
        %4887 = vmatprep.subr.bf16.mxu0 %v4357
        %4888 = vmatpush1.bf16.msra.mxu0 %v4356
        %4889 = vmatprep.subr.bf16.mxu0 %v4361
        %4890 = vmatpush1.bf16.msra.mxu0 %v4360
        %4891 = vmatprep.subr.bf16.mxu0 %v4365
        %4892 = vmatpush1.bf16.msra.mxu0 %v4364
        %4893 = vmatprep.subr.bf16.mxu0 %v4369
        %4894 = vmatpush1.bf16.msra.mxu0 %v4368
        %4895 = vmatprep.subr.bf16.mxu0 %v4373
        %4896 = vmatpush1.bf16.msra.mxu0 %v4372
        %4897 = vmatprep.subr.bf16.mxu0 %v4377
        %4898 = vmatpush1.bf16.msra.mxu0 %v4376
        %4899 = vmatprep.subr.bf16.mxu0 %v4381
        %4900 = vmatpush1.bf16.msra.mxu0 %v4380
        %4901 = vmatprep.subr.bf16.mxu0 %v4385
        %4902 = vmatpush1.bf16.msra.mxu0 %v4384
        %4903 = vmatprep.subr.bf16.mxu0 %v4389
        %4904 = vmatpush1.bf16.msra.mxu0 %v4388
        %4905 = vmatprep.subr.bf16.mxu0 %v4393
        %4906 = vmatpush1.bf16.msra.mxu0 %v4392
        %4907 = vmatprep.subr.bf16.mxu0 %v4397
        %4908 = vmatpush1.bf16.msra.mxu0 %v4396
        %4909 = vmatprep.subr.bf16.mxu0 %v4401
        %4910 = vmatpush1.bf16.msra.mxu0 %v4400
        %4911 = vmatprep.subr.bf16.mxu0 %v4405
        %4912 = vmatpush1.bf16.msra.mxu0 %v4404
        %4913 = vmatprep.subr.bf16.mxu0 %v4409
        %4914 = vmatpush1.bf16.msra.mxu0 %v4408
        %4915 = vmatprep.mubr.bf16.mxu0 %v4635
        %4916 = vmatmul.mubr.bf16.gmra.mrb[0].mxu0 %v4634
        %v4917 = vpop.f32.mrb[0].mxu0
        %v4918 = vadd.f32 0.0, %v4917
        %v4919 = vpop.f32.mrb[0].mxu0
        %v4920 = vadd.f32 0.0, %v4919
        %v4921 = vpop.f32.mrb[0].mxu0
        %v4922 = vadd.f32 0.0, %v4921
        %v4923 = vpop.f32.mrb[0].mxu0
        %v4924 = vadd.f32 0.0, %v4923
        %4925 = vmatprep.mubr.bf16.mxu0 %v4643
        %4926 = vmatmul.mubr.bf16.gmra.mrb[0].mxu0 %v4642
        %v4927 = vpop.f32.mrb[0].mxu0
        %v4928 = vadd.f32 0.0, %v4927
        %v4929 = vpop.f32.mrb[0].mxu0
        %v4930 = vadd.f32 0.0, %v4929
        %v4931 = vpop.f32.mrb[0].mxu0
        %v4932 = vadd.f32 0.0, %v4931
        %v4933 = vpop.f32.mrb[0].mxu0
        %v4934 = vadd.f32 0.0, %v4933
        %4935 = vdwg.mxu0
        %4936 = vmatprep.subr.bf16.mxu0 %v4413
        %4937 = vmatpush1.bf16.msra.mxu0 %v4412
        %4938 = vmatprep.subr.bf16.mxu0 %v4417
        %4939 = vmatpush1.bf16.msra.mxu0 %v4416
        %4940 = vmatprep.subr.bf16.mxu0 %v4421
        %4941 = vmatpush1.bf16.msra.mxu0 %v4420
        %4942 = vmatprep.subr.bf16.mxu0 %v4425
        %4943 = vmatpush1.bf16.msra.mxu0 %v4424
        %4944 = vmatprep.subr.bf16.mxu0 %v4429
        %4945 = vmatpush1.bf16.msra.mxu0 %v4428
        %4946 = vmatprep.subr.bf16.mxu0 %v4433
        %4947 = vmatpush1.bf16.msra.mxu0 %v4432
        %4948 = vmatprep.subr.bf16.mxu0 %v4437
        %4949 = vmatpush1.bf16.msra.mxu0 %v4436
        %4950 = vmatprep.subr.bf16.mxu0 %v4441
        %4951 = vmatpush1.bf16.msra.mxu0 %v4440
        %4952 = vmatprep.subr.bf16.mxu0 %v4445
        %4953 = vmatpush1.bf16.msra.mxu0 %v4444
        %4954 = vmatprep.subr.bf16.mxu0 %v4449
        %4955 = vmatpush1.bf16.msra.mxu0 %v4448
        %4956 = vmatprep.subr.bf16.mxu0 %v4453
        %4957 = vmatpush1.bf16.msra.mxu0 %v4452
        %4958 = vmatprep.subr.bf16.mxu0 %v4457
        %4959 = vmatpush1.bf16.msra.mxu0 %v4456
        %4960 = vmatprep.subr.bf16.mxu0 %v4461
        %4961 = vmatpush1.bf16.msra.mxu0 %v4460
        %4962 = vmatprep.subr.bf16.mxu0 %v4465
        %4963 = vmatpush1.bf16.msra.mxu0 %v4464
        %4964 = vmatprep.subr.bf16.mxu0 %v4469
        %4965 = vmatpush1.bf16.msra.mxu0 %v4468
        %4966 = vmatprep.subr.bf16.mxu0 %v4473
        %4967 = vmatpush1.bf16.msra.mxu0 %v4472
        %4968 = vmatprep.mubr.bf16.mxu0 %v4637
        %4969 = vmatmul.mubr.bf16.gmra.mrb[0].mxu0 %v4636
        %v4970 = vpop.f32.mrb[0].mxu0
        %v4971 = vadd.f32 %v4918, %v4970
        %v4972 = vpop.f32.mrb[0].mxu0
        %v4973 = vadd.f32 %v4920, %v4972
        %v4974 = vpop.f32.mrb[0].mxu0
        %v4975 = vadd.f32 %v4922, %v4974
        %v4976 = vpop.f32.mrb[0].mxu0
        %v4977 = vadd.f32 %v4924, %v4976
        %4978 = vmatprep.mubr.bf16.mxu0 %v4645
        %4979 = vmatmul.mubr.bf16.gmra.mrb[0].mxu0 %v4644
        %v4980 = vpop.f32.mrb[0].mxu0
        %v4981 = vadd.f32 %v4928, %v4980
        %v4982 = vpop.f32.mrb[0].mxu0
        %v4983 = vadd.f32 %v4930, %v4982
        %v4984 = vpop.f32.mrb[0].mxu0
        %v4985 = vadd.f32 %v4932, %v4984
        %v4986 = vpop.f32.mrb[0].mxu0
        %v4987 = vadd.f32 %v4934, %v4986
        %4988 = vdwg.mxu0
        %4989 = vmatprep.subr.bf16.mxu0 %v4477
        %4990 = vmatpush1.bf16.msra.mxu0 %v4476
        %4991 = vmatprep.subr.bf16.mxu0 %v4481
        %4992 = vmatpush1.bf16.msra.mxu0 %v4480
        %4993 = vmatprep.subr.bf16.mxu0 %v4485
        %4994 = vmatpush1.bf16.msra.mxu0 %v4484
        %4995 = vmatprep.subr.bf16.mxu0 %v4489
        %4996 = vmatpush1.bf16.msra.mxu0 %v4488
        %4997 = vmatprep.subr.bf16.mxu0 %v4493
        %4998 = vmatpush1.bf16.msra.mxu0 %v4492
        %4999 = vmatprep.subr.bf16.mxu0 %v4497
        %5000 = vmatpush1.bf16.msra.mxu0 %v4496
        %5001 = vmatprep.subr.bf16.mxu0 %v4501
        %5002 = vmatpush1.bf16.msra.mxu0 %v4500
        %5003 = vmatprep.subr.bf16.mxu0 %v4505
        %5004 = vmatpush1.bf16.msra.mxu0 %v4504
        %5005 = vmatprep.subr.bf16.mxu0 %v4509
        %5006 = vmatpush1.bf16.msra.mxu0 %v4508
        %5007 = vmatprep.subr.bf16.mxu0 %v4513
        %5008 = vmatpush1.bf16.msra.mxu0 %v4512
        %5009 = vmatprep.subr.bf16.mxu0 %v4517
        %5010 = vmatpush1.bf16.msra.mxu0 %v4516
        %5011 = vmatprep.subr.bf16.mxu0 %v4521
        %5012 = vmatpush1.bf16.msra.mxu0 %v4520
        %5013 = vmatprep.subr.bf16.mxu0 %v4525
        %5014 = vmatpush1.bf16.msra.mxu0 %v4524
        %5015 = vmatprep.subr.bf16.mxu0 %v4529
        %5016 = vmatpush1.bf16.msra.mxu0 %v4528
        %5017 = vmatprep.subr.bf16.mxu0 %v4533
        %5018 = vmatpush1.bf16.msra.mxu0 %v4532
        %5019 = vmatprep.subr.bf16.mxu0 %v4537
        %5020 = vmatpush1.bf16.msra.mxu0 %v4536
        %5021 = vmatprep.mubr.bf16.mxu0 %v4639
        %5022 = vmatmul.mubr.bf16.gmra.mrb[0].mxu0 %v4638
        %v5023 = vpop.f32.mrb[0].mxu0
        %v5024 = vadd.f32 %v4971, %v5023
        %v5025 = vpop.f32.mrb[0].mxu0
        %v5026 = vadd.f32 %v4973, %v5025
        %v5027 = vpop.f32.mrb[0].mxu0
        %v5028 = vadd.f32 %v4975, %v5027
        %v5029 = vpop.f32.mrb[0].mxu0
        %v5030 = vadd.f32 %v4977, %v5029
        %5031 = vmatprep.mubr.bf16.mxu0 %v4647
        %5032 = vmatmul.mubr.bf16.gmra.mrb[0].mxu0 %v4646
        %v5033 = vpop.f32.mrb[0].mxu0
        %v5034 = vadd.f32 %v4981, %v5033
        %v5035 = vpop.f32.mrb[0].mxu0
        %v5036 = vadd.f32 %v4983, %v5035
        %v5037 = vpop.f32.mrb[0].mxu0
        %v5038 = vadd.f32 %v4985, %v5037
        %v5039 = vpop.f32.mrb[0].mxu0
        %v5040 = vadd.f32 %v4987, %v5039
        %5041 = vdwg.mxu0
        %5042 = vmatprep.subr.bf16.mxu0 %v4541
        %5043 = vmatpush1.bf16.msra.mxu0 %v4540
        %5044 = vmatprep.subr.bf16.mxu0 %v4545
        %5045 = vmatpush1.bf16.msra.mxu0 %v4544
        %5046 = vmatprep.subr.bf16.mxu0 %v4549
        %5047 = vmatpush1.bf16.msra.mxu0 %v4548
        %5048 = vmatprep.subr.bf16.mxu0 %v4553
        %5049 = vmatpush1.bf16.msra.mxu0 %v4552
        %5050 = vmatprep.subr.bf16.mxu0 %v4557
        %5051 = vmatpush1.bf16.msra.mxu0 %v4556
        %5052 = vmatprep.subr.bf16.mxu0 %v4561
        %5053 = vmatpush1.bf16.msra.mxu0 %v4560
        %5054 = vmatprep.subr.bf16.mxu0 %v4565
        %5055 = vmatpush1.bf16.msra.mxu0 %v4564
        %5056 = vmatprep.subr.bf16.mxu0 %v4569
        %5057 = vmatpush1.bf16.msra.mxu0 %v4568
        %5058 = vmatprep.subr.bf16.mxu0 %v4573
        %5059 = vmatpush1.bf16.msra.mxu0 %v4572
        %5060 = vmatprep.subr.bf16.mxu0 %v4577
        %5061 = vmatpush1.bf16.msra.mxu0 %v4576
        %5062 = vmatprep.subr.bf16.mxu0 %v4581
        %5063 = vmatpush1.bf16.msra.mxu0 %v4580
        %5064 = vmatprep.subr.bf16.mxu0 %v4585
        %5065 = vmatpush1.bf16.msra.mxu0 %v4584
        %5066 = vmatprep.subr.bf16.mxu0 0
        %5067 = vmatpush1.bf16.msra.mxu0 0
        %5068 = vmatprep.subr.bf16.mxu0 0
        %5069 = vmatpush1.bf16.msra.mxu0 0
        %5070 = vmatprep.subr.bf16.mxu0 0
        %5071 = vmatpush1.bf16.msra.mxu0 0
        %5072 = vmatprep.subr.bf16.mxu0 0
        %5073 = vmatpush1.bf16.msra.mxu0 0
        %5074 = vmatprep.mubr.bf16.mxu0 %v4666
        %5075 = vmatmul.mubr.bf16.gmra.mrb[0].mxu0 %v4640
        %v5076 = vpop.f32.mrb[0].mxu0
        %v5077 = vadd.f32 %v5024, %v5076
        %v5078 = vpop.f32.mrb[0].mxu0
        %v5079 = vadd.f32 %v5026, %v5078
        %v5080 = vpop.f32.mrb[0].mxu0
        %v5081 = vadd.f32 %v5028, %v5080
        %v5082 = vpop.f32.mrb[0].mxu0
        %v5083 = vadd.f32 %v5030, %v5082
        %5084 = vmatprep.mubr.bf16.mxu0 %v4669
        %5085 = vmatmul.mubr.bf16.gmra.mrb[0].mxu0 %v4648
        %v5086 = vpop.f32.mrb[0].mxu0
        %v5087 = vadd.f32 %v5034, %v5086
        %v5088 = vpop.f32.mrb[0].mxu0
        %v5089 = vadd.f32 %v5036, %v5088
        %v5090 = vpop.f32.mrb[0].mxu0
        %v5091 = vadd.f32 %v5038, %v5090
        %v5092 = vpop.f32.mrb[0].mxu0
        %v5093 = vadd.f32 %v5040, %v5092
        %5094 = vdwg.mxu0
        %5095 = vst [vmem:[%s313] sm:$0xff] %v4865
        %5096 = vst [vmem:[%s313 + $0x8] sm:$0xff] %v4867
        %5097 = vst [vmem:[%s313 + $0x10] sm:$0xff] %v5077
        %5098 = vst [vmem:[%s313 + $0x18] sm:$0xff] %v5079
        %5099 = vst [vmem:[%s313 + $0x20] sm:$0xff] %v4869
        %5100 = vst [vmem:[%s313 + $0x28] sm:$0xff] %v4871
        %5101 = vst [vmem:[%s313 + $0x30] sm:$0xff] %v5081
        %5102 = vst [vmem:[%s313 + $0x38] sm:$0xff] %v5083
        %5103 = vst [vmem:[%s313 + $0x40] sm:$0xff] %v4875
        %5104 = vst [vmem:[%s313 + $0x48] sm:$0xff] %v4877
        %5105 = vst [vmem:[%s313 + $0x50] sm:$0xff] %v5087
        %5106 = vst [vmem:[%s313 + $0x58] sm:$0xff] %v5089
        %5107 = vst [vmem:[%s313 + $0x60] sm:$0xff] %v4879
        %5108 = vst [vmem:[%s313 + $0x68] sm:$0xff] %v4881
        %5109 = vst [vmem:[%s313 + $0x70] sm:$0xff] %v5091
        %5110 = vst [vmem:[%s313 + $0x78] sm:$0xff] %v5093
        %v5111 = vadd.f32 %v4865, %v4867
        %v5112 = vadd.f32 %v5111, %v5077
        %v5113 = vadd.f32 %v5112, %v5079
        %5114 = vadd.xlane.f32.xlu0 %v5113
        %v5115 = vpop.xlane.xlu0 %5114
        %v5116 = vadd.f32 %v4869, %v4871
        %v5117 = vadd.f32 %v5116, %v5081
        %v5118 = vadd.f32 %v5117, %v5083
        %5119 = vadd.xlane.f32.xlu0 %v5118
        %v5120 = vpop.xlane.xlu0 %5119
        %v5121 = vadd.f32 %v4875, %v4877
        %v5122 = vadd.f32 %v5121, %v5087
        %v5123 = vadd.f32 %v5122, %v5089
        %5124 = vadd.xlane.f32.xlu0 %v5123
        %v5125 = vpop.xlane.xlu0 %5124
        %v5126 = vadd.f32 %v4879, %v4881
        %v5127 = vadd.f32 %v5126, %v5091
        %v5128 = vadd.f32 %v5127, %v5093
        %5129 = vadd.xlane.f32.xlu0 %v5128
        %v5130 = vpop.xlane.xlu0 %5129
        %vm5131 = vcmask 7168
        %5132 = vst.msk [vmem:[%s328] sm:$0xff] %vm5131, %v5115
        %5133 = vst.msk [vmem:[%s328 + $0x8] sm:$0xff] %vm5131, %v5120
        %5134 = vst.msk [vmem:[%s328 + $0x10] sm:$0xff] %vm5131, %v5125
        %5135 = vst.msk [vmem:[%s328 + $0x18] sm:$0xff] %vm5131, %v5130
        %v5136 = vmul.f32 %v4865, %v4865
        %v5137 = vmul.f32 %v4867, %v4867
        %v5138 = vmul.f32 %v5077, %v5077
        %v5139 = vmul.f32 %v5079, %v5079
        %v5140 = vmul.f32 %v4869, %v4869
        %v5141 = vmul.f32 %v4871, %v4871
        %v5142 = vmul.f32 %v5081, %v5081
        %v5143 = vmul.f32 %v5083, %v5083
        %v5144 = vmul.f32 %v4875, %v4875
        %v5145 = vmul.f32 %v4877, %v4877
        %v5146 = vmul.f32 %v5087, %v5087
        %v5147 = vmul.f32 %v5089, %v5089
        %v5148 = vmul.f32 %v4879, %v4879
        %v5149 = vmul.f32 %v4881, %v4881
        %v5150 = vmul.f32 %v5091, %v5091
        %v5151 = vmul.f32 %v5093, %v5093
        %v5152 = vadd.f32 %v5136, %v5137
        %v5153 = vadd.f32 %v5152, %v5138
        %v5154 = vadd.f32 %v5153, %v5139
        %5155 = vadd.xlane.f32.xlu0 %v5154
        %v5156 = vpop.xlane.xlu0 %5155
        %v5157 = vadd.f32 %v5140, %v5141
        %v5158 = vadd.f32 %v5157, %v5142
        %v5159 = vadd.f32 %v5158, %v5143
        %5160 = vadd.xlane.f32.xlu0 %v5159
        %v5161 = vpop.xlane.xlu0 %5160
        %v5162 = vadd.f32 %v5144, %v5145
        %v5163 = vadd.f32 %v5162, %v5146
        %v5164 = vadd.f32 %v5163, %v5147
        %5165 = vadd.xlane.f32.xlu0 %v5164
        %v5166 = vpop.xlane.xlu0 %5165
        %v5167 = vadd.f32 %v5148, %v5149
        %v5168 = vadd.f32 %v5167, %v5150
        %v5169 = vadd.f32 %v5168, %v5151
        %5170 = vadd.xlane.f32.xlu0 %v5169
        %v5171 = vpop.xlane.xlu0 %5170
        %vm5172 = vcmask 15368
        %5173 = vst.msk [vmem:[%s328] sm:$0xff] %vm5172, %v5156
        %5174 = vst.msk [vmem:[%s328 + $0x8] sm:$0xff] %vm5172, %v5161
        %5175 = vst.msk [vmem:[%s328 + $0x10] sm:$0xff] %vm5172, %v5166
        %5176 = vst.msk [vmem:[%s328 + $0x18] sm:$0xff] %vm5172, %v5171
        %s5177 = sand.u32 %s129, 1
        %s5178 = scalar_lea.sflag [#allocation5], %s5177
        %s5179 = sand.u32 %s129, 1
        %s5180 = smul.addr %s5179, 128
        %s5181 = scalar_lea.vmem [#allocation11], %s5180
        %p5182 = scmp.lt.s32.totalorder %s27, 1
        %s5183 = scalar_select %p5182, %s27, 1
        %s5184 = smul.addr %s5183, 4
        %s5185 = smul.addr %s5184, 8
        %s5186 = scalar_lea.vmem %s5, %s5185
        // Predicated region
        $region53: #{tpu_custom_call.1} parent=35 // pred_check
          %p5187 = pneg %p139
        $region54: #{tpu_custom_call.1} parent=35 // pred_check_branch
          %5189 = sbr.rel (%p5187) target = $region56
        $region55: #{tpu_custom_call.1} parent=35 // pred_region
          %s5190 = smul.u32 4, %s27
          %s5192 = ssub.s32 2048, 2048
          %5193 = vsyncadd %s5178, %s5192
          %s5194 = smul.addr %s5190, 128
          %s5195 = scalar_lea.hbm %s4, %s5194
          %s5196 = sshll.u32 %s5181, 4
          %s5197 = int_to_ptr.vmem [resolvable:$true] %s5196
          %5202 = dma.vmem_to_hbm [thread:$0]  %s5197, 2048, %s5195, %s5178, 512, 1024, 32
        $region56: #{tpu_custom_call.1} parent=35 // pred_fallthru
          _
        // Predicated region
        $region57: #{tpu_custom_call.1} parent=35 // pred_check
          %p5203 = pneg %p165
        $region58: #{tpu_custom_call.1} parent=35 // pred_check_branch
          %5205 = sbr.rel (%p5203) target = $region60
        $region59: #{tpu_custom_call.1} parent=35 // pred_region
          _
        $region60: #{tpu_custom_call.1} parent=35 // pred_fallthru
          _
      $region36: #{tpu_custom_call.1} parent=5 // pred_fallthru
        _
      %p5206 = scmp.le.s32.totalorder 2, %s22
      // Predicated region
      $region61: #{tpu_custom_call.1} parent=5 // pred_check
        %p5207 = pneg %p5206
      $region62: #{tpu_custom_call.1} parent=5 // pred_check_branch
        %5209 = sbr.rel (%p5207) target = $region64
      $region63: #{tpu_custom_call.1} parent=5 // pred_region
        %s5210 = ssub.s32 %s22, 2
        // Predicated region
        $region65: #{tpu_custom_call.1} parent=63 // pred_check
          %p5211 = pneg %p145
        $region66: #{tpu_custom_call.1} parent=63 // pred_check_branch
          %5213 = sbr.rel (%p5211) target = $region68
        $region67: #{tpu_custom_call.1} parent=63 // pred_region
          %s5214 = sand.u32 %s130, 1
          %s5215 = scalar_lea.sflag [#allocation5], %s5214
          %s5216 = sand.u32 %s130, 1
          %s5217 = smul.addr %s5216, 128
          %s5218 = scalar_lea.vmem [#allocation11], %s5217
          %5219 = dma.done %s5215, 2048
        $region68: #{tpu_custom_call.1} parent=63 // pred_fallthru
          _
        // Predicated region
        $region69: #{tpu_custom_call.1} parent=63 // pred_check
          %p5220 = pneg %p171
        $region70: #{tpu_custom_call.1} parent=63 // pred_check_branch
          %5222 = sbr.rel (%p5220) target = $region72
        $region71: #{tpu_custom_call.1} parent=63 // pred_region
          %p5223 = scmp.lt.s32.totalorder %s28, 1
          %s5224 = scalar_select %p5223, %s28, 1
          %s5225 = smul.addr %s5224, 4
          %s5226 = smul.addr %s5225, 8
          %s5227 = scalar_lea.vmem %s5, %s5226
        $region72: #{tpu_custom_call.1} parent=63 // pred_fallthru
          _
      $region64: #{tpu_custom_call.1} parent=5 // pred_fallthru
        _
    $region6: #{tpu_custom_call.1} parent=1 // loop_footer
      %s26 = sadd.s32 1, %s22
    $region7: #{tpu_custom_call.1} parent=1 // loop_footer_branch
      %21 = sbr.rel target = $region3
    $region8: #{tpu_custom_call.1} parent=1 // loop_exit
      _
    %5228 = vsyncpa [#allocation4], 1
    %s5229 = scalar_lea.sflag [#allocation4], 1
    %5230 = vsyncpa %s5229, 1
    %5231 = vsyncpa [#allocation9], 1
    %s5232 = scalar_lea.sflag [#allocation9], 1
    %5233 = vsyncpa %s5232, 1
    %5234 = vsyncpa [#allocation5], 1
    %s5235 = scalar_lea.sflag [#allocation5], 1
    %5236 = vsyncpa %s5235, 1
    %5237 = vsyncpa [#allocation6], 1
    %s5238 = scalar_lea.sflag [#allocation6], 1
    %5239 = vsyncpa %s5238, 1

</llo_original>
